<compile_context>
chip_gen: v7x
topology: tpu7x:2x2x1
jax: 0.10.0
libtpu: 0.0.40
codegen_flags: <defaults>
</compile_context>

<pallas_src>
import functools

import jax
import jax.numpy as jnp
from jax import lax
from jax.experimental import pallas as pl
from jax.experimental.pallas import tpu as pltpu

EPS = 1e-5
EXPANSION = 4
LANE = 128
_VMEM_LIMIT = 32 * 1024 * 1024


# --------------------------------------------------------------------------- #
# helpers
# --------------------------------------------------------------------------- #
def _ceil_to(x, m):
    return ((x + m - 1) // m) * m


def _pick_row_tile(m, target):
    """Largest divisor of m that is <= target and a multiple of 8 (or m itself)."""
    t = min(target, m)
    for cand in range(t, 0, -1):
        if m % cand == 0 and (cand % 8 == 0 or cand == m):
            return cand
    return m


def _pad_axis(a, axis, new_size):
    pad = new_size - a.shape[axis]
    if pad == 0:
        return a
    widths = [(0, 0)] * a.ndim
    widths[axis] = (0, pad)
    return jnp.pad(a, widths)


def _scale_shift(psum, psumsq, count, gamma_p, beta_p):
    """Fold one-pass batch stats into a per-channel FMA:  y * scale + shift."""
    s = jnp.sum(psum, axis=0)            # (1, Cp)
    ss = jnp.sum(psumsq, axis=0)         # (1, Cp)
    mean = s / count
    var = jnp.maximum(ss / count - mean * mean, 0.0)   # biased variance, f32
    scale = gamma_p * lax.rsqrt(var + EPS)
    shift = beta_p - mean * scale
    return scale.astype(jnp.float32), shift.astype(jnp.float32)


def _write_out_with_stats(y, y_ref, s_ref, ss_ref):
    cp = y.shape[-1]
    y_ref[...] = y
    s_ref[...] = jnp.sum(y, axis=0, keepdims=True).reshape(1, 1, cp)
    ss_ref[...] = jnp.sum(y * y, axis=0, keepdims=True).reshape(1, 1, cp)


# --------------------------------------------------------------------------- #
# K1 / K3 : (optional bn+relu) -> 1x1-conv matmul + partial BN stats
# --------------------------------------------------------------------------- #
def _make_matmul_kernel(apply_affine):
    if apply_affine:
        def kernel(x_ref, sc_ref, sh_ref, w_ref, y_ref, s_ref, ss_ref):
            # bn (scale/shift FMA) + relu in f32, cast to bf16 for the MXU.
            a = jnp.maximum(x_ref[...] * sc_ref[...] + sh_ref[...], 0.0)
            y = jnp.dot(a.astype(jnp.bfloat16), w_ref[...],
                        preferred_element_type=jnp.float32)
            _write_out_with_stats(y, y_ref, s_ref, ss_ref)
    else:
        def kernel(x_ref, w_ref, y_ref, s_ref, ss_ref):
            y = jnp.dot(x_ref[...], w_ref[...],
                        preferred_element_type=jnp.float32)
            _write_out_with_stats(y, y_ref, s_ref, ss_ref)
    return kernel


def _conv1x1_stats(x2d, w_bf16, scale=None, shift=None, *, row_tile=256):
    """y = [relu(x*scale+shift)] @ w, tiled over rows, plus per-tile BN stats."""
    m, kp = x2d.shape
    cout = w_bf16.shape[1]
    tm = _pick_row_tile(m, row_tile)
    nt = m // tm
    affine = scale is not None
    kernel = _make_matmul_kernel(affine)

    tile_in = pl.BlockSpec((tm, kp), lambda i: (i, 0))
    vec_in = pl.BlockSpec((1, kp), lambda i: (0, 0))
    w_in = pl.BlockSpec((kp, cout), lambda i: (0, 0))

    in_arrays = [x2d]
    in_specs = [tile_in]
    if affine:
        in_arrays += [scale, shift]
        in_specs += [vec_in, vec_in]
    in_arrays.append(w_bf16)
    in_specs.append(w_in)

    flops = 2 * m * kp * cout
    bytes_accessed = int(sum(a.size * a.dtype.itemsize for a in in_arrays)
                         + m * cout * 4)

    y, s, ss = pl.pallas_call(
        kernel,
        out_shape=(
            jax.ShapeDtypeStruct((m, cout), jnp.float32),
            jax.ShapeDtypeStruct((nt, 1, cout), jnp.float32),
            jax.ShapeDtypeStruct((nt, 1, cout), jnp.float32),
        ),
        grid_spec=pltpu.PrefetchScalarGridSpec(
            num_scalar_prefetch=0,
            grid=(nt,),
            in_specs=in_specs,
            out_specs=(
                pl.BlockSpec((tm, cout), lambda i: (i, 0)),
                pl.BlockSpec((1, 1, cout), lambda i: (i, 0, 0)),
                pl.BlockSpec((1, 1, cout), lambda i: (i, 0, 0)),
            ),
        ),
        compiler_params=pltpu.CompilerParams(
            dimension_semantics=("parallel",),
            vmem_limit_bytes=_VMEM_LIMIT),
        cost_estimate=pl.CostEstimate(flops=flops, transcendentals=0,
                                      bytes_accessed=bytes_accessed),
    )(*in_arrays)
    return y, s, ss


# --------------------------------------------------------------------------- #
# K1 (fused variant): conv1 + downsample conv share one HBM read of x
# --------------------------------------------------------------------------- #
def _dual_matmul_kernel(x_ref, w1_ref, wd_ref, y1_ref, id_ref,
                        s1_ref, ss1_ref, sd_ref, ssd_ref):
    x = x_ref[...]
    y1 = jnp.dot(x, w1_ref[...], preferred_element_type=jnp.float32)
    yd = jnp.dot(x, wd_ref[...], preferred_element_type=jnp.float32)
    _write_out_with_stats(y1, y1_ref, s1_ref, ss1_ref)
    _write_out_with_stats(yd, id_ref, sd_ref, ssd_ref)


def _conv1x1_dual_stats(x2d, w1_bf16, wd_bf16, *, row_tile=256):
    """y1 = x @ w1 and idn = x @ wd in one pass over x (stride == 1 only)."""
    m, kp = x2d.shape
    c1 = w1_bf16.shape[1]
    cd = wd_bf16.shape[1]
    tm = _pick_row_tile(m, row_tile)
    nt = m // tm

    flops = 2 * m * kp * (c1 + cd)
    bytes_accessed = int(x2d.size * 2 + w1_bf16.size * 2 + wd_bf16.size * 2
                         + m * (c1 + cd) * 4)

    y1, idn, s1, ss1, sd, ssd = pl.pallas_call(
        _dual_matmul_kernel,
        out_shape=(
            jax.ShapeDtypeStruct((m, c1), jnp.float32),
            jax.ShapeDtypeStruct((m, cd), jnp.float32),
            jax.ShapeDtypeStruct((nt, 1, c1), jnp.float32),
            jax.ShapeDtypeStruct((nt, 1, c1), jnp.float32),
            jax.ShapeDtypeStruct((nt, 1, cd), jnp.float32),
            jax.ShapeDtypeStruct((nt, 1, cd), jnp.float32),
        ),
        grid_spec=pltpu.PrefetchScalarGridSpec(
            num_scalar_prefetch=0,
            grid=(nt,),
            in_specs=[
                pl.BlockSpec((tm, kp), lambda i: (i, 0)),
                pl.BlockSpec((kp, c1), lambda i: (0, 0)),
                pl.BlockSpec((kp, cd), lambda i: (0, 0)),
            ],
            out_specs=(
                pl.BlockSpec((tm, c1), lambda i: (i, 0)),
                pl.BlockSpec((tm, cd), lambda i: (i, 0)),
                pl.BlockSpec((1, 1, c1), lambda i: (i, 0, 0)),
                pl.BlockSpec((1, 1, c1), lambda i: (i, 0, 0)),
                pl.BlockSpec((1, 1, cd), lambda i: (i, 0, 0)),
                pl.BlockSpec((1, 1, cd), lambda i: (i, 0, 0)),
            ),
        ),
        compiler_params=pltpu.CompilerParams(
            dimension_semantics=("parallel",),
            vmem_limit_bytes=_VMEM_LIMIT),
        cost_estimate=pl.CostEstimate(flops=flops, transcendentals=0,
                                      bytes_accessed=bytes_accessed),
    )(x2d, w1_bf16, wd_bf16)
    return y1, idn, s1, ss1, sd, ssd


# --------------------------------------------------------------------------- #
# K2 : bn1 + relu -> 3x3 conv (im2col, single K = 9*C matmul) + partial stats
# --------------------------------------------------------------------------- #
def _make_conv3x3_kernel(H, W, Hout, Wout, Cp, stride):
    def kernel(y1_ref, sc_ref, sh_ref, w_ref, y2_ref, s_ref, ss_ref,
               pad_ref, col_ref):
        # Zero only the 1-pixel halo border (redone every step so the grid axis
        # can stay "parallel"); the interior is overwritten below.
        zr = jnp.zeros((1, W + 2, Cp), jnp.bfloat16)
        zc = jnp.zeros((H + 2, 1, Cp), jnp.bfloat16)
        pad_ref[0:1, :, :] = zr
        pad_ref[H + 1:H + 2, :, :] = zr
        pad_ref[:, 0:1, :] = zc
        pad_ref[:, W + 1:W + 2, :] = zc

        # bn1 (scale/shift) + relu in f32, write bf16 into the padded interior.
        sc = sc_ref[...].reshape(1, 1, Cp)
        sh = sh_ref[...].reshape(1, 1, Cp)
        a = jnp.maximum(y1_ref[0] * sc + sh, 0.0)
        pad_ref[1:H + 1, 1:W + 1, :] = a.astype(jnp.bfloat16)

        # im2col: gather the 9 shifted windows once, then one K=9*Cp MXU matmul.
        for ky in range(3):
            for kx in range(3):
                ki = ky * 3 + kx
                if stride == 1:
                    win = pad_ref[ky:ky + Hout, kx:kx + Wout, :]
                else:
                    win = pad_ref[pl.ds(ky, Hout, stride=stride),
                                  pl.ds(kx, Wout, stride=stride), :]
                col_ref[:, ki * Cp:(ki + 1) * Cp] = win.reshape(Hout * Wout, Cp)

        y2 = jnp.dot(col_ref[...], w_ref[...],
                     preferred_element_type=jnp.float32)       # (Hout*Wout, Cp)
        y2_ref[0] = y2.reshape(Hout, Wout, Cp)
        s_ref[...] = jnp.sum(y2, axis=0, keepdims=True).reshape(1, 1, Cp)
        ss_ref[...] = jnp.sum(y2 * y2, axis=0, keepdims=True).reshape(1, 1, Cp)

    return kernel


def _conv3x3_stats(y1_img, scale, shift, w2flat_bf16, stride):
    N, H, W, Cp = y1_img.shape
    Hout = (H - 1) // stride + 1
    Wout = (W - 1) // stride + 1
    kernel = _make_conv3x3_kernel(H, W, Hout, Wout, Cp, stride)

    flops = 2 * N * Hout * Wout * (9 * Cp) * Cp
    bytes_accessed = int(y1_img.size * 4 + w2flat_bf16.size * 2
                         + N * Hout * Wout * Cp * 4)

    y2, s, ss = pl.pallas_call(
        kernel,
        out_shape=(
            jax.ShapeDtypeStruct((N, Hout, Wout, Cp), jnp.float32),
            jax.ShapeDtypeStruct((N, 1, Cp), jnp.float32),
            jax.ShapeDtypeStruct((N, 1, Cp), jnp.float32),
        ),
        grid_spec=pltpu.PrefetchScalarGridSpec(
            num_scalar_prefetch=0,
            grid=(N,),
            in_specs=[
                pl.BlockSpec((1, H, W, Cp), lambda n: (n, 0, 0, 0)),
                pl.BlockSpec((1, Cp), lambda n: (0, 0)),
                pl.BlockSpec((1, Cp), lambda n: (0, 0)),
                pl.BlockSpec((9 * Cp, Cp), lambda n: (0, 0)),
            ],
            out_specs=(
                pl.BlockSpec((1, Hout, Wout, Cp), lambda n: (n, 0, 0, 0)),
                pl.BlockSpec((1, 1, Cp), lambda n: (n, 0, 0)),
                pl.BlockSpec((1, 1, Cp), lambda n: (n, 0, 0)),
            ),
            scratch_shapes=[
                pltpu.VMEM((H + 2, W + 2, Cp), jnp.bfloat16),        # padded act
                pltpu.VMEM((Hout * Wout, 9 * Cp), jnp.bfloat16),     # im2col
            ],
        ),
        compiler_params=pltpu.CompilerParams(
            dimension_semantics=("parallel",),
            vmem_limit_bytes=_VMEM_LIMIT),
        cost_estimate=pl.CostEstimate(flops=flops, transcendentals=0,
                                      bytes_accessed=bytes_accessed),
    )(y1_img, scale, shift, w2flat_bf16)
    return y2, s, ss


# --------------------------------------------------------------------------- #
# K4 : bn3 (+ bn_downsample) + residual add + relu, single fused store
# --------------------------------------------------------------------------- #
def _make_final_kernel(has_ds):
    if has_ds:
        def kernel(y3_ref, sc3_ref, sh3_ref, idn_ref, scd_ref, shd_ref, out_ref):
            main = y3_ref[...] * sc3_ref[...] + sh3_ref[...]
            side = idn_ref[...] * scd_ref[...] + shd_ref[...]
            out_ref[...] = jnp.maximum(main + side, 0.0)
    else:
        def kernel(y3_ref, sc3_ref, sh3_ref, idn_ref, out_ref):
            main = y3_ref[...] * sc3_ref[...] + sh3_ref[...]
            out_ref[...] = jnp.maximum(main + idn_ref[...], 0.0)
    return kernel


def _residual_bn_add_relu(y3, sc3, sh3, idn, scd=None, shd=None, *, row_tile=256):
    m, cp = y3.shape
    tm = _pick_row_tile(m, row_tile)
    nt = m // tm
    has_ds = scd is not None
    kernel = _make_final_kernel(has_ds)

    tile = pl.BlockSpec((tm, cp), lambda i: (i, 0))
    vec = pl.BlockSpec((1, cp), lambda i: (0, 0))
    in_arrays = [y3, sc3, sh3, idn] + ([scd, shd] if has_ds else [])
    in_specs = [tile, vec, vec, tile] + ([vec, vec] if has_ds else [])

    out = pl.pallas_call(
        kernel,
        out_shape=jax.ShapeDtypeStruct((m, cp), jnp.float32),
        grid_spec=pltpu.PrefetchScalarGridSpec(
            num_scalar_prefetch=0,
            grid=(nt,),
            in_specs=in_specs,
            out_specs=tile,
        ),
        compiler_params=pltpu.CompilerParams(
            dimension_semantics=("parallel",),
            vmem_limit_bytes=_VMEM_LIMIT),
    )(*in_arrays)
    return out


# --------------------------------------------------------------------------- #
# forward pass
# --------------------------------------------------------------------------- #
def bottleneck_forward_nhwc(x_nhwc, params, stride=1, row_tile=256):
    N, H, W, Cin = x_nhwc.shape
    Cmid = params["w1"].shape[1]
    Cexp = params["w3"].shape[1]
    has_ds = "wd" in params
    if not has_ds and stride != 1:
        # Mirrors the PyTorch module: downsample exists iff Cin != Cexp; without
        # it the residual add only type-checks for stride == 1.
        raise ValueError("Bottleneck without downsample requires stride == 1")

    Cin_p = _ceil_to(Cin, LANE)
    Cmid_p = _ceil_to(Cmid, LANE)
    Cexp_p = _ceil_to(Cexp, LANE)
    Hout = (H - 1) // stride + 1
    Wout = (W - 1) // stride + 1
    M, Mo = N * H * W, N * Hout * Wout

    x = x_nhwc.astype(jnp.float32)

    # --- pad channels to the lane width (zero gamma/beta in the padding keeps
    #     padded channels identically zero), cast weights to bf16 -------------
    w1 = _pad_axis(_pad_axis(params["w1"], 0, Cin_p), 1, Cmid_p).astype(jnp.bfloat16)
    w2 = _pad_axis(_pad_axis(params["w2"], 2, Cmid_p), 3, Cmid_p)
    w2 = w2.reshape(9 * Cmid_p, Cmid_p).astype(jnp.bfloat16)      # (ky,kx,ci) rows
    w3 = _pad_axis(_pad_axis(params["w3"], 0, Cmid_p), 1, Cexp_p).astype(jnp.bfloat16)
    g1 = _pad_axis(params["g1"], 1, Cmid_p); b1 = _pad_axis(params["b1"], 1, Cmid_p)
    g2 = _pad_axis(params["g2"], 1, Cmid_p); b2 = _pad_axis(params["b2"], 1, Cmid_p)
    g3 = _pad_axis(params["g3"], 1, Cexp_p); b3 = _pad_axis(params["b3"], 1, Cexp_p)
    if has_ds:
        wd = _pad_axis(_pad_axis(params["wd"], 0, Cin_p), 1, Cexp_p).astype(jnp.bfloat16)
        gd = _pad_axis(params["gd"], 1, Cexp_p); bd = _pad_axis(params["bd"], 1, Cexp_p)

    x_p = _pad_axis(x, 3, Cin_p)
    x2d = x_p.reshape(M, Cin_p).astype(jnp.bfloat16)              # MXU input

    # --- stage 1: conv1 (1x1) + BN1 batch stats; downsample conv fused when
    #     stride == 1 so x is read from HBM exactly once ----------------------
    idn = scd = shd = None
    if has_ds and stride == 1:
        y1, idn, s1, ss1, sd, ssd = _conv1x1_dual_stats(x2d, w1, wd,
                                                        row_tile=row_tile)
        sc1, sh1 = _scale_shift(s1, ss1, float(M), g1, b1)
        scd, shd = _scale_shift(sd, ssd, float(Mo), gd, bd)       # Mo == M here
    else:
        y1, s1, ss1 = _conv1x1_stats(x2d, w1, row_tile=row_tile)
        sc1, sh1 = _scale_shift(s1, ss1, float(M), g1, b1)

    # --- stage 2: bn1+relu -> conv2 (3x3, im2col) + BN2 stats ----------------
    y1_img = y1.reshape(N, H, W, Cmid_p)
    y2_img, s2, ss2 = _conv3x3_stats(y1_img, sc1, sh1, w2, stride)
    sc2, sh2 = _scale_shift(s2, ss2, float(Mo), g2, b2)

    # --- stage 3: bn2+relu -> conv3 (1x1) + BN3 stats ------------------------
    y2 = y2_img.reshape(Mo, Cmid_p)
    y3, s3, ss3 = _conv1x1_stats(y2, w3, sc2, sh2, row_tile=row_tile)
    sc3, sh3 = _scale_shift(s3, ss3, float(Mo), g3, b3)

    # --- stage 4: downsample (if not already fused) + bn + residual + relu ---
    if has_ds:
        if idn is None:
            # stride != 1: stride handled at the XLA level -> kernels only see
            # contiguous rows.
            xs2d = x_p[:, ::stride, ::stride, :].reshape(Mo, Cin_p).astype(jnp.bfloat16)
            idn, sd, ssd = _conv1x1_stats(xs2d, wd, row_tile=row_tile)
            scd, shd = _scale_shift(sd, ssd, float(Mo), gd, bd)
        out2d = _residual_bn_add_relu(y3, sc3, sh3, idn, scd, shd, row_tile=row_tile)
    else:
        idn_res = x_p.reshape(Mo, Cexp_p)     # Cin == Cexp, stride == 1 (f32 identity)
        out2d = _residual_bn_add_relu(y3, sc3, sh3, idn_res, row_tile=row_tile)

    return out2d.reshape(N, Hout, Wout, Cexp_p)[..., :Cexp]


def bottleneck_forward(x_nchw, params, stride=1, row_tile=256):
    # The PyTorch module is NCHW; kernel work is channels-last so channels sit
    # on the TPU lane axis.  In an end-to-end NHWC model both transposes vanish
    # (use bottleneck_forward_nhwc directly as the hot-path entry point).
    x = jnp.transpose(x_nchw, (0, 2, 3, 1))
    out = bottleneck_forward_nhwc(x, params, stride=stride, row_tile=row_tile)
    return jnp.transpose(out, (0, 3, 1, 2))


# --------------------------------------------------------------------------- #
# parameters & pure-JAX reference (for the self-check)
# --------------------------------------------------------------------------- #
def init_params(key, ch_in, ch_out, expansion=EXPANSION):
    cexp = ch_out * expansion
    ks = jax.random.split(key, 10)

    def w(k, shape, fan_in):
        return jax.random.normal(k, shape, jnp.float32) / jnp.sqrt(float(fan_in))

    def affine(kg, kb, c):
        g = 1.0 + 0.1 * jax.random.normal(kg, (1, c), jnp.float32)
        b = 0.1 * jax.random.normal(kb, (1, c), jnp.float32)
        return g, b

    g1, b1 = affine(ks[4], ks[5], ch_out)
    g2, b2 = affine(ks[6], ks[7], ch_out)
    g3, b3 = affine(ks[8], ks[9], cexp)
    p = {
        "w1": w(ks[0], (ch_in, ch_out), ch_in), "g1": g1, "b1": b1,
        "w2": w(ks[1], (3, 3, ch_out, ch_out), 9 * ch_out), "g2": g2, "b2": b2,
        "w3": w(ks[2], (ch_out, cexp), ch_out), "g3": g3, "b3": b3,
    }
    if ch_in != cexp:                       # same condition as the PyTorch module
        p["wd"] = w(ks[3], (ch_in, cexp), ch_in)
        p["gd"] = jnp.ones((1, cexp), jnp.float32)
        p["bd"] = jnp.zeros((1, cexp), jnp.float32)
    return p


def ref_forward(x_nchw, params, stride=1, matmul_dtype=jnp.float32):
    """Pure-JAX NHWC reference; matmul_dtype=bf16 mirrors the kernel's MXU casts."""
    x = jnp.transpose(x_nchw, (0, 2, 3, 1)).astype(jnp.float32)
    md = matmul_dtype

    def bn(y, g, b):
        m = y.mean(axis=(0, 1, 2), keepdims=True)
        v = jnp.maximum((y * y).mean(axis=(0, 1, 2), keepdims=True) - m * m, 0.0)
        return (y - m) * lax.rsqrt(v + EPS) * g.reshape(1, 1, 1, -1) + b.reshape(1, 1, 1, -1)

    def conv1x1(a, w):
        n, h, ww, c = a.shape
        y = jnp.dot(a.reshape(n * h * ww, c).astype(md), w.astype(md),
                    preferred_element_type=jnp.float32)
        return y.reshape(n, h, ww, -1)

    relu = lambda t: jnp.maximum(t, 0.0)
    y = relu(bn(conv1x1(x, params["w1"]), params["g1"], params["b1"]))
    y = lax.conv_general_dilated(y.astype(md), params["w2"].astype(md),
                                 window_strides=(stride, stride),
                                 padding=((1, 1), (1, 1)),
                                 dimension_numbers=("NHWC", "HWIO", "NHWC"),
                                 preferred_element_type=jnp.float32)
    y = relu(bn(y, params["g2"], params["b2"]))
    y = bn(conv1x1(y, params["w3"]), params["g3"], params["b3"])
    if "wd" in params:
        xs = x[:, ::stride, ::stride, :]
        idn = bn(conv1x1(xs, params["wd"]), params["gd"], params["bd"])
    else:
        idn = x[:, ::stride, ::stride, :]
    return jnp.transpose(relu(y + idn), (0, 3, 1, 2))


# --------------------------------------------------------------------------- #
# demo / self-check
# --------------------------------------------------------------------------- #
if __name__ == "__main__":
    key = jax.random.PRNGKey(0)
    kx, kp = jax.random.split(key)

    N, Cin, H, W = 2, 4, 16, 16     # NCHW input, as the PyTorch module expects
    ch_out = 4                      # expansion 4 -> Cexp = 16 -> downsample active
    stride = 1

    x = jax.random.normal(kx, (N, Cin, H, W), jnp.float32)
    params = init_params(kp, Cin, ch_out)

    fwd = jax.jit(functools.partial(bottleneck_forward, stride=stride, row_tile=256))
    out = jax.block_until_ready(fwd(x, params))
    assert out.shape == (N, ch_out * EXPANSION, H, W), out.shape

    # Structural check: reference with the same bf16 MXU-input casts.
    ref_match = ref_forward(x, params, stride=stride, matmul_dtype=jnp.bfloat16)
    err_match = float(jnp.max(jnp.abs(out - ref_match)))
    if not jnp.allclose(out, ref_match, rtol=2e-2, atol=2e-2):
        raise AssertionError(f"mismatch vs bf16-matched reference, max abs err = {err_match}")

    # Sanity check vs the full-f32 module semantics (bounds bf16 quantization).
    ref_f32 = ref_forward(x, params, stride=stride, matmul_dtype=jnp.float32)
    err_f32 = float(jnp.max(jnp.abs(out - ref_f32)))
    if err_f32 > 0.15:
        raise AssertionError(f"bf16 quantization error too large vs f32 reference: {err_f32}")

    print("KERNEL_OK")
</pallas_src>

<mosaic_0001>
module attributes {stable_mosaic.version = 11 : i64} {
  func.func @_dual_matmul_kernel(%arg0: i32, %arg1: memref<256x128xbf16, #tpu.memory_space<vmem>>, %arg2: memref<128x128xbf16, #tpu.memory_space<vmem>>, %arg3: memref<128x128xbf16, #tpu.memory_space<vmem>>, %arg4: memref<256x128xf32, #tpu.memory_space<vmem>>, %arg5: memref<256x128xf32, #tpu.memory_space<vmem>>, %arg6: memref<1x1x128xf32, #tpu.memory_space<vmem>>, %arg7: memref<1x1x128xf32, #tpu.memory_space<vmem>>, %arg8: memref<1x1x128xf32, #tpu.memory_space<vmem>>, %arg9: memref<1x1x128xf32, #tpu.memory_space<vmem>>) attributes {dimension_semantics = [#tpu.dimension_semantics<parallel>], iteration_bounds = array<i64: 2>, scalar_prefetch = 0 : i64, scratch_operands = 0 : i64, tpu.core_type = #tpu.core_type<tc>, window_params = [{transform_indices = @transform_0, window_bounds = array<i64: 256, 128>}, {pipeline_mode = #tpu.pipeline_mode<synchronous>, transform_indices = @transform_1, window_bounds = array<i64: 128, 128>}, {pipeline_mode = #tpu.pipeline_mode<synchronous>, transform_indices = @transform_2, window_bounds = array<i64: 128, 128>}, {transform_indices = @transform_3, window_bounds = array<i64: 256, 128>}, {transform_indices = @transform_4, window_bounds = array<i64: 256, 128>}, {transform_indices = @transform_5, window_bounds = array<i64: 1, 1, 128>}, {transform_indices = @transform_6, window_bounds = array<i64: 1, 1, 128>}, {transform_indices = @transform_7, window_bounds = array<i64: 1, 1, 128>}, {transform_indices = @transform_8, window_bounds = array<i64: 1, 1, 128>}]} {
    %c0 = arith.constant 0 : index
    %c0_0 = arith.constant 0 : index
    %0 = vector.load %arg1[%c0, %c0_0] : memref<256x128xbf16, #tpu.memory_space<vmem>>, vector<256x128xbf16>
    %c0_1 = arith.constant 0 : index
    %c0_2 = arith.constant 0 : index
    %1 = vector.load %arg2[%c0_1, %c0_2] : memref<128x128xbf16, #tpu.memory_space<vmem>>, vector<128x128xbf16>
    %cst = arith.constant dense<0.000000e+00> : vector<256x128xf32>
    %2 = tpu.matmul %0, %1, %cst {dimension_numbers = #tpu.dot_dimension_numbers<[1], [0], [0], [1], [0, 0, 1, 1], [], []>} : vector<256x128xbf16>, vector<128x128xbf16>, vector<256x128xf32> -> vector<256x128xf32>
    %c0_3 = arith.constant 0 : index
    %c0_4 = arith.constant 0 : index
    %3 = vector.load %arg3[%c0_3, %c0_4] : memref<128x128xbf16, #tpu.memory_space<vmem>>, vector<128x128xbf16>
    %cst_5 = arith.constant dense<0.000000e+00> : vector<256x128xf32>
    %4 = tpu.matmul %0, %3, %cst_5 {dimension_numbers = #tpu.dot_dimension_numbers<[1], [0], [0], [1], [0, 0, 1, 1], [], []>} : vector<256x128xbf16>, vector<128x128xbf16>, vector<256x128xf32> -> vector<256x128xf32>
    %c0_6 = arith.constant 0 : index
    %c0_7 = arith.constant 0 : index
    %5 = vector.load %arg4[%c0_6, %c0_7] : memref<256x128xf32, #tpu.memory_space<vmem>>, vector<256x128xf32>
    tpu.vector_store %arg4[%c0_6, %c0_7], %2 {strides = array<i32>} : memref<256x128xf32, #tpu.memory_space<vmem>>, vector<256x128xf32>,
    %cst_8 = arith.constant dense<0.000000e+00> : vector<128xf32>
    %6 = vector.multi_reduction <add>, %2, %cst_8 [0] : vector<256x128xf32> to vector<128xf32>
    %7 = vector.shape_cast %6 : vector<128xf32> to vector<1x128xf32>
    %8 = vector.shape_cast %7 : vector<1x128xf32> to vector<1x1x128xf32>
    %c0_9 = arith.constant 0 : index
    %c0_10 = arith.constant 0 : index
    %c0_11 = arith.constant 0 : index
    %9 = vector.load %arg6[%c0_9, %c0_10, %c0_11] : memref<1x1x128xf32, #tpu.memory_space<vmem>>, vector<1x1x128xf32>
    tpu.vector_store %arg6[%c0_9, %c0_10, %c0_11], %8 {strides = array<i32>} : memref<1x1x128xf32, #tpu.memory_space<vmem>>, vector<1x1x128xf32>,
    %10 = arith.mulf %2, %2 : vector<256x128xf32>
    %cst_12 = arith.constant dense<0.000000e+00> : vector<128xf32>
    %11 = vector.multi_reduction <add>, %10, %cst_12 [0] : vector<256x128xf32> to vector<128xf32>
    %12 = vector.shape_cast %11 : vector<128xf32> to vector<1x128xf32>
    %13 = vector.shape_cast %12 : vector<1x128xf32> to vector<1x1x128xf32>
    %c0_13 = arith.constant 0 : index
    %c0_14 = arith.constant 0 : index
    %c0_15 = arith.constant 0 : index
    %14 = vector.load %arg7[%c0_13, %c0_14, %c0_15] : memref<1x1x128xf32, #tpu.memory_space<vmem>>, vector<1x1x128xf32>
    tpu.vector_store %arg7[%c0_13, %c0_14, %c0_15], %13 {strides = array<i32>} : memref<1x1x128xf32, #tpu.memory_space<vmem>>, vector<1x1x128xf32>,
    %c0_16 = arith.constant 0 : index
    %c0_17 = arith.constant 0 : index
    %15 = vector.load %arg5[%c0_16, %c0_17] : memref<256x128xf32, #tpu.memory_space<vmem>>, vector<256x128xf32>
    tpu.vector_store %arg5[%c0_16, %c0_17], %4 {strides = array<i32>} : memref<256x128xf32, #tpu.memory_space<vmem>>, vector<256x128xf32>,
    %cst_18 = arith.constant dense<0.000000e+00> : vector<128xf32>
    %16 = vector.multi_reduction <add>, %4, %cst_18 [0] : vector<256x128xf32> to vector<128xf32>
    %17 = vector.shape_cast %16 : vector<128xf32> to vector<1x128xf32>
    %18 = vector.shape_cast %17 : vector<1x128xf32> to vector<1x1x128xf32>
    %c0_19 = arith.constant 0 : index
    %c0_20 = arith.constant 0 : index
    %c0_21 = arith.constant 0 : index
    %19 = vector.load %arg8[%c0_19, %c0_20, %c0_21] : memref<1x1x128xf32, #tpu.memory_space<vmem>>, vector<1x1x128xf32>
    tpu.vector_store %arg8[%c0_19, %c0_20, %c0_21], %18 {strides = array<i32>} : memref<1x1x128xf32, #tpu.memory_space<vmem>>, vector<1x1x128xf32>,
    %20 = arith.mulf %4, %4 : vector<256x128xf32>
    %cst_22 = arith.constant dense<0.000000e+00> : vector<128xf32>
    %21 = vector.multi_reduction <add>, %20, %cst_22 [0] : vector<256x128xf32> to vector<128xf32>
    %22 = vector.shape_cast %21 : vector<128xf32> to vector<1x128xf32>
    %23 = vector.shape_cast %22 : vector<1x128xf32> to vector<1x1x128xf32>
    %c0_23 = arith.constant 0 : index
    %c0_24 = arith.constant 0 : index
    %c0_25 = arith.constant 0 : index
    %24 = vector.load %arg9[%c0_23, %c0_24, %c0_25] : memref<1x1x128xf32, #tpu.memory_space<vmem>>, vector<1x1x128xf32>
    tpu.vector_store %arg9[%c0_23, %c0_24, %c0_25], %23 {strides = array<i32>} : memref<1x1x128xf32, #tpu.memory_space<vmem>>, vector<1x1x128xf32>,
    return
  }
  func.func @transform_0(%arg0: i32) -> (i32, i32) {
    %c0_i32 = arith.constant 0 : i32
    %c0_i32_0 = arith.constant 0 : i32
    return %arg0, %c0_i32 : i32, i32
  }
  func.func @transform_1(%arg0: i32) -> (i32, i32) {
    %c0_i32 = arith.constant 0 : i32
    %c0_i32_0 = arith.constant 0 : i32
    %c0_i32_1 = arith.constant 0 : i32
    return %c0_i32, %c0_i32_0 : i32, i32
  }
  func.func @transform_2(%arg0: i32) -> (i32, i32) {
    %c0_i32 = arith.constant 0 : i32
    %c0_i32_0 = arith.constant 0 : i32
    %c0_i32_1 = arith.constant 0 : i32
    return %c0_i32, %c0_i32_0 : i32, i32
  }
  func.func @transform_3(%arg0: i32) -> (i32, i32) {
    %c0_i32 = arith.constant 0 : i32
    %c0_i32_0 = arith.constant 0 : i32
    return %arg0, %c0_i32 : i32, i32
  }
  func.func @transform_4(%arg0: i32) -> (i32, i32) {
    %c0_i32 = arith.constant 0 : i32
    %c0_i32_0 = arith.constant 0 : i32
    return %arg0, %c0_i32 : i32, i32
  }
  func.func @transform_5(%arg0: i32) -> (i32, i32, i32) {
    %c0_i32 = arith.constant 0 : i32
    %c0_i32_0 = arith.constant 0 : i32
    %c0_i32_1 = arith.constant 0 : i32
    return %arg0, %c0_i32, %c0_i32_0 : i32, i32, i32
  }
  func.func @transform_6(%arg0: i32) -> (i32, i32, i32) {
    %c0_i32 = arith.constant 0 : i32
    %c0_i32_0 = arith.constant 0 : i32
    %c0_i32_1 = arith.constant 0 : i32
    return %arg0, %c0_i32, %c0_i32_0 : i32, i32, i32
  }
  func.func @transform_7(%arg0: i32) -> (i32, i32, i32) {
    %c0_i32 = arith.constant 0 : i32
    %c0_i32_0 = arith.constant 0 : i32
    %c0_i32_1 = arith.constant 0 : i32
    return %arg0, %c0_i32, %c0_i32_0 : i32, i32, i32
  }
  func.func @transform_8(%arg0: i32) -> (i32, i32, i32) {
    %c0_i32 = arith.constant 0 : i32
    %c0_i32_0 = arith.constant 0 : i32
    %c0_i32_1 = arith.constant 0 : i32
    return %arg0, %c0_i32, %c0_i32_0 : i32, i32, i32
  }
}

module attributes {stable_mosaic.version = 11 : i64} {
  func.func @kernel(%arg0: i32, %arg1: memref<256x128xf32, #tpu.memory_space<vmem>>, %arg2: memref<1x128xf32, #tpu.memory_space<vmem>>, %arg3: memref<1x128xf32, #tpu.memory_space<vmem>>, %arg4: memref<128x128xbf16, #tpu.memory_space<vmem>>, %arg5: memref<256x128xf32, #tpu.memory_space<vmem>>, %arg6: memref<1x1x128xf32, #tpu.memory_space<vmem>>, %arg7: memref<1x1x128xf32, #tpu.memory_space<vmem>>) attributes {dimension_semantics = [#tpu.dimension_semantics<parallel>], iteration_bounds = array<i64: 2>, scalar_prefetch = 0 : i64, scratch_operands = 0 : i64, tpu.core_type = #tpu.core_type<tc>, window_params = [{transform_indices = @transform_0, window_bounds = array<i64: 256, 128>}, {pipeline_mode = #tpu.pipeline_mode<synchronous>, transform_indices = @transform_1, window_bounds = array<i64: 1, 128>}, {pipeline_mode = #tpu.pipeline_mode<synchronous>, transform_indices = @transform_2, window_bounds = array<i64: 1, 128>}, {pipeline_mode = #tpu.pipeline_mode<synchronous>, transform_indices = @transform_3, window_bounds = array<i64: 128, 128>}, {transform_indices = @transform_4, window_bounds = array<i64: 256, 128>}, {transform_indices = @transform_5, window_bounds = array<i64: 1, 1, 128>}, {transform_indices = @transform_6, window_bounds = array<i64: 1, 1, 128>}]} {
    %c0 = arith.constant 0 : index
    %c0_0 = arith.constant 0 : index
    %0 = vector.load %arg1[%c0, %c0_0] : memref<256x128xf32, #tpu.memory_space<vmem>>, vector<256x128xf32>
    %c0_1 = arith.constant 0 : index
    %c0_2 = arith.constant 0 : index
    %1 = vector.load %arg2[%c0_1, %c0_2] : memref<1x128xf32, #tpu.memory_space<vmem>>, vector<1x128xf32>
    %2 = vector.broadcast %1 : vector<1x128xf32> to vector<256x128xf32>
    %3 = arith.mulf %0, %2 : vector<256x128xf32>
    %c0_3 = arith.constant 0 : index
    %c0_4 = arith.constant 0 : index
    %4 = vector.load %arg3[%c0_3, %c0_4] : memref<1x128xf32, #tpu.memory_space<vmem>>, vector<1x128xf32>
    %5 = vector.broadcast %4 : vector<1x128xf32> to vector<256x128xf32>
    %6 = arith.addf %3, %5 : vector<256x128xf32>
    %cst = arith.constant 0.000000e+00 : f32
    %7 = vector.broadcast %cst : f32 to vector<256x128xf32>
    %8 = arith.maximumf %6, %7 : vector<256x128xf32>
    %9 = arith.truncf %8 : vector<256x128xf32> to vector<256x128xbf16>
    %c0_5 = arith.constant 0 : index
    %c0_6 = arith.constant 0 : index
    %10 = vector.load %arg4[%c0_5, %c0_6] : memref<128x128xbf16, #tpu.memory_space<vmem>>, vector<128x128xbf16>
    %cst_7 = arith.constant dense<0.000000e+00> : vector<256x128xf32>
    %11 = tpu.matmul %9, %10, %cst_7 {dimension_numbers = #tpu.dot_dimension_numbers<[1], [0], [0], [1], [0, 0, 1, 1], [], []>} : vector<256x128xbf16>, vector<128x128xbf16>, vector<256x128xf32> -> vector<256x128xf32>
    %c0_8 = arith.constant 0 : index
    %c0_9 = arith.constant 0 : index
    %12 = vector.load %arg5[%c0_8, %c0_9] : memref<256x128xf32, #tpu.memory_space<vmem>>, vector<256x128xf32>
    tpu.vector_store %arg5[%c0_8, %c0_9], %11 {strides = array<i32>} : memref<256x128xf32, #tpu.memory_space<vmem>>, vector<256x128xf32>,
    %cst_10 = arith.constant dense<0.000000e+00> : vector<128xf32>
    %13 = vector.multi_reduction <add>, %11, %cst_10 [0] : vector<256x128xf32> to vector<128xf32>
    %14 = vector.shape_cast %13 : vector<128xf32> to vector<1x128xf32>
    %15 = vector.shape_cast %14 : vector<1x128xf32> to vector<1x1x128xf32>
    %c0_11 = arith.constant 0 : index
    %c0_12 = arith.constant 0 : index
    %c0_13 = arith.constant 0 : index
    %16 = vector.load %arg6[%c0_11, %c0_12, %c0_13] : memref<1x1x128xf32, #tpu.memory_space<vmem>>, vector<1x1x128xf32>
    tpu.vector_store %arg6[%c0_11, %c0_12, %c0_13], %15 {strides = array<i32>} : memref<1x1x128xf32, #tpu.memory_space<vmem>>, vector<1x1x128xf32>,
    %17 = arith.mulf %11, %11 : vector<256x128xf32>
    %cst_14 = arith.constant dense<0.000000e+00> : vector<128xf32>
    %18 = vector.multi_reduction <add>, %17, %cst_14 [0] : vector<256x128xf32> to vector<128xf32>
    %19 = vector.shape_cast %18 : vector<128xf32> to vector<1x128xf32>
    %20 = vector.shape_cast %19 : vector<1x128xf32> to vector<1x1x128xf32>
    %c0_15 = arith.constant 0 : index
    %c0_16 = arith.constant 0 : index
    %c0_17 = arith.constant 0 : index
    %21 = vector.load %arg7[%c0_15, %c0_16, %c0_17] : memref<1x1x128xf32, #tpu.memory_space<vmem>>, vector<1x1x128xf32>
    tpu.vector_store %arg7[%c0_15, %c0_16, %c0_17], %20 {strides = array<i32>} : memref<1x1x128xf32, #tpu.memory_space<vmem>>, vector<1x1x128xf32>,
    return
  }
  func.func @transform_0(%arg0: i32) -> (i32, i32) {
    %c0_i32 = arith.constant 0 : i32
    %c0_i32_0 = arith.constant 0 : i32
    return %arg0, %c0_i32 : i32, i32
  }
  func.func @transform_1(%arg0: i32) -> (i32, i32) {
    %c0_i32 = arith.constant 0 : i32
    %c0_i32_0 = arith.constant 0 : i32
    %c0_i32_1 = arith.constant 0 : i32
    return %c0_i32, %c0_i32_0 : i32, i32
  }
  func.func @transform_2(%arg0: i32) -> (i32, i32) {
    %c0_i32 = arith.constant 0 : i32
    %c0_i32_0 = arith.constant 0 : i32
    %c0_i32_1 = arith.constant 0 : i32
    return %c0_i32, %c0_i32_0 : i32, i32
  }
  func.func @transform_3(%arg0: i32) -> (i32, i32) {
    %c0_i32 = arith.constant 0 : i32
    %c0_i32_0 = arith.constant 0 : i32
    %c0_i32_1 = arith.constant 0 : i32
    return %c0_i32, %c0_i32_0 : i32, i32
  }
  func.func @transform_4(%arg0: i32) -> (i32, i32) {
    %c0_i32 = arith.constant 0 : i32
    %c0_i32_0 = arith.constant 0 : i32
    return %arg0, %c0_i32 : i32, i32
  }
  func.func @transform_5(%arg0: i32) -> (i32, i32, i32) {
    %c0_i32 = arith.constant 0 : i32
    %c0_i32_0 = arith.constant 0 : i32
    %c0_i32_1 = arith.constant 0 : i32
    return %arg0, %c0_i32, %c0_i32_0 : i32, i32, i32
  }
  func.func @transform_6(%arg0: i32) -> (i32, i32, i32) {
    %c0_i32 = arith.constant 0 : i32
    %c0_i32_0 = arith.constant 0 : i32
    %c0_i32_1 = arith.constant 0 : i32
    return %arg0, %c0_i32, %c0_i32_0 : i32, i32, i32
  }
}

module attributes {stable_mosaic.version = 11 : i64} {
  func.func @kernel(%arg0: i32, %arg1: memref<1x16x16x128xf32, #tpu.memory_space<vmem>>, %arg2: memref<1x128xf32, #tpu.memory_space<vmem>>, %arg3: memref<1x128xf32, #tpu.memory_space<vmem>>, %arg4: memref<1152x128xbf16, #tpu.memory_space<vmem>>, %arg5: memref<1x16x16x128xf32, #tpu.memory_space<vmem>>, %arg6: memref<1x1x128xf32, #tpu.memory_space<vmem>>, %arg7: memref<1x1x128xf32, #tpu.memory_space<vmem>>, %arg8: memref<18x18x128xbf16, #tpu.memory_space<vmem>>, %arg9: memref<256x1152xbf16, #tpu.memory_space<vmem>>) attributes {dimension_semantics = [#tpu.dimension_semantics<parallel>], iteration_bounds = array<i64: 2>, scalar_prefetch = 0 : i64, scratch_operands = 2 : i64, tpu.core_type = #tpu.core_type<tc>, window_params = [{transform_indices = @transform_0, window_bounds = array<i64: 1, 16, 16, 128>}, {pipeline_mode = #tpu.pipeline_mode<synchronous>, transform_indices = @transform_1, window_bounds = array<i64: 1, 128>}, {pipeline_mode = #tpu.pipeline_mode<synchronous>, transform_indices = @transform_2, window_bounds = array<i64: 1, 128>}, {pipeline_mode = #tpu.pipeline_mode<synchronous>, transform_indices = @transform_3, window_bounds = array<i64: 1152, 128>}, {transform_indices = @transform_4, window_bounds = array<i64: 1, 16, 16, 128>}, {transform_indices = @transform_5, window_bounds = array<i64: 1, 1, 128>}, {transform_indices = @transform_6, window_bounds = array<i64: 1, 1, 128>}]} {
    %cst = arith.constant 0.000000e+00 : bf16
    %0 = vector.broadcast %cst : bf16 to vector<1x18x128xbf16>
    %cst_0 = arith.constant 0.000000e+00 : bf16
    %1 = vector.broadcast %cst_0 : bf16 to vector<18x1x128xbf16>
    %c0 = arith.constant 0 : index
    %c0_1 = arith.constant 0 : index
    %c0_2 = arith.constant 0 : index
    %2 = vector.load %arg8[%c0, %c0_1, %c0_2] : memref<18x18x128xbf16, #tpu.memory_space<vmem>>, vector<1x18x128xbf16>
    tpu.vector_store %arg8[%c0, %c0_1, %c0_2], %0 {strides = array<i32>} : memref<18x18x128xbf16, #tpu.memory_space<vmem>>, vector<1x18x128xbf16>,
    %c17 = arith.constant 17 : index
    %c0_3 = arith.constant 0 : index
    %c0_4 = arith.constant 0 : index
    %3 = vector.load %arg8[%c17, %c0_3, %c0_4] : memref<18x18x128xbf16, #tpu.memory_space<vmem>>, vector<1x18x128xbf16>
    tpu.vector_store %arg8[%c17, %c0_3, %c0_4], %0 {strides = array<i32>} : memref<18x18x128xbf16, #tpu.memory_space<vmem>>, vector<1x18x128xbf16>,
    %c0_5 = arith.constant 0 : index
    %c0_6 = arith.constant 0 : index
    %c0_7 = arith.constant 0 : index
    %4 = vector.load %arg8[%c0_5, %c0_6, %c0_7] : memref<18x18x128xbf16, #tpu.memory_space<vmem>>, vector<18x1x128xbf16>
    tpu.vector_store %arg8[%c0_5, %c0_6, %c0_7], %1 {strides = array<i32>} : memref<18x18x128xbf16, #tpu.memory_space<vmem>>, vector<18x1x128xbf16>,
    %c0_8 = arith.constant 0 : index
    %c17_9 = arith.constant 17 : index
    %c0_10 = arith.constant 0 : index
    %5 = vector.load %arg8[%c0_8, %c17_9, %c0_10] : memref<18x18x128xbf16, #tpu.memory_space<vmem>>, vector<18x1x128xbf16>
    tpu.vector_store %arg8[%c0_8, %c17_9, %c0_10], %1 {strides = array<i32>} : memref<18x18x128xbf16, #tpu.memory_space<vmem>>, vector<18x1x128xbf16>,
    %c0_11 = arith.constant 0 : index
    %c0_12 = arith.constant 0 : index
    %6 = vector.load %arg2[%c0_11, %c0_12] : memref<1x128xf32, #tpu.memory_space<vmem>>, vector<1x128xf32>
    %7 = vector.shape_cast %6 : vector<1x128xf32> to vector<1x1x128xf32>
    %c0_13 = arith.constant 0 : index
    %c0_14 = arith.constant 0 : index
    %8 = vector.load %arg3[%c0_13, %c0_14] : memref<1x128xf32, #tpu.memory_space<vmem>>, vector<1x128xf32>
    %9 = vector.shape_cast %8 : vector<1x128xf32> to vector<1x1x128xf32>
    %c0_15 = arith.constant 0 : index
    %c0_16 = arith.constant 0 : index
    %c0_17 = arith.constant 0 : index
    %c0_18 = arith.constant 0 : index
    %10 = vector.load %arg1[%c0_15, %c0_16, %c0_17, %c0_18] : memref<1x16x16x128xf32, #tpu.memory_space<vmem>>, vector<1x16x16x128xf32>
    %11 = vector.shape_cast %10 : vector<1x16x16x128xf32> to vector<16x16x128xf32>
    %12 = vector.broadcast %7 : vector<1x1x128xf32> to vector<16x16x128xf32>
    %13 = arith.mulf %11, %12 : vector<16x16x128xf32>
    %14 = vector.broadcast %9 : vector<1x1x128xf32> to vector<16x16x128xf32>
    %15 = arith.addf %13, %14 : vector<16x16x128xf32>
    %cst_19 = arith.constant 0.000000e+00 : f32
    %16 = vector.broadcast %cst_19 : f32 to vector<16x16x128xf32>
    %17 = arith.maximumf %15, %16 : vector<16x16x128xf32>
    %18 = arith.truncf %17 : vector<16x16x128xf32> to vector<16x16x128xbf16>
    %c1 = arith.constant 1 : index
    %c1_20 = arith.constant 1 : index
    %c0_21 = arith.constant 0 : index
    %19 = vector.load %arg8[%c1, %c1_20, %c0_21] : memref<18x18x128xbf16, #tpu.memory_space<vmem>>, vector<16x16x128xbf16>
    tpu.vector_store %arg8[%c1, %c1_20, %c0_21], %18 {strides = array<i32>} : memref<18x18x128xbf16, #tpu.memory_space<vmem>>, vector<16x16x128xbf16>,
    %c0_22 = arith.constant 0 : index
    %c0_23 = arith.constant 0 : index
    %c0_24 = arith.constant 0 : index
    %20 = vector.load %arg8[%c0_22, %c0_23, %c0_24] : memref<18x18x128xbf16, #tpu.memory_space<vmem>>, vector<16x16x128xbf16>
    %21 = vector.shape_cast %20 : vector<16x16x128xbf16> to vector<256x128xbf16>
    %c0_25 = arith.constant 0 : index
    %c0_26 = arith.constant 0 : index
    %22 = vector.load %arg9[%c0_25, %c0_26] : memref<256x1152xbf16, #tpu.memory_space<vmem>>, vector<256x128xbf16>
    tpu.vector_store %arg9[%c0_25, %c0_26], %21 {strides = array<i32>} : memref<256x1152xbf16, #tpu.memory_space<vmem>>, vector<256x128xbf16>,
    %c0_27 = arith.constant 0 : index
    %c1_28 = arith.constant 1 : index
    %c0_29 = arith.constant 0 : index
    %23 = vector.load %arg8[%c0_27, %c1_28, %c0_29] : memref<18x18x128xbf16, #tpu.memory_space<vmem>>, vector<16x16x128xbf16>
    %24 = vector.shape_cast %23 : vector<16x16x128xbf16> to vector<256x128xbf16>
    %c0_30 = arith.constant 0 : index
    %c128 = arith.constant 128 : index
    %25 = vector.load %arg9[%c0_30, %c128] : memref<256x1152xbf16, #tpu.memory_space<vmem>>, vector<256x128xbf16>
    tpu.vector_store %arg9[%c0_30, %c128], %24 {strides = array<i32>} : memref<256x1152xbf16, #tpu.memory_space<vmem>>, vector<256x128xbf16>,
    %c0_31 = arith.constant 0 : index
    %c2 = arith.constant 2 : index
    %c0_32 = arith.constant 0 : index
    %26 = vector.load %arg8[%c0_31, %c2, %c0_32] : memref<18x18x128xbf16, #tpu.memory_space<vmem>>, vector<16x16x128xbf16>
    %27 = vector.shape_cast %26 : vector<16x16x128xbf16> to vector<256x128xbf16>
    %c0_33 = arith.constant 0 : index
    %c256 = arith.constant 256 : index
    %28 = vector.load %arg9[%c0_33, %c256] : memref<256x1152xbf16, #tpu.memory_space<vmem>>, vector<256x128xbf16>
    tpu.vector_store %arg9[%c0_33, %c256], %27 {strides = array<i32>} : memref<256x1152xbf16, #tpu.memory_space<vmem>>, vector<256x128xbf16>,
    %c1_34 = arith.constant 1 : index
    %c0_35 = arith.constant 0 : index
    %c0_36 = arith.constant 0 : index
    %29 = vector.load %arg8[%c1_34, %c0_35, %c0_36] : memref<18x18x128xbf16, #tpu.memory_space<vmem>>, vector<16x16x128xbf16>
    %30 = vector.shape_cast %29 : vector<16x16x128xbf16> to vector<256x128xbf16>
    %c0_37 = arith.constant 0 : index
    %c384 = arith.constant 384 : index
    %31 = vector.load %arg9[%c0_37, %c384] : memref<256x1152xbf16, #tpu.memory_space<vmem>>, vector<256x128xbf16>
    tpu.vector_store %arg9[%c0_37, %c384], %30 {strides = array<i32>} : memref<256x1152xbf16, #tpu.memory_space<vmem>>, vector<256x128xbf16>,
    %c1_38 = arith.constant 1 : index
    %c1_39 = arith.constant 1 : index
    %c0_40 = arith.constant 0 : index
    %32 = vector.load %arg8[%c1_38, %c1_39, %c0_40] : memref<18x18x128xbf16, #tpu.memory_space<vmem>>, vector<16x16x128xbf16>
    %33 = vector.shape_cast %32 : vector<16x16x128xbf16> to vector<256x128xbf16>
    %c0_41 = arith.constant 0 : index
    %c512 = arith.constant 512 : index
    %34 = vector.load %arg9[%c0_41, %c512] : memref<256x1152xbf16, #tpu.memory_space<vmem>>, vector<256x128xbf16>
    tpu.vector_store %arg9[%c0_41, %c512], %33 {strides = array<i32>} : memref<256x1152xbf16, #tpu.memory_space<vmem>>, vector<256x128xbf16>,
    %c1_42 = arith.constant 1 : index
    %c2_43 = arith.constant 2 : index
    %c0_44 = arith.constant 0 : index
    %35 = vector.load %arg8[%c1_42, %c2_43, %c0_44] : memref<18x18x128xbf16, #tpu.memory_space<vmem>>, vector<16x16x128xbf16>
    %36 = vector.shape_cast %35 : vector<16x16x128xbf16> to vector<256x128xbf16>
    %c0_45 = arith.constant 0 : index
    %c640 = arith.constant 640 : index
    %37 = vector.load %arg9[%c0_45, %c640] : memref<256x1152xbf16, #tpu.memory_space<vmem>>, vector<256x128xbf16>
    tpu.vector_store %arg9[%c0_45, %c640], %36 {strides = array<i32>} : memref<256x1152xbf16, #tpu.memory_space<vmem>>, vector<256x128xbf16>,
    %c2_46 = arith.constant 2 : index
    %c0_47 = arith.constant 0 : index
    %c0_48 = arith.constant 0 : index
    %38 = vector.load %arg8[%c2_46, %c0_47, %c0_48] : memref<18x18x128xbf16, #tpu.memory_space<vmem>>, vector<16x16x128xbf16>
    %39 = vector.shape_cast %38 : vector<16x16x128xbf16> to vector<256x128xbf16>
    %c0_49 = arith.constant 0 : index
    %c768 = arith.constant 768 : index
    %40 = vector.load %arg9[%c0_49, %c768] : memref<256x1152xbf16, #tpu.memory_space<vmem>>, vector<256x128xbf16>
    tpu.vector_store %arg9[%c0_49, %c768], %39 {strides = array<i32>} : memref<256x1152xbf16, #tpu.memory_space<vmem>>, vector<256x128xbf16>,
    %c2_50 = arith.constant 2 : index
    %c1_51 = arith.constant 1 : index
    %c0_52 = arith.constant 0 : index
    %41 = vector.load %arg8[%c2_50, %c1_51, %c0_52] : memref<18x18x128xbf16, #tpu.memory_space<vmem>>, vector<16x16x128xbf16>
    %42 = vector.shape_cast %41 : vector<16x16x128xbf16> to vector<256x128xbf16>
    %c0_53 = arith.constant 0 : index
    %c896 = arith.constant 896 : index
    %43 = vector.load %arg9[%c0_53, %c896] : memref<256x1152xbf16, #tpu.memory_space<vmem>>, vector<256x128xbf16>
    tpu.vector_store %arg9[%c0_53, %c896], %42 {strides = array<i32>} : memref<256x1152xbf16, #tpu.memory_space<vmem>>, vector<256x128xbf16>,
    %c2_54 = arith.constant 2 : index
    %c2_55 = arith.constant 2 : index
    %c0_56 = arith.constant 0 : index
    %44 = vector.load %arg8[%c2_54, %c2_55, %c0_56] : memref<18x18x128xbf16, #tpu.memory_space<vmem>>, vector<16x16x128xbf16>
    %45 = vector.shape_cast %44 : vector<16x16x128xbf16> to vector<256x128xbf16>
    %c0_57 = arith.constant 0 : index
    %c1024 = arith.constant 1024 : index
    %46 = vector.load %arg9[%c0_57, %c1024] : memref<256x1152xbf16, #tpu.memory_space<vmem>>, vector<256x128xbf16>
    tpu.vector_store %arg9[%c0_57, %c1024], %45 {strides = array<i32>} : memref<256x1152xbf16, #tpu.memory_space<vmem>>, vector<256x128xbf16>,
    %c0_58 = arith.constant 0 : index
    %c0_59 = arith.constant 0 : index
    %47 = vector.load %arg9[%c0_58, %c0_59] : memref<256x1152xbf16, #tpu.memory_space<vmem>>, vector<256x1152xbf16>
    %c0_60 = arith.constant 0 : index
    %c0_61 = arith.constant 0 : index
    %48 = vector.load %arg4[%c0_60, %c0_61] : memref<1152x128xbf16, #tpu.memory_space<vmem>>, vector<1152x128xbf16>
    %cst_62 = arith.constant dense<0.000000e+00> : vector<256x128xf32>
    %49 = tpu.matmul %47, %48, %cst_62 {dimension_numbers = #tpu.dot_dimension_numbers<[1], [0], [0], [1], [0, 0, 1, 1], [], []>} : vector<256x1152xbf16>, vector<1152x128xbf16>, vector<256x128xf32> -> vector<256x128xf32>
    %50 = vector.shape_cast %49 : vector<256x128xf32> to vector<16x16x128xf32>
    %c0_63 = arith.constant 0 : index
    %c0_64 = arith.constant 0 : index
    %c0_65 = arith.constant 0 : index
    %c0_66 = arith.constant 0 : index
    %51 = vector.load %arg5[%c0_63, %c0_64, %c0_65, %c0_66] : memref<1x16x16x128xf32, #tpu.memory_space<vmem>>, vector<1x16x16x128xf32>
    %52 = vector.shape_cast %51 : vector<1x16x16x128xf32> to vector<16x16x128xf32>
    %53 = vector.shape_cast %50 : vector<16x16x128xf32> to vector<1x16x16x128xf32>
    tpu.vector_store %arg5[%c0_63, %c0_64, %c0_65, %c0_66], %53 {strides = array<i32>} : memref<1x16x16x128xf32, #tpu.memory_space<vmem>>, vector<1x16x16x128xf32>,
    %cst_67 = arith.constant dense<0.000000e+00> : vector<128xf32>
    %54 = vector.multi_reduction <add>, %49, %cst_67 [0] : vector<256x128xf32> to vector<128xf32>
    %55 = vector.shape_cast %54 : vector<128xf32> to vector<1x128xf32>
    %56 = vector.shape_cast %55 : vector<1x128xf32> to vector<1x1x128xf32>
    %c0_68 = arith.constant 0 : index
    %c0_69 = arith.constant 0 : index
    %c0_70 = arith.constant 0 : index
    %57 = vector.load %arg6[%c0_68, %c0_69, %c0_70] : memref<1x1x128xf32, #tpu.memory_space<vmem>>, vector<1x1x128xf32>
    tpu.vector_store %arg6[%c0_68, %c0_69, %c0_70], %56 {strides = array<i32>} : memref<1x1x128xf32, #tpu.memory_space<vmem>>, vector<1x1x128xf32>,
    %58 = arith.mulf %49, %49 : vector<256x128xf32>
    %cst_71 = arith.constant dense<0.000000e+00> : vector<128xf32>
    %59 = vector.multi_reduction <add>, %58, %cst_71 [0] : vector<256x128xf32> to vector<128xf32>
    %60 = vector.shape_cast %59 : vector<128xf32> to vector<1x128xf32>
    %61 = vector.shape_cast %60 : vector<1x128xf32> to vector<1x1x128xf32>
    %c0_72 = arith.constant 0 : index
    %c0_73 = arith.constant 0 : index
    %c0_74 = arith.constant 0 : index
    %62 = vector.load %arg7[%c0_72, %c0_73, %c0_74] : memref<1x1x128xf32, #tpu.memory_space<vmem>>, vector<1x1x128xf32>
    tpu.vector_store %arg7[%c0_72, %c0_73, %c0_74], %61 {strides = array<i32>} : memref<1x1x128xf32, #tpu.memory_space<vmem>>, vector<1x1x128xf32>,
    return
  }
  func.func @transform_0(%arg0: i32) -> (i32, i32, i32, i32) {
    %c0_i32 = arith.constant 0 : i32
    %c0_i32_0 = arith.constant 0 : i32
    %c0_i32_1 = arith.constant 0 : i32
    %c0_i32_2 = arith.constant 0 : i32
    return %arg0, %c0_i32, %c0_i32_0, %c0_i32_1 : i32, i32, i32, i32
  }
  func.func @transform_1(%arg0: i32) -> (i32, i32) {
    %c0_i32 = arith.constant 0 : i32
    %c0_i32_0 = arith.constant 0 : i32
    %c0_i32_1 = arith.constant 0 : i32
    return %c0_i32, %c0_i32_0 : i32, i32
  }
  func.func @transform_2(%arg0: i32) -> (i32, i32) {
    %c0_i32 = arith.constant 0 : i32
    %c0_i32_0 = arith.constant 0 : i32
    %c0_i32_1 = arith.constant 0 : i32
    return %c0_i32, %c0_i32_0 : i32, i32
  }
  func.func @transform_3(%arg0: i32) -> (i32, i32) {
    %c0_i32 = arith.constant 0 : i32
    %c0_i32_0 = arith.constant 0 : i32
    %c0_i32_1 = arith.constant 0 : i32
    return %c0_i32, %c0_i32_0 : i32, i32
  }
  func.func @transform_4(%arg0: i32) -> (i32, i32, i32, i32) {
    %c0_i32 = arith.constant 0 : i32
    %c0_i32_0 = arith.constant 0 : i32
    %c0_i32_1 = arith.constant 0 : i32
    %c0_i32_2 = arith.constant 0 : i32
    return %arg0, %c0_i32, %c0_i32_0, %c0_i32_1 : i32, i32, i32, i32
  }
  func.func @transform_5(%arg0: i32) -> (i32, i32, i32) {
    %c0_i32 = arith.constant 0 : i32
    %c0_i32_0 = arith.constant 0 : i32
    %c0_i32_1 = arith.constant 0 : i32
    return %arg0, %c0_i32, %c0_i32_0 : i32, i32, i32
  }
  func.func @transform_6(%arg0: i32) -> (i32, i32, i32) {
    %c0_i32 = arith.constant 0 : i32
    %c0_i32_0 = arith.constant 0 : i32
    %c0_i32_1 = arith.constant 0 : i32
    return %arg0, %c0_i32, %c0_i32_0 : i32, i32, i32
  }
}

module attributes {stable_mosaic.version = 11 : i64} {
  func.func @kernel(%arg0: i32, %arg1: memref<256x128xf32, #tpu.memory_space<vmem>>, %arg2: memref<1x128xf32, #tpu.memory_space<vmem>>, %arg3: memref<1x128xf32, #tpu.memory_space<vmem>>, %arg4: memref<256x128xf32, #tpu.memory_space<vmem>>, %arg5: memref<1x128xf32, #tpu.memory_space<vmem>>, %arg6: memref<1x128xf32, #tpu.memory_space<vmem>>, %arg7: memref<256x128xf32, #tpu.memory_space<vmem>>) attributes {dimension_semantics = [#tpu.dimension_semantics<parallel>], iteration_bounds = array<i64: 2>, scalar_prefetch = 0 : i64, scratch_operands = 0 : i64, tpu.core_type = #tpu.core_type<tc>, window_params = [{transform_indices = @transform_0, window_bounds = array<i64: 256, 128>}, {pipeline_mode = #tpu.pipeline_mode<synchronous>, transform_indices = @transform_1, window_bounds = array<i64: 1, 128>}, {pipeline_mode = #tpu.pipeline_mode<synchronous>, transform_indices = @transform_2, window_bounds = array<i64: 1, 128>}, {transform_indices = @transform_3, window_bounds = array<i64: 256, 128>}, {pipeline_mode = #tpu.pipeline_mode<synchronous>, transform_indices = @transform_4, window_bounds = array<i64: 1, 128>}, {pipeline_mode = #tpu.pipeline_mode<synchronous>, transform_indices = @transform_5, window_bounds = array<i64: 1, 128>}, {transform_indices = @transform_6, window_bounds = array<i64: 256, 128>}]} {
    %c0 = arith.constant 0 : index
    %c0_0 = arith.constant 0 : index
    %0 = vector.load %arg1[%c0, %c0_0] : memref<256x128xf32, #tpu.memory_space<vmem>>, vector<256x128xf32>
    %c0_1 = arith.constant 0 : index
    %c0_2 = arith.constant 0 : index
    %1 = vector.load %arg2[%c0_1, %c0_2] : memref<1x128xf32, #tpu.memory_space<vmem>>, vector<1x128xf32>
    %2 = vector.broadcast %1 : vector<1x128xf32> to vector<256x128xf32>
    %3 = arith.mulf %0, %2 : vector<256x128xf32>
    %c0_3 = arith.constant 0 : index
    %c0_4 = arith.constant 0 : index
    %4 = vector.load %arg3[%c0_3, %c0_4] : memref<1x128xf32, #tpu.memory_space<vmem>>, vector<1x128xf32>
    %5 = vector.broadcast %4 : vector<1x128xf32> to vector<256x128xf32>
    %6 = arith.addf %3, %5 : vector<256x128xf32>
    %c0_5 = arith.constant 0 : index
    %c0_6 = arith.constant 0 : index
    %7 = vector.load %arg4[%c0_5, %c0_6] : memref<256x128xf32, #tpu.memory_space<vmem>>, vector<256x128xf32>
    %c0_7 = arith.constant 0 : index
    %c0_8 = arith.constant 0 : index
    %8 = vector.load %arg5[%c0_7, %c0_8] : memref<1x128xf32, #tpu.memory_space<vmem>>, vector<1x128xf32>
    %9 = vector.broadcast %8 : vector<1x128xf32> to vector<256x128xf32>
    %10 = arith.mulf %7, %9 : vector<256x128xf32>
    %c0_9 = arith.constant 0 : index
    %c0_10 = arith.constant 0 : index
    %11 = vector.load %arg6[%c0_9, %c0_10] : memref<1x128xf32, #tpu.memory_space<vmem>>, vector<1x128xf32>
    %12 = vector.broadcast %11 : vector<1x128xf32> to vector<256x128xf32>
    %13 = arith.addf %10, %12 : vector<256x128xf32>
    %14 = arith.addf %6, %13 : vector<256x128xf32>
    %cst = arith.constant 0.000000e+00 : f32
    %15 = vector.broadcast %cst : f32 to vector<256x128xf32>
    %16 = arith.maximumf %14, %15 : vector<256x128xf32>
    %c0_11 = arith.constant 0 : index
    %c0_12 = arith.constant 0 : index
    %17 = vector.load %arg7[%c0_11, %c0_12] : memref<256x128xf32, #tpu.memory_space<vmem>>, vector<256x128xf32>
    tpu.vector_store %arg7[%c0_11, %c0_12], %16 {strides = array<i32>} : memref<256x128xf32, #tpu.memory_space<vmem>>, vector<256x128xf32>,
    return
  }
  func.func @transform_0(%arg0: i32) -> (i32, i32) {
    %c0_i32 = arith.constant 0 : i32
    %c0_i32_0 = arith.constant 0 : i32
    return %arg0, %c0_i32 : i32, i32
  }
  func.func @transform_1(%arg0: i32) -> (i32, i32) {
    %c0_i32 = arith.constant 0 : i32
    %c0_i32_0 = arith.constant 0 : i32
    %c0_i32_1 = arith.constant 0 : i32
    return %c0_i32, %c0_i32_0 : i32, i32
  }
  func.func @transform_2(%arg0: i32) -> (i32, i32) {
    %c0_i32 = arith.constant 0 : i32
    %c0_i32_0 = arith.constant 0 : i32
    %c0_i32_1 = arith.constant 0 : i32
    return %c0_i32, %c0_i32_0 : i32, i32
  }
  func.func @transform_3(%arg0: i32) -> (i32, i32) {
    %c0_i32 = arith.constant 0 : i32
    %c0_i32_0 = arith.constant 0 : i32
    return %arg0, %c0_i32 : i32, i32
  }
  func.func @transform_4(%arg0: i32) -> (i32, i32) {
    %c0_i32 = arith.constant 0 : i32
    %c0_i32_0 = arith.constant 0 : i32
    %c0_i32_1 = arith.constant 0 : i32
    return %c0_i32, %c0_i32_0 : i32, i32
  }
  func.func @transform_5(%arg0: i32) -> (i32, i32) {
    %c0_i32 = arith.constant 0 : i32
    %c0_i32_0 = arith.constant 0 : i32
    %c0_i32_1 = arith.constant 0 : i32
    return %c0_i32, %c0_i32_0 : i32, i32
  }
  func.func @transform_6(%arg0: i32) -> (i32, i32) {
    %c0_i32 = arith.constant 0 : i32
    %c0_i32_0 = arith.constant 0 : i32
    return %arg0, %c0_i32 : i32, i32
  }
}

</mosaic_0001>

<llo_original>
// kernel: bottleneck_forward.7
$region0: #{bottleneck_forward.7}
  #allocation0 [shape = 'u32[]', space=smem, size = 0x4, offset = 0x4, fixed_abs, tag = 'smem constant byte address 0x4 - core index']
  #allocation1 [shape = 'u32[144,128]{1,0:T(1,128)}', space=vmem, size = 0x12000, scoped, tag = 'internal scratch']
  %s0 = inlined_call_operand.vmem [shape: f32[512,128], index: 0, kind: input, shape index: {}]
  %s1 = inlined_call_operand.vmem [shape: f32[1,128], index: 1, kind: input, shape index: {}]
  %s2 = inlined_call_operand.vmem [shape: f32[1,128], index: 2, kind: input, shape index: {}]
  %s3 = inlined_call_operand.vmem [shape: f32[512,128], index: 3, kind: input, shape index: {}]
  %s4 = inlined_call_operand.vmem [shape: f32[1,128], index: 4, kind: input, shape index: {}]
  %s5 = inlined_call_operand.vmem [shape: f32[1,128], index: 5, kind: input, shape index: {}]
  %s6 = inlined_call_operand.vmem [shape: f32[512,128], index: 6, kind: output, shape index: {}]
  %s7 = sld [smem:[#allocation0]]
  $region57: #{bottleneck_forward.7} parent=0
    _
  %s9 = ssub.s32 1, %s7
  %s10 = scalar_select 0, %s9, %s7
  loop: start=0, step=1, limit=4
  $region2: #{bottleneck_forward.7} parent=0 // loop_pre_header
    _
  $region3: #{bottleneck_forward.7} parent=0 // loop_header
    %s12 = sphi 0, %s16
    %p13 = scmp.ge.s32.totalorder %s12, 4
    %s22 = sphi 0, %s24
    %s25 = sphi 0, %s22
    %s26 = sphi 0, %s25
    %s42 = sphi 0, %s26
    %s46 = sphi 0, %s46
    %s48 = sphi 0, %s46
    %s49 = sphi 0, %s48
    %s63 = sphi 0, %s49
    %s67 = sphi 0, %s67
    %s69 = sphi 0, %s67
    %s70 = sphi 0, %s69
    %s84 = sphi 0, %s70
    %s90 = sphi 0, %s92
    %s93 = sphi 0, %s90
    %s94 = sphi 0, %s93
    %s110 = sphi 0, %s94
    %s114 = sphi 0, %s114
    %s116 = sphi 0, %s114
    %s117 = sphi 0, %s116
    %s131 = sphi 0, %s117
    %s135 = sphi 0, %s135
    %s137 = sphi 0, %s135
    %s138 = sphi 0, %s137
    %s152 = sphi 0, %s138
    %s158 = sphi 0, %s160
    %s161 = sphi 0, %s158
    %s162 = sphi 0, %s161
    %s178 = sphi 0, %s162
  $region4: #{bottleneck_forward.7} parent=0 // loop_header_branch
    %15 = sbr.rel (%p13) target = $region8
  $region5: #{bottleneck_forward.7} parent=0 // loop_body
    %s17 = ssub.s32 %s12, 1
    %s18 = ssub.s32 %s12, 2
    %s19 = sadd.s32 %s12, 1
    %s20 = ssub.s32 %s12, %s19
    %p21 = scmp.eq.s32.totalorder %s20, 0
    %s23 = sadd.s32 %s22, 1
    %s24 = scalar_select %p21, %s22, %s23
    %p27 = pneg %p21
    %p28 = scmp.eq.s32.totalorder %s12, 1
    %p29 = por %p27, %p28
    %p30 = scmp.ne.s32.totalorder %s22, %s25
    %p31 = scmp.eq.s32.totalorder %s12, 0
    %p32 = por %p30, %p31
    %p33 = scmp.ne.s32.totalorder %s22, %s25
    %p34 = scmp.eq.s32.totalorder %s17, 1
    %p35 = por %p33, %p34
    %p36 = scmp.ne.s32.totalorder %s25, %s26
    %p37 = scmp.eq.s32.totalorder %s17, 0
    %p38 = por %p36, %p37
    %p39 = scmp.ne.s32.totalorder %s25, %s26
    %p40 = scmp.eq.s32.totalorder %s18, 1
    %p41 = por %p39, %p40
    %p43 = scmp.ne.s32.totalorder %s26, %s42
    %p44 = scmp.eq.s32.totalorder %s18, 0
    %p45 = por %p43, %p44
    %s47 = sadd.s32 %s46, 1
    %p50 = scmp.eq.s32.totalorder %s12, 1
    %p51 = scmp.ne.s32.totalorder %s46, %s48
    %p52 = scmp.eq.s32.totalorder %s12, 0
    %p53 = por %p51, %p52
    %p54 = scmp.ne.s32.totalorder %s46, %s48
    %p55 = scmp.eq.s32.totalorder %s17, 1
    %p56 = por %p54, %p55
    %p57 = scmp.ne.s32.totalorder %s48, %s49
    %p58 = scmp.eq.s32.totalorder %s17, 0
    %p59 = por %p57, %p58
    %p60 = scmp.ne.s32.totalorder %s48, %s49
    %p61 = scmp.eq.s32.totalorder %s18, 1
    %p62 = por %p60, %p61
    %p64 = scmp.ne.s32.totalorder %s49, %s63
    %p65 = scmp.eq.s32.totalorder %s18, 0
    %p66 = por %p64, %p65
    %s68 = sadd.s32 %s67, 1
    %p71 = scmp.eq.s32.totalorder %s12, 1
    %p72 = scmp.ne.s32.totalorder %s67, %s69
    %p73 = scmp.eq.s32.totalorder %s12, 0
    %p74 = por %p72, %p73
    %p75 = scmp.ne.s32.totalorder %s67, %s69
    %p76 = scmp.eq.s32.totalorder %s17, 1
    %p77 = por %p75, %p76
    %p78 = scmp.ne.s32.totalorder %s69, %s70
    %p79 = scmp.eq.s32.totalorder %s17, 0
    %p80 = por %p78, %p79
    %p81 = scmp.ne.s32.totalorder %s69, %s70
    %p82 = scmp.eq.s32.totalorder %s18, 1
    %p83 = por %p81, %p82
    %p85 = scmp.ne.s32.totalorder %s70, %s84
    %p86 = scmp.eq.s32.totalorder %s18, 0
    %p87 = por %p85, %p86
    %s88 = ssub.s32 %s12, %s19
    %p89 = scmp.eq.s32.totalorder %s88, 0
    %s91 = sadd.s32 %s90, 1
    %s92 = scalar_select %p89, %s90, %s91
    %p95 = pneg %p89
    %p96 = scmp.eq.s32.totalorder %s12, 1
    %p97 = por %p95, %p96
    %p98 = scmp.ne.s32.totalorder %s90, %s93
    %p99 = scmp.eq.s32.totalorder %s12, 0
    %p100 = por %p98, %p99
    %p101 = scmp.ne.s32.totalorder %s90, %s93
    %p102 = scmp.eq.s32.totalorder %s17, 1
    %p103 = por %p101, %p102
    %p104 = scmp.ne.s32.totalorder %s93, %s94
    %p105 = scmp.eq.s32.totalorder %s17, 0
    %p106 = por %p104, %p105
    %p107 = scmp.ne.s32.totalorder %s93, %s94
    %p108 = scmp.eq.s32.totalorder %s18, 1
    %p109 = por %p107, %p108
    %p111 = scmp.ne.s32.totalorder %s94, %s110
    %p112 = scmp.eq.s32.totalorder %s18, 0
    %p113 = por %p111, %p112
    %s115 = sadd.s32 %s114, 1
    %p118 = scmp.eq.s32.totalorder %s12, 1
    %p119 = scmp.ne.s32.totalorder %s114, %s116
    %p120 = scmp.eq.s32.totalorder %s12, 0
    %p121 = por %p119, %p120
    %p122 = scmp.ne.s32.totalorder %s114, %s116
    %p123 = scmp.eq.s32.totalorder %s17, 1
    %p124 = por %p122, %p123
    %p125 = scmp.ne.s32.totalorder %s116, %s117
    %p126 = scmp.eq.s32.totalorder %s17, 0
    %p127 = por %p125, %p126
    %p128 = scmp.ne.s32.totalorder %s116, %s117
    %p129 = scmp.eq.s32.totalorder %s18, 1
    %p130 = por %p128, %p129
    %p132 = scmp.ne.s32.totalorder %s117, %s131
    %p133 = scmp.eq.s32.totalorder %s18, 0
    %p134 = por %p132, %p133
    %s136 = sadd.s32 %s135, 1
    %p139 = scmp.eq.s32.totalorder %s12, 1
    %p140 = scmp.ne.s32.totalorder %s135, %s137
    %p141 = scmp.eq.s32.totalorder %s12, 0
    %p142 = por %p140, %p141
    %p143 = scmp.ne.s32.totalorder %s135, %s137
    %p144 = scmp.eq.s32.totalorder %s17, 1
    %p145 = por %p143, %p144
    %p146 = scmp.ne.s32.totalorder %s137, %s138
    %p147 = scmp.eq.s32.totalorder %s17, 0
    %p148 = por %p146, %p147
    %p149 = scmp.ne.s32.totalorder %s137, %s138
    %p150 = scmp.eq.s32.totalorder %s18, 1
    %p151 = por %p149, %p150
    %p153 = scmp.ne.s32.totalorder %s138, %s152
    %p154 = scmp.eq.s32.totalorder %s18, 0
    %p155 = por %p153, %p154
    %s156 = ssub.s32 %s12, %s19
    %p157 = scmp.eq.s32.totalorder %s156, 0
    %s159 = sadd.s32 %s158, 1
    %s160 = scalar_select %p157, %s158, %s159
    %p163 = pneg %p157
    %p164 = scmp.eq.s32.totalorder %s12, 1
    %p165 = por %p163, %p164
    %p166 = scmp.ne.s32.totalorder %s158, %s161
    %p167 = scmp.eq.s32.totalorder %s12, 0
    %p168 = por %p166, %p167
    %p169 = scmp.ne.s32.totalorder %s158, %s161
    %p170 = scmp.eq.s32.totalorder %s17, 1
    %p171 = por %p169, %p170
    %p172 = scmp.ne.s32.totalorder %s161, %s162
    %p173 = scmp.eq.s32.totalorder %s17, 0
    %p174 = por %p172, %p173
    %p175 = scmp.ne.s32.totalorder %s161, %s162
    %p176 = scmp.eq.s32.totalorder %s18, 1
    %p177 = por %p175, %p176
    %p179 = scmp.ne.s32.totalorder %s162, %s178
    %p180 = scmp.eq.s32.totalorder %s18, 0
    %p181 = por %p179, %p180
    %p182 = scmp.le.s32.totalorder 1, %s12
    %p183 = scmp.lt.s32.totalorder %s12, 3
    %p184 = pnand %p182, %p183
    %p185 = pneg %p184
    // Predicated region
    $region9: #{bottleneck_forward.7} parent=5 // pred_check
      _
    $region10: #{bottleneck_forward.7} parent=5 // pred_check_branch
      %187 = sbr.rel (%p184) target = $region12
    $region11: #{bottleneck_forward.7} parent=5 // pred_region
      %s188 = ssub.s32 %s12, 1
      // Predicated region
      $region13: #{bottleneck_forward.7} parent=11 // pred_check
        %p189 = pneg %p59
      $region14: #{bottleneck_forward.7} parent=11 // pred_check_branch
        %191 = sbr.rel (%p189) target = $region16
      $region15: #{bottleneck_forward.7} parent=11 // pred_region
        _
      $region16: #{bottleneck_forward.7} parent=11 // pred_fallthru
        _
      // Predicated region
      $region17: #{bottleneck_forward.7} parent=11 // pred_check
        %p192 = pneg %p80
      $region18: #{bottleneck_forward.7} parent=11 // pred_check_branch
        %194 = sbr.rel (%p192) target = $region20
      $region19: #{bottleneck_forward.7} parent=11 // pred_region
        _
      $region20: #{bottleneck_forward.7} parent=11 // pred_fallthru
        _
      // Predicated region
      $region21: #{bottleneck_forward.7} parent=11 // pred_check
        %p195 = pneg %p127
      $region22: #{bottleneck_forward.7} parent=11 // pred_check_branch
        %197 = sbr.rel (%p195) target = $region24
      $region23: #{bottleneck_forward.7} parent=11 // pred_region
        _
      $region24: #{bottleneck_forward.7} parent=11 // pred_fallthru
        _
      // Predicated region
      $region25: #{bottleneck_forward.7} parent=11 // pred_check
        %p198 = pneg %p148
      $region26: #{bottleneck_forward.7} parent=11 // pred_check_branch
        %200 = sbr.rel (%p198) target = $region28
      $region27: #{bottleneck_forward.7} parent=11 // pred_region
        _
      $region28: #{bottleneck_forward.7} parent=11 // pred_fallthru
        _
    $region12: #{bottleneck_forward.7} parent=5 // pred_fallthru
      _
    %p201 = scmp.lt.s32.totalorder %s12, 2
    // Predicated region
    $region29: #{bottleneck_forward.7} parent=5 // pred_check
      %p202 = pneg %p201
    $region30: #{bottleneck_forward.7} parent=5 // pred_check_branch
      %204 = sbr.rel (%p202) target = $region32
    $region31: #{bottleneck_forward.7} parent=5 // pred_region
      // Predicated region
      $region33: #{bottleneck_forward.7} parent=31 // pred_check
        %p205 = pneg %p32
      $region34: #{bottleneck_forward.7} parent=31 // pred_check_branch
        %207 = sbr.rel (%p205) target = $region36
      $region35: #{bottleneck_forward.7} parent=31 // pred_region
        %s208 = smul.u32 32, %s12
        %p209 = scmp.lt.s32.totalorder %s208, 63
        %s210 = scalar_select %p209, %s208, 63
        %s211 = smul.addr %s210, 8
        %s212 = scalar_lea.vmem %s0, %s211
        %s213 = smul.u32 32, %s12
      $region36: #{bottleneck_forward.7} parent=31 // pred_fallthru
        _
      // Predicated region
      $region37: #{bottleneck_forward.7} parent=31 // pred_check
        %p214 = pneg %p100
      $region38: #{bottleneck_forward.7} parent=31 // pred_check_branch
        %216 = sbr.rel (%p214) target = $region40
      $region39: #{bottleneck_forward.7} parent=31 // pred_region
        %s217 = smul.u32 32, %s12
        %p218 = scmp.lt.s32.totalorder %s217, 63
        %s219 = scalar_select %p218, %s217, 63
        %s220 = smul.addr %s219, 8
        %s221 = scalar_lea.vmem %s3, %s220
        %s222 = smul.u32 32, %s12
      $region40: #{bottleneck_forward.7} parent=31 // pred_fallthru
        _
    $region32: #{bottleneck_forward.7} parent=5 // pred_fallthru
      _
    %p223 = scmp.le.s32.totalorder 1, %s12
    %p224 = scmp.lt.s32.totalorder %s12, 3
    %p225 = pnand %p223, %p224
    %p226 = pneg %p225
    // Predicated region
    $region41: #{bottleneck_forward.7} parent=5 // pred_check
      _
    $region42: #{bottleneck_forward.7} parent=5 // pred_check_branch
      %228 = sbr.rel (%p225) target = $region44
    $region43: #{bottleneck_forward.7} parent=5 // pred_region
      %s229 = ssub.s32 %s12, 1
      %s230 = smul.u32 32, %s17
      %p231 = scmp.lt.s32.totalorder %s230, 63
      %s232 = scalar_select %p231, %s230, 63
      %s233 = smul.addr %s232, 8
      %s234 = scalar_lea.vmem %s0, %s233
      %p235 = pneg %p38
      %p236 = pneg %p35
      %p237 = pneg %p59
      %p238 = pneg %p56
      %p239 = pneg %p80
      %p240 = pneg %p77
      %s241 = smul.u32 32, %s17
      %p242 = scmp.lt.s32.totalorder %s241, 63
      %s243 = scalar_select %p242, %s241, 63
      %s244 = smul.addr %s243, 8
      %s245 = scalar_lea.vmem %s3, %s244
      %p246 = pneg %p106
      %p247 = pneg %p103
      %p248 = pneg %p127
      %p249 = pneg %p124
      %p250 = pneg %p148
      %p251 = pneg %p145
      %p252 = pneg %p174
      %p253 = pneg %p171
      %s254 = smul.u32 32, %s17
      %p255 = scmp.lt.s32.totalorder %s254, 63
      %s256 = scalar_select %p255, %s254, 63
      %s257 = smul.addr %s256, 8
      %s258 = scalar_lea.vmem %s6, %s257
      %s259 = smul.u32 32, %s17
      %p260 = scmp.lt.s32.totalorder %s259, 63
      %s261 = scalar_select %p260, %s259, 63
      %s262 = smul.addr %s261, 8
      %s263 = scalar_lea.vmem %s0, %s262
      %s264 = smul.u32 32, %s17
      %s265 = smul.u32 32, %s17
      %p266 = scmp.lt.s32.totalorder %s265, 63
      %s267 = scalar_select %p266, %s265, 63
      %s268 = smul.addr %s267, 8
      %s269 = scalar_lea.vmem %s3, %s268
      %s270 = smul.u32 32, %s17
      %s271 = smul.u32 32, %s17
      %p272 = scmp.lt.s32.totalorder %s271, 63
      %s273 = scalar_select %p272, %s271, 63
      %s274 = smul.addr %s273, 8
      %s275 = scalar_lea.vmem %s6, %s274
      %s276 = smul.u32 32, %s17
      %v277 = vld [vmem:[%s263] sm:$0xff]
      %v278 = vld [vmem:[%s263 + $0x8] sm:$0xff]
      %v279 = vld [vmem:[%s263 + $0x10] sm:$0xff]
      %v280 = vld [vmem:[%s263 + $0x18] sm:$0xff]
      %v281 = vld [vmem:[%s263 + $0x20] sm:$0xff]
      %v282 = vld [vmem:[%s263 + $0x28] sm:$0xff]
      %v283 = vld [vmem:[%s263 + $0x30] sm:$0xff]
      %v284 = vld [vmem:[%s263 + $0x38] sm:$0xff]
      %v285 = vld [vmem:[%s263 + $0x40] sm:$0xff]
      %v286 = vld [vmem:[%s263 + $0x48] sm:$0xff]
      %v287 = vld [vmem:[%s263 + $0x50] sm:$0xff]
      %v288 = vld [vmem:[%s263 + $0x58] sm:$0xff]
      %v289 = vld [vmem:[%s263 + $0x60] sm:$0xff]
      %v290 = vld [vmem:[%s263 + $0x68] sm:$0xff]
      %v291 = vld [vmem:[%s263 + $0x70] sm:$0xff]
      %v292 = vld [vmem:[%s263 + $0x78] sm:$0xff]
      %v293 = vld [vmem:[%s263 + $0x80] sm:$0xff]
      %v294 = vld [vmem:[%s263 + $0x88] sm:$0xff]
      %v295 = vld [vmem:[%s263 + $0x90] sm:$0xff]
      %v296 = vld [vmem:[%s263 + $0x98] sm:$0xff]
      %v297 = vld [vmem:[%s263 + $0xa0] sm:$0xff]
      %v298 = vld [vmem:[%s263 + $0xa8] sm:$0xff]
      %v299 = vld [vmem:[%s263 + $0xb0] sm:$0xff]
      %v300 = vld [vmem:[%s263 + $0xb8] sm:$0xff]
      %v301 = vld [vmem:[%s263 + $0xc0] sm:$0xff]
      %v302 = vld [vmem:[%s263 + $0xc8] sm:$0xff]
      %v303 = vld [vmem:[%s263 + $0xd0] sm:$0xff]
      %v304 = vld [vmem:[%s263 + $0xd8] sm:$0xff]
      %v305 = vld [vmem:[%s263 + $0xe0] sm:$0xff]
      %v306 = vld [vmem:[%s263 + $0xe8] sm:$0xff]
      %v307 = vld [vmem:[%s263 + $0xf0] sm:$0xff]
      %v308 = vld [vmem:[%s263 + $0xf8] sm:$0xff]
      %v309 = vld [vmem:[%s1] sm:$0x1]
      %v311 = vlaneseq
      %v312 = vshrl.u32 %v311, 7
      %v313 = vsub.s32 0, %v312
      %v314 = vrot.slane %v309, %v313
      %v316 = vmul.f32 %v277, %v314
      %v317 = vmul.f32 %v278, %v314
      %v318 = vmul.f32 %v279, %v314
      %v319 = vmul.f32 %v280, %v314
      %v320 = vmul.f32 %v281, %v314
      %v321 = vmul.f32 %v282, %v314
      %v322 = vmul.f32 %v283, %v314
      %v323 = vmul.f32 %v284, %v314
      %v324 = vmul.f32 %v285, %v314
      %v325 = vmul.f32 %v286, %v314
      %v326 = vmul.f32 %v287, %v314
      %v327 = vmul.f32 %v288, %v314
      %v328 = vmul.f32 %v289, %v314
      %v329 = vmul.f32 %v290, %v314
      %v330 = vmul.f32 %v291, %v314
      %v331 = vmul.f32 %v292, %v314
      %v332 = vmul.f32 %v293, %v314
      %v333 = vmul.f32 %v294, %v314
      %v334 = vmul.f32 %v295, %v314
      %v335 = vmul.f32 %v296, %v314
      %v336 = vmul.f32 %v297, %v314
      %v337 = vmul.f32 %v298, %v314
      %v338 = vmul.f32 %v299, %v314
      %v339 = vmul.f32 %v300, %v314
      %v340 = vmul.f32 %v301, %v314
      %v341 = vmul.f32 %v302, %v314
      %v342 = vmul.f32 %v303, %v314
      %v343 = vmul.f32 %v304, %v314
      %v344 = vmul.f32 %v305, %v314
      %v345 = vmul.f32 %v306, %v314
      %v346 = vmul.f32 %v307, %v314
      %v347 = vmul.f32 %v308, %v314
      %v348 = vld [vmem:[%s2] sm:$0x1]
      %v350 = vlaneseq
      %v351 = vshrl.u32 %v350, 7
      %v352 = vsub.s32 0, %v351
      %v353 = vrot.slane %v348, %v352
      %v355 = vadd.f32 %v316, %v353
      %v356 = vadd.f32 %v317, %v353
      %v357 = vadd.f32 %v318, %v353
      %v358 = vadd.f32 %v319, %v353
      %v359 = vadd.f32 %v320, %v353
      %v360 = vadd.f32 %v321, %v353
      %v361 = vadd.f32 %v322, %v353
      %v362 = vadd.f32 %v323, %v353
      %v363 = vadd.f32 %v324, %v353
      %v364 = vadd.f32 %v325, %v353
      %v365 = vadd.f32 %v326, %v353
      %v366 = vadd.f32 %v327, %v353
      %v367 = vadd.f32 %v328, %v353
      %v368 = vadd.f32 %v329, %v353
      %v369 = vadd.f32 %v330, %v353
      %v370 = vadd.f32 %v331, %v353
      %v371 = vadd.f32 %v332, %v353
      %v372 = vadd.f32 %v333, %v353
      %v373 = vadd.f32 %v334, %v353
      %v374 = vadd.f32 %v335, %v353
      %v375 = vadd.f32 %v336, %v353
      %v376 = vadd.f32 %v337, %v353
      %v377 = vadd.f32 %v338, %v353
      %v378 = vadd.f32 %v339, %v353
      %v379 = vadd.f32 %v340, %v353
      %v380 = vadd.f32 %v341, %v353
      %v381 = vadd.f32 %v342, %v353
      %v382 = vadd.f32 %v343, %v353
      %v383 = vadd.f32 %v344, %v353
      %v384 = vadd.f32 %v345, %v353
      %v385 = vadd.f32 %v346, %v353
      %v386 = vadd.f32 %v347, %v353
      %v387 = vld [vmem:[%s269] sm:$0xff]
      %v388 = vld [vmem:[%s269 + $0x8] sm:$0xff]
      %v389 = vld [vmem:[%s269 + $0x10] sm:$0xff]
      %v390 = vld [vmem:[%s269 + $0x18] sm:$0xff]
      %v391 = vld [vmem:[%s269 + $0x20] sm:$0xff]
      %v392 = vld [vmem:[%s269 + $0x28] sm:$0xff]
      %v393 = vld [vmem:[%s269 + $0x30] sm:$0xff]
      %v394 = vld [vmem:[%s269 + $0x38] sm:$0xff]
      %v395 = vld [vmem:[%s269 + $0x40] sm:$0xff]
      %v396 = vld [vmem:[%s269 + $0x48] sm:$0xff]
      %v397 = vld [vmem:[%s269 + $0x50] sm:$0xff]
      %v398 = vld [vmem:[%s269 + $0x58] sm:$0xff]
      %v399 = vld [vmem:[%s269 + $0x60] sm:$0xff]
      %v400 = vld [vmem:[%s269 + $0x68] sm:$0xff]
      %v401 = vld [vmem:[%s269 + $0x70] sm:$0xff]
      %v402 = vld [vmem:[%s269 + $0x78] sm:$0xff]
      %v403 = vld [vmem:[%s269 + $0x80] sm:$0xff]
      %v404 = vld [vmem:[%s269 + $0x88] sm:$0xff]
      %v405 = vld [vmem:[%s269 + $0x90] sm:$0xff]
      %v406 = vld [vmem:[%s269 + $0x98] sm:$0xff]
      %v407 = vld [vmem:[%s269 + $0xa0] sm:$0xff]
      %v408 = vld [vmem:[%s269 + $0xa8] sm:$0xff]
      %v409 = vld [vmem:[%s269 + $0xb0] sm:$0xff]
      %v410 = vld [vmem:[%s269 + $0xb8] sm:$0xff]
      %v411 = vld [vmem:[%s269 + $0xc0] sm:$0xff]
      %v412 = vld [vmem:[%s269 + $0xc8] sm:$0xff]
      %v413 = vld [vmem:[%s269 + $0xd0] sm:$0xff]
      %v414 = vld [vmem:[%s269 + $0xd8] sm:$0xff]
      %v415 = vld [vmem:[%s269 + $0xe0] sm:$0xff]
      %v416 = vld [vmem:[%s269 + $0xe8] sm:$0xff]
      %v417 = vld [vmem:[%s269 + $0xf0] sm:$0xff]
      %v418 = vld [vmem:[%s269 + $0xf8] sm:$0xff]
      %v419 = vld [vmem:[%s4] sm:$0x1]
      %v421 = vlaneseq
      %v422 = vshrl.u32 %v421, 7
      %v423 = vsub.s32 0, %v422
      %v424 = vrot.slane %v419, %v423
      %v426 = vmul.f32 %v387, %v424
      %v427 = vmul.f32 %v388, %v424
      %v428 = vmul.f32 %v389, %v424
      %v429 = vmul.f32 %v390, %v424
      %v430 = vmul.f32 %v391, %v424
      %v431 = vmul.f32 %v392, %v424
      %v432 = vmul.f32 %v393, %v424
      %v433 = vmul.f32 %v394, %v424
      %v434 = vmul.f32 %v395, %v424
      %v435 = vmul.f32 %v396, %v424
      %v436 = vmul.f32 %v397, %v424
      %v437 = vmul.f32 %v398, %v424
      %v438 = vmul.f32 %v399, %v424
      %v439 = vmul.f32 %v400, %v424
      %v440 = vmul.f32 %v401, %v424
      %v441 = vmul.f32 %v402, %v424
      %v442 = vmul.f32 %v403, %v424
      %v443 = vmul.f32 %v404, %v424
      %v444 = vmul.f32 %v405, %v424
      %v445 = vmul.f32 %v406, %v424
      %v446 = vmul.f32 %v407, %v424
      %v447 = vmul.f32 %v408, %v424
      %v448 = vmul.f32 %v409, %v424
      %v449 = vmul.f32 %v410, %v424
      %v450 = vmul.f32 %v411, %v424
      %v451 = vmul.f32 %v412, %v424
      %v452 = vmul.f32 %v413, %v424
      %v453 = vmul.f32 %v414, %v424
      %v454 = vmul.f32 %v415, %v424
      %v455 = vmul.f32 %v416, %v424
      %v456 = vmul.f32 %v417, %v424
      %v457 = vmul.f32 %v418, %v424
      %v458 = vld [vmem:[%s5] sm:$0x1]
      %v460 = vlaneseq
      %v461 = vshrl.u32 %v460, 7
      %v462 = vsub.s32 0, %v461
      %v463 = vrot.slane %v458, %v462
      %v465 = vadd.f32 %v426, %v463
      %v466 = vadd.f32 %v427, %v463
      %v467 = vadd.f32 %v428, %v463
      %v468 = vadd.f32 %v429, %v463
      %v469 = vadd.f32 %v430, %v463
      %v470 = vadd.f32 %v431, %v463
      %v471 = vadd.f32 %v432, %v463
      %v472 = vadd.f32 %v433, %v463
      %v473 = vadd.f32 %v434, %v463
      %v474 = vadd.f32 %v435, %v463
      %v475 = vadd.f32 %v436, %v463
      %v476 = vadd.f32 %v437, %v463
      %v477 = vadd.f32 %v438, %v463
      %v478 = vadd.f32 %v439, %v463
      %v479 = vadd.f32 %v440, %v463
      %v480 = vadd.f32 %v441, %v463
      %v481 = vadd.f32 %v442, %v463
      %v482 = vadd.f32 %v443, %v463
      %v483 = vadd.f32 %v444, %v463
      %v484 = vadd.f32 %v445, %v463
      %v485 = vadd.f32 %v446, %v463
      %v486 = vadd.f32 %v447, %v463
      %v487 = vadd.f32 %v448, %v463
      %v488 = vadd.f32 %v449, %v463
      %v489 = vadd.f32 %v450, %v463
      %v490 = vadd.f32 %v451, %v463
      %v491 = vadd.f32 %v452, %v463
      %v492 = vadd.f32 %v453, %v463
      %v493 = vadd.f32 %v454, %v463
      %v494 = vadd.f32 %v455, %v463
      %v495 = vadd.f32 %v456, %v463
      %v496 = vadd.f32 %v457, %v463
      %v497 = vadd.f32 %v355, %v465
      %v498 = vadd.f32 %v356, %v466
      %v499 = vadd.f32 %v357, %v467
      %v500 = vadd.f32 %v358, %v468
      %v501 = vadd.f32 %v359, %v469
      %v502 = vadd.f32 %v360, %v470
      %v503 = vadd.f32 %v361, %v471
      %v504 = vadd.f32 %v362, %v472
      %v505 = vadd.f32 %v363, %v473
      %v506 = vadd.f32 %v364, %v474
      %v507 = vadd.f32 %v365, %v475
      %v508 = vadd.f32 %v366, %v476
      %v509 = vadd.f32 %v367, %v477
      %v510 = vadd.f32 %v368, %v478
      %v511 = vadd.f32 %v369, %v479
      %v512 = vadd.f32 %v370, %v480
      %v513 = vadd.f32 %v371, %v481
      %v514 = vadd.f32 %v372, %v482
      %v515 = vadd.f32 %v373, %v483
      %v516 = vadd.f32 %v374, %v484
      %v517 = vadd.f32 %v375, %v485
      %v518 = vadd.f32 %v376, %v486
      %v519 = vadd.f32 %v377, %v487
      %v520 = vadd.f32 %v378, %v488
      %v521 = vadd.f32 %v379, %v489
      %v522 = vadd.f32 %v380, %v490
      %v523 = vadd.f32 %v381, %v491
      %v524 = vadd.f32 %v382, %v492
      %v525 = vadd.f32 %v383, %v493
      %v526 = vadd.f32 %v384, %v494
      %v527 = vadd.f32 %v385, %v495
      %v528 = vadd.f32 %v386, %v496
      %v529 = vmax.f32 %v497, 0.0
      %v530 = vmax.f32 %v498, 0.0
      %v531 = vmax.f32 %v499, 0.0
      %v532 = vmax.f32 %v500, 0.0
      %v533 = vmax.f32 %v501, 0.0
      %v534 = vmax.f32 %v502, 0.0
      %v535 = vmax.f32 %v503, 0.0
      %v536 = vmax.f32 %v504, 0.0
      %v537 = vmax.f32 %v505, 0.0
      %v538 = vmax.f32 %v506, 0.0
      %v539 = vmax.f32 %v507, 0.0
      %v540 = vmax.f32 %v508, 0.0
      %v541 = vmax.f32 %v509, 0.0
      %v542 = vmax.f32 %v510, 0.0
      %v543 = vmax.f32 %v511, 0.0
      %v544 = vmax.f32 %v512, 0.0
      %v545 = vmax.f32 %v513, 0.0
      %v546 = vmax.f32 %v514, 0.0
      %v547 = vmax.f32 %v515, 0.0
      %v548 = vmax.f32 %v516, 0.0
      %v549 = vmax.f32 %v517, 0.0
      %v550 = vmax.f32 %v518, 0.0
      %v551 = vmax.f32 %v519, 0.0
      %v552 = vmax.f32 %v520, 0.0
      %v553 = vmax.f32 %v521, 0.0
      %v554 = vmax.f32 %v522, 0.0
      %v555 = vmax.f32 %v523, 0.0
      %v556 = vmax.f32 %v524, 0.0
      %v557 = vmax.f32 %v525, 0.0
      %v558 = vmax.f32 %v526, 0.0
      %v559 = vmax.f32 %v527, 0.0
      %v560 = vmax.f32 %v528, 0.0
      %561 = vst [vmem:[%s275] sm:$0xff] %v529
      %562 = vst [vmem:[%s275 + $0x8] sm:$0xff] %v530
      %563 = vst [vmem:[%s275 + $0x10] sm:$0xff] %v531
      %564 = vst [vmem:[%s275 + $0x18] sm:$0xff] %v532
      %565 = vst [vmem:[%s275 + $0x20] sm:$0xff] %v533
      %566 = vst [vmem:[%s275 + $0x28] sm:$0xff] %v534
      %567 = vst [vmem:[%s275 + $0x30] sm:$0xff] %v535
      %568 = vst [vmem:[%s275 + $0x38] sm:$0xff] %v536
      %569 = vst [vmem:[%s275 + $0x40] sm:$0xff] %v537
      %570 = vst [vmem:[%s275 + $0x48] sm:$0xff] %v538
      %571 = vst [vmem:[%s275 + $0x50] sm:$0xff] %v539
      %572 = vst [vmem:[%s275 + $0x58] sm:$0xff] %v540
      %573 = vst [vmem:[%s275 + $0x60] sm:$0xff] %v541
      %574 = vst [vmem:[%s275 + $0x68] sm:$0xff] %v542
      %575 = vst [vmem:[%s275 + $0x70] sm:$0xff] %v543
      %576 = vst [vmem:[%s275 + $0x78] sm:$0xff] %v544
      %577 = vst [vmem:[%s275 + $0x80] sm:$0xff] %v545
      %578 = vst [vmem:[%s275 + $0x88] sm:$0xff] %v546
      %579 = vst [vmem:[%s275 + $0x90] sm:$0xff] %v547
      %580 = vst [vmem:[%s275 + $0x98] sm:$0xff] %v548
      %581 = vst [vmem:[%s275 + $0xa0] sm:$0xff] %v549
      %582 = vst [vmem:[%s275 + $0xa8] sm:$0xff] %v550
      %583 = vst [vmem:[%s275 + $0xb0] sm:$0xff] %v551
      %584 = vst [vmem:[%s275 + $0xb8] sm:$0xff] %v552
      %585 = vst [vmem:[%s275 + $0xc0] sm:$0xff] %v553
      %586 = vst [vmem:[%s275 + $0xc8] sm:$0xff] %v554
      %587 = vst [vmem:[%s275 + $0xd0] sm:$0xff] %v555
      %588 = vst [vmem:[%s275 + $0xd8] sm:$0xff] %v556
      %589 = vst [vmem:[%s275 + $0xe0] sm:$0xff] %v557
      %590 = vst [vmem:[%s275 + $0xe8] sm:$0xff] %v558
      %591 = vst [vmem:[%s275 + $0xf0] sm:$0xff] %v559
      %592 = vst [vmem:[%s275 + $0xf8] sm:$0xff] %v560
      %s593 = smul.u32 32, %s17
      %p594 = scmp.lt.s32.totalorder %s593, 63
      %s595 = scalar_select %p594, %s593, 63
      %s596 = smul.addr %s595, 8
      %s597 = scalar_lea.vmem %s6, %s596
      // Predicated region
      $region45: #{bottleneck_forward.7} parent=43 // pred_check
        %p598 = pneg %p171
      $region46: #{bottleneck_forward.7} parent=43 // pred_check_branch
        %600 = sbr.rel (%p598) target = $region48
      $region47: #{bottleneck_forward.7} parent=43 // pred_region
        %s601 = smul.u32 32, %s17
      $region48: #{bottleneck_forward.7} parent=43 // pred_fallthru
        _
    $region44: #{bottleneck_forward.7} parent=5 // pred_fallthru
      _
    %p602 = scmp.le.s32.totalorder 2, %s12
    // Predicated region
    $region49: #{bottleneck_forward.7} parent=5 // pred_check
      %p603 = pneg %p602
    $region50: #{bottleneck_forward.7} parent=5 // pred_check_branch
      %605 = sbr.rel (%p603) target = $region52
    $region51: #{bottleneck_forward.7} parent=5 // pred_region
      %s606 = ssub.s32 %s12, 2
      // Predicated region
      $region53: #{bottleneck_forward.7} parent=51 // pred_check
        %p607 = pneg %p177
      $region54: #{bottleneck_forward.7} parent=51 // pred_check_branch
        %609 = sbr.rel (%p607) target = $region56
      $region55: #{bottleneck_forward.7} parent=51 // pred_region
        %s610 = smul.u32 32, %s18
        %p611 = scmp.lt.s32.totalorder %s610, 63
        %s612 = scalar_select %p611, %s610, 63
        %s613 = smul.addr %s612, 8
        %s614 = scalar_lea.vmem %s6, %s613
      $region56: #{bottleneck_forward.7} parent=51 // pred_fallthru
        _
    $region52: #{bottleneck_forward.7} parent=5 // pred_fallthru
      _
  $region6: #{bottleneck_forward.7} parent=0 // loop_footer
    %s16 = sadd.s32 1, %s12
  $region7: #{bottleneck_forward.7} parent=0 // loop_footer_branch
    %11 = sbr.rel target = $region3
  $region8: #{bottleneck_forward.7} parent=0 // loop_exit
    _

// kernel: bottleneck_forward.6
$region0: #{bottleneck_forward.6}
  #allocation0 [shape = 'u32[]', space=smem, size = 0x4, offset = 0x4, fixed_abs, tag = 'smem constant byte address 0x4 - core index']
  #allocation1 [shape = 'u32[144,128]{1,0:T(1,128)}', space=vmem, size = 0x12000, scoped, tag = 'internal scratch']
  %s0 = inlined_call_operand.vmem [shape: f32[512,128], index: 0, kind: input, shape index: {}]
  %s1 = inlined_call_operand.vmem [shape: f32[1,128], index: 1, kind: input, shape index: {}]
  %s2 = inlined_call_operand.vmem [shape: f32[1,128], index: 2, kind: input, shape index: {}]
  %s3 = inlined_call_operand.vmem [shape: bf16[128,128], index: 3, kind: input, shape index: {}]
  %s4 = inlined_call_operand.vmem [shape: f32[512,128], index: 4, kind: output, shape index: {0}]
  %s5 = inlined_call_operand.vmem [shape: f32[2,1,128], index: 5, kind: output, shape index: {1}]
  %s6 = inlined_call_operand.vmem [shape: f32[2,1,128], index: 6, kind: output, shape index: {2}]
  %7 = xla_tuple %s4, %s5, %s6
  %s8 = sld [smem:[#allocation0]]
  $region65: #{bottleneck_forward.6} parent=0
    _
  %s10 = ssub.s32 1, %s8
  %s11 = scalar_select 0, %s10, %s8
  loop: start=0, step=1, limit=4
  $region2: #{bottleneck_forward.6} parent=0 // loop_pre_header
    _
  $region3: #{bottleneck_forward.6} parent=0 // loop_header
    %s13 = sphi 0, %s17
    %p14 = scmp.ge.s32.totalorder %s13, 4
    %s23 = sphi 0, %s25
    %s26 = sphi 0, %s23
    %s27 = sphi 0, %s26
    %s43 = sphi 0, %s27
    %s47 = sphi 0, %s47
    %s49 = sphi 0, %s47
    %s50 = sphi 0, %s49
    %s64 = sphi 0, %s50
    %s68 = sphi 0, %s68
    %s70 = sphi 0, %s68
    %s71 = sphi 0, %s70
    %s85 = sphi 0, %s71
    %s89 = sphi 0, %s89
    %s91 = sphi 0, %s89
    %s92 = sphi 0, %s91
    %s106 = sphi 0, %s92
    %s112 = sphi 0, %s114
    %s115 = sphi 0, %s112
    %s116 = sphi 0, %s115
    %s132 = sphi 0, %s116
    %s138 = sphi 0, %s140
    %s141 = sphi 0, %s138
    %s142 = sphi 0, %s141
    %s158 = sphi 0, %s142
    %s164 = sphi 0, %s166
    %s167 = sphi 0, %s164
    %s168 = sphi 0, %s167
    %s184 = sphi 0, %s168
  $region4: #{bottleneck_forward.6} parent=0 // loop_header_branch
    %16 = sbr.rel (%p14) target = $region8
  $region5: #{bottleneck_forward.6} parent=0 // loop_body
    %s18 = ssub.s32 %s13, 1
    %s19 = ssub.s32 %s13, 2
    %s20 = sadd.s32 %s13, 1
    %s21 = ssub.s32 %s13, %s20
    %p22 = scmp.eq.s32.totalorder %s21, 0
    %s24 = sadd.s32 %s23, 1
    %s25 = scalar_select %p22, %s23, %s24
    %p28 = pneg %p22
    %p29 = scmp.eq.s32.totalorder %s13, 1
    %p30 = por %p28, %p29
    %p31 = scmp.ne.s32.totalorder %s23, %s26
    %p32 = scmp.eq.s32.totalorder %s13, 0
    %p33 = por %p31, %p32
    %p34 = scmp.ne.s32.totalorder %s23, %s26
    %p35 = scmp.eq.s32.totalorder %s18, 1
    %p36 = por %p34, %p35
    %p37 = scmp.ne.s32.totalorder %s26, %s27
    %p38 = scmp.eq.s32.totalorder %s18, 0
    %p39 = por %p37, %p38
    %p40 = scmp.ne.s32.totalorder %s26, %s27
    %p41 = scmp.eq.s32.totalorder %s19, 1
    %p42 = por %p40, %p41
    %p44 = scmp.ne.s32.totalorder %s27, %s43
    %p45 = scmp.eq.s32.totalorder %s19, 0
    %p46 = por %p44, %p45
    %s48 = sadd.s32 %s47, 1
    %p51 = scmp.eq.s32.totalorder %s13, 1
    %p52 = scmp.ne.s32.totalorder %s47, %s49
    %p53 = scmp.eq.s32.totalorder %s13, 0
    %p54 = por %p52, %p53
    %p55 = scmp.ne.s32.totalorder %s47, %s49
    %p56 = scmp.eq.s32.totalorder %s18, 1
    %p57 = por %p55, %p56
    %p58 = scmp.ne.s32.totalorder %s49, %s50
    %p59 = scmp.eq.s32.totalorder %s18, 0
    %p60 = por %p58, %p59
    %p61 = scmp.ne.s32.totalorder %s49, %s50
    %p62 = scmp.eq.s32.totalorder %s19, 1
    %p63 = por %p61, %p62
    %p65 = scmp.ne.s32.totalorder %s50, %s64
    %p66 = scmp.eq.s32.totalorder %s19, 0
    %p67 = por %p65, %p66
    %s69 = sadd.s32 %s68, 1
    %p72 = scmp.eq.s32.totalorder %s13, 1
    %p73 = scmp.ne.s32.totalorder %s68, %s70
    %p74 = scmp.eq.s32.totalorder %s13, 0
    %p75 = por %p73, %p74
    %p76 = scmp.ne.s32.totalorder %s68, %s70
    %p77 = scmp.eq.s32.totalorder %s18, 1
    %p78 = por %p76, %p77
    %p79 = scmp.ne.s32.totalorder %s70, %s71
    %p80 = scmp.eq.s32.totalorder %s18, 0
    %p81 = por %p79, %p80
    %p82 = scmp.ne.s32.totalorder %s70, %s71
    %p83 = scmp.eq.s32.totalorder %s19, 1
    %p84 = por %p82, %p83
    %p86 = scmp.ne.s32.totalorder %s71, %s85
    %p87 = scmp.eq.s32.totalorder %s19, 0
    %p88 = por %p86, %p87
    %s90 = sadd.s32 %s89, 1
    %p93 = scmp.eq.s32.totalorder %s13, 1
    %p94 = scmp.ne.s32.totalorder %s89, %s91
    %p95 = scmp.eq.s32.totalorder %s13, 0
    %p96 = por %p94, %p95
    %p97 = scmp.ne.s32.totalorder %s89, %s91
    %p98 = scmp.eq.s32.totalorder %s18, 1
    %p99 = por %p97, %p98
    %p100 = scmp.ne.s32.totalorder %s91, %s92
    %p101 = scmp.eq.s32.totalorder %s18, 0
    %p102 = por %p100, %p101
    %p103 = scmp.ne.s32.totalorder %s91, %s92
    %p104 = scmp.eq.s32.totalorder %s19, 1
    %p105 = por %p103, %p104
    %p107 = scmp.ne.s32.totalorder %s92, %s106
    %p108 = scmp.eq.s32.totalorder %s19, 0
    %p109 = por %p107, %p108
    %s110 = ssub.s32 %s13, %s20
    %p111 = scmp.eq.s32.totalorder %s110, 0
    %s113 = sadd.s32 %s112, 1
    %s114 = scalar_select %p111, %s112, %s113
    %p117 = pneg %p111
    %p118 = scmp.eq.s32.totalorder %s13, 1
    %p119 = por %p117, %p118
    %p120 = scmp.ne.s32.totalorder %s112, %s115
    %p121 = scmp.eq.s32.totalorder %s13, 0
    %p122 = por %p120, %p121
    %p123 = scmp.ne.s32.totalorder %s112, %s115
    %p124 = scmp.eq.s32.totalorder %s18, 1
    %p125 = por %p123, %p124
    %p126 = scmp.ne.s32.totalorder %s115, %s116
    %p127 = scmp.eq.s32.totalorder %s18, 0
    %p128 = por %p126, %p127
    %p129 = scmp.ne.s32.totalorder %s115, %s116
    %p130 = scmp.eq.s32.totalorder %s19, 1
    %p131 = por %p129, %p130
    %p133 = scmp.ne.s32.totalorder %s116, %s132
    %p134 = scmp.eq.s32.totalorder %s19, 0
    %p135 = por %p133, %p134
    %s136 = ssub.s32 %s13, %s20
    %p137 = scmp.eq.s32.totalorder %s136, 0
    %s139 = sadd.s32 %s138, 1
    %s140 = scalar_select %p137, %s138, %s139
    %p143 = pneg %p137
    %p144 = scmp.eq.s32.totalorder %s13, 1
    %p145 = por %p143, %p144
    %p146 = scmp.ne.s32.totalorder %s138, %s141
    %p147 = scmp.eq.s32.totalorder %s13, 0
    %p148 = por %p146, %p147
    %p149 = scmp.ne.s32.totalorder %s138, %s141
    %p150 = scmp.eq.s32.totalorder %s18, 1
    %p151 = por %p149, %p150
    %p152 = scmp.ne.s32.totalorder %s141, %s142
    %p153 = scmp.eq.s32.totalorder %s18, 0
    %p154 = por %p152, %p153
    %p155 = scmp.ne.s32.totalorder %s141, %s142
    %p156 = scmp.eq.s32.totalorder %s19, 1
    %p157 = por %p155, %p156
    %p159 = scmp.ne.s32.totalorder %s142, %s158
    %p160 = scmp.eq.s32.totalorder %s19, 0
    %p161 = por %p159, %p160
    %s162 = ssub.s32 %s13, %s20
    %p163 = scmp.eq.s32.totalorder %s162, 0
    %s165 = sadd.s32 %s164, 1
    %s166 = scalar_select %p163, %s164, %s165
    %p169 = pneg %p163
    %p170 = scmp.eq.s32.totalorder %s13, 1
    %p171 = por %p169, %p170
    %p172 = scmp.ne.s32.totalorder %s164, %s167
    %p173 = scmp.eq.s32.totalorder %s13, 0
    %p174 = por %p172, %p173
    %p175 = scmp.ne.s32.totalorder %s164, %s167
    %p176 = scmp.eq.s32.totalorder %s18, 1
    %p177 = por %p175, %p176
    %p178 = scmp.ne.s32.totalorder %s167, %s168
    %p179 = scmp.eq.s32.totalorder %s18, 0
    %p180 = por %p178, %p179
    %p181 = scmp.ne.s32.totalorder %s167, %s168
    %p182 = scmp.eq.s32.totalorder %s19, 1
    %p183 = por %p181, %p182
    %p185 = scmp.ne.s32.totalorder %s168, %s184
    %p186 = scmp.eq.s32.totalorder %s19, 0
    %p187 = por %p185, %p186
    %p188 = scmp.le.s32.totalorder 1, %s13
    %p189 = scmp.lt.s32.totalorder %s13, 3
    %p190 = pnand %p188, %p189
    %p191 = pneg %p190
    // Predicated region
    $region9: #{bottleneck_forward.6} parent=5 // pred_check
      _
    $region10: #{bottleneck_forward.6} parent=5 // pred_check_branch
      %193 = sbr.rel (%p190) target = $region12
    $region11: #{bottleneck_forward.6} parent=5 // pred_region
      %s194 = ssub.s32 %s13, 1
      // Predicated region
      $region13: #{bottleneck_forward.6} parent=11 // pred_check
        %p195 = pneg %p60
      $region14: #{bottleneck_forward.6} parent=11 // pred_check_branch
        %197 = sbr.rel (%p195) target = $region16
      $region15: #{bottleneck_forward.6} parent=11 // pred_region
        _
      $region16: #{bottleneck_forward.6} parent=11 // pred_fallthru
        _
      // Predicated region
      $region17: #{bottleneck_forward.6} parent=11 // pred_check
        %p198 = pneg %p81
      $region18: #{bottleneck_forward.6} parent=11 // pred_check_branch
        %200 = sbr.rel (%p198) target = $region20
      $region19: #{bottleneck_forward.6} parent=11 // pred_region
        _
      $region20: #{bottleneck_forward.6} parent=11 // pred_fallthru
        _
      // Predicated region
      $region21: #{bottleneck_forward.6} parent=11 // pred_check
        %p201 = pneg %p102
      $region22: #{bottleneck_forward.6} parent=11 // pred_check_branch
        %203 = sbr.rel (%p201) target = $region24
      $region23: #{bottleneck_forward.6} parent=11 // pred_region
        _
      $region24: #{bottleneck_forward.6} parent=11 // pred_fallthru
        _
    $region12: #{bottleneck_forward.6} parent=5 // pred_fallthru
      _
    %p204 = scmp.lt.s32.totalorder %s13, 2
    // Predicated region
    $region25: #{bottleneck_forward.6} parent=5 // pred_check
      %p205 = pneg %p204
    $region26: #{bottleneck_forward.6} parent=5 // pred_check_branch
      %207 = sbr.rel (%p205) target = $region28
    $region27: #{bottleneck_forward.6} parent=5 // pred_region
      // Predicated region
      $region29: #{bottleneck_forward.6} parent=27 // pred_check
        %p208 = pneg %p33
      $region30: #{bottleneck_forward.6} parent=27 // pred_check_branch
        %210 = sbr.rel (%p208) target = $region32
      $region31: #{bottleneck_forward.6} parent=27 // pred_region
        %s211 = smul.u32 32, %s13
        %p212 = scmp.lt.s32.totalorder %s211, 63
        %s213 = scalar_select %p212, %s211, 63
        %s214 = smul.addr %s213, 8
        %s215 = scalar_lea.vmem %s0, %s214
        %s216 = smul.u32 32, %s13
      $region32: #{bottleneck_forward.6} parent=27 // pred_fallthru
        _
    $region28: #{bottleneck_forward.6} parent=5 // pred_fallthru
      _
    %p217 = scmp.le.s32.totalorder 1, %s13
    %p218 = scmp.lt.s32.totalorder %s13, 3
    %p219 = pnand %p217, %p218
    %p220 = pneg %p219
    // Predicated region
    $region33: #{bottleneck_forward.6} parent=5 // pred_check
      _
    $region34: #{bottleneck_forward.6} parent=5 // pred_check_branch
      %222 = sbr.rel (%p219) target = $region36
    $region35: #{bottleneck_forward.6} parent=5 // pred_region
      %s223 = ssub.s32 %s13, 1
      %s224 = smul.u32 32, %s18
      %p225 = scmp.lt.s32.totalorder %s224, 63
      %s226 = scalar_select %p225, %s224, 63
      %s227 = smul.addr %s226, 8
      %s228 = scalar_lea.vmem %s0, %s227
      %p229 = pneg %p39
      %p230 = pneg %p36
      %p231 = pneg %p60
      %p232 = pneg %p57
      %p233 = pneg %p81
      %p234 = pneg %p78
      %p235 = pneg %p102
      %p236 = pneg %p99
      %p237 = pneg %p128
      %p238 = pneg %p125
      %s239 = smul.u32 32, %s18
      %p240 = scmp.lt.s32.totalorder %s239, 63
      %s241 = scalar_select %p240, %s239, 63
      %s242 = smul.addr %s241, 8
      %s243 = scalar_lea.vmem %s4, %s242
      %p244 = pneg %p154
      %p245 = pneg %p151
      %p246 = scmp.lt.s32.totalorder %s18, 1
      %s247 = scalar_select %p246, %s18, 1
      %s248 = scalar_lea.vmem %s5, %s247
      %p249 = pneg %p180
      %p250 = pneg %p177
      %p251 = scmp.lt.s32.totalorder %s18, 1
      %s252 = scalar_select %p251, %s18, 1
      %s253 = scalar_lea.vmem %s6, %s252
      %s254 = smul.u32 32, %s18
      %p255 = scmp.lt.s32.totalorder %s254, 63
      %s256 = scalar_select %p255, %s254, 63
      %s257 = smul.addr %s256, 8
      %s258 = scalar_lea.vmem %s0, %s257
      %s259 = smul.u32 32, %s18
      %s260 = smul.u32 32, %s18
      %p261 = scmp.lt.s32.totalorder %s260, 63
      %s262 = scalar_select %p261, %s260, 63
      %s263 = smul.addr %s262, 8
      %s264 = scalar_lea.vmem %s4, %s263
      %s265 = smul.u32 32, %s18
      %p266 = scmp.lt.s32.totalorder %s18, 1
      %s267 = scalar_select %p266, %s18, 1
      %s268 = scalar_lea.vmem %s5, %s267
      %p269 = scmp.lt.s32.totalorder %s18, 1
      %s270 = scalar_select %p269, %s18, 1
      %s271 = scalar_lea.vmem %s6, %s270
      %v273 = vld [vmem:[%s258] sm:$0xff]
      %v274 = vld [vmem:[%s258 + $0x8] sm:$0xff]
      %v275 = vld [vmem:[%s258 + $0x10] sm:$0xff]
      %v276 = vld [vmem:[%s258 + $0x18] sm:$0xff]
      %v277 = vld [vmem:[%s258 + $0x20] sm:$0xff]
      %v278 = vld [vmem:[%s258 + $0x28] sm:$0xff]
      %v279 = vld [vmem:[%s258 + $0x30] sm:$0xff]
      %v280 = vld [vmem:[%s258 + $0x38] sm:$0xff]
      %v281 = vld [vmem:[%s258 + $0x40] sm:$0xff]
      %v282 = vld [vmem:[%s258 + $0x48] sm:$0xff]
      %v283 = vld [vmem:[%s258 + $0x50] sm:$0xff]
      %v284 = vld [vmem:[%s258 + $0x58] sm:$0xff]
      %v285 = vld [vmem:[%s258 + $0x60] sm:$0xff]
      %v286 = vld [vmem:[%s258 + $0x68] sm:$0xff]
      %v287 = vld [vmem:[%s258 + $0x70] sm:$0xff]
      %v288 = vld [vmem:[%s258 + $0x78] sm:$0xff]
      %v289 = vld [vmem:[%s258 + $0x80] sm:$0xff]
      %v290 = vld [vmem:[%s258 + $0x88] sm:$0xff]
      %v291 = vld [vmem:[%s258 + $0x90] sm:$0xff]
      %v292 = vld [vmem:[%s258 + $0x98] sm:$0xff]
      %v293 = vld [vmem:[%s258 + $0xa0] sm:$0xff]
      %v294 = vld [vmem:[%s258 + $0xa8] sm:$0xff]
      %v295 = vld [vmem:[%s258 + $0xb0] sm:$0xff]
      %v296 = vld [vmem:[%s258 + $0xb8] sm:$0xff]
      %v297 = vld [vmem:[%s258 + $0xc0] sm:$0xff]
      %v298 = vld [vmem:[%s258 + $0xc8] sm:$0xff]
      %v299 = vld [vmem:[%s258 + $0xd0] sm:$0xff]
      %v300 = vld [vmem:[%s258 + $0xd8] sm:$0xff]
      %v301 = vld [vmem:[%s258 + $0xe0] sm:$0xff]
      %v302 = vld [vmem:[%s258 + $0xe8] sm:$0xff]
      %v303 = vld [vmem:[%s258 + $0xf0] sm:$0xff]
      %v304 = vld [vmem:[%s258 + $0xf8] sm:$0xff]
      %v305 = vld [vmem:[%s1] sm:$0x1]
      %v307 = vlaneseq
      %v308 = vshrl.u32 %v307, 7
      %v309 = vsub.s32 0, %v308
      %v310 = vrot.slane %v305, %v309
      %v312 = vmul.f32 %v273, %v310
      %v313 = vmul.f32 %v274, %v310
      %v314 = vmul.f32 %v275, %v310
      %v315 = vmul.f32 %v276, %v310
      %v316 = vmul.f32 %v277, %v310
      %v317 = vmul.f32 %v278, %v310
      %v318 = vmul.f32 %v279, %v310
      %v319 = vmul.f32 %v280, %v310
      %v320 = vmul.f32 %v281, %v310
      %v321 = vmul.f32 %v282, %v310
      %v322 = vmul.f32 %v283, %v310
      %v323 = vmul.f32 %v284, %v310
      %v324 = vmul.f32 %v285, %v310
      %v325 = vmul.f32 %v286, %v310
      %v326 = vmul.f32 %v287, %v310
      %v327 = vmul.f32 %v288, %v310
      %v328 = vmul.f32 %v289, %v310
      %v329 = vmul.f32 %v290, %v310
      %v330 = vmul.f32 %v291, %v310
      %v331 = vmul.f32 %v292, %v310
      %v332 = vmul.f32 %v293, %v310
      %v333 = vmul.f32 %v294, %v310
      %v334 = vmul.f32 %v295, %v310
      %v335 = vmul.f32 %v296, %v310
      %v336 = vmul.f32 %v297, %v310
      %v337 = vmul.f32 %v298, %v310
      %v338 = vmul.f32 %v299, %v310
      %v339 = vmul.f32 %v300, %v310
      %v340 = vmul.f32 %v301, %v310
      %v341 = vmul.f32 %v302, %v310
      %v342 = vmul.f32 %v303, %v310
      %v343 = vmul.f32 %v304, %v310
      %v344 = vld [vmem:[%s2] sm:$0x1]
      %v346 = vlaneseq
      %v347 = vshrl.u32 %v346, 7
      %v348 = vsub.s32 0, %v347
      %v349 = vrot.slane %v344, %v348
      %v351 = vadd.f32 %v312, %v349
      %v352 = vadd.f32 %v313, %v349
      %v353 = vadd.f32 %v314, %v349
      %v354 = vadd.f32 %v315, %v349
      %v355 = vadd.f32 %v316, %v349
      %v356 = vadd.f32 %v317, %v349
      %v357 = vadd.f32 %v318, %v349
      %v358 = vadd.f32 %v319, %v349
      %v359 = vadd.f32 %v320, %v349
      %v360 = vadd.f32 %v321, %v349
      %v361 = vadd.f32 %v322, %v349
      %v362 = vadd.f32 %v323, %v349
      %v363 = vadd.f32 %v324, %v349
      %v364 = vadd.f32 %v325, %v349
      %v365 = vadd.f32 %v326, %v349
      %v366 = vadd.f32 %v327, %v349
      %v367 = vadd.f32 %v328, %v349
      %v368 = vadd.f32 %v329, %v349
      %v369 = vadd.f32 %v330, %v349
      %v370 = vadd.f32 %v331, %v349
      %v371 = vadd.f32 %v332, %v349
      %v372 = vadd.f32 %v333, %v349
      %v373 = vadd.f32 %v334, %v349
      %v374 = vadd.f32 %v335, %v349
      %v375 = vadd.f32 %v336, %v349
      %v376 = vadd.f32 %v337, %v349
      %v377 = vadd.f32 %v338, %v349
      %v378 = vadd.f32 %v339, %v349
      %v379 = vadd.f32 %v340, %v349
      %v380 = vadd.f32 %v341, %v349
      %v381 = vadd.f32 %v342, %v349
      %v382 = vadd.f32 %v343, %v349
      %v383 = vmax.f32 %v351, 0.0
      %v384 = vmax.f32 %v352, 0.0
      %v385 = vmax.f32 %v353, 0.0
      %v386 = vmax.f32 %v354, 0.0
      %v387 = vmax.f32 %v355, 0.0
      %v388 = vmax.f32 %v356, 0.0
      %v389 = vmax.f32 %v357, 0.0
      %v390 = vmax.f32 %v358, 0.0
      %v391 = vmax.f32 %v359, 0.0
      %v392 = vmax.f32 %v360, 0.0
      %v393 = vmax.f32 %v361, 0.0
      %v394 = vmax.f32 %v362, 0.0
      %v395 = vmax.f32 %v363, 0.0
      %v396 = vmax.f32 %v364, 0.0
      %v397 = vmax.f32 %v365, 0.0
      %v398 = vmax.f32 %v366, 0.0
      %v399 = vmax.f32 %v367, 0.0
      %v400 = vmax.f32 %v368, 0.0
      %v401 = vmax.f32 %v369, 0.0
      %v402 = vmax.f32 %v370, 0.0
      %v403 = vmax.f32 %v371, 0.0
      %v404 = vmax.f32 %v372, 0.0
      %v405 = vmax.f32 %v373, 0.0
      %v406 = vmax.f32 %v374, 0.0
      %v407 = vmax.f32 %v375, 0.0
      %v408 = vmax.f32 %v376, 0.0
      %v409 = vmax.f32 %v377, 0.0
      %v410 = vmax.f32 %v378, 0.0
      %v411 = vmax.f32 %v379, 0.0
      %v412 = vmax.f32 %v380, 0.0
      %v413 = vmax.f32 %v381, 0.0
      %v414 = vmax.f32 %v382, 0.0
      %v415 = vpack.c.bf16 %v384, %v383
      %v416 = vpack.c.bf16 %v386, %v385
      %v417 = vpack.c.bf16 %v388, %v387
      %v418 = vpack.c.bf16 %v390, %v389
      %v419 = vpack.c.bf16 %v392, %v391
      %v420 = vpack.c.bf16 %v394, %v393
      %v421 = vpack.c.bf16 %v396, %v395
      %v422 = vpack.c.bf16 %v398, %v397
      %v423 = vpack.c.bf16 %v400, %v399
      %v424 = vpack.c.bf16 %v402, %v401
      %v425 = vpack.c.bf16 %v404, %v403
      %v426 = vpack.c.bf16 %v406, %v405
      %v427 = vpack.c.bf16 %v408, %v407
      %v428 = vpack.c.bf16 %v410, %v409
      %v429 = vpack.c.bf16 %v412, %v411
      %v430 = vpack.c.bf16 %v414, %v413
      %v431 = vld [vmem:[%s3] sm:$0xf]
      %v432 = vld [vmem:[%s3 + $0x4] sm:$0xf]
      %v433 = vld [vmem:[%s3 + $0x8] sm:$0xf]
      %v434 = vld [vmem:[%s3 + $0xc] sm:$0xf]
      %v435 = vld [vmem:[%s3 + $0x10] sm:$0xf]
      %v436 = vld [vmem:[%s3 + $0x14] sm:$0xf]
      %v437 = vld [vmem:[%s3 + $0x18] sm:$0xf]
      %v438 = vld [vmem:[%s3 + $0x1c] sm:$0xf]
      %v439 = vld [vmem:[%s3 + $0x20] sm:$0xf]
      %v440 = vld [vmem:[%s3 + $0x24] sm:$0xf]
      %v441 = vld [vmem:[%s3 + $0x28] sm:$0xf]
      %v442 = vld [vmem:[%s3 + $0x2c] sm:$0xf]
      %v443 = vld [vmem:[%s3 + $0x30] sm:$0xf]
      %v444 = vld [vmem:[%s3 + $0x34] sm:$0xf]
      %v445 = vld [vmem:[%s3 + $0x38] sm:$0xf]
      %v446 = vld [vmem:[%s3 + $0x3c] sm:$0xf]
      %v463 = vunpack.c.l.b16 %v431
      %v464 = vunpack.c.l.b16 %v432
      %v465 = vunpack.c.l.b16 %v433
      %v466 = vunpack.c.l.b16 %v434
      %v467 = vunpack.c.l.b16 %v435
      %v468 = vunpack.c.l.b16 %v436
      %v469 = vunpack.c.l.b16 %v437
      %v470 = vunpack.c.l.b16 %v438
      %v471 = vunpack.c.l.b16 %v439
      %v472 = vunpack.c.l.b16 %v440
      %v473 = vunpack.c.l.b16 %v441
      %v474 = vunpack.c.l.b16 %v442
      %v475 = vunpack.c.l.b16 %v443
      %v476 = vunpack.c.l.b16 %v444
      %v477 = vunpack.c.l.b16 %v445
      %v478 = vunpack.c.l.b16 %v446
      %v479 = vpack.c.b16 %v464, %v463
      %v480 = vpack.c.b16 %v466, %v465
      %v481 = vpack.c.b16 %v468, %v467
      %v482 = vpack.c.b16 %v470, %v469
      %v483 = vpack.c.b16 %v472, %v471
      %v484 = vpack.c.b16 %v474, %v473
      %v485 = vpack.c.b16 %v476, %v475
      %v486 = vpack.c.b16 %v478, %v477
      %495 = vmatprep.subr.bf16.mxu0 0
      %496 = vmatpush1.bf16.msra.mxu0 %v479
      %497 = vmatprep.subr.bf16.mxu0 0
      %498 = vmatpush1.bf16.msra.mxu0 %v480
      %499 = vmatprep.subr.bf16.mxu0 0
      %500 = vmatpush1.bf16.msra.mxu0 %v481
      %501 = vmatprep.subr.bf16.mxu0 0
      %502 = vmatpush1.bf16.msra.mxu0 %v482
      %503 = vmatprep.subr.bf16.mxu0 0
      %504 = vmatpush1.bf16.msra.mxu0 %v483
      %505 = vmatprep.subr.bf16.mxu0 0
      %506 = vmatpush1.bf16.msra.mxu0 %v484
      %507 = vmatprep.subr.bf16.mxu0 0
      %508 = vmatpush1.bf16.msra.mxu0 %v485
      %509 = vmatprep.subr.bf16.mxu0 0
      %510 = vmatpush1.bf16.msra.mxu0 %v486
      %511 = vmatprep.subr.bf16.mxu0 0
      %512 = vmatpush1.bf16.msra.mxu0 0
      %513 = vmatprep.subr.bf16.mxu0 0
      %514 = vmatpush1.bf16.msra.mxu0 0
      %515 = vmatprep.subr.bf16.mxu0 0
      %516 = vmatpush1.bf16.msra.mxu0 0
      %517 = vmatprep.subr.bf16.mxu0 0
      %518 = vmatpush1.bf16.msra.mxu0 0
      %519 = vmatprep.subr.bf16.mxu0 0
      %520 = vmatpush1.bf16.msra.mxu0 0
      %521 = vmatprep.subr.bf16.mxu0 0
      %522 = vmatpush1.bf16.msra.mxu0 0
      %523 = vmatprep.subr.bf16.mxu0 0
      %524 = vmatpush1.bf16.msra.mxu0 0
      %525 = vmatprep.subr.bf16.mxu0 0
      %526 = vmatpush1.bf16.msra.mxu0 0
      %527 = vmatprep.mubr.bf16.mxu0 0
      %528 = vmatmul.mubr.bf16.gmra.mrb[0].mxu0 %v415
      %v529 = vpop.f32.mrb[0].mxu0
      %v530 = vadd.f32 0.0, %v529
      %v531 = vpop.f32.mrb[0].mxu0
      %v532 = vpop.f32.mrb[0].mxu0
      %v533 = vadd.f32 0.0, %v532
      %v534 = vpop.f32.mrb[0].mxu0
      %535 = vmatprep.mubr.bf16.mxu0 0
      %536 = vmatmul.mubr.bf16.gmra.mrb[0].mxu0 %v416
      %v537 = vpop.f32.mrb[0].mxu0
      %v538 = vadd.f32 0.0, %v537
      %v539 = vpop.f32.mrb[0].mxu0
      %v540 = vpop.f32.mrb[0].mxu0
      %v541 = vadd.f32 0.0, %v540
      %v542 = vpop.f32.mrb[0].mxu0
      %543 = vmatprep.mubr.bf16.mxu0 0
      %544 = vmatmul.mubr.bf16.gmra.mrb[0].mxu0 %v417
      %v545 = vpop.f32.mrb[0].mxu0
      %v546 = vadd.f32 0.0, %v545
      %v547 = vpop.f32.mrb[0].mxu0
      %v548 = vpop.f32.mrb[0].mxu0
      %v549 = vadd.f32 0.0, %v548
      %v550 = vpop.f32.mrb[0].mxu0
      %551 = vmatprep.mubr.bf16.mxu0 0
      %552 = vmatmul.mubr.bf16.gmra.mrb[0].mxu0 %v418
      %v553 = vpop.f32.mrb[0].mxu0
      %v554 = vadd.f32 0.0, %v553
      %v555 = vpop.f32.mrb[0].mxu0
      %v556 = vpop.f32.mrb[0].mxu0
      %v557 = vadd.f32 0.0, %v556
      %v558 = vpop.f32.mrb[0].mxu0
      %559 = vmatprep.mubr.bf16.mxu0 0
      %560 = vmatmul.mubr.bf16.gmra.mrb[0].mxu0 %v419
      %v561 = vpop.f32.mrb[0].mxu0
      %v562 = vadd.f32 0.0, %v561
      %v563 = vpop.f32.mrb[0].mxu0
      %v564 = vpop.f32.mrb[0].mxu0
      %v565 = vadd.f32 0.0, %v564
      %v566 = vpop.f32.mrb[0].mxu0
      %567 = vmatprep.mubr.bf16.mxu0 0
      %568 = vmatmul.mubr.bf16.gmra.mrb[0].mxu0 %v420
      %v569 = vpop.f32.mrb[0].mxu0
      %v570 = vadd.f32 0.0, %v569
      %v571 = vpop.f32.mrb[0].mxu0
      %v572 = vpop.f32.mrb[0].mxu0
      %v573 = vadd.f32 0.0, %v572
      %v574 = vpop.f32.mrb[0].mxu0
      %575 = vmatprep.mubr.bf16.mxu0 0
      %576 = vmatmul.mubr.bf16.gmra.mrb[0].mxu0 %v421
      %v577 = vpop.f32.mrb[0].mxu0
      %v578 = vadd.f32 0.0, %v577
      %v579 = vpop.f32.mrb[0].mxu0
      %v580 = vpop.f32.mrb[0].mxu0
      %v581 = vadd.f32 0.0, %v580
      %v582 = vpop.f32.mrb[0].mxu0
      %583 = vmatprep.mubr.bf16.mxu0 0
      %584 = vmatmul.mubr.bf16.gmra.mrb[0].mxu0 %v422
      %v585 = vpop.f32.mrb[0].mxu0
      %v586 = vadd.f32 0.0, %v585
      %v587 = vpop.f32.mrb[0].mxu0
      %v588 = vpop.f32.mrb[0].mxu0
      %v589 = vadd.f32 0.0, %v588
      %v590 = vpop.f32.mrb[0].mxu0
      %591 = vmatprep.mubr.bf16.mxu0 0
      %592 = vmatmul.mubr.bf16.gmra.mrb[0].mxu0 %v423
      %v593 = vpop.f32.mrb[0].mxu0
      %v594 = vadd.f32 0.0, %v593
      %v595 = vpop.f32.mrb[0].mxu0
      %v596 = vpop.f32.mrb[0].mxu0
      %v597 = vadd.f32 0.0, %v596
      %v598 = vpop.f32.mrb[0].mxu0
      %599 = vmatprep.mubr.bf16.mxu0 0
      %600 = vmatmul.mubr.bf16.gmra.mrb[0].mxu0 %v424
      %v601 = vpop.f32.mrb[0].mxu0
      %v602 = vadd.f32 0.0, %v601
      %v603 = vpop.f32.mrb[0].mxu0
      %v604 = vpop.f32.mrb[0].mxu0
      %v605 = vadd.f32 0.0, %v604
      %v606 = vpop.f32.mrb[0].mxu0
      %607 = vmatprep.mubr.bf16.mxu0 0
      %608 = vmatmul.mubr.bf16.gmra.mrb[0].mxu0 %v425
      %v609 = vpop.f32.mrb[0].mxu0
      %v610 = vadd.f32 0.0, %v609
      %v611 = vpop.f32.mrb[0].mxu0
      %v612 = vpop.f32.mrb[0].mxu0
      %v613 = vadd.f32 0.0, %v612
      %v614 = vpop.f32.mrb[0].mxu0
      %615 = vmatprep.mubr.bf16.mxu0 0
      %616 = vmatmul.mubr.bf16.gmra.mrb[0].mxu0 %v426
      %v617 = vpop.f32.mrb[0].mxu0
      %v618 = vadd.f32 0.0, %v617
      %v619 = vpop.f32.mrb[0].mxu0
      %v620 = vpop.f32.mrb[0].mxu0
      %v621 = vadd.f32 0.0, %v620
      %v622 = vpop.f32.mrb[0].mxu0
      %623 = vmatprep.mubr.bf16.mxu0 0
      %624 = vmatmul.mubr.bf16.gmra.mrb[0].mxu0 %v427
      %v625 = vpop.f32.mrb[0].mxu0
      %v626 = vadd.f32 0.0, %v625
      %v627 = vpop.f32.mrb[0].mxu0
      %v628 = vpop.f32.mrb[0].mxu0
      %v629 = vadd.f32 0.0, %v628
      %v630 = vpop.f32.mrb[0].mxu0
      %631 = vmatprep.mubr.bf16.mxu0 0
      %632 = vmatmul.mubr.bf16.gmra.mrb[0].mxu0 %v428
      %v633 = vpop.f32.mrb[0].mxu0
      %v634 = vadd.f32 0.0, %v633
      %v635 = vpop.f32.mrb[0].mxu0
      %v636 = vpop.f32.mrb[0].mxu0
      %v637 = vadd.f32 0.0, %v636
      %v638 = vpop.f32.mrb[0].mxu0
      %639 = vmatprep.mubr.bf16.mxu0 0
      %640 = vmatmul.mubr.bf16.gmra.mrb[0].mxu0 %v429
      %v641 = vpop.f32.mrb[0].mxu0
      %v642 = vadd.f32 0.0, %v641
      %v643 = vpop.f32.mrb[0].mxu0
      %v644 = vpop.f32.mrb[0].mxu0
      %v645 = vadd.f32 0.0, %v644
      %v646 = vpop.f32.mrb[0].mxu0
      %647 = vmatprep.mubr.bf16.mxu0 0
      %648 = vmatmul.mubr.bf16.gmra.mrb[0].mxu0 %v430
      %v649 = vpop.f32.mrb[0].mxu0
      %v650 = vadd.f32 0.0, %v649
      %v651 = vpop.f32.mrb[0].mxu0
      %v652 = vpop.f32.mrb[0].mxu0
      %v653 = vadd.f32 0.0, %v652
      %v654 = vpop.f32.mrb[0].mxu0
      %655 = vdwg.mxu0
      %656 = vst [vmem:[%s264] sm:$0xff] %v530
      %657 = vst [vmem:[%s264 + $0x8] sm:$0xff] %v533
      %658 = vst [vmem:[%s264 + $0x10] sm:$0xff] %v538
      %659 = vst [vmem:[%s264 + $0x18] sm:$0xff] %v541
      %660 = vst [vmem:[%s264 + $0x20] sm:$0xff] %v546
      %661 = vst [vmem:[%s264 + $0x28] sm:$0xff] %v549
      %662 = vst [vmem:[%s264 + $0x30] sm:$0xff] %v554
      %663 = vst [vmem:[%s264 + $0x38] sm:$0xff] %v557
      %664 = vst [vmem:[%s264 + $0x40] sm:$0xff] %v562
      %665 = vst [vmem:[%s264 + $0x48] sm:$0xff] %v565
      %666 = vst [vmem:[%s264 + $0x50] sm:$0xff] %v570
      %667 = vst [vmem:[%s264 + $0x58] sm:$0xff] %v573
      %668 = vst [vmem:[%s264 + $0x60] sm:$0xff] %v578
      %669 = vst [vmem:[%s264 + $0x68] sm:$0xff] %v581
      %670 = vst [vmem:[%s264 + $0x70] sm:$0xff] %v586
      %671 = vst [vmem:[%s264 + $0x78] sm:$0xff] %v589
      %672 = vst [vmem:[%s264 + $0x80] sm:$0xff] %v594
      %673 = vst [vmem:[%s264 + $0x88] sm:$0xff] %v597
      %674 = vst [vmem:[%s264 + $0x90] sm:$0xff] %v602
      %675 = vst [vmem:[%s264 + $0x98] sm:$0xff] %v605
      %676 = vst [vmem:[%s264 + $0xa0] sm:$0xff] %v610
      %677 = vst [vmem:[%s264 + $0xa8] sm:$0xff] %v613
      %678 = vst [vmem:[%s264 + $0xb0] sm:$0xff] %v618
      %679 = vst [vmem:[%s264 + $0xb8] sm:$0xff] %v621
      %680 = vst [vmem:[%s264 + $0xc0] sm:$0xff] %v626
      %681 = vst [vmem:[%s264 + $0xc8] sm:$0xff] %v629
      %682 = vst [vmem:[%s264 + $0xd0] sm:$0xff] %v634
      %683 = vst [vmem:[%s264 + $0xd8] sm:$0xff] %v637
      %684 = vst [vmem:[%s264 + $0xe0] sm:$0xff] %v642
      %685 = vst [vmem:[%s264 + $0xe8] sm:$0xff] %v645
      %686 = vst [vmem:[%s264 + $0xf0] sm:$0xff] %v650
      %687 = vst [vmem:[%s264 + $0xf8] sm:$0xff] %v653
      %v688 = vadd.f32 %v530, %v533
      %v689 = vadd.f32 %v688, %v538
      %v690 = vadd.f32 %v689, %v541
      %v691 = vadd.f32 %v690, %v546
      %v692 = vadd.f32 %v691, %v549
      %v693 = vadd.f32 %v692, %v554
      %v694 = vadd.f32 %v693, %v557
      %v695 = vadd.f32 %v694, %v562
      %v696 = vadd.f32 %v695, %v565
      %v697 = vadd.f32 %v696, %v570
      %v698 = vadd.f32 %v697, %v573
      %v699 = vadd.f32 %v698, %v578
      %v700 = vadd.f32 %v699, %v581
      %v701 = vadd.f32 %v700, %v586
      %v702 = vadd.f32 %v701, %v589
      %v703 = vadd.f32 %v702, %v594
      %v704 = vadd.f32 %v703, %v597
      %v705 = vadd.f32 %v704, %v602
      %v706 = vadd.f32 %v705, %v605
      %v707 = vadd.f32 %v706, %v610
      %v708 = vadd.f32 %v707, %v613
      %v709 = vadd.f32 %v708, %v618
      %v710 = vadd.f32 %v709, %v621
      %v711 = vadd.f32 %v710, %v626
      %v712 = vadd.f32 %v711, %v629
      %v713 = vadd.f32 %v712, %v634
      %v714 = vadd.f32 %v713, %v637
      %v715 = vadd.f32 %v714, %v642
      %v716 = vadd.f32 %v715, %v645
      %v717 = vadd.f32 %v716, %v650
      %v718 = vadd.f32 %v717, %v653
      %v719 = vrot.slane %v718, 4
      %v720 = vadd.f32 %v718, %v719
      %v721 = vrot.slane %v720, 2
      %v722 = vadd.f32 %v720, %v721
      %v723 = vrot.slane %v722, 1
      %v724 = vadd.f32 %v722, %v723
      %725 = vst [vmem:[%s268] sm:$0x1] %v724
      %v726 = vmul.f32 %v530, %v530
      %v727 = vmul.f32 %v533, %v533
      %v728 = vmul.f32 %v538, %v538
      %v729 = vmul.f32 %v541, %v541
      %v730 = vmul.f32 %v546, %v546
      %v731 = vmul.f32 %v549, %v549
      %v732 = vmul.f32 %v554, %v554
      %v733 = vmul.f32 %v557, %v557
      %v734 = vmul.f32 %v562, %v562
      %v735 = vmul.f32 %v565, %v565
      %v736 = vmul.f32 %v570, %v570
      %v737 = vmul.f32 %v573, %v573
      %v738 = vmul.f32 %v578, %v578
      %v739 = vmul.f32 %v581, %v581
      %v740 = vmul.f32 %v586, %v586
      %v741 = vmul.f32 %v589, %v589
      %v742 = vmul.f32 %v594, %v594
      %v743 = vmul.f32 %v597, %v597
      %v744 = vmul.f32 %v602, %v602
      %v745 = vmul.f32 %v605, %v605
      %v746 = vmul.f32 %v610, %v610
      %v747 = vmul.f32 %v613, %v613
      %v748 = vmul.f32 %v618, %v618
      %v749 = vmul.f32 %v621, %v621
      %v750 = vmul.f32 %v626, %v626
      %v751 = vmul.f32 %v629, %v629
      %v752 = vmul.f32 %v634, %v634
      %v753 = vmul.f32 %v637, %v637
      %v754 = vmul.f32 %v642, %v642
      %v755 = vmul.f32 %v645, %v645
      %v756 = vmul.f32 %v650, %v650
      %v757 = vmul.f32 %v653, %v653
      %v758 = vadd.f32 %v726, %v727
      %v759 = vadd.f32 %v758, %v728
      %v760 = vadd.f32 %v759, %v729
      %v761 = vadd.f32 %v760, %v730
      %v762 = vadd.f32 %v761, %v731
      %v763 = vadd.f32 %v762, %v732
      %v764 = vadd.f32 %v763, %v733
      %v765 = vadd.f32 %v764, %v734
      %v766 = vadd.f32 %v765, %v735
      %v767 = vadd.f32 %v766, %v736
      %v768 = vadd.f32 %v767, %v737
      %v769 = vadd.f32 %v768, %v738
      %v770 = vadd.f32 %v769, %v739
      %v771 = vadd.f32 %v770, %v740
      %v772 = vadd.f32 %v771, %v741
      %v773 = vadd.f32 %v772, %v742
      %v774 = vadd.f32 %v773, %v743
      %v775 = vadd.f32 %v774, %v744
      %v776 = vadd.f32 %v775, %v745
      %v777 = vadd.f32 %v776, %v746
      %v778 = vadd.f32 %v777, %v747
      %v779 = vadd.f32 %v778, %v748
      %v780 = vadd.f32 %v779, %v749
      %v781 = vadd.f32 %v780, %v750
      %v782 = vadd.f32 %v781, %v751
      %v783 = vadd.f32 %v782, %v752
      %v784 = vadd.f32 %v783, %v753
      %v785 = vadd.f32 %v784, %v754
      %v786 = vadd.f32 %v785, %v755
      %v787 = vadd.f32 %v786, %v756
      %v788 = vadd.f32 %v787, %v757
      %v789 = vrot.slane %v788, 4
      %v790 = vadd.f32 %v788, %v789
      %v791 = vrot.slane %v790, 2
      %v792 = vadd.f32 %v790, %v791
      %v793 = vrot.slane %v792, 1
      %v794 = vadd.f32 %v792, %v793
      %795 = vst [vmem:[%s271] sm:$0x1] %v794
      %s796 = smul.u32 32, %s18
      %p797 = scmp.lt.s32.totalorder %s796, 63
      %s798 = scalar_select %p797, %s796, 63
      %s799 = smul.addr %s798, 8
      %s800 = scalar_lea.vmem %s4, %s799
      %p801 = scmp.lt.s32.totalorder %s18, 1
      %s802 = scalar_select %p801, %s18, 1
      %s803 = scalar_lea.vmem %s5, %s802
      %p804 = scmp.lt.s32.totalorder %s18, 1
      %s805 = scalar_select %p804, %s18, 1
      %s806 = scalar_lea.vmem %s6, %s805
      // Predicated region
      $region37: #{bottleneck_forward.6} parent=35 // pred_check
        %p807 = pneg %p125
      $region38: #{bottleneck_forward.6} parent=35 // pred_check_branch
        %809 = sbr.rel (%p807) target = $region40
      $region39: #{bottleneck_forward.6} parent=35 // pred_region
        %s810 = smul.u32 32, %s18
      $region40: #{bottleneck_forward.6} parent=35 // pred_fallthru
        _
      // Predicated region
      $region41: #{bottleneck_forward.6} parent=35 // pred_check
        %p811 = pneg %p151
      $region42: #{bottleneck_forward.6} parent=35 // pred_check_branch
        %813 = sbr.rel (%p811) target = $region44
      $region43: #{bottleneck_forward.6} parent=35 // pred_region
        _
      $region44: #{bottleneck_forward.6} parent=35 // pred_fallthru
        _
      // Predicated region
      $region45: #{bottleneck_forward.6} parent=35 // pred_check
        %p814 = pneg %p177
      $region46: #{bottleneck_forward.6} parent=35 // pred_check_branch
        %816 = sbr.rel (%p814) target = $region48
      $region47: #{bottleneck_forward.6} parent=35 // pred_region
        _
      $region48: #{bottleneck_forward.6} parent=35 // pred_fallthru
        _
    $region36: #{bottleneck_forward.6} parent=5 // pred_fallthru
      _
    %p817 = scmp.le.s32.totalorder 2, %s13
    // Predicated region
    $region49: #{bottleneck_forward.6} parent=5 // pred_check
      %p818 = pneg %p817
    $region50: #{bottleneck_forward.6} parent=5 // pred_check_branch
      %820 = sbr.rel (%p818) target = $region52
    $region51: #{bottleneck_forward.6} parent=5 // pred_region
      %s821 = ssub.s32 %s13, 2
      // Predicated region
      $region53: #{bottleneck_forward.6} parent=51 // pred_check
        %p822 = pneg %p131
      $region54: #{bottleneck_forward.6} parent=51 // pred_check_branch
        %824 = sbr.rel (%p822) target = $region56
      $region55: #{bottleneck_forward.6} parent=51 // pred_region
        %s825 = smul.u32 32, %s19
        %p826 = scmp.lt.s32.totalorder %s825, 63
        %s827 = scalar_select %p826, %s825, 63
        %s828 = smul.addr %s827, 8
        %s829 = scalar_lea.vmem %s4, %s828
      $region56: #{bottleneck_forward.6} parent=51 // pred_fallthru
        _
      // Predicated region
      $region57: #{bottleneck_forward.6} parent=51 // pred_check
        %p830 = pneg %p157
      $region58: #{bottleneck_forward.6} parent=51 // pred_check_branch
        %832 = sbr.rel (%p830) target = $region60
      $region59: #{bottleneck_forward.6} parent=51 // pred_region
        %p833 = scmp.lt.s32.totalorder %s19, 1
        %s834 = scalar_select %p833, %s19, 1
        %s835 = scalar_lea.vmem %s5, %s834
      $region60: #{bottleneck_forward.6} parent=51 // pred_fallthru
        _
      // Predicated region
      $region61: #{bottleneck_forward.6} parent=51 // pred_check
        %p836 = pneg %p183
      $region62: #{bottleneck_forward.6} parent=51 // pred_check_branch
        %838 = sbr.rel (%p836) target = $region64
      $region63: #{bottleneck_forward.6} parent=51 // pred_region
        %p839 = scmp.lt.s32.totalorder %s19, 1
        %s840 = scalar_select %p839, %s19, 1
        %s841 = scalar_lea.vmem %s6, %s840
      $region64: #{bottleneck_forward.6} parent=51 // pred_fallthru
        _
    $region52: #{bottleneck_forward.6} parent=5 // pred_fallthru
      _
  $region6: #{bottleneck_forward.6} parent=0 // loop_footer
    %s17 = sadd.s32 1, %s13
  $region7: #{bottleneck_forward.6} parent=0 // loop_footer_branch
    %12 = sbr.rel target = $region3
  $region8: #{bottleneck_forward.6} parent=0 // loop_exit
    _

// kernel: bottleneck_forward.4
$region0: #{bottleneck_forward.4}
  #allocation0 [shape = 'u32[]', space=smem, size = 0x4, offset = 0x4, fixed_abs, tag = 'smem constant byte address 0x4 - core index']
  #allocation1 [shape = 'u32[144,128]{1,0:T(1,128)}', space=vmem, size = 0x12000, scoped, tag = 'internal scratch']
  %s0 = inlined_call_operand.vmem [shape: bf16[512,128], index: 0, kind: input, shape index: {}]
  %s1 = inlined_call_operand.vmem [shape: bf16[128,128], index: 1, kind: input, shape index: {}]
  %s2 = inlined_call_operand.vmem [shape: bf16[128,128], index: 2, kind: input, shape index: {}]
  %s3 = inlined_call_operand.vmem [shape: f32[512,128], index: 3, kind: output, shape index: {0}]
  %s4 = inlined_call_operand.vmem [shape: f32[512,128], index: 4, kind: output, shape index: {1}]
  %s5 = inlined_call_operand.vmem [shape: f32[2,1,128], index: 5, kind: output, shape index: {2}]
  %s6 = inlined_call_operand.vmem [shape: f32[2,1,128], index: 6, kind: output, shape index: {3}]
  %s7 = inlined_call_operand.vmem [shape: f32[2,1,128], index: 7, kind: output, shape index: {4}]
  %s8 = inlined_call_operand.vmem [shape: f32[2,1,128], index: 8, kind: output, shape index: {5}]
  %9 = xla_tuple %s3, %s4, %s5, %s6, %s7, %s8
  %s10 = sld [smem:[#allocation0]]
  $region85: #{bottleneck_forward.4} parent=0
    _
  %s12 = ssub.s32 1, %s10
  %s13 = scalar_select 0, %s12, %s10
  loop: start=0, step=1, limit=4
  $region2: #{bottleneck_forward.4} parent=0 // loop_pre_header
    _
  $region3: #{bottleneck_forward.4} parent=0 // loop_header
    %s15 = sphi 0, %s19
    %p16 = scmp.ge.s32.totalorder %s15, 4
    %s25 = sphi 0, %s27
    %s28 = sphi 0, %s25
    %s29 = sphi 0, %s28
    %s45 = sphi 0, %s29
    %s49 = sphi 0, %s49
    %s51 = sphi 0, %s49
    %s52 = sphi 0, %s51
    %s66 = sphi 0, %s52
    %s70 = sphi 0, %s70
    %s72 = sphi 0, %s70
    %s73 = sphi 0, %s72
    %s87 = sphi 0, %s73
    %s93 = sphi 0, %s95
    %s96 = sphi 0, %s93
    %s97 = sphi 0, %s96
    %s113 = sphi 0, %s97
    %s119 = sphi 0, %s121
    %s122 = sphi 0, %s119
    %s123 = sphi 0, %s122
    %s139 = sphi 0, %s123
    %s145 = sphi 0, %s147
    %s148 = sphi 0, %s145
    %s149 = sphi 0, %s148
    %s165 = sphi 0, %s149
    %s171 = sphi 0, %s173
    %s174 = sphi 0, %s171
    %s175 = sphi 0, %s174
    %s191 = sphi 0, %s175
    %s197 = sphi 0, %s199
    %s200 = sphi 0, %s197
    %s201 = sphi 0, %s200
    %s217 = sphi 0, %s201
    %s223 = sphi 0, %s225
    %s226 = sphi 0, %s223
    %s227 = sphi 0, %s226
    %s243 = sphi 0, %s227
  $region4: #{bottleneck_forward.4} parent=0 // loop_header_branch
    %18 = sbr.rel (%p16) target = $region8
  $region5: #{bottleneck_forward.4} parent=0 // loop_body
    %s20 = ssub.s32 %s15, 1
    %s21 = ssub.s32 %s15, 2
    %s22 = sadd.s32 %s15, 1
    %s23 = ssub.s32 %s15, %s22
    %p24 = scmp.eq.s32.totalorder %s23, 0
    %s26 = sadd.s32 %s25, 1
    %s27 = scalar_select %p24, %s25, %s26
    %p30 = pneg %p24
    %p31 = scmp.eq.s32.totalorder %s15, 1
    %p32 = por %p30, %p31
    %p33 = scmp.ne.s32.totalorder %s25, %s28
    %p34 = scmp.eq.s32.totalorder %s15, 0
    %p35 = por %p33, %p34
    %p36 = scmp.ne.s32.totalorder %s25, %s28
    %p37 = scmp.eq.s32.totalorder %s20, 1
    %p38 = por %p36, %p37
    %p39 = scmp.ne.s32.totalorder %s28, %s29
    %p40 = scmp.eq.s32.totalorder %s20, 0
    %p41 = por %p39, %p40
    %p42 = scmp.ne.s32.totalorder %s28, %s29
    %p43 = scmp.eq.s32.totalorder %s21, 1
    %p44 = por %p42, %p43
    %p46 = scmp.ne.s32.totalorder %s29, %s45
    %p47 = scmp.eq.s32.totalorder %s21, 0
    %p48 = por %p46, %p47
    %s50 = sadd.s32 %s49, 1
    %p53 = scmp.eq.s32.totalorder %s15, 1
    %p54 = scmp.ne.s32.totalorder %s49, %s51
    %p55 = scmp.eq.s32.totalorder %s15, 0
    %p56 = por %p54, %p55
    %p57 = scmp.ne.s32.totalorder %s49, %s51
    %p58 = scmp.eq.s32.totalorder %s20, 1
    %p59 = por %p57, %p58
    %p60 = scmp.ne.s32.totalorder %s51, %s52
    %p61 = scmp.eq.s32.totalorder %s20, 0
    %p62 = por %p60, %p61
    %p63 = scmp.ne.s32.totalorder %s51, %s52
    %p64 = scmp.eq.s32.totalorder %s21, 1
    %p65 = por %p63, %p64
    %p67 = scmp.ne.s32.totalorder %s52, %s66
    %p68 = scmp.eq.s32.totalorder %s21, 0
    %p69 = por %p67, %p68
    %s71 = sadd.s32 %s70, 1
    %p74 = scmp.eq.s32.totalorder %s15, 1
    %p75 = scmp.ne.s32.totalorder %s70, %s72
    %p76 = scmp.eq.s32.totalorder %s15, 0
    %p77 = por %p75, %p76
    %p78 = scmp.ne.s32.totalorder %s70, %s72
    %p79 = scmp.eq.s32.totalorder %s20, 1
    %p80 = por %p78, %p79
    %p81 = scmp.ne.s32.totalorder %s72, %s73
    %p82 = scmp.eq.s32.totalorder %s20, 0
    %p83 = por %p81, %p82
    %p84 = scmp.ne.s32.totalorder %s72, %s73
    %p85 = scmp.eq.s32.totalorder %s21, 1
    %p86 = por %p84, %p85
    %p88 = scmp.ne.s32.totalorder %s73, %s87
    %p89 = scmp.eq.s32.totalorder %s21, 0
    %p90 = por %p88, %p89
    %s91 = ssub.s32 %s15, %s22
    %p92 = scmp.eq.s32.totalorder %s91, 0
    %s94 = sadd.s32 %s93, 1
    %s95 = scalar_select %p92, %s93, %s94
    %p98 = pneg %p92
    %p99 = scmp.eq.s32.totalorder %s15, 1
    %p100 = por %p98, %p99
    %p101 = scmp.ne.s32.totalorder %s93, %s96
    %p102 = scmp.eq.s32.totalorder %s15, 0
    %p103 = por %p101, %p102
    %p104 = scmp.ne.s32.totalorder %s93, %s96
    %p105 = scmp.eq.s32.totalorder %s20, 1
    %p106 = por %p104, %p105
    %p107 = scmp.ne.s32.totalorder %s96, %s97
    %p108 = scmp.eq.s32.totalorder %s20, 0
    %p109 = por %p107, %p108
    %p110 = scmp.ne.s32.totalorder %s96, %s97
    %p111 = scmp.eq.s32.totalorder %s21, 1
    %p112 = por %p110, %p111
    %p114 = scmp.ne.s32.totalorder %s97, %s113
    %p115 = scmp.eq.s32.totalorder %s21, 0
    %p116 = por %p114, %p115
    %s117 = ssub.s32 %s15, %s22
    %p118 = scmp.eq.s32.totalorder %s117, 0
    %s120 = sadd.s32 %s119, 1
    %s121 = scalar_select %p118, %s119, %s120
    %p124 = pneg %p118
    %p125 = scmp.eq.s32.totalorder %s15, 1
    %p126 = por %p124, %p125
    %p127 = scmp.ne.s32.totalorder %s119, %s122
    %p128 = scmp.eq.s32.totalorder %s15, 0
    %p129 = por %p127, %p128
    %p130 = scmp.ne.s32.totalorder %s119, %s122
    %p131 = scmp.eq.s32.totalorder %s20, 1
    %p132 = por %p130, %p131
    %p133 = scmp.ne.s32.totalorder %s122, %s123
    %p134 = scmp.eq.s32.totalorder %s20, 0
    %p135 = por %p133, %p134
    %p136 = scmp.ne.s32.totalorder %s122, %s123
    %p137 = scmp.eq.s32.totalorder %s21, 1
    %p138 = por %p136, %p137
    %p140 = scmp.ne.s32.totalorder %s123, %s139
    %p141 = scmp.eq.s32.totalorder %s21, 0
    %p142 = por %p140, %p141
    %s143 = ssub.s32 %s15, %s22
    %p144 = scmp.eq.s32.totalorder %s143, 0
    %s146 = sadd.s32 %s145, 1
    %s147 = scalar_select %p144, %s145, %s146
    %p150 = pneg %p144
    %p151 = scmp.eq.s32.totalorder %s15, 1
    %p152 = por %p150, %p151
    %p153 = scmp.ne.s32.totalorder %s145, %s148
    %p154 = scmp.eq.s32.totalorder %s15, 0
    %p155 = por %p153, %p154
    %p156 = scmp.ne.s32.totalorder %s145, %s148
    %p157 = scmp.eq.s32.totalorder %s20, 1
    %p158 = por %p156, %p157
    %p159 = scmp.ne.s32.totalorder %s148, %s149
    %p160 = scmp.eq.s32.totalorder %s20, 0
    %p161 = por %p159, %p160
    %p162 = scmp.ne.s32.totalorder %s148, %s149
    %p163 = scmp.eq.s32.totalorder %s21, 1
    %p164 = por %p162, %p163
    %p166 = scmp.ne.s32.totalorder %s149, %s165
    %p167 = scmp.eq.s32.totalorder %s21, 0
    %p168 = por %p166, %p167
    %s169 = ssub.s32 %s15, %s22
    %p170 = scmp.eq.s32.totalorder %s169, 0
    %s172 = sadd.s32 %s171, 1
    %s173 = scalar_select %p170, %s171, %s172
    %p176 = pneg %p170
    %p177 = scmp.eq.s32.totalorder %s15, 1
    %p178 = por %p176, %p177
    %p179 = scmp.ne.s32.totalorder %s171, %s174
    %p180 = scmp.eq.s32.totalorder %s15, 0
    %p181 = por %p179, %p180
    %p182 = scmp.ne.s32.totalorder %s171, %s174
    %p183 = scmp.eq.s32.totalorder %s20, 1
    %p184 = por %p182, %p183
    %p185 = scmp.ne.s32.totalorder %s174, %s175
    %p186 = scmp.eq.s32.totalorder %s20, 0
    %p187 = por %p185, %p186
    %p188 = scmp.ne.s32.totalorder %s174, %s175
    %p189 = scmp.eq.s32.totalorder %s21, 1
    %p190 = por %p188, %p189
    %p192 = scmp.ne.s32.totalorder %s175, %s191
    %p193 = scmp.eq.s32.totalorder %s21, 0
    %p194 = por %p192, %p193
    %s195 = ssub.s32 %s15, %s22
    %p196 = scmp.eq.s32.totalorder %s195, 0
    %s198 = sadd.s32 %s197, 1
    %s199 = scalar_select %p196, %s197, %s198
    %p202 = pneg %p196
    %p203 = scmp.eq.s32.totalorder %s15, 1
    %p204 = por %p202, %p203
    %p205 = scmp.ne.s32.totalorder %s197, %s200
    %p206 = scmp.eq.s32.totalorder %s15, 0
    %p207 = por %p205, %p206
    %p208 = scmp.ne.s32.totalorder %s197, %s200
    %p209 = scmp.eq.s32.totalorder %s20, 1
    %p210 = por %p208, %p209
    %p211 = scmp.ne.s32.totalorder %s200, %s201
    %p212 = scmp.eq.s32.totalorder %s20, 0
    %p213 = por %p211, %p212
    %p214 = scmp.ne.s32.totalorder %s200, %s201
    %p215 = scmp.eq.s32.totalorder %s21, 1
    %p216 = por %p214, %p215
    %p218 = scmp.ne.s32.totalorder %s201, %s217
    %p219 = scmp.eq.s32.totalorder %s21, 0
    %p220 = por %p218, %p219
    %s221 = ssub.s32 %s15, %s22
    %p222 = scmp.eq.s32.totalorder %s221, 0
    %s224 = sadd.s32 %s223, 1
    %s225 = scalar_select %p222, %s223, %s224
    %p228 = pneg %p222
    %p229 = scmp.eq.s32.totalorder %s15, 1
    %p230 = por %p228, %p229
    %p231 = scmp.ne.s32.totalorder %s223, %s226
    %p232 = scmp.eq.s32.totalorder %s15, 0
    %p233 = por %p231, %p232
    %p234 = scmp.ne.s32.totalorder %s223, %s226
    %p235 = scmp.eq.s32.totalorder %s20, 1
    %p236 = por %p234, %p235
    %p237 = scmp.ne.s32.totalorder %s226, %s227
    %p238 = scmp.eq.s32.totalorder %s20, 0
    %p239 = por %p237, %p238
    %p240 = scmp.ne.s32.totalorder %s226, %s227
    %p241 = scmp.eq.s32.totalorder %s21, 1
    %p242 = por %p240, %p241
    %p244 = scmp.ne.s32.totalorder %s227, %s243
    %p245 = scmp.eq.s32.totalorder %s21, 0
    %p246 = por %p244, %p245
    %p247 = scmp.le.s32.totalorder 1, %s15
    %p248 = scmp.lt.s32.totalorder %s15, 3
    %p249 = pnand %p247, %p248
    %p250 = pneg %p249
    // Predicated region
    $region9: #{bottleneck_forward.4} parent=5 // pred_check
      _
    $region10: #{bottleneck_forward.4} parent=5 // pred_check_branch
      %252 = sbr.rel (%p249) target = $region12
    $region11: #{bottleneck_forward.4} parent=5 // pred_region
      %s253 = ssub.s32 %s15, 1
      // Predicated region
      $region13: #{bottleneck_forward.4} parent=11 // pred_check
        %p254 = pneg %p62
      $region14: #{bottleneck_forward.4} parent=11 // pred_check_branch
        %256 = sbr.rel (%p254) target = $region16
      $region15: #{bottleneck_forward.4} parent=11 // pred_region
        _
      $region16: #{bottleneck_forward.4} parent=11 // pred_fallthru
        _
      // Predicated region
      $region17: #{bottleneck_forward.4} parent=11 // pred_check
        %p257 = pneg %p83
      $region18: #{bottleneck_forward.4} parent=11 // pred_check_branch
        %259 = sbr.rel (%p257) target = $region20
      $region19: #{bottleneck_forward.4} parent=11 // pred_region
        _
      $region20: #{bottleneck_forward.4} parent=11 // pred_fallthru
        _
    $region12: #{bottleneck_forward.4} parent=5 // pred_fallthru
      _
    %p260 = scmp.lt.s32.totalorder %s15, 2
    // Predicated region
    $region21: #{bottleneck_forward.4} parent=5 // pred_check
      %p261 = pneg %p260
    $region22: #{bottleneck_forward.4} parent=5 // pred_check_branch
      %263 = sbr.rel (%p261) target = $region24
    $region23: #{bottleneck_forward.4} parent=5 // pred_region
      // Predicated region
      $region25: #{bottleneck_forward.4} parent=23 // pred_check
        %p264 = pneg %p35
      $region26: #{bottleneck_forward.4} parent=23 // pred_check_branch
        %266 = sbr.rel (%p264) target = $region28
      $region27: #{bottleneck_forward.4} parent=23 // pred_region
        %s267 = smul.u32 32, %s15
        %p268 = scmp.lt.s32.totalorder %s267, 63
        %s269 = scalar_select %p268, %s267, 63
        %s270 = smul.addr %s269, 4
        %s271 = scalar_lea.vmem %s0, %s270
        %s272 = smul.u32 32, %s15
      $region28: #{bottleneck_forward.4} parent=23 // pred_fallthru
        _
    $region24: #{bottleneck_forward.4} parent=5 // pred_fallthru
      _
    %p273 = scmp.le.s32.totalorder 1, %s15
    %p274 = scmp.lt.s32.totalorder %s15, 3
    %p275 = pnand %p273, %p274
    %p276 = pneg %p275
    // Predicated region
    $region29: #{bottleneck_forward.4} parent=5 // pred_check
      _
    $region30: #{bottleneck_forward.4} parent=5 // pred_check_branch
      %278 = sbr.rel (%p275) target = $region32
    $region31: #{bottleneck_forward.4} parent=5 // pred_region
      %s279 = ssub.s32 %s15, 1
      %s280 = smul.u32 32, %s20
      %p281 = scmp.lt.s32.totalorder %s280, 63
      %s282 = scalar_select %p281, %s280, 63
      %s283 = smul.addr %s282, 4
      %s284 = scalar_lea.vmem %s0, %s283
      %p285 = pneg %p41
      %p286 = pneg %p38
      %p287 = pneg %p62
      %p288 = pneg %p59
      %p289 = pneg %p83
      %p290 = pneg %p80
      %p291 = pneg %p109
      %p292 = pneg %p106
      %s293 = smul.u32 32, %s20
      %p294 = scmp.lt.s32.totalorder %s293, 63
      %s295 = scalar_select %p294, %s293, 63
      %s296 = smul.addr %s295, 8
      %s297 = scalar_lea.vmem %s3, %s296
      %p298 = pneg %p135
      %p299 = pneg %p132
      %s300 = smul.u32 32, %s20
      %p301 = scmp.lt.s32.totalorder %s300, 63
      %s302 = scalar_select %p301, %s300, 63
      %s303 = smul.addr %s302, 8
      %s304 = scalar_lea.vmem %s4, %s303
      %p305 = pneg %p161
      %p306 = pneg %p158
      %p307 = scmp.lt.s32.totalorder %s20, 1
      %s308 = scalar_select %p307, %s20, 1
      %s309 = scalar_lea.vmem %s5, %s308
      %p310 = pneg %p187
      %p311 = pneg %p184
      %p312 = scmp.lt.s32.totalorder %s20, 1
      %s313 = scalar_select %p312, %s20, 1
      %s314 = scalar_lea.vmem %s6, %s313
      %p315 = pneg %p213
      %p316 = pneg %p210
      %p317 = scmp.lt.s32.totalorder %s20, 1
      %s318 = scalar_select %p317, %s20, 1
      %s319 = scalar_lea.vmem %s7, %s318
      %p320 = pneg %p239
      %p321 = pneg %p236
      %p322 = scmp.lt.s32.totalorder %s20, 1
      %s323 = scalar_select %p322, %s20, 1
      %s324 = scalar_lea.vmem %s8, %s323
      %s325 = smul.u32 32, %s20
      %p326 = scmp.lt.s32.totalorder %s325, 63
      %s327 = scalar_select %p326, %s325, 63
      %s328 = smul.addr %s327, 4
      %s329 = scalar_lea.vmem %s0, %s328
      %s330 = smul.u32 32, %s20
      %s331 = smul.u32 32, %s20
      %p332 = scmp.lt.s32.totalorder %s331, 63
      %s333 = scalar_select %p332, %s331, 63
      %s334 = smul.addr %s333, 8
      %s335 = scalar_lea.vmem %s3, %s334
      %s336 = smul.u32 32, %s20
      %s337 = smul.u32 32, %s20
      %p338 = scmp.lt.s32.totalorder %s337, 63
      %s339 = scalar_select %p338, %s337, 63
      %s340 = smul.addr %s339, 8
      %s341 = scalar_lea.vmem %s4, %s340
      %s342 = smul.u32 32, %s20
      %p343 = scmp.lt.s32.totalorder %s20, 1
      %s344 = scalar_select %p343, %s20, 1
      %s345 = scalar_lea.vmem %s5, %s344
      %p346 = scmp.lt.s32.totalorder %s20, 1
      %s347 = scalar_select %p346, %s20, 1
      %s348 = scalar_lea.vmem %s6, %s347
      %p349 = scmp.lt.s32.totalorder %s20, 1
      %s350 = scalar_select %p349, %s20, 1
      %s351 = scalar_lea.vmem %s7, %s350
      %p352 = scmp.lt.s32.totalorder %s20, 1
      %s353 = scalar_select %p352, %s20, 1
      %s354 = scalar_lea.vmem %s8, %s353
      %v356 = vld [vmem:[%s329] sm:$0xf]
      %v357 = vld [vmem:[%s329 + $0x4] sm:$0xf]
      %v358 = vld [vmem:[%s329 + $0x8] sm:$0xf]
      %v359 = vld [vmem:[%s329 + $0xc] sm:$0xf]
      %v360 = vld [vmem:[%s329 + $0x10] sm:$0xf]
      %v361 = vld [vmem:[%s329 + $0x14] sm:$0xf]
      %v362 = vld [vmem:[%s329 + $0x18] sm:$0xf]
      %v363 = vld [vmem:[%s329 + $0x1c] sm:$0xf]
      %v364 = vld [vmem:[%s329 + $0x20] sm:$0xf]
      %v365 = vld [vmem:[%s329 + $0x24] sm:$0xf]
      %v366 = vld [vmem:[%s329 + $0x28] sm:$0xf]
      %v367 = vld [vmem:[%s329 + $0x2c] sm:$0xf]
      %v368 = vld [vmem:[%s329 + $0x30] sm:$0xf]
      %v369 = vld [vmem:[%s329 + $0x34] sm:$0xf]
      %v370 = vld [vmem:[%s329 + $0x38] sm:$0xf]
      %v371 = vld [vmem:[%s329 + $0x3c] sm:$0xf]
      %v372 = vld [vmem:[%s329 + $0x40] sm:$0xf]
      %v373 = vld [vmem:[%s329 + $0x44] sm:$0xf]
      %v374 = vld [vmem:[%s329 + $0x48] sm:$0xf]
      %v375 = vld [vmem:[%s329 + $0x4c] sm:$0xf]
      %v376 = vld [vmem:[%s329 + $0x50] sm:$0xf]
      %v377 = vld [vmem:[%s329 + $0x54] sm:$0xf]
      %v378 = vld [vmem:[%s329 + $0x58] sm:$0xf]
      %v379 = vld [vmem:[%s329 + $0x5c] sm:$0xf]
      %v380 = vld [vmem:[%s329 + $0x60] sm:$0xf]
      %v381 = vld [vmem:[%s329 + $0x64] sm:$0xf]
      %v382 = vld [vmem:[%s329 + $0x68] sm:$0xf]
      %v383 = vld [vmem:[%s329 + $0x6c] sm:$0xf]
      %v384 = vld [vmem:[%s329 + $0x70] sm:$0xf]
      %v385 = vld [vmem:[%s329 + $0x74] sm:$0xf]
      %v386 = vld [vmem:[%s329 + $0x78] sm:$0xf]
      %v387 = vld [vmem:[%s329 + $0x7c] sm:$0xf]
      %v388 = vld [vmem:[%s1] sm:$0xf]
      %v389 = vld [vmem:[%s1 + $0x4] sm:$0xf]
      %v390 = vld [vmem:[%s1 + $0x8] sm:$0xf]
      %v391 = vld [vmem:[%s1 + $0xc] sm:$0xf]
      %v392 = vld [vmem:[%s1 + $0x10] sm:$0xf]
      %v393 = vld [vmem:[%s1 + $0x14] sm:$0xf]
      %v394 = vld [vmem:[%s1 + $0x18] sm:$0xf]
      %v395 = vld [vmem:[%s1 + $0x1c] sm:$0xf]
      %v396 = vld [vmem:[%s1 + $0x20] sm:$0xf]
      %v397 = vld [vmem:[%s1 + $0x24] sm:$0xf]
      %v398 = vld [vmem:[%s1 + $0x28] sm:$0xf]
      %v399 = vld [vmem:[%s1 + $0x2c] sm:$0xf]
      %v400 = vld [vmem:[%s1 + $0x30] sm:$0xf]
      %v401 = vld [vmem:[%s1 + $0x34] sm:$0xf]
      %v402 = vld [vmem:[%s1 + $0x38] sm:$0xf]
      %v403 = vld [vmem:[%s1 + $0x3c] sm:$0xf]
      %v436 = vunpack.c.l.b16 %v356
      %v437 = vunpack.c.l.b16 %v357
      %v438 = vunpack.c.l.b16 %v358
      %v439 = vunpack.c.l.b16 %v359
      %v440 = vunpack.c.l.b16 %v360
      %v441 = vunpack.c.l.b16 %v361
      %v442 = vunpack.c.l.b16 %v362
      %v443 = vunpack.c.l.b16 %v363
      %v444 = vunpack.c.l.b16 %v364
      %v445 = vunpack.c.l.b16 %v365
      %v446 = vunpack.c.l.b16 %v366
      %v447 = vunpack.c.l.b16 %v367
      %v448 = vunpack.c.l.b16 %v368
      %v449 = vunpack.c.l.b16 %v369
      %v450 = vunpack.c.l.b16 %v370
      %v451 = vunpack.c.l.b16 %v371
      %v452 = vunpack.c.l.b16 %v372
      %v453 = vunpack.c.l.b16 %v373
      %v454 = vunpack.c.l.b16 %v374
      %v455 = vunpack.c.l.b16 %v375
      %v456 = vunpack.c.l.b16 %v376
      %v457 = vunpack.c.l.b16 %v377
      %v458 = vunpack.c.l.b16 %v378
      %v459 = vunpack.c.l.b16 %v379
      %v460 = vunpack.c.l.b16 %v380
      %v461 = vunpack.c.l.b16 %v381
      %v462 = vunpack.c.l.b16 %v382
      %v463 = vunpack.c.l.b16 %v383
      %v464 = vunpack.c.l.b16 %v384
      %v465 = vunpack.c.l.b16 %v385
      %v466 = vunpack.c.l.b16 %v386
      %v467 = vunpack.c.l.b16 %v387
      %v468 = vpack.c.b16 %v437, %v436
      %v469 = vpack.c.b16 %v439, %v438
      %v470 = vpack.c.b16 %v441, %v440
      %v471 = vpack.c.b16 %v443, %v442
      %v472 = vpack.c.b16 %v445, %v444
      %v473 = vpack.c.b16 %v447, %v446
      %v474 = vpack.c.b16 %v449, %v448
      %v475 = vpack.c.b16 %v451, %v450
      %v476 = vpack.c.b16 %v453, %v452
      %v477 = vpack.c.b16 %v455, %v454
      %v478 = vpack.c.b16 %v457, %v456
      %v479 = vpack.c.b16 %v459, %v458
      %v480 = vpack.c.b16 %v461, %v460
      %v481 = vpack.c.b16 %v463, %v462
      %v482 = vpack.c.b16 %v465, %v464
      %v483 = vpack.c.b16 %v467, %v466
      %v516 = vunpack.c.l.b16 %v388
      %v517 = vunpack.c.l.b16 %v389
      %v518 = vunpack.c.l.b16 %v390
      %v519 = vunpack.c.l.b16 %v391
      %v520 = vunpack.c.l.b16 %v392
      %v521 = vunpack.c.l.b16 %v393
      %v522 = vunpack.c.l.b16 %v394
      %v523 = vunpack.c.l.b16 %v395
      %v524 = vunpack.c.l.b16 %v396
      %v525 = vunpack.c.l.b16 %v397
      %v526 = vunpack.c.l.b16 %v398
      %v527 = vunpack.c.l.b16 %v399
      %v528 = vunpack.c.l.b16 %v400
      %v529 = vunpack.c.l.b16 %v401
      %v530 = vunpack.c.l.b16 %v402
      %v531 = vunpack.c.l.b16 %v403
      %v532 = vpack.c.b16 %v517, %v516
      %v533 = vpack.c.b16 %v519, %v518
      %v534 = vpack.c.b16 %v521, %v520
      %v535 = vpack.c.b16 %v523, %v522
      %v536 = vpack.c.b16 %v525, %v524
      %v537 = vpack.c.b16 %v527, %v526
      %v538 = vpack.c.b16 %v529, %v528
      %v539 = vpack.c.b16 %v531, %v530
      %548 = vmatprep.subr.bf16.mxu0 0
      %549 = vmatpush1.bf16.msra.mxu0 %v532
      %550 = vmatprep.subr.bf16.mxu0 0
      %551 = vmatpush1.bf16.msra.mxu0 %v533
      %552 = vmatprep.subr.bf16.mxu0 0
      %553 = vmatpush1.bf16.msra.mxu0 %v534
      %554 = vmatprep.subr.bf16.mxu0 0
      %555 = vmatpush1.bf16.msra.mxu0 %v535
      %556 = vmatprep.subr.bf16.mxu0 0
      %557 = vmatpush1.bf16.msra.mxu0 %v536
      %558 = vmatprep.subr.bf16.mxu0 0
      %559 = vmatpush1.bf16.msra.mxu0 %v537
      %560 = vmatprep.subr.bf16.mxu0 0
      %561 = vmatpush1.bf16.msra.mxu0 %v538
      %562 = vmatprep.subr.bf16.mxu0 0
      %563 = vmatpush1.bf16.msra.mxu0 %v539
      %564 = vmatprep.subr.bf16.mxu0 0
      %565 = vmatpush1.bf16.msra.mxu0 0
      %566 = vmatprep.subr.bf16.mxu0 0
      %567 = vmatpush1.bf16.msra.mxu0 0
      %568 = vmatprep.subr.bf16.mxu0 0
      %569 = vmatpush1.bf16.msra.mxu0 0
      %570 = vmatprep.subr.bf16.mxu0 0
      %571 = vmatpush1.bf16.msra.mxu0 0
      %572 = vmatprep.subr.bf16.mxu0 0
      %573 = vmatpush1.bf16.msra.mxu0 0
      %574 = vmatprep.subr.bf16.mxu0 0
      %575 = vmatpush1.bf16.msra.mxu0 0
      %576 = vmatprep.subr.bf16.mxu0 0
      %577 = vmatpush1.bf16.msra.mxu0 0
      %578 = vmatprep.subr.bf16.mxu0 0
      %579 = vmatpush1.bf16.msra.mxu0 0
      %580 = vmatprep.mubr.bf16.mxu0 0
      %581 = vmatmul.mubr.bf16.gmra.mrb[0].mxu0 %v468
      %v582 = vpop.f32.mrb[0].mxu0
      %v583 = vadd.f32 0.0, %v582
      %v584 = vpop.f32.mrb[0].mxu0
      %v585 = vpop.f32.mrb[0].mxu0
      %v586 = vadd.f32 0.0, %v585
      %v587 = vpop.f32.mrb[0].mxu0
      %588 = vmatprep.mubr.bf16.mxu0 0
      %589 = vmatmul.mubr.bf16.gmra.mrb[0].mxu0 %v469
      %v590 = vpop.f32.mrb[0].mxu0
      %v591 = vadd.f32 0.0, %v590
      %v592 = vpop.f32.mrb[0].mxu0
      %v593 = vpop.f32.mrb[0].mxu0
      %v594 = vadd.f32 0.0, %v593
      %v595 = vpop.f32.mrb[0].mxu0
      %596 = vmatprep.mubr.bf16.mxu0 0
      %597 = vmatmul.mubr.bf16.gmra.mrb[0].mxu0 %v470
      %v598 = vpop.f32.mrb[0].mxu0
      %v599 = vadd.f32 0.0, %v598
      %v600 = vpop.f32.mrb[0].mxu0
      %v601 = vpop.f32.mrb[0].mxu0
      %v602 = vadd.f32 0.0, %v601
      %v603 = vpop.f32.mrb[0].mxu0
      %604 = vmatprep.mubr.bf16.mxu0 0
      %605 = vmatmul.mubr.bf16.gmra.mrb[0].mxu0 %v471
      %v606 = vpop.f32.mrb[0].mxu0
      %v607 = vadd.f32 0.0, %v606
      %v608 = vpop.f32.mrb[0].mxu0
      %v609 = vpop.f32.mrb[0].mxu0
      %v610 = vadd.f32 0.0, %v609
      %v611 = vpop.f32.mrb[0].mxu0
      %612 = vmatprep.mubr.bf16.mxu0 0
      %613 = vmatmul.mubr.bf16.gmra.mrb[0].mxu0 %v472
      %v614 = vpop.f32.mrb[0].mxu0
      %v615 = vadd.f32 0.0, %v614
      %v616 = vpop.f32.mrb[0].mxu0
      %v617 = vpop.f32.mrb[0].mxu0
      %v618 = vadd.f32 0.0, %v617
      %v619 = vpop.f32.mrb[0].mxu0
      %620 = vmatprep.mubr.bf16.mxu0 0
      %621 = vmatmul.mubr.bf16.gmra.mrb[0].mxu0 %v473
      %v622 = vpop.f32.mrb[0].mxu0
      %v623 = vadd.f32 0.0, %v622
      %v624 = vpop.f32.mrb[0].mxu0
      %v625 = vpop.f32.mrb[0].mxu0
      %v626 = vadd.f32 0.0, %v625
      %v627 = vpop.f32.mrb[0].mxu0
      %628 = vmatprep.mubr.bf16.mxu0 0
      %629 = vmatmul.mubr.bf16.gmra.mrb[0].mxu0 %v474
      %v630 = vpop.f32.mrb[0].mxu0
      %v631 = vadd.f32 0.0, %v630
      %v632 = vpop.f32.mrb[0].mxu0
      %v633 = vpop.f32.mrb[0].mxu0
      %v634 = vadd.f32 0.0, %v633
      %v635 = vpop.f32.mrb[0].mxu0
      %636 = vmatprep.mubr.bf16.mxu0 0
      %637 = vmatmul.mubr.bf16.gmra.mrb[0].mxu0 %v475
      %v638 = vpop.f32.mrb[0].mxu0
      %v639 = vadd.f32 0.0, %v638
      %v640 = vpop.f32.mrb[0].mxu0
      %v641 = vpop.f32.mrb[0].mxu0
      %v642 = vadd.f32 0.0, %v641
      %v643 = vpop.f32.mrb[0].mxu0
      %644 = vmatprep.mubr.bf16.mxu0 0
      %645 = vmatmul.mubr.bf16.gmra.mrb[0].mxu0 %v476
      %v646 = vpop.f32.mrb[0].mxu0
      %v647 = vadd.f32 0.0, %v646
      %v648 = vpop.f32.mrb[0].mxu0
      %v649 = vpop.f32.mrb[0].mxu0
      %v650 = vadd.f32 0.0, %v649
      %v651 = vpop.f32.mrb[0].mxu0
      %652 = vmatprep.mubr.bf16.mxu0 0
      %653 = vmatmul.mubr.bf16.gmra.mrb[0].mxu0 %v477
      %v654 = vpop.f32.mrb[0].mxu0
      %v655 = vadd.f32 0.0, %v654
      %v656 = vpop.f32.mrb[0].mxu0
      %v657 = vpop.f32.mrb[0].mxu0
      %v658 = vadd.f32 0.0, %v657
      %v659 = vpop.f32.mrb[0].mxu0
      %660 = vmatprep.mubr.bf16.mxu0 0
      %661 = vmatmul.mubr.bf16.gmra.mrb[0].mxu0 %v478
      %v662 = vpop.f32.mrb[0].mxu0
      %v663 = vadd.f32 0.0, %v662
      %v664 = vpop.f32.mrb[0].mxu0
      %v665 = vpop.f32.mrb[0].mxu0
      %v666 = vadd.f32 0.0, %v665
      %v667 = vpop.f32.mrb[0].mxu0
      %668 = vmatprep.mubr.bf16.mxu0 0
      %669 = vmatmul.mubr.bf16.gmra.mrb[0].mxu0 %v479
      %v670 = vpop.f32.mrb[0].mxu0
      %v671 = vadd.f32 0.0, %v670
      %v672 = vpop.f32.mrb[0].mxu0
      %v673 = vpop.f32.mrb[0].mxu0
      %v674 = vadd.f32 0.0, %v673
      %v675 = vpop.f32.mrb[0].mxu0
      %676 = vmatprep.mubr.bf16.mxu0 0
      %677 = vmatmul.mubr.bf16.gmra.mrb[0].mxu0 %v480
      %v678 = vpop.f32.mrb[0].mxu0
      %v679 = vadd.f32 0.0, %v678
      %v680 = vpop.f32.mrb[0].mxu0
      %v681 = vpop.f32.mrb[0].mxu0
      %v682 = vadd.f32 0.0, %v681
      %v683 = vpop.f32.mrb[0].mxu0
      %684 = vmatprep.mubr.bf16.mxu0 0
      %685 = vmatmul.mubr.bf16.gmra.mrb[0].mxu0 %v481
      %v686 = vpop.f32.mrb[0].mxu0
      %v687 = vadd.f32 0.0, %v686
      %v688 = vpop.f32.mrb[0].mxu0
      %v689 = vpop.f32.mrb[0].mxu0
      %v690 = vadd.f32 0.0, %v689
      %v691 = vpop.f32.mrb[0].mxu0
      %692 = vmatprep.mubr.bf16.mxu0 0
      %693 = vmatmul.mubr.bf16.gmra.mrb[0].mxu0 %v482
      %v694 = vpop.f32.mrb[0].mxu0
      %v695 = vadd.f32 0.0, %v694
      %v696 = vpop.f32.mrb[0].mxu0
      %v697 = vpop.f32.mrb[0].mxu0
      %v698 = vadd.f32 0.0, %v697
      %v699 = vpop.f32.mrb[0].mxu0
      %700 = vmatprep.mubr.bf16.mxu0 0
      %701 = vmatmul.mubr.bf16.gmra.mrb[0].mxu0 %v483
      %v702 = vpop.f32.mrb[0].mxu0
      %v703 = vadd.f32 0.0, %v702
      %v704 = vpop.f32.mrb[0].mxu0
      %v705 = vpop.f32.mrb[0].mxu0
      %v706 = vadd.f32 0.0, %v705
      %v707 = vpop.f32.mrb[0].mxu0
      %708 = vdwg.mxu0
      %v709 = vld [vmem:[%s2] sm:$0xf]
      %v710 = vld [vmem:[%s2 + $0x4] sm:$0xf]
      %v711 = vld [vmem:[%s2 + $0x8] sm:$0xf]
      %v712 = vld [vmem:[%s2 + $0xc] sm:$0xf]
      %v713 = vld [vmem:[%s2 + $0x10] sm:$0xf]
      %v714 = vld [vmem:[%s2 + $0x14] sm:$0xf]
      %v715 = vld [vmem:[%s2 + $0x18] sm:$0xf]
      %v716 = vld [vmem:[%s2 + $0x1c] sm:$0xf]
      %v717 = vld [vmem:[%s2 + $0x20] sm:$0xf]
      %v718 = vld [vmem:[%s2 + $0x24] sm:$0xf]
      %v719 = vld [vmem:[%s2 + $0x28] sm:$0xf]
      %v720 = vld [vmem:[%s2 + $0x2c] sm:$0xf]
      %v721 = vld [vmem:[%s2 + $0x30] sm:$0xf]
      %v722 = vld [vmem:[%s2 + $0x34] sm:$0xf]
      %v723 = vld [vmem:[%s2 + $0x38] sm:$0xf]
      %v724 = vld [vmem:[%s2 + $0x3c] sm:$0xf]
      %v741 = vunpack.c.l.b16 %v709
      %v742 = vunpack.c.l.b16 %v710
      %v743 = vunpack.c.l.b16 %v711
      %v744 = vunpack.c.l.b16 %v712
      %v745 = vunpack.c.l.b16 %v713
      %v746 = vunpack.c.l.b16 %v714
      %v747 = vunpack.c.l.b16 %v715
      %v748 = vunpack.c.l.b16 %v716
      %v749 = vunpack.c.l.b16 %v717
      %v750 = vunpack.c.l.b16 %v718
      %v751 = vunpack.c.l.b16 %v719
      %v752 = vunpack.c.l.b16 %v720
      %v753 = vunpack.c.l.b16 %v721
      %v754 = vunpack.c.l.b16 %v722
      %v755 = vunpack.c.l.b16 %v723
      %v756 = vunpack.c.l.b16 %v724
      %v757 = vpack.c.b16 %v742, %v741
      %v758 = vpack.c.b16 %v744, %v743
      %v759 = vpack.c.b16 %v746, %v745
      %v760 = vpack.c.b16 %v748, %v747
      %v761 = vpack.c.b16 %v750, %v749
      %v762 = vpack.c.b16 %v752, %v751
      %v763 = vpack.c.b16 %v754, %v753
      %v764 = vpack.c.b16 %v756, %v755
      %773 = vmatprep.subr.bf16.mxu0 0
      %774 = vmatpush1.bf16.msra.mxu0 %v757
      %775 = vmatprep.subr.bf16.mxu0 0
      %776 = vmatpush1.bf16.msra.mxu0 %v758
      %777 = vmatprep.subr.bf16.mxu0 0
      %778 = vmatpush1.bf16.msra.mxu0 %v759
      %779 = vmatprep.subr.bf16.mxu0 0
      %780 = vmatpush1.bf16.msra.mxu0 %v760
      %781 = vmatprep.subr.bf16.mxu0 0
      %782 = vmatpush1.bf16.msra.mxu0 %v761
      %783 = vmatprep.subr.bf16.mxu0 0
      %784 = vmatpush1.bf16.msra.mxu0 %v762
      %785 = vmatprep.subr.bf16.mxu0 0
      %786 = vmatpush1.bf16.msra.mxu0 %v763
      %787 = vmatprep.subr.bf16.mxu0 0
      %788 = vmatpush1.bf16.msra.mxu0 %v764
      %789 = vmatprep.subr.bf16.mxu0 0
      %790 = vmatpush1.bf16.msra.mxu0 0
      %791 = vmatprep.subr.bf16.mxu0 0
      %792 = vmatpush1.bf16.msra.mxu0 0
      %793 = vmatprep.subr.bf16.mxu0 0
      %794 = vmatpush1.bf16.msra.mxu0 0
      %795 = vmatprep.subr.bf16.mxu0 0
      %796 = vmatpush1.bf16.msra.mxu0 0
      %797 = vmatprep.subr.bf16.mxu0 0
      %798 = vmatpush1.bf16.msra.mxu0 0
      %799 = vmatprep.subr.bf16.mxu0 0
      %800 = vmatpush1.bf16.msra.mxu0 0
      %801 = vmatprep.subr.bf16.mxu0 0
      %802 = vmatpush1.bf16.msra.mxu0 0
      %803 = vmatprep.subr.bf16.mxu0 0
      %804 = vmatpush1.bf16.msra.mxu0 0
      %805 = vmatprep.mubr.bf16.mxu0 0
      %806 = vmatmul.mubr.bf16.gmra.mrb[0].mxu0 %v468
      %v807 = vpop.f32.mrb[0].mxu0
      %v808 = vadd.f32 0.0, %v807
      %v809 = vpop.f32.mrb[0].mxu0
      %v810 = vpop.f32.mrb[0].mxu0
      %v811 = vadd.f32 0.0, %v810
      %v812 = vpop.f32.mrb[0].mxu0
      %813 = vmatprep.mubr.bf16.mxu0 0
      %814 = vmatmul.mubr.bf16.gmra.mrb[0].mxu0 %v469
      %v815 = vpop.f32.mrb[0].mxu0
      %v816 = vadd.f32 0.0, %v815
      %v817 = vpop.f32.mrb[0].mxu0
      %v818 = vpop.f32.mrb[0].mxu0
      %v819 = vadd.f32 0.0, %v818
      %v820 = vpop.f32.mrb[0].mxu0
      %821 = vmatprep.mubr.bf16.mxu0 0
      %822 = vmatmul.mubr.bf16.gmra.mrb[0].mxu0 %v470
      %v823 = vpop.f32.mrb[0].mxu0
      %v824 = vadd.f32 0.0, %v823
      %v825 = vpop.f32.mrb[0].mxu0
      %v826 = vpop.f32.mrb[0].mxu0
      %v827 = vadd.f32 0.0, %v826
      %v828 = vpop.f32.mrb[0].mxu0
      %829 = vmatprep.mubr.bf16.mxu0 0
      %830 = vmatmul.mubr.bf16.gmra.mrb[0].mxu0 %v471
      %v831 = vpop.f32.mrb[0].mxu0
      %v832 = vadd.f32 0.0, %v831
      %v833 = vpop.f32.mrb[0].mxu0
      %v834 = vpop.f32.mrb[0].mxu0
      %v835 = vadd.f32 0.0, %v834
      %v836 = vpop.f32.mrb[0].mxu0
      %837 = vmatprep.mubr.bf16.mxu0 0
      %838 = vmatmul.mubr.bf16.gmra.mrb[0].mxu0 %v472
      %v839 = vpop.f32.mrb[0].mxu0
      %v840 = vadd.f32 0.0, %v839
      %v841 = vpop.f32.mrb[0].mxu0
      %v842 = vpop.f32.mrb[0].mxu0
      %v843 = vadd.f32 0.0, %v842
      %v844 = vpop.f32.mrb[0].mxu0
      %845 = vmatprep.mubr.bf16.mxu0 0
      %846 = vmatmul.mubr.bf16.gmra.mrb[0].mxu0 %v473
      %v847 = vpop.f32.mrb[0].mxu0
      %v848 = vadd.f32 0.0, %v847
      %v849 = vpop.f32.mrb[0].mxu0
      %v850 = vpop.f32.mrb[0].mxu0
      %v851 = vadd.f32 0.0, %v850
      %v852 = vpop.f32.mrb[0].mxu0
      %853 = vmatprep.mubr.bf16.mxu0 0
      %854 = vmatmul.mubr.bf16.gmra.mrb[0].mxu0 %v474
      %v855 = vpop.f32.mrb[0].mxu0
      %v856 = vadd.f32 0.0, %v855
      %v857 = vpop.f32.mrb[0].mxu0
      %v858 = vpop.f32.mrb[0].mxu0
      %v859 = vadd.f32 0.0, %v858
      %v860 = vpop.f32.mrb[0].mxu0
      %861 = vmatprep.mubr.bf16.mxu0 0
      %862 = vmatmul.mubr.bf16.gmra.mrb[0].mxu0 %v475
      %v863 = vpop.f32.mrb[0].mxu0
      %v864 = vadd.f32 0.0, %v863
      %v865 = vpop.f32.mrb[0].mxu0
      %v866 = vpop.f32.mrb[0].mxu0
      %v867 = vadd.f32 0.0, %v866
      %v868 = vpop.f32.mrb[0].mxu0
      %869 = vmatprep.mubr.bf16.mxu0 0
      %870 = vmatmul.mubr.bf16.gmra.mrb[0].mxu0 %v476
      %v871 = vpop.f32.mrb[0].mxu0
      %v872 = vadd.f32 0.0, %v871
      %v873 = vpop.f32.mrb[0].mxu0
      %v874 = vpop.f32.mrb[0].mxu0
      %v875 = vadd.f32 0.0, %v874
      %v876 = vpop.f32.mrb[0].mxu0
      %877 = vmatprep.mubr.bf16.mxu0 0
      %878 = vmatmul.mubr.bf16.gmra.mrb[0].mxu0 %v477
      %v879 = vpop.f32.mrb[0].mxu0
      %v880 = vadd.f32 0.0, %v879
      %v881 = vpop.f32.mrb[0].mxu0
      %v882 = vpop.f32.mrb[0].mxu0
      %v883 = vadd.f32 0.0, %v882
      %v884 = vpop.f32.mrb[0].mxu0
      %885 = vmatprep.mubr.bf16.mxu0 0
      %886 = vmatmul.mubr.bf16.gmra.mrb[0].mxu0 %v478
      %v887 = vpop.f32.mrb[0].mxu0
      %v888 = vadd.f32 0.0, %v887
      %v889 = vpop.f32.mrb[0].mxu0
      %v890 = vpop.f32.mrb[0].mxu0
      %v891 = vadd.f32 0.0, %v890
      %v892 = vpop.f32.mrb[0].mxu0
      %893 = vmatprep.mubr.bf16.mxu0 0
      %894 = vmatmul.mubr.bf16.gmra.mrb[0].mxu0 %v479
      %v895 = vpop.f32.mrb[0].mxu0
      %v896 = vadd.f32 0.0, %v895
      %v897 = vpop.f32.mrb[0].mxu0
      %v898 = vpop.f32.mrb[0].mxu0
      %v899 = vadd.f32 0.0, %v898
      %v900 = vpop.f32.mrb[0].mxu0
      %901 = vmatprep.mubr.bf16.mxu0 0
      %902 = vmatmul.mubr.bf16.gmra.mrb[0].mxu0 %v480
      %v903 = vpop.f32.mrb[0].mxu0
      %v904 = vadd.f32 0.0, %v903
      %v905 = vpop.f32.mrb[0].mxu0
      %v906 = vpop.f32.mrb[0].mxu0
      %v907 = vadd.f32 0.0, %v906
      %v908 = vpop.f32.mrb[0].mxu0
      %909 = vmatprep.mubr.bf16.mxu0 0
      %910 = vmatmul.mubr.bf16.gmra.mrb[0].mxu0 %v481
      %v911 = vpop.f32.mrb[0].mxu0
      %v912 = vadd.f32 0.0, %v911
      %v913 = vpop.f32.mrb[0].mxu0
      %v914 = vpop.f32.mrb[0].mxu0
      %v915 = vadd.f32 0.0, %v914
      %v916 = vpop.f32.mrb[0].mxu0
      %917 = vmatprep.mubr.bf16.mxu0 0
      %918 = vmatmul.mubr.bf16.gmra.mrb[0].mxu0 %v482
      %v919 = vpop.f32.mrb[0].mxu0
      %v920 = vadd.f32 0.0, %v919
      %v921 = vpop.f32.mrb[0].mxu0
      %v922 = vpop.f32.mrb[0].mxu0
      %v923 = vadd.f32 0.0, %v922
      %v924 = vpop.f32.mrb[0].mxu0
      %925 = vmatprep.mubr.bf16.mxu0 0
      %926 = vmatmul.mubr.bf16.gmra.mrb[0].mxu0 %v483
      %v927 = vpop.f32.mrb[0].mxu0
      %v928 = vadd.f32 0.0, %v927
      %v929 = vpop.f32.mrb[0].mxu0
      %v930 = vpop.f32.mrb[0].mxu0
      %v931 = vadd.f32 0.0, %v930
      %v932 = vpop.f32.mrb[0].mxu0
      %933 = vdwg.mxu0
      %934 = vst [vmem:[%s335] sm:$0xff] %v583
      %935 = vst [vmem:[%s335 + $0x8] sm:$0xff] %v586
      %936 = vst [vmem:[%s335 + $0x10] sm:$0xff] %v591
      %937 = vst [vmem:[%s335 + $0x18] sm:$0xff] %v594
      %938 = vst [vmem:[%s335 + $0x20] sm:$0xff] %v599
      %939 = vst [vmem:[%s335 + $0x28] sm:$0xff] %v602
      %940 = vst [vmem:[%s335 + $0x30] sm:$0xff] %v607
      %941 = vst [vmem:[%s335 + $0x38] sm:$0xff] %v610
      %942 = vst [vmem:[%s335 + $0x40] sm:$0xff] %v615
      %943 = vst [vmem:[%s335 + $0x48] sm:$0xff] %v618
      %944 = vst [vmem:[%s335 + $0x50] sm:$0xff] %v623
      %945 = vst [vmem:[%s335 + $0x58] sm:$0xff] %v626
      %946 = vst [vmem:[%s335 + $0x60] sm:$0xff] %v631
      %947 = vst [vmem:[%s335 + $0x68] sm:$0xff] %v634
      %948 = vst [vmem:[%s335 + $0x70] sm:$0xff] %v639
      %949 = vst [vmem:[%s335 + $0x78] sm:$0xff] %v642
      %950 = vst [vmem:[%s335 + $0x80] sm:$0xff] %v647
      %951 = vst [vmem:[%s335 + $0x88] sm:$0xff] %v650
      %952 = vst [vmem:[%s335 + $0x90] sm:$0xff] %v655
      %953 = vst [vmem:[%s335 + $0x98] sm:$0xff] %v658
      %954 = vst [vmem:[%s335 + $0xa0] sm:$0xff] %v663
      %955 = vst [vmem:[%s335 + $0xa8] sm:$0xff] %v666
      %956 = vst [vmem:[%s335 + $0xb0] sm:$0xff] %v671
      %957 = vst [vmem:[%s335 + $0xb8] sm:$0xff] %v674
      %958 = vst [vmem:[%s335 + $0xc0] sm:$0xff] %v679
      %959 = vst [vmem:[%s335 + $0xc8] sm:$0xff] %v682
      %960 = vst [vmem:[%s335 + $0xd0] sm:$0xff] %v687
      %961 = vst [vmem:[%s335 + $0xd8] sm:$0xff] %v690
      %962 = vst [vmem:[%s335 + $0xe0] sm:$0xff] %v695
      %963 = vst [vmem:[%s335 + $0xe8] sm:$0xff] %v698
      %964 = vst [vmem:[%s335 + $0xf0] sm:$0xff] %v703
      %965 = vst [vmem:[%s335 + $0xf8] sm:$0xff] %v706
      %v966 = vadd.f32 %v583, %v586
      %v967 = vadd.f32 %v966, %v591
      %v968 = vadd.f32 %v967, %v594
      %v969 = vadd.f32 %v968, %v599
      %v970 = vadd.f32 %v969, %v602
      %v971 = vadd.f32 %v970, %v607
      %v972 = vadd.f32 %v971, %v610
      %v973 = vadd.f32 %v972, %v615
      %v974 = vadd.f32 %v973, %v618
      %v975 = vadd.f32 %v974, %v623
      %v976 = vadd.f32 %v975, %v626
      %v977 = vadd.f32 %v976, %v631
      %v978 = vadd.f32 %v977, %v634
      %v979 = vadd.f32 %v978, %v639
      %v980 = vadd.f32 %v979, %v642
      %v981 = vadd.f32 %v980, %v647
      %v982 = vadd.f32 %v981, %v650
      %v983 = vadd.f32 %v982, %v655
      %v984 = vadd.f32 %v983, %v658
      %v985 = vadd.f32 %v984, %v663
      %v986 = vadd.f32 %v985, %v666
      %v987 = vadd.f32 %v986, %v671
      %v988 = vadd.f32 %v987, %v674
      %v989 = vadd.f32 %v988, %v679
      %v990 = vadd.f32 %v989, %v682
      %v991 = vadd.f32 %v990, %v687
      %v992 = vadd.f32 %v991, %v690
      %v993 = vadd.f32 %v992, %v695
      %v994 = vadd.f32 %v993, %v698
      %v995 = vadd.f32 %v994, %v703
      %v996 = vadd.f32 %v995, %v706
      %v997 = vrot.slane %v996, 4
      %v998 = vadd.f32 %v996, %v997
      %v999 = vrot.slane %v998, 2
      %v1000 = vadd.f32 %v998, %v999
      %v1001 = vrot.slane %v1000, 1
      %v1002 = vadd.f32 %v1000, %v1001
      %1003 = vst [vmem:[%s345] sm:$0x1] %v1002
      %v1004 = vmul.f32 %v583, %v583
      %v1005 = vmul.f32 %v586, %v586
      %v1006 = vmul.f32 %v591, %v591
      %v1007 = vmul.f32 %v594, %v594
      %v1008 = vmul.f32 %v599, %v599
      %v1009 = vmul.f32 %v602, %v602
      %v1010 = vmul.f32 %v607, %v607
      %v1011 = vmul.f32 %v610, %v610
      %v1012 = vmul.f32 %v615, %v615
      %v1013 = vmul.f32 %v618, %v618
      %v1014 = vmul.f32 %v623, %v623
      %v1015 = vmul.f32 %v626, %v626
      %v1016 = vmul.f32 %v631, %v631
      %v1017 = vmul.f32 %v634, %v634
      %v1018 = vmul.f32 %v639, %v639
      %v1019 = vmul.f32 %v642, %v642
      %v1020 = vmul.f32 %v647, %v647
      %v1021 = vmul.f32 %v650, %v650
      %v1022 = vmul.f32 %v655, %v655
      %v1023 = vmul.f32 %v658, %v658
      %v1024 = vmul.f32 %v663, %v663
      %v1025 = vmul.f32 %v666, %v666
      %v1026 = vmul.f32 %v671, %v671
      %v1027 = vmul.f32 %v674, %v674
      %v1028 = vmul.f32 %v679, %v679
      %v1029 = vmul.f32 %v682, %v682
      %v1030 = vmul.f32 %v687, %v687
      %v1031 = vmul.f32 %v690, %v690
      %v1032 = vmul.f32 %v695, %v695
      %v1033 = vmul.f32 %v698, %v698
      %v1034 = vmul.f32 %v703, %v703
      %v1035 = vmul.f32 %v706, %v706
      %v1036 = vadd.f32 %v1004, %v1005
      %v1037 = vadd.f32 %v1036, %v1006
      %v1038 = vadd.f32 %v1037, %v1007
      %v1039 = vadd.f32 %v1038, %v1008
      %v1040 = vadd.f32 %v1039, %v1009
      %v1041 = vadd.f32 %v1040, %v1010
      %v1042 = vadd.f32 %v1041, %v1011
      %v1043 = vadd.f32 %v1042, %v1012
      %v1044 = vadd.f32 %v1043, %v1013
      %v1045 = vadd.f32 %v1044, %v1014
      %v1046 = vadd.f32 %v1045, %v1015
      %v1047 = vadd.f32 %v1046, %v1016
      %v1048 = vadd.f32 %v1047, %v1017
      %v1049 = vadd.f32 %v1048, %v1018
      %v1050 = vadd.f32 %v1049, %v1019
      %v1051 = vadd.f32 %v1050, %v1020
      %v1052 = vadd.f32 %v1051, %v1021
      %v1053 = vadd.f32 %v1052, %v1022
      %v1054 = vadd.f32 %v1053, %v1023
      %v1055 = vadd.f32 %v1054, %v1024
      %v1056 = vadd.f32 %v1055, %v1025
      %v1057 = vadd.f32 %v1056, %v1026
      %v1058 = vadd.f32 %v1057, %v1027
      %v1059 = vadd.f32 %v1058, %v1028
      %v1060 = vadd.f32 %v1059, %v1029
      %v1061 = vadd.f32 %v1060, %v1030
      %v1062 = vadd.f32 %v1061, %v1031
      %v1063 = vadd.f32 %v1062, %v1032
      %v1064 = vadd.f32 %v1063, %v1033
      %v1065 = vadd.f32 %v1064, %v1034
      %v1066 = vadd.f32 %v1065, %v1035
      %v1067 = vrot.slane %v1066, 4
      %v1068 = vadd.f32 %v1066, %v1067
      %v1069 = vrot.slane %v1068, 2
      %v1070 = vadd.f32 %v1068, %v1069
      %v1071 = vrot.slane %v1070, 1
      %v1072 = vadd.f32 %v1070, %v1071
      %1073 = vst [vmem:[%s348] sm:$0x1] %v1072
      %1074 = vst [vmem:[%s341] sm:$0xff] %v808
      %1075 = vst [vmem:[%s341 + $0x8] sm:$0xff] %v811
      %1076 = vst [vmem:[%s341 + $0x10] sm:$0xff] %v816
      %1077 = vst [vmem:[%s341 + $0x18] sm:$0xff] %v819
      %1078 = vst [vmem:[%s341 + $0x20] sm:$0xff] %v824
      %1079 = vst [vmem:[%s341 + $0x28] sm:$0xff] %v827
      %1080 = vst [vmem:[%s341 + $0x30] sm:$0xff] %v832
      %1081 = vst [vmem:[%s341 + $0x38] sm:$0xff] %v835
      %1082 = vst [vmem:[%s341 + $0x40] sm:$0xff] %v840
      %1083 = vst [vmem:[%s341 + $0x48] sm:$0xff] %v843
      %1084 = vst [vmem:[%s341 + $0x50] sm:$0xff] %v848
      %1085 = vst [vmem:[%s341 + $0x58] sm:$0xff] %v851
      %1086 = vst [vmem:[%s341 + $0x60] sm:$0xff] %v856
      %1087 = vst [vmem:[%s341 + $0x68] sm:$0xff] %v859
      %1088 = vst [vmem:[%s341 + $0x70] sm:$0xff] %v864
      %1089 = vst [vmem:[%s341 + $0x78] sm:$0xff] %v867
      %1090 = vst [vmem:[%s341 + $0x80] sm:$0xff] %v872
      %1091 = vst [vmem:[%s341 + $0x88] sm:$0xff] %v875
      %1092 = vst [vmem:[%s341 + $0x90] sm:$0xff] %v880
      %1093 = vst [vmem:[%s341 + $0x98] sm:$0xff] %v883
      %1094 = vst [vmem:[%s341 + $0xa0] sm:$0xff] %v888
      %1095 = vst [vmem:[%s341 + $0xa8] sm:$0xff] %v891
      %1096 = vst [vmem:[%s341 + $0xb0] sm:$0xff] %v896
      %1097 = vst [vmem:[%s341 + $0xb8] sm:$0xff] %v899
      %1098 = vst [vmem:[%s341 + $0xc0] sm:$0xff] %v904
      %1099 = vst [vmem:[%s341 + $0xc8] sm:$0xff] %v907
      %1100 = vst [vmem:[%s341 + $0xd0] sm:$0xff] %v912
      %1101 = vst [vmem:[%s341 + $0xd8] sm:$0xff] %v915
      %1102 = vst [vmem:[%s341 + $0xe0] sm:$0xff] %v920
      %1103 = vst [vmem:[%s341 + $0xe8] sm:$0xff] %v923
      %1104 = vst [vmem:[%s341 + $0xf0] sm:$0xff] %v928
      %1105 = vst [vmem:[%s341 + $0xf8] sm:$0xff] %v931
      %v1106 = vadd.f32 %v808, %v811
      %v1107 = vadd.f32 %v1106, %v816
      %v1108 = vadd.f32 %v1107, %v819
      %v1109 = vadd.f32 %v1108, %v824
      %v1110 = vadd.f32 %v1109, %v827
      %v1111 = vadd.f32 %v1110, %v832
      %v1112 = vadd.f32 %v1111, %v835
      %v1113 = vadd.f32 %v1112, %v840
      %v1114 = vadd.f32 %v1113, %v843
      %v1115 = vadd.f32 %v1114, %v848
      %v1116 = vadd.f32 %v1115, %v851
      %v1117 = vadd.f32 %v1116, %v856
      %v1118 = vadd.f32 %v1117, %v859
      %v1119 = vadd.f32 %v1118, %v864
      %v1120 = vadd.f32 %v1119, %v867
      %v1121 = vadd.f32 %v1120, %v872
      %v1122 = vadd.f32 %v1121, %v875
      %v1123 = vadd.f32 %v1122, %v880
      %v1124 = vadd.f32 %v1123, %v883
      %v1125 = vadd.f32 %v1124, %v888
      %v1126 = vadd.f32 %v1125, %v891
      %v1127 = vadd.f32 %v1126, %v896
      %v1128 = vadd.f32 %v1127, %v899
      %v1129 = vadd.f32 %v1128, %v904
      %v1130 = vadd.f32 %v1129, %v907
      %v1131 = vadd.f32 %v1130, %v912
      %v1132 = vadd.f32 %v1131, %v915
      %v1133 = vadd.f32 %v1132, %v920
      %v1134 = vadd.f32 %v1133, %v923
      %v1135 = vadd.f32 %v1134, %v928
      %v1136 = vadd.f32 %v1135, %v931
      %v1137 = vrot.slane %v1136, 4
      %v1138 = vadd.f32 %v1136, %v1137
      %v1139 = vrot.slane %v1138, 2
      %v1140 = vadd.f32 %v1138, %v1139
      %v1141 = vrot.slane %v1140, 1
      %v1142 = vadd.f32 %v1140, %v1141
      %1143 = vst [vmem:[%s351] sm:$0x1] %v1142
      %v1144 = vmul.f32 %v808, %v808
      %v1145 = vmul.f32 %v811, %v811
      %v1146 = vmul.f32 %v816, %v816
      %v1147 = vmul.f32 %v819, %v819
      %v1148 = vmul.f32 %v824, %v824
      %v1149 = vmul.f32 %v827, %v827
      %v1150 = vmul.f32 %v832, %v832
      %v1151 = vmul.f32 %v835, %v835
      %v1152 = vmul.f32 %v840, %v840
      %v1153 = vmul.f32 %v843, %v843
      %v1154 = vmul.f32 %v848, %v848
      %v1155 = vmul.f32 %v851, %v851
      %v1156 = vmul.f32 %v856, %v856
      %v1157 = vmul.f32 %v859, %v859
      %v1158 = vmul.f32 %v864, %v864
      %v1159 = vmul.f32 %v867, %v867
      %v1160 = vmul.f32 %v872, %v872
      %v1161 = vmul.f32 %v875, %v875
      %v1162 = vmul.f32 %v880, %v880
      %v1163 = vmul.f32 %v883, %v883
      %v1164 = vmul.f32 %v888, %v888
      %v1165 = vmul.f32 %v891, %v891
      %v1166 = vmul.f32 %v896, %v896
      %v1167 = vmul.f32 %v899, %v899
      %v1168 = vmul.f32 %v904, %v904
      %v1169 = vmul.f32 %v907, %v907
      %v1170 = vmul.f32 %v912, %v912
      %v1171 = vmul.f32 %v915, %v915
      %v1172 = vmul.f32 %v920, %v920
      %v1173 = vmul.f32 %v923, %v923
      %v1174 = vmul.f32 %v928, %v928
      %v1175 = vmul.f32 %v931, %v931
      %v1176 = vadd.f32 %v1144, %v1145
      %v1177 = vadd.f32 %v1176, %v1146
      %v1178 = vadd.f32 %v1177, %v1147
      %v1179 = vadd.f32 %v1178, %v1148
      %v1180 = vadd.f32 %v1179, %v1149
      %v1181 = vadd.f32 %v1180, %v1150
      %v1182 = vadd.f32 %v1181, %v1151
      %v1183 = vadd.f32 %v1182, %v1152
      %v1184 = vadd.f32 %v1183, %v1153
      %v1185 = vadd.f32 %v1184, %v1154
      %v1186 = vadd.f32 %v1185, %v1155
      %v1187 = vadd.f32 %v1186, %v1156
      %v1188 = vadd.f32 %v1187, %v1157
      %v1189 = vadd.f32 %v1188, %v1158
      %v1190 = vadd.f32 %v1189, %v1159
      %v1191 = vadd.f32 %v1190, %v1160
      %v1192 = vadd.f32 %v1191, %v1161
      %v1193 = vadd.f32 %v1192, %v1162
      %v1194 = vadd.f32 %v1193, %v1163
      %v1195 = vadd.f32 %v1194, %v1164
      %v1196 = vadd.f32 %v1195, %v1165
      %v1197 = vadd.f32 %v1196, %v1166
      %v1198 = vadd.f32 %v1197, %v1167
      %v1199 = vadd.f32 %v1198, %v1168
      %v1200 = vadd.f32 %v1199, %v1169
      %v1201 = vadd.f32 %v1200, %v1170
      %v1202 = vadd.f32 %v1201, %v1171
      %v1203 = vadd.f32 %v1202, %v1172
      %v1204 = vadd.f32 %v1203, %v1173
      %v1205 = vadd.f32 %v1204, %v1174
      %v1206 = vadd.f32 %v1205, %v1175
      %v1207 = vrot.slane %v1206, 4
      %v1208 = vadd.f32 %v1206, %v1207
      %v1209 = vrot.slane %v1208, 2
      %v1210 = vadd.f32 %v1208, %v1209
      %v1211 = vrot.slane %v1210, 1
      %v1212 = vadd.f32 %v1210, %v1211
      %1213 = vst [vmem:[%s354] sm:$0x1] %v1212
      %s1214 = smul.u32 32, %s20
      %p1215 = scmp.lt.s32.totalorder %s1214, 63
      %s1216 = scalar_select %p1215, %s1214, 63
      %s1217 = smul.addr %s1216, 8
      %s1218 = scalar_lea.vmem %s3, %s1217
      %s1219 = smul.u32 32, %s20
      %p1220 = scmp.lt.s32.totalorder %s1219, 63
      %s1221 = scalar_select %p1220, %s1219, 63
      %s1222 = smul.addr %s1221, 8
      %s1223 = scalar_lea.vmem %s4, %s1222
      %p1224 = scmp.lt.s32.totalorder %s20, 1
      %s1225 = scalar_select %p1224, %s20, 1
      %s1226 = scalar_lea.vmem %s5, %s1225
      %p1227 = scmp.lt.s32.totalorder %s20, 1
      %s1228 = scalar_select %p1227, %s20, 1
      %s1229 = scalar_lea.vmem %s6, %s1228
      %p1230 = scmp.lt.s32.totalorder %s20, 1
      %s1231 = scalar_select %p1230, %s20, 1
      %s1232 = scalar_lea.vmem %s7, %s1231
      %p1233 = scmp.lt.s32.totalorder %s20, 1
      %s1234 = scalar_select %p1233, %s20, 1
      %s1235 = scalar_lea.vmem %s8, %s1234
      // Predicated region
      $region33: #{bottleneck_forward.4} parent=31 // pred_check
        %p1236 = pneg %p106
      $region34: #{bottleneck_forward.4} parent=31 // pred_check_branch
        %1238 = sbr.rel (%p1236) target = $region36
      $region35: #{bottleneck_forward.4} parent=31 // pred_region
        %s1239 = smul.u32 32, %s20
      $region36: #{bottleneck_forward.4} parent=31 // pred_fallthru
        _
      // Predicated region
      $region37: #{bottleneck_forward.4} parent=31 // pred_check
        %p1240 = pneg %p132
      $region38: #{bottleneck_forward.4} parent=31 // pred_check_branch
        %1242 = sbr.rel (%p1240) target = $region40
      $region39: #{bottleneck_forward.4} parent=31 // pred_region
        %s1243 = smul.u32 32, %s20
      $region40: #{bottleneck_forward.4} parent=31 // pred_fallthru
        _
      // Predicated region
      $region41: #{bottleneck_forward.4} parent=31 // pred_check
        %p1244 = pneg %p158
      $region42: #{bottleneck_forward.4} parent=31 // pred_check_branch
        %1246 = sbr.rel (%p1244) target = $region44
      $region43: #{bottleneck_forward.4} parent=31 // pred_region
        _
      $region44: #{bottleneck_forward.4} parent=31 // pred_fallthru
        _
      // Predicated region
      $region45: #{bottleneck_forward.4} parent=31 // pred_check
        %p1247 = pneg %p184
      $region46: #{bottleneck_forward.4} parent=31 // pred_check_branch
        %1249 = sbr.rel (%p1247) target = $region48
      $region47: #{bottleneck_forward.4} parent=31 // pred_region
        _
      $region48: #{bottleneck_forward.4} parent=31 // pred_fallthru
        _
      // Predicated region
      $region49: #{bottleneck_forward.4} parent=31 // pred_check
        %p1250 = pneg %p210
      $region50: #{bottleneck_forward.4} parent=31 // pred_check_branch
        %1252 = sbr.rel (%p1250) target = $region52
      $region51: #{bottleneck_forward.4} parent=31 // pred_region
        _
      $region52: #{bottleneck_forward.4} parent=31 // pred_fallthru
        _
      // Predicated region
      $region53: #{bottleneck_forward.4} parent=31 // pred_check
        %p1253 = pneg %p236
      $region54: #{bottleneck_forward.4} parent=31 // pred_check_branch
        %1255 = sbr.rel (%p1253) target = $region56
      $region55: #{bottleneck_forward.4} parent=31 // pred_region
        _
      $region56: #{bottleneck_forward.4} parent=31 // pred_fallthru
        _
    $region32: #{bottleneck_forward.4} parent=5 // pred_fallthru
      _
    %p1256 = scmp.le.s32.totalorder 2, %s15
    // Predicated region
    $region57: #{bottleneck_forward.4} parent=5 // pred_check
      %p1257 = pneg %p1256
    $region58: #{bottleneck_forward.4} parent=5 // pred_check_branch
      %1259 = sbr.rel (%p1257) target = $region60
    $region59: #{bottleneck_forward.4} parent=5 // pred_region
      %s1260 = ssub.s32 %s15, 2
      // Predicated region
      $region61: #{bottleneck_forward.4} parent=59 // pred_check
        %p1261 = pneg %p112
      $region62: #{bottleneck_forward.4} parent=59 // pred_check_branch
        %1263 = sbr.rel (%p1261) target = $region64
      $region63: #{bottleneck_forward.4} parent=59 // pred_region
        %s1264 = smul.u32 32, %s21
        %p1265 = scmp.lt.s32.totalorder %s1264, 63
        %s1266 = scalar_select %p1265, %s1264, 63
        %s1267 = smul.addr %s1266, 8
        %s1268 = scalar_lea.vmem %s3, %s1267
      $region64: #{bottleneck_forward.4} parent=59 // pred_fallthru
        _
      // Predicated region
      $region65: #{bottleneck_forward.4} parent=59 // pred_check
        %p1269 = pneg %p138
      $region66: #{bottleneck_forward.4} parent=59 // pred_check_branch
        %1271 = sbr.rel (%p1269) target = $region68
      $region67: #{bottleneck_forward.4} parent=59 // pred_region
        %s1272 = smul.u32 32, %s21
        %p1273 = scmp.lt.s32.totalorder %s1272, 63
        %s1274 = scalar_select %p1273, %s1272, 63
        %s1275 = smul.addr %s1274, 8
        %s1276 = scalar_lea.vmem %s4, %s1275
      $region68: #{bottleneck_forward.4} parent=59 // pred_fallthru
        _
      // Predicated region
      $region69: #{bottleneck_forward.4} parent=59 // pred_check
        %p1277 = pneg %p164
      $region70: #{bottleneck_forward.4} parent=59 // pred_check_branch
        %1279 = sbr.rel (%p1277) target = $region72
      $region71: #{bottleneck_forward.4} parent=59 // pred_region
        %p1280 = scmp.lt.s32.totalorder %s21, 1
        %s1281 = scalar_select %p1280, %s21, 1
        %s1282 = scalar_lea.vmem %s5, %s1281
      $region72: #{bottleneck_forward.4} parent=59 // pred_fallthru
        _
      // Predicated region
      $region73: #{bottleneck_forward.4} parent=59 // pred_check
        %p1283 = pneg %p190
      $region74: #{bottleneck_forward.4} parent=59 // pred_check_branch
        %1285 = sbr.rel (%p1283) target = $region76
      $region75: #{bottleneck_forward.4} parent=59 // pred_region
        %p1286 = scmp.lt.s32.totalorder %s21, 1
        %s1287 = scalar_select %p1286, %s21, 1
        %s1288 = scalar_lea.vmem %s6, %s1287
      $region76: #{bottleneck_forward.4} parent=59 // pred_fallthru
        _
      // Predicated region
      $region77: #{bottleneck_forward.4} parent=59 // pred_check
        %p1289 = pneg %p216
      $region78: #{bottleneck_forward.4} parent=59 // pred_check_branch
        %1291 = sbr.rel (%p1289) target = $region80
      $region79: #{bottleneck_forward.4} parent=59 // pred_region
        %p1292 = scmp.lt.s32.totalorder %s21, 1
        %s1293 = scalar_select %p1292, %s21, 1
        %s1294 = scalar_lea.vmem %s7, %s1293
      $region80: #{bottleneck_forward.4} parent=59 // pred_fallthru
        _
      // Predicated region
      $region81: #{bottleneck_forward.4} parent=59 // pred_check
        %p1295 = pneg %p242
      $region82: #{bottleneck_forward.4} parent=59 // pred_check_branch
        %1297 = sbr.rel (%p1295) target = $region84
      $region83: #{bottleneck_forward.4} parent=59 // pred_region
        %p1298 = scmp.lt.s32.totalorder %s21, 1
        %s1299 = scalar_select %p1298, %s21, 1
        %s1300 = scalar_lea.vmem %s8, %s1299
      $region84: #{bottleneck_forward.4} parent=59 // pred_fallthru
        _
    $region60: #{bottleneck_forward.4} parent=5 // pred_fallthru
      _
  $region6: #{bottleneck_forward.4} parent=0 // loop_footer
    %s19 = sadd.s32 1, %s15
  $region7: #{bottleneck_forward.4} parent=0 // loop_footer_branch
    %14 = sbr.rel target = $region3
  $region8: #{bottleneck_forward.4} parent=0 // loop_exit
    _

// kernel: bottleneck_forward.5
$region0: #{bottleneck_forward.5}
  #allocation0 [shape = 'u32[]', space=smem, size = 0x4, offset = 0x4, fixed_abs, tag = 'smem constant byte address 0x4 - core index']
  #allocation1 [shape = 'u32[144,128]{1,0:T(1,128)}', space=vmem, size = 0x12000, scoped, tag = 'internal scratch']
  #allocation2 [shape = 'bf16[18,18,128]{2,1,0:T(8,128)(2,1)}', space=vmem, size = 0x1b000, scoped, tag = 'scratch operand']
  #allocation3 [shape = 'bf16[256,1152]{1,0:T(16,128)(2,1)}', space=vmem, size = 0x90000, scoped, tag = 'scratch operand']
  %s0 = inlined_call_operand.vmem [shape: f32[2,16,16,128], index: 0, kind: input, shape index: {}]
  %s1 = inlined_call_operand.vmem [shape: f32[1,128], index: 1, kind: input, shape index: {}]
  %s2 = inlined_call_operand.vmem [shape: f32[1,128], index: 2, kind: input, shape index: {}]
  %s3 = inlined_call_operand.vmem [shape: bf16[1152,128], index: 3, kind: input, shape index: {}]
  %s4 = inlined_call_operand.vmem [shape: f32[2,16,16,128], index: 4, kind: output, shape index: {0}]
  %s5 = inlined_call_operand.vmem [shape: f32[2,1,128], index: 5, kind: output, shape index: {1}]
  %s6 = inlined_call_operand.vmem [shape: f32[2,1,128], index: 6, kind: output, shape index: {2}]
  %7 = xla_tuple %s4, %s5, %s6
  %s8 = sld [smem:[#allocation0]]
  $region65: #{bottleneck_forward.5} parent=0
    _
  %s10 = ssub.s32 1, %s8
  %s11 = scalar_select 0, %s10, %s8
  loop: start=0, step=1, limit=4
  $region2: #{bottleneck_forward.5} parent=0 // loop_pre_header
    _
  $region3: #{bottleneck_forward.5} parent=0 // loop_header
    %s13 = sphi 0, %s17
    %p14 = scmp.ge.s32.totalorder %s13, 4
    %s23 = sphi 0, %s25
    %s26 = sphi 0, %s23
    %s27 = sphi 0, %s26
    %s43 = sphi 0, %s27
    %s47 = sphi 0, %s47
    %s49 = sphi 0, %s47
    %s50 = sphi 0, %s49
    %s64 = sphi 0, %s50
    %s68 = sphi 0, %s68
    %s70 = sphi 0, %s68
    %s71 = sphi 0, %s70
    %s85 = sphi 0, %s71
    %s89 = sphi 0, %s89
    %s91 = sphi 0, %s89
    %s92 = sphi 0, %s91
    %s106 = sphi 0, %s92
    %s112 = sphi 0, %s114
    %s115 = sphi 0, %s112
    %s116 = sphi 0, %s115
    %s132 = sphi 0, %s116
    %s138 = sphi 0, %s140
    %s141 = sphi 0, %s138
    %s142 = sphi 0, %s141
    %s158 = sphi 0, %s142
    %s164 = sphi 0, %s166
    %s167 = sphi 0, %s164
    %s168 = sphi 0, %s167
    %s184 = sphi 0, %s168
  $region4: #{bottleneck_forward.5} parent=0 // loop_header_branch
    %16 = sbr.rel (%p14) target = $region8
  $region5: #{bottleneck_forward.5} parent=0 // loop_body
    %s18 = ssub.s32 %s13, 1
    %s19 = ssub.s32 %s13, 2
    %s20 = sadd.s32 %s13, 1
    %s21 = ssub.s32 %s13, %s20
    %p22 = scmp.eq.s32.totalorder %s21, 0
    %s24 = sadd.s32 %s23, 1
    %s25 = scalar_select %p22, %s23, %s24
    %p28 = pneg %p22
    %p29 = scmp.eq.s32.totalorder %s13, 1
    %p30 = por %p28, %p29
    %p31 = scmp.ne.s32.totalorder %s23, %s26
    %p32 = scmp.eq.s32.totalorder %s13, 0
    %p33 = por %p31, %p32
    %p34 = scmp.ne.s32.totalorder %s23, %s26
    %p35 = scmp.eq.s32.totalorder %s18, 1
    %p36 = por %p34, %p35
    %p37 = scmp.ne.s32.totalorder %s26, %s27
    %p38 = scmp.eq.s32.totalorder %s18, 0
    %p39 = por %p37, %p38
    %p40 = scmp.ne.s32.totalorder %s26, %s27
    %p41 = scmp.eq.s32.totalorder %s19, 1
    %p42 = por %p40, %p41
    %p44 = scmp.ne.s32.totalorder %s27, %s43
    %p45 = scmp.eq.s32.totalorder %s19, 0
    %p46 = por %p44, %p45
    %s48 = sadd.s32 %s47, 1
    %p51 = scmp.eq.s32.totalorder %s13, 1
    %p52 = scmp.ne.s32.totalorder %s47, %s49
    %p53 = scmp.eq.s32.totalorder %s13, 0
    %p54 = por %p52, %p53
    %p55 = scmp.ne.s32.totalorder %s47, %s49
    %p56 = scmp.eq.s32.totalorder %s18, 1
    %p57 = por %p55, %p56
    %p58 = scmp.ne.s32.totalorder %s49, %s50
    %p59 = scmp.eq.s32.totalorder %s18, 0
    %p60 = por %p58, %p59
    %p61 = scmp.ne.s32.totalorder %s49, %s50
    %p62 = scmp.eq.s32.totalorder %s19, 1
    %p63 = por %p61, %p62
    %p65 = scmp.ne.s32.totalorder %s50, %s64
    %p66 = scmp.eq.s32.totalorder %s19, 0
    %p67 = por %p65, %p66
    %s69 = sadd.s32 %s68, 1
    %p72 = scmp.eq.s32.totalorder %s13, 1
    %p73 = scmp.ne.s32.totalorder %s68, %s70
    %p74 = scmp.eq.s32.totalorder %s13, 0
    %p75 = por %p73, %p74
    %p76 = scmp.ne.s32.totalorder %s68, %s70
    %p77 = scmp.eq.s32.totalorder %s18, 1
    %p78 = por %p76, %p77
    %p79 = scmp.ne.s32.totalorder %s70, %s71
    %p80 = scmp.eq.s32.totalorder %s18, 0
    %p81 = por %p79, %p80
    %p82 = scmp.ne.s32.totalorder %s70, %s71
    %p83 = scmp.eq.s32.totalorder %s19, 1
    %p84 = por %p82, %p83
    %p86 = scmp.ne.s32.totalorder %s71, %s85
    %p87 = scmp.eq.s32.totalorder %s19, 0
    %p88 = por %p86, %p87
    %s90 = sadd.s32 %s89, 1
    %p93 = scmp.eq.s32.totalorder %s13, 1
    %p94 = scmp.ne.s32.totalorder %s89, %s91
    %p95 = scmp.eq.s32.totalorder %s13, 0
    %p96 = por %p94, %p95
    %p97 = scmp.ne.s32.totalorder %s89, %s91
    %p98 = scmp.eq.s32.totalorder %s18, 1
    %p99 = por %p97, %p98
    %p100 = scmp.ne.s32.totalorder %s91, %s92
    %p101 = scmp.eq.s32.totalorder %s18, 0
    %p102 = por %p100, %p101
    %p103 = scmp.ne.s32.totalorder %s91, %s92
    %p104 = scmp.eq.s32.totalorder %s19, 1
    %p105 = por %p103, %p104
    %p107 = scmp.ne.s32.totalorder %s92, %s106
    %p108 = scmp.eq.s32.totalorder %s19, 0
    %p109 = por %p107, %p108
    %s110 = ssub.s32 %s13, %s20
    %p111 = scmp.eq.s32.totalorder %s110, 0
    %s113 = sadd.s32 %s112, 1
    %s114 = scalar_select %p111, %s112, %s113
    %p117 = pneg %p111
    %p118 = scmp.eq.s32.totalorder %s13, 1
    %p119 = por %p117, %p118
    %p120 = scmp.ne.s32.totalorder %s112, %s115
    %p121 = scmp.eq.s32.totalorder %s13, 0
    %p122 = por %p120, %p121
    %p123 = scmp.ne.s32.totalorder %s112, %s115
    %p124 = scmp.eq.s32.totalorder %s18, 1
    %p125 = por %p123, %p124
    %p126 = scmp.ne.s32.totalorder %s115, %s116
    %p127 = scmp.eq.s32.totalorder %s18, 0
    %p128 = por %p126, %p127
    %p129 = scmp.ne.s32.totalorder %s115, %s116
    %p130 = scmp.eq.s32.totalorder %s19, 1
    %p131 = por %p129, %p130
    %p133 = scmp.ne.s32.totalorder %s116, %s132
    %p134 = scmp.eq.s32.totalorder %s19, 0
    %p135 = por %p133, %p134
    %s136 = ssub.s32 %s13, %s20
    %p137 = scmp.eq.s32.totalorder %s136, 0
    %s139 = sadd.s32 %s138, 1
    %s140 = scalar_select %p137, %s138, %s139
    %p143 = pneg %p137
    %p144 = scmp.eq.s32.totalorder %s13, 1
    %p145 = por %p143, %p144
    %p146 = scmp.ne.s32.totalorder %s138, %s141
    %p147 = scmp.eq.s32.totalorder %s13, 0
    %p148 = por %p146, %p147
    %p149 = scmp.ne.s32.totalorder %s138, %s141
    %p150 = scmp.eq.s32.totalorder %s18, 1
    %p151 = por %p149, %p150
    %p152 = scmp.ne.s32.totalorder %s141, %s142
    %p153 = scmp.eq.s32.totalorder %s18, 0
    %p154 = por %p152, %p153
    %p155 = scmp.ne.s32.totalorder %s141, %s142
    %p156 = scmp.eq.s32.totalorder %s19, 1
    %p157 = por %p155, %p156
    %p159 = scmp.ne.s32.totalorder %s142, %s158
    %p160 = scmp.eq.s32.totalorder %s19, 0
    %p161 = por %p159, %p160
    %s162 = ssub.s32 %s13, %s20
    %p163 = scmp.eq.s32.totalorder %s162, 0
    %s165 = sadd.s32 %s164, 1
    %s166 = scalar_select %p163, %s164, %s165
    %p169 = pneg %p163
    %p170 = scmp.eq.s32.totalorder %s13, 1
    %p171 = por %p169, %p170
    %p172 = scmp.ne.s32.totalorder %s164, %s167
    %p173 = scmp.eq.s32.totalorder %s13, 0
    %p174 = por %p172, %p173
    %p175 = scmp.ne.s32.totalorder %s164, %s167
    %p176 = scmp.eq.s32.totalorder %s18, 1
    %p177 = por %p175, %p176
    %p178 = scmp.ne.s32.totalorder %s167, %s168
    %p179 = scmp.eq.s32.totalorder %s18, 0
    %p180 = por %p178, %p179
    %p181 = scmp.ne.s32.totalorder %s167, %s168
    %p182 = scmp.eq.s32.totalorder %s19, 1
    %p183 = por %p181, %p182
    %p185 = scmp.ne.s32.totalorder %s168, %s184
    %p186 = scmp.eq.s32.totalorder %s19, 0
    %p187 = por %p185, %p186
    %p188 = scmp.le.s32.totalorder 1, %s13
    %p189 = scmp.lt.s32.totalorder %s13, 3
    %p190 = pnand %p188, %p189
    %p191 = pneg %p190
    // Predicated region
    $region9: #{bottleneck_forward.5} parent=5 // pred_check
      _
    $region10: #{bottleneck_forward.5} parent=5 // pred_check_branch
      %193 = sbr.rel (%p190) target = $region12
    $region11: #{bottleneck_forward.5} parent=5 // pred_region
      %s194 = ssub.s32 %s13, 1
      // Predicated region
      $region13: #{bottleneck_forward.5} parent=11 // pred_check
        %p195 = pneg %p60
      $region14: #{bottleneck_forward.5} parent=11 // pred_check_branch
        %197 = sbr.rel (%p195) target = $region16
      $region15: #{bottleneck_forward.5} parent=11 // pred_region
        _
      $region16: #{bottleneck_forward.5} parent=11 // pred_fallthru
        _
      // Predicated region
      $region17: #{bottleneck_forward.5} parent=11 // pred_check
        %p198 = pneg %p81
      $region18: #{bottleneck_forward.5} parent=11 // pred_check_branch
        %200 = sbr.rel (%p198) target = $region20
      $region19: #{bottleneck_forward.5} parent=11 // pred_region
        _
      $region20: #{bottleneck_forward.5} parent=11 // pred_fallthru
        _
      // Predicated region
      $region21: #{bottleneck_forward.5} parent=11 // pred_check
        %p201 = pneg %p102
      $region22: #{bottleneck_forward.5} parent=11 // pred_check_branch
        %203 = sbr.rel (%p201) target = $region24
      $region23: #{bottleneck_forward.5} parent=11 // pred_region
        _
      $region24: #{bottleneck_forward.5} parent=11 // pred_fallthru
        _
    $region12: #{bottleneck_forward.5} parent=5 // pred_fallthru
      _
    %p204 = scmp.lt.s32.totalorder %s13, 2
    // Predicated region
    $region25: #{bottleneck_forward.5} parent=5 // pred_check
      %p205 = pneg %p204
    $region26: #{bottleneck_forward.5} parent=5 // pred_check_branch
      %207 = sbr.rel (%p205) target = $region28
    $region27: #{bottleneck_forward.5} parent=5 // pred_region
      // Predicated region
      $region29: #{bottleneck_forward.5} parent=27 // pred_check
        %p208 = pneg %p33
      $region30: #{bottleneck_forward.5} parent=27 // pred_check_branch
        %210 = sbr.rel (%p208) target = $region32
      $region31: #{bottleneck_forward.5} parent=27 // pred_region
        %p211 = scmp.lt.s32.totalorder %s13, 1
        %s212 = scalar_select %p211, %s13, 1
        %s213 = smul.addr %s212, 32
        %s214 = smul.addr %s213, 8
        %s215 = scalar_lea.vmem %s0, %s214
      $region32: #{bottleneck_forward.5} parent=27 // pred_fallthru
        _
    $region28: #{bottleneck_forward.5} parent=5 // pred_fallthru
      _
    %p216 = scmp.le.s32.totalorder 1, %s13
    %p217 = scmp.lt.s32.totalorder %s13, 3
    %p218 = pnand %p216, %p217
    %p219 = pneg %p218
    // Predicated region
    $region33: #{bottleneck_forward.5} parent=5 // pred_check
      _
    $region34: #{bottleneck_forward.5} parent=5 // pred_check_branch
      %221 = sbr.rel (%p218) target = $region36
    $region35: #{bottleneck_forward.5} parent=5 // pred_region
      %s222 = ssub.s32 %s13, 1
      %p223 = scmp.lt.s32.totalorder %s18, 1
      %s224 = scalar_select %p223, %s18, 1
      %s225 = smul.addr %s224, 32
      %s226 = smul.addr %s225, 8
      %s227 = scalar_lea.vmem %s0, %s226
      %p228 = pneg %p39
      %p229 = pneg %p36
      %p230 = pneg %p60
      %p231 = pneg %p57
      %p232 = pneg %p81
      %p233 = pneg %p78
      %p234 = pneg %p102
      %p235 = pneg %p99
      %p236 = pneg %p128
      %p237 = pneg %p125
      %p238 = scmp.lt.s32.totalorder %s18, 1
      %s239 = scalar_select %p238, %s18, 1
      %s240 = smul.addr %s239, 32
      %s241 = smul.addr %s240, 8
      %s242 = scalar_lea.vmem %s4, %s241
      %p243 = pneg %p154
      %p244 = pneg %p151
      %p245 = scmp.lt.s32.totalorder %s18, 1
      %s246 = scalar_select %p245, %s18, 1
      %s247 = scalar_lea.vmem %s5, %s246
      %p248 = pneg %p180
      %p249 = pneg %p177
      %p250 = scmp.lt.s32.totalorder %s18, 1
      %s251 = scalar_select %p250, %s18, 1
      %s252 = scalar_lea.vmem %s6, %s251
      %p253 = scmp.lt.s32.totalorder %s18, 1
      %s254 = scalar_select %p253, %s18, 1
      %s255 = smul.addr %s254, 32
      %s256 = smul.addr %s255, 8
      %s257 = scalar_lea.vmem %s0, %s256
      %p258 = scmp.lt.s32.totalorder %s18, 1
      %s259 = scalar_select %p258, %s18, 1
      %s260 = smul.addr %s259, 32
      %s261 = smul.addr %s260, 8
      %s262 = scalar_lea.vmem %s4, %s261
      %p263 = scmp.lt.s32.totalorder %s18, 1
      %s264 = scalar_select %p263, %s18, 1
      %s265 = scalar_lea.vmem %s5, %s264
      %p266 = scmp.lt.s32.totalorder %s18, 1
      %s267 = scalar_select %p266, %s18, 1
      %s268 = scalar_lea.vmem %s6, %s267
      %270 = vst [vmem:[#allocation2] sm:$0xf] 0
      %271 = vst [vmem:[#allocation2 + $0x4] sm:$0xf] 0
      %272 = vst [vmem:[#allocation2 + $0x8] sm:$0x1] 0
      %s273 = scalar_lea.vmem [#allocation2], 204
      %274 = vst [vmem:[%s273] sm:$0xf] 0
      %275 = vst [vmem:[%s273 + $0x4] sm:$0xf] 0
      %276 = vst [vmem:[%s273 + $0x8] sm:$0x1] 0
      %vm277 = vcmask 1040384
      %vm278 = vsmask.f32 256
      %vm279 = vmand %vm277, %vm278
      %v280 = vld [vmem:[#allocation2] sm:$0x1]
      %v281 = vsel %vm279, 0, %v280
      %282 = vst [vmem:[#allocation2] sm:$0x1] %v281
      %v283 = vld [vmem:[#allocation2 + $0xc] sm:$0x1]
      %v284 = vsel %vm279, 0, %v283
      %285 = vst [vmem:[#allocation2 + $0xc] sm:$0x1] %v284
      %v286 = vld [vmem:[#allocation2 + $0x18] sm:$0x1]
      %v287 = vsel %vm279, 0, %v286
      %288 = vst [vmem:[#allocation2 + $0x18] sm:$0x1] %v287
      %v289 = vld [vmem:[#allocation2 + $0x24] sm:$0x1]
      %v290 = vsel %vm279, 0, %v289
      %291 = vst [vmem:[#allocation2 + $0x24] sm:$0x1] %v290
      %v292 = vld [vmem:[#allocation2 + $0x30] sm:$0x1]
      %v293 = vsel %vm279, 0, %v292
      %294 = vst [vmem:[#allocation2 + $0x30] sm:$0x1] %v293
      %v295 = vld [vmem:[#allocation2 + $0x3c] sm:$0x1]
      %v296 = vsel %vm279, 0, %v295
      %297 = vst [vmem:[#allocation2 + $0x3c] sm:$0x1] %v296
      %v298 = vld [vmem:[#allocation2 + $0x48] sm:$0x1]
      %v299 = vsel %vm279, 0, %v298
      %300 = vst [vmem:[#allocation2 + $0x48] sm:$0x1] %v299
      %v301 = vld [vmem:[#allocation2 + $0x54] sm:$0x1]
      %v302 = vsel %vm279, 0, %v301
      %303 = vst [vmem:[#allocation2 + $0x54] sm:$0x1] %v302
      %v304 = vld [vmem:[#allocation2 + $0x60] sm:$0x1]
      %v305 = vsel %vm279, 0, %v304
      %306 = vst [vmem:[#allocation2 + $0x60] sm:$0x1] %v305
      %v307 = vld [vmem:[#allocation2 + $0x6c] sm:$0x1]
      %v308 = vsel %vm279, 0, %v307
      %309 = vst [vmem:[#allocation2 + $0x6c] sm:$0x1] %v308
      %v310 = vld [vmem:[#allocation2 + $0x78] sm:$0x1]
      %v311 = vsel %vm279, 0, %v310
      %312 = vst [vmem:[#allocation2 + $0x78] sm:$0x1] %v311
      %v313 = vld [vmem:[#allocation2 + $0x84] sm:$0x1]
      %v314 = vsel %vm279, 0, %v313
      %315 = vst [vmem:[#allocation2 + $0x84] sm:$0x1] %v314
      %v316 = vld [vmem:[#allocation2 + $0x90] sm:$0x1]
      %v317 = vsel %vm279, 0, %v316
      %318 = vst [vmem:[#allocation2 + $0x90] sm:$0x1] %v317
      %v319 = vld [vmem:[#allocation2 + $0x9c] sm:$0x1]
      %v320 = vsel %vm279, 0, %v319
      %321 = vst [vmem:[#allocation2 + $0x9c] sm:$0x1] %v320
      %v322 = vld [vmem:[#allocation2 + $0xa8] sm:$0x1]
      %v323 = vsel %vm279, 0, %v322
      %324 = vst [vmem:[#allocation2 + $0xa8] sm:$0x1] %v323
      %v325 = vld [vmem:[#allocation2 + $0xb4] sm:$0x1]
      %v326 = vsel %vm279, 0, %v325
      %327 = vst [vmem:[#allocation2 + $0xb4] sm:$0x1] %v326
      %v328 = vld [vmem:[#allocation2 + $0xc0] sm:$0x1]
      %v329 = vsel %vm279, 0, %v328
      %330 = vst [vmem:[#allocation2 + $0xc0] sm:$0x1] %v329
      %v331 = vld [vmem:[#allocation2 + $0xcc] sm:$0x1]
      %v332 = vsel %vm279, 0, %v331
      %333 = vst [vmem:[#allocation2 + $0xcc] sm:$0x1] %v332
      %vm334 = vsmask.f32 7938
      %vm335 = vmand %vm277, %vm334
      %v336 = vld [vmem:[#allocation2 + $0x8] sm:$0x1]
      %v337 = vsel %vm335, 0, %v336
      %338 = vst [vmem:[#allocation2 + $0x8] sm:$0x1] %v337
      %v339 = vld [vmem:[#allocation2 + $0x14] sm:$0x1]
      %v340 = vsel %vm335, 0, %v339
      %341 = vst [vmem:[#allocation2 + $0x14] sm:$0x1] %v340
      %v342 = vld [vmem:[#allocation2 + $0x20] sm:$0x1]
      %v343 = vsel %vm335, 0, %v342
      %344 = vst [vmem:[#allocation2 + $0x20] sm:$0x1] %v343
      %v345 = vld [vmem:[#allocation2 + $0x2c] sm:$0x1]
      %v346 = vsel %vm335, 0, %v345
      %347 = vst [vmem:[#allocation2 + $0x2c] sm:$0x1] %v346
      %v348 = vld [vmem:[#allocation2 + $0x38] sm:$0x1]
      %v349 = vsel %vm335, 0, %v348
      %350 = vst [vmem:[#allocation2 + $0x38] sm:$0x1] %v349
      %v351 = vld [vmem:[#allocation2 + $0x44] sm:$0x1]
      %v352 = vsel %vm335, 0, %v351
      %353 = vst [vmem:[#allocation2 + $0x44] sm:$0x1] %v352
      %v354 = vld [vmem:[#allocation2 + $0x50] sm:$0x1]
      %v355 = vsel %vm335, 0, %v354
      %356 = vst [vmem:[#allocation2 + $0x50] sm:$0x1] %v355
      %v357 = vld [vmem:[#allocation2 + $0x5c] sm:$0x1]
      %v358 = vsel %vm335, 0, %v357
      %359 = vst [vmem:[#allocation2 + $0x5c] sm:$0x1] %v358
      %v360 = vld [vmem:[#allocation2 + $0x68] sm:$0x1]
      %v361 = vsel %vm335, 0, %v360
      %362 = vst [vmem:[#allocation2 + $0x68] sm:$0x1] %v361
      %v363 = vld [vmem:[#allocation2 + $0x74] sm:$0x1]
      %v364 = vsel %vm335, 0, %v363
      %365 = vst [vmem:[#allocation2 + $0x74] sm:$0x1] %v364
      %v366 = vld [vmem:[#allocation2 + $0x80] sm:$0x1]
      %v367 = vsel %vm335, 0, %v366
      %368 = vst [vmem:[#allocation2 + $0x80] sm:$0x1] %v367
      %v369 = vld [vmem:[#allocation2 + $0x8c] sm:$0x1]
      %v370 = vsel %vm335, 0, %v369
      %371 = vst [vmem:[#allocation2 + $0x8c] sm:$0x1] %v370
      %v372 = vld [vmem:[#allocation2 + $0x98] sm:$0x1]
      %v373 = vsel %vm335, 0, %v372
      %374 = vst [vmem:[#allocation2 + $0x98] sm:$0x1] %v373
      %v375 = vld [vmem:[#allocation2 + $0xa4] sm:$0x1]
      %v376 = vsel %vm335, 0, %v375
      %377 = vst [vmem:[#allocation2 + $0xa4] sm:$0x1] %v376
      %v378 = vld [vmem:[#allocation2 + $0xb0] sm:$0x1]
      %v379 = vsel %vm335, 0, %v378
      %380 = vst [vmem:[#allocation2 + $0xb0] sm:$0x1] %v379
      %v381 = vld [vmem:[#allocation2 + $0xbc] sm:$0x1]
      %v382 = vsel %vm335, 0, %v381
      %383 = vst [vmem:[#allocation2 + $0xbc] sm:$0x1] %v382
      %v384 = vld [vmem:[#allocation2 + $0xc8] sm:$0x1]
      %v385 = vsel %vm335, 0, %v384
      %386 = vst [vmem:[#allocation2 + $0xc8] sm:$0x1] %v385
      %v387 = vld [vmem:[#allocation2 + $0xd4] sm:$0x1]
      %v388 = vsel %vm335, 0, %v387
      %389 = vst [vmem:[#allocation2 + $0xd4] sm:$0x1] %v388
      %v390 = vld [vmem:[%s1] sm:$0x1]
      %v391 = vld [vmem:[%s2] sm:$0x1]
      %v392 = vld [vmem:[%s257] sm:$0xff]
      %v393 = vld [vmem:[%s257 + $0x8] sm:$0xff]
      %v394 = vld [vmem:[%s257 + $0x10] sm:$0xff]
      %v395 = vld [vmem:[%s257 + $0x18] sm:$0xff]
      %v396 = vld [vmem:[%s257 + $0x20] sm:$0xff]
      %v397 = vld [vmem:[%s257 + $0x28] sm:$0xff]
      %v398 = vld [vmem:[%s257 + $0x30] sm:$0xff]
      %v399 = vld [vmem:[%s257 + $0x38] sm:$0xff]
      %v400 = vld [vmem:[%s257 + $0x40] sm:$0xff]
      %v401 = vld [vmem:[%s257 + $0x48] sm:$0xff]
      %v402 = vld [vmem:[%s257 + $0x50] sm:$0xff]
      %v403 = vld [vmem:[%s257 + $0x58] sm:$0xff]
      %v404 = vld [vmem:[%s257 + $0x60] sm:$0xff]
      %v405 = vld [vmem:[%s257 + $0x68] sm:$0xff]
      %v406 = vld [vmem:[%s257 + $0x70] sm:$0xff]
      %v407 = vld [vmem:[%s257 + $0x78] sm:$0xff]
      %v408 = vld [vmem:[%s257 + $0x80] sm:$0xff]
      %v409 = vld [vmem:[%s257 + $0x88] sm:$0xff]
      %v410 = vld [vmem:[%s257 + $0x90] sm:$0xff]
      %v411 = vld [vmem:[%s257 + $0x98] sm:$0xff]
      %v412 = vld [vmem:[%s257 + $0xa0] sm:$0xff]
      %v413 = vld [vmem:[%s257 + $0xa8] sm:$0xff]
      %v414 = vld [vmem:[%s257 + $0xb0] sm:$0xff]
      %v415 = vld [vmem:[%s257 + $0xb8] sm:$0xff]
      %v416 = vld [vmem:[%s257 + $0xc0] sm:$0xff]
      %v417 = vld [vmem:[%s257 + $0xc8] sm:$0xff]
      %v418 = vld [vmem:[%s257 + $0xd0] sm:$0xff]
      %v419 = vld [vmem:[%s257 + $0xd8] sm:$0xff]
      %v420 = vld [vmem:[%s257 + $0xe0] sm:$0xff]
      %v421 = vld [vmem:[%s257 + $0xe8] sm:$0xff]
      %v422 = vld [vmem:[%s257 + $0xf0] sm:$0xff]
      %v423 = vld [vmem:[%s257 + $0xf8] sm:$0xff]
      %v425 = vlaneseq
      %v426 = vshrl.u32 %v425, 7
      %v427 = vsub.s32 0, %v426
      %v428 = vrot.slane %v390, %v427
      %v430 = vmul.f32 %v392, %v428
      %v431 = vmul.f32 %v393, %v428
      %v432 = vmul.f32 %v394, %v428
      %v433 = vmul.f32 %v395, %v428
      %v434 = vmul.f32 %v396, %v428
      %v435 = vmul.f32 %v397, %v428
      %v436 = vmul.f32 %v398, %v428
      %v437 = vmul.f32 %v399, %v428
      %v438 = vmul.f32 %v400, %v428
      %v439 = vmul.f32 %v401, %v428
      %v440 = vmul.f32 %v402, %v428
      %v441 = vmul.f32 %v403, %v428
      %v442 = vmul.f32 %v404, %v428
      %v443 = vmul.f32 %v405, %v428
      %v444 = vmul.f32 %v406, %v428
      %v445 = vmul.f32 %v407, %v428
      %v446 = vmul.f32 %v408, %v428
      %v447 = vmul.f32 %v409, %v428
      %v448 = vmul.f32 %v410, %v428
      %v449 = vmul.f32 %v411, %v428
      %v450 = vmul.f32 %v412, %v428
      %v451 = vmul.f32 %v413, %v428
      %v452 = vmul.f32 %v414, %v428
      %v453 = vmul.f32 %v415, %v428
      %v454 = vmul.f32 %v416, %v428
      %v455 = vmul.f32 %v417, %v428
      %v456 = vmul.f32 %v418, %v428
      %v457 = vmul.f32 %v419, %v428
      %v458 = vmul.f32 %v420, %v428
      %v459 = vmul.f32 %v421, %v428
      %v460 = vmul.f32 %v422, %v428
      %v461 = vmul.f32 %v423, %v428
      %v463 = vlaneseq
      %v464 = vshrl.u32 %v463, 7
      %v465 = vsub.s32 0, %v464
      %v466 = vrot.slane %v391, %v465
      %v468 = vadd.f32 %v430, %v466
      %v469 = vadd.f32 %v431, %v466
      %v470 = vadd.f32 %v432, %v466
      %v471 = vadd.f32 %v433, %v466
      %v472 = vadd.f32 %v434, %v466
      %v473 = vadd.f32 %v435, %v466
      %v474 = vadd.f32 %v436, %v466
      %v475 = vadd.f32 %v437, %v466
      %v476 = vadd.f32 %v438, %v466
      %v477 = vadd.f32 %v439, %v466
      %v478 = vadd.f32 %v440, %v466
      %v479 = vadd.f32 %v441, %v466
      %v480 = vadd.f32 %v442, %v466
      %v481 = vadd.f32 %v443, %v466
      %v482 = vadd.f32 %v444, %v466
      %v483 = vadd.f32 %v445, %v466
      %v484 = vadd.f32 %v446, %v466
      %v485 = vadd.f32 %v447, %v466
      %v486 = vadd.f32 %v448, %v466
      %v487 = vadd.f32 %v449, %v466
      %v488 = vadd.f32 %v450, %v466
      %v489 = vadd.f32 %v451, %v466
      %v490 = vadd.f32 %v452, %v466
      %v491 = vadd.f32 %v453, %v466
      %v492 = vadd.f32 %v454, %v466
      %v493 = vadd.f32 %v455, %v466
      %v494 = vadd.f32 %v456, %v466
      %v495 = vadd.f32 %v457, %v466
      %v496 = vadd.f32 %v458, %v466
      %v497 = vadd.f32 %v459, %v466
      %v498 = vadd.f32 %v460, %v466
      %v499 = vadd.f32 %v461, %v466
      %v500 = vmax.f32 %v468, 0.0
      %v501 = vmax.f32 %v469, 0.0
      %v502 = vmax.f32 %v470, 0.0
      %v503 = vmax.f32 %v471, 0.0
      %v504 = vmax.f32 %v472, 0.0
      %v505 = vmax.f32 %v473, 0.0
      %v506 = vmax.f32 %v474, 0.0
      %v507 = vmax.f32 %v475, 0.0
      %v508 = vmax.f32 %v476, 0.0
      %v509 = vmax.f32 %v477, 0.0
      %v510 = vmax.f32 %v478, 0.0
      %v511 = vmax.f32 %v479, 0.0
      %v512 = vmax.f32 %v480, 0.0
      %v513 = vmax.f32 %v481, 0.0
      %v514 = vmax.f32 %v482, 0.0
      %v515 = vmax.f32 %v483, 0.0
      %v516 = vmax.f32 %v484, 0.0
      %v517 = vmax.f32 %v485, 0.0
      %v518 = vmax.f32 %v486, 0.0
      %v519 = vmax.f32 %v487, 0.0
      %v520 = vmax.f32 %v488, 0.0
      %v521 = vmax.f32 %v489, 0.0
      %v522 = vmax.f32 %v490, 0.0
      %v523 = vmax.f32 %v491, 0.0
      %v524 = vmax.f32 %v492, 0.0
      %v525 = vmax.f32 %v493, 0.0
      %v526 = vmax.f32 %v494, 0.0
      %v527 = vmax.f32 %v495, 0.0
      %v528 = vmax.f32 %v496, 0.0
      %v529 = vmax.f32 %v497, 0.0
      %v530 = vmax.f32 %v498, 0.0
      %v531 = vmax.f32 %v499, 0.0
      %v532 = vpack.c.bf16 %v501, %v500
      %v533 = vpack.c.bf16 %v503, %v502
      %v534 = vpack.c.bf16 %v505, %v504
      %v535 = vpack.c.bf16 %v507, %v506
      %v536 = vpack.c.bf16 %v509, %v508
      %v537 = vpack.c.bf16 %v511, %v510
      %v538 = vpack.c.bf16 %v513, %v512
      %v539 = vpack.c.bf16 %v515, %v514
      %v540 = vpack.c.bf16 %v517, %v516
      %v541 = vpack.c.bf16 %v519, %v518
      %v542 = vpack.c.bf16 %v521, %v520
      %v543 = vpack.c.bf16 %v523, %v522
      %v544 = vpack.c.bf16 %v525, %v524
      %v545 = vpack.c.bf16 %v527, %v526
      %v546 = vpack.c.bf16 %v529, %v528
      %v547 = vpack.c.bf16 %v531, %v530
      %v564 = vunpack.c.l.b16 %v532
      %v565 = vunpack.c.h.b16 %v532
      %v566 = vunpack.c.l.b16 %v533
      %v567 = vunpack.c.h.b16 %v533
      %v568 = vunpack.c.l.b16 %v534
      %v569 = vunpack.c.h.b16 %v534
      %v570 = vunpack.c.l.b16 %v535
      %v571 = vunpack.c.h.b16 %v535
      %v572 = vunpack.c.l.b16 %v536
      %v573 = vunpack.c.h.b16 %v536
      %v574 = vunpack.c.l.b16 %v537
      %v575 = vunpack.c.h.b16 %v537
      %v576 = vunpack.c.l.b16 %v538
      %v577 = vunpack.c.h.b16 %v538
      %v578 = vunpack.c.l.b16 %v539
      %v579 = vunpack.c.h.b16 %v539
      %v580 = vunpack.c.l.b16 %v540
      %v581 = vunpack.c.h.b16 %v540
      %v582 = vunpack.c.l.b16 %v541
      %v583 = vunpack.c.h.b16 %v541
      %v584 = vunpack.c.l.b16 %v542
      %v585 = vunpack.c.h.b16 %v542
      %v586 = vunpack.c.l.b16 %v543
      %v587 = vunpack.c.h.b16 %v543
      %v588 = vunpack.c.l.b16 %v544
      %v589 = vunpack.c.h.b16 %v544
      %v590 = vunpack.c.l.b16 %v545
      %v591 = vunpack.c.h.b16 %v545
      %v592 = vunpack.c.l.b16 %v546
      %v593 = vunpack.c.h.b16 %v546
      %v594 = vunpack.c.l.b16 %v547
      %v595 = vunpack.c.h.b16 %v547
      %v596 = vpack.c.b16 %v564, %v564
      %v597 = vpack.c.b16 %v565, %v565
      %v598 = vpack.c.b16 %v566, %v566
      %v599 = vpack.c.b16 %v567, %v567
      %v600 = vpack.c.b16 %v568, %v568
      %v601 = vpack.c.b16 %v569, %v569
      %v602 = vpack.c.b16 %v570, %v570
      %v603 = vpack.c.b16 %v571, %v571
      %v604 = vpack.c.b16 %v572, %v572
      %v605 = vpack.c.b16 %v573, %v573
      %v606 = vpack.c.b16 %v574, %v574
      %v607 = vpack.c.b16 %v575, %v575
      %v608 = vpack.c.b16 %v576, %v576
      %v609 = vpack.c.b16 %v577, %v577
      %v610 = vpack.c.b16 %v578, %v578
      %v611 = vpack.c.b16 %v579, %v579
      %v612 = vpack.c.b16 %v580, %v580
      %v613 = vpack.c.b16 %v581, %v581
      %v614 = vpack.c.b16 %v582, %v582
      %v615 = vpack.c.b16 %v583, %v583
      %v616 = vpack.c.b16 %v584, %v584
      %v617 = vpack.c.b16 %v585, %v585
      %v618 = vpack.c.b16 %v586, %v586
      %v619 = vpack.c.b16 %v587, %v587
      %v620 = vpack.c.b16 %v588, %v588
      %v621 = vpack.c.b16 %v589, %v589
      %v622 = vpack.c.b16 %v590, %v590
      %v623 = vpack.c.b16 %v591, %v591
      %v624 = vpack.c.b16 %v592, %v592
      %v625 = vpack.c.b16 %v593, %v593
      %v626 = vpack.c.b16 %v594, %v594
      %v627 = vpack.c.b16 %v595, %v595
      %vm628 = vsmask.f32 4368
      %vm629 = vmor %vm278, %vm628
      %v631 = vshrl.u32 %v596, 16
      %v633 = vrot.slane %v631, 7
      %v634 = vshll.u32 %v596, 16
      %v636 = vor.u32 %v633, %v634
      %v637 = vrot.slane %v633, 4
      %v639 = vshrl.u32 %v597, 16
      %v641 = vrot.slane %v639, 7
      %v642 = vshll.u32 %v597, 16
      %v644 = vor.u32 %v641, %v642
      %v645 = vsel %vm629, %v637, %v644
      %v646 = vrot.slane %v641, 4
      %v648 = vshrl.u32 %v598, 16
      %v650 = vrot.slane %v648, 7
      %v651 = vshll.u32 %v598, 16
      %v653 = vor.u32 %v650, %v651
      %v654 = vrot.slane %v650, 4
      %v656 = vshrl.u32 %v599, 16
      %v658 = vrot.slane %v656, 7
      %v659 = vshll.u32 %v599, 16
      %v661 = vor.u32 %v658, %v659
      %v662 = vsel %vm629, %v654, %v661
      %v663 = vrot.slane %v658, 4
      %v665 = vshrl.u32 %v600, 16
      %v667 = vrot.slane %v665, 7
      %v668 = vshll.u32 %v600, 16
      %v670 = vor.u32 %v667, %v668
      %v671 = vrot.slane %v667, 4
      %v673 = vshrl.u32 %v601, 16
      %v675 = vrot.slane %v673, 7
      %v676 = vshll.u32 %v601, 16
      %v678 = vor.u32 %v675, %v676
      %v679 = vsel %vm629, %v671, %v678
      %v680 = vrot.slane %v675, 4
      %v682 = vshrl.u32 %v602, 16
      %v684 = vrot.slane %v682, 7
      %v685 = vshll.u32 %v602, 16
      %v687 = vor.u32 %v684, %v685
      %v688 = vrot.slane %v684, 4
      %v690 = vshrl.u32 %v603, 16
      %v692 = vrot.slane %v690, 7
      %v693 = vshll.u32 %v603, 16
      %v695 = vor.u32 %v692, %v693
      %v696 = vsel %vm629, %v688, %v695
      %v697 = vrot.slane %v692, 4
      %v699 = vshrl.u32 %v604, 16
      %v701 = vrot.slane %v699, 7
      %v702 = vshll.u32 %v604, 16
      %v704 = vor.u32 %v701, %v702
      %v705 = vrot.slane %v701, 4
      %v707 = vshrl.u32 %v605, 16
      %v709 = vrot.slane %v707, 7
      %v710 = vshll.u32 %v605, 16
      %v712 = vor.u32 %v709, %v710
      %v713 = vsel %vm629, %v705, %v712
      %v714 = vrot.slane %v709, 4
      %v716 = vshrl.u32 %v606, 16
      %v718 = vrot.slane %v716, 7
      %v719 = vshll.u32 %v606, 16
      %v721 = vor.u32 %v718, %v719
      %v722 = vrot.slane %v718, 4
      %v724 = vshrl.u32 %v607, 16
      %v726 = vrot.slane %v724, 7
      %v727 = vshll.u32 %v607, 16
      %v729 = vor.u32 %v726, %v727
      %v730 = vsel %vm629, %v722, %v729
      %v731 = vrot.slane %v726, 4
      %v733 = vshrl.u32 %v608, 16
      %v735 = vrot.slane %v733, 7
      %v736 = vshll.u32 %v608, 16
      %v738 = vor.u32 %v735, %v736
      %v739 = vrot.slane %v735, 4
      %v741 = vshrl.u32 %v609, 16
      %v743 = vrot.slane %v741, 7
      %v744 = vshll.u32 %v609, 16
      %v746 = vor.u32 %v743, %v744
      %v747 = vsel %vm629, %v739, %v746
      %v748 = vrot.slane %v743, 4
      %v750 = vshrl.u32 %v610, 16
      %v752 = vrot.slane %v750, 7
      %v753 = vshll.u32 %v610, 16
      %v755 = vor.u32 %v752, %v753
      %v756 = vrot.slane %v752, 4
      %v758 = vshrl.u32 %v611, 16
      %v760 = vrot.slane %v758, 7
      %v761 = vshll.u32 %v611, 16
      %v763 = vor.u32 %v760, %v761
      %v764 = vsel %vm629, %v756, %v763
      %v765 = vrot.slane %v760, 4
      %v767 = vshrl.u32 %v612, 16
      %v769 = vrot.slane %v767, 7
      %v770 = vshll.u32 %v612, 16
      %v772 = vor.u32 %v769, %v770
      %v773 = vrot.slane %v769, 4
      %v775 = vshrl.u32 %v613, 16
      %v777 = vrot.slane %v775, 7
      %v778 = vshll.u32 %v613, 16
      %v780 = vor.u32 %v777, %v778
      %v781 = vsel %vm629, %v773, %v780
      %v782 = vrot.slane %v777, 4
      %v784 = vshrl.u32 %v614, 16
      %v786 = vrot.slane %v784, 7
      %v787 = vshll.u32 %v614, 16
      %v789 = vor.u32 %v786, %v787
      %v790 = vrot.slane %v786, 4
      %v792 = vshrl.u32 %v615, 16
      %v794 = vrot.slane %v792, 7
      %v795 = vshll.u32 %v615, 16
      %v797 = vor.u32 %v794, %v795
      %v798 = vsel %vm629, %v790, %v797
      %v799 = vrot.slane %v794, 4
      %v801 = vshrl.u32 %v616, 16
      %v803 = vrot.slane %v801, 7
      %v804 = vshll.u32 %v616, 16
      %v806 = vor.u32 %v803, %v804
      %v807 = vrot.slane %v803, 4
      %v809 = vshrl.u32 %v617, 16
      %v811 = vrot.slane %v809, 7
      %v812 = vshll.u32 %v617, 16
      %v814 = vor.u32 %v811, %v812
      %v815 = vsel %vm629, %v807, %v814
      %v816 = vrot.slane %v811, 4
      %v818 = vshrl.u32 %v618, 16
      %v820 = vrot.slane %v818, 7
      %v821 = vshll.u32 %v618, 16
      %v823 = vor.u32 %v820, %v821
      %v824 = vrot.slane %v820, 4
      %v826 = vshrl.u32 %v619, 16
      %v828 = vrot.slane %v826, 7
      %v829 = vshll.u32 %v619, 16
      %v831 = vor.u32 %v828, %v829
      %v832 = vsel %vm629, %v824, %v831
      %v833 = vrot.slane %v828, 4
      %v835 = vshrl.u32 %v620, 16
      %v837 = vrot.slane %v835, 7
      %v838 = vshll.u32 %v620, 16
      %v840 = vor.u32 %v837, %v838
      %v841 = vrot.slane %v837, 4
      %v843 = vshrl.u32 %v621, 16
      %v845 = vrot.slane %v843, 7
      %v846 = vshll.u32 %v621, 16
      %v848 = vor.u32 %v845, %v846
      %v849 = vsel %vm629, %v841, %v848
      %v850 = vrot.slane %v845, 4
      %v852 = vshrl.u32 %v622, 16
      %v854 = vrot.slane %v852, 7
      %v855 = vshll.u32 %v622, 16
      %v857 = vor.u32 %v854, %v855
      %v858 = vrot.slane %v854, 4
      %v860 = vshrl.u32 %v623, 16
      %v862 = vrot.slane %v860, 7
      %v863 = vshll.u32 %v623, 16
      %v865 = vor.u32 %v862, %v863
      %v866 = vsel %vm629, %v858, %v865
      %v867 = vrot.slane %v862, 4
      %v869 = vshrl.u32 %v624, 16
      %v871 = vrot.slane %v869, 7
      %v872 = vshll.u32 %v624, 16
      %v874 = vor.u32 %v871, %v872
      %v875 = vrot.slane %v871, 4
      %v877 = vshrl.u32 %v625, 16
      %v879 = vrot.slane %v877, 7
      %v880 = vshll.u32 %v625, 16
      %v882 = vor.u32 %v879, %v880
      %v883 = vsel %vm629, %v875, %v882
      %v884 = vrot.slane %v879, 4
      %v886 = vshrl.u32 %v626, 16
      %v888 = vrot.slane %v886, 7
      %v889 = vshll.u32 %v626, 16
      %v891 = vor.u32 %v888, %v889
      %v892 = vrot.slane %v888, 4
      %v894 = vshrl.u32 %v627, 16
      %v896 = vrot.slane %v894, 7
      %v897 = vshll.u32 %v627, 16
      %v899 = vor.u32 %v896, %v897
      %v900 = vsel %vm629, %v892, %v899
      %v901 = vrot.slane %v896, 4
      %s950 = scalar_lea.vmem [#allocation2], 12
      %vm951 = vcmask 1043456
      %vm952 = vmand %vm951, %vm334
      %v953 = vld [vmem:[%s950] sm:$0xf]
      %v954 = vsel %vm952, %v636, %v953
      %955 = vst [vmem:[%s950] sm:$0xf] %v954
      %956 = vst [vmem:[%s950 + $0x4] sm:$0xf] %v645
      %v957 = vld [vmem:[%s950 + $0x8] sm:$0x1]
      %v958 = vsel %vm279, %v646, %v957
      %959 = vst [vmem:[%s950 + $0x8] sm:$0x1] %v958
      %v960 = vld [vmem:[%s950 + $0xc] sm:$0xf]
      %v961 = vsel %vm952, %v653, %v960
      %962 = vst [vmem:[%s950 + $0xc] sm:$0xf] %v961
      %963 = vst [vmem:[%s950 + $0x10] sm:$0xf] %v662
      %v964 = vld [vmem:[%s950 + $0x14] sm:$0x1]
      %v965 = vsel %vm279, %v663, %v964
      %966 = vst [vmem:[%s950 + $0x14] sm:$0x1] %v965
      %v967 = vld [vmem:[%s950 + $0x18] sm:$0xf]
      %v968 = vsel %vm952, %v670, %v967
      %969 = vst [vmem:[%s950 + $0x18] sm:$0xf] %v968
      %970 = vst [vmem:[%s950 + $0x1c] sm:$0xf] %v679
      %v971 = vld [vmem:[%s950 + $0x20] sm:$0x1]
      %v972 = vsel %vm279, %v680, %v971
      %973 = vst [vmem:[%s950 + $0x20] sm:$0x1] %v972
      %v974 = vld [vmem:[%s950 + $0x24] sm:$0xf]
      %v975 = vsel %vm952, %v687, %v974
      %976 = vst [vmem:[%s950 + $0x24] sm:$0xf] %v975
      %977 = vst [vmem:[%s950 + $0x28] sm:$0xf] %v696
      %v978 = vld [vmem:[%s950 + $0x2c] sm:$0x1]
      %v979 = vsel %vm279, %v697, %v978
      %980 = vst [vmem:[%s950 + $0x2c] sm:$0x1] %v979
      %v981 = vld [vmem:[%s950 + $0x30] sm:$0xf]
      %v982 = vsel %vm952, %v704, %v981
      %983 = vst [vmem:[%s950 + $0x30] sm:$0xf] %v982
      %984 = vst [vmem:[%s950 + $0x34] sm:$0xf] %v713
      %v985 = vld [vmem:[%s950 + $0x38] sm:$0x1]
      %v986 = vsel %vm279, %v714, %v985
      %987 = vst [vmem:[%s950 + $0x38] sm:$0x1] %v986
      %v988 = vld [vmem:[%s950 + $0x3c] sm:$0xf]
      %v989 = vsel %vm952, %v721, %v988
      %990 = vst [vmem:[%s950 + $0x3c] sm:$0xf] %v989
      %991 = vst [vmem:[%s950 + $0x40] sm:$0xf] %v730
      %v992 = vld [vmem:[%s950 + $0x44] sm:$0x1]
      %v993 = vsel %vm279, %v731, %v992
      %994 = vst [vmem:[%s950 + $0x44] sm:$0x1] %v993
      %v995 = vld [vmem:[%s950 + $0x48] sm:$0xf]
      %v996 = vsel %vm952, %v738, %v995
      %997 = vst [vmem:[%s950 + $0x48] sm:$0xf] %v996
      %998 = vst [vmem:[%s950 + $0x4c] sm:$0xf] %v747
      %v999 = vld [vmem:[%s950 + $0x50] sm:$0x1]
      %v1000 = vsel %vm279, %v748, %v999
      %1001 = vst [vmem:[%s950 + $0x50] sm:$0x1] %v1000
      %v1002 = vld [vmem:[%s950 + $0x54] sm:$0xf]
      %v1003 = vsel %vm952, %v755, %v1002
      %1004 = vst [vmem:[%s950 + $0x54] sm:$0xf] %v1003
      %1005 = vst [vmem:[%s950 + $0x58] sm:$0xf] %v764
      %v1006 = vld [vmem:[%s950 + $0x5c] sm:$0x1]
      %v1007 = vsel %vm279, %v765, %v1006
      %1008 = vst [vmem:[%s950 + $0x5c] sm:$0x1] %v1007
      %v1009 = vld [vmem:[%s950 + $0x60] sm:$0xf]
      %v1010 = vsel %vm952, %v772, %v1009
      %1011 = vst [vmem:[%s950 + $0x60] sm:$0xf] %v1010
      %1012 = vst [vmem:[%s950 + $0x64] sm:$0xf] %v781
      %v1013 = vld [vmem:[%s950 + $0x68] sm:$0x1]
      %v1014 = vsel %vm279, %v782, %v1013
      %1015 = vst [vmem:[%s950 + $0x68] sm:$0x1] %v1014
      %v1016 = vld [vmem:[%s950 + $0x6c] sm:$0xf]
      %v1017 = vsel %vm952, %v789, %v1016
      %1018 = vst [vmem:[%s950 + $0x6c] sm:$0xf] %v1017
      %1019 = vst [vmem:[%s950 + $0x70] sm:$0xf] %v798
      %v1020 = vld [vmem:[%s950 + $0x74] sm:$0x1]
      %v1021 = vsel %vm279, %v799, %v1020
      %1022 = vst [vmem:[%s950 + $0x74] sm:$0x1] %v1021
      %v1023 = vld [vmem:[%s950 + $0x78] sm:$0xf]
      %v1024 = vsel %vm952, %v806, %v1023
      %1025 = vst [vmem:[%s950 + $0x78] sm:$0xf] %v1024
      %1026 = vst [vmem:[%s950 + $0x7c] sm:$0xf] %v815
      %v1027 = vld [vmem:[%s950 + $0x80] sm:$0x1]
      %v1028 = vsel %vm279, %v816, %v1027
      %1029 = vst [vmem:[%s950 + $0x80] sm:$0x1] %v1028
      %v1030 = vld [vmem:[%s950 + $0x84] sm:$0xf]
      %v1031 = vsel %vm952, %v823, %v1030
      %1032 = vst [vmem:[%s950 + $0x84] sm:$0xf] %v1031
      %1033 = vst [vmem:[%s950 + $0x88] sm:$0xf] %v832
      %v1034 = vld [vmem:[%s950 + $0x8c] sm:$0x1]
      %v1035 = vsel %vm279, %v833, %v1034
      %1036 = vst [vmem:[%s950 + $0x8c] sm:$0x1] %v1035
      %v1037 = vld [vmem:[%s950 + $0x90] sm:$0xf]
      %v1038 = vsel %vm952, %v840, %v1037
      %1039 = vst [vmem:[%s950 + $0x90] sm:$0xf] %v1038
      %1040 = vst [vmem:[%s950 + $0x94] sm:$0xf] %v849
      %v1041 = vld [vmem:[%s950 + $0x98] sm:$0x1]
      %v1042 = vsel %vm279, %v850, %v1041
      %1043 = vst [vmem:[%s950 + $0x98] sm:$0x1] %v1042
      %v1044 = vld [vmem:[%s950 + $0x9c] sm:$0xf]
      %v1045 = vsel %vm952, %v857, %v1044
      %1046 = vst [vmem:[%s950 + $0x9c] sm:$0xf] %v1045
      %1047 = vst [vmem:[%s950 + $0xa0] sm:$0xf] %v866
      %v1048 = vld [vmem:[%s950 + $0xa4] sm:$0x1]
      %v1049 = vsel %vm279, %v867, %v1048
      %1050 = vst [vmem:[%s950 + $0xa4] sm:$0x1] %v1049
      %v1051 = vld [vmem:[%s950 + $0xa8] sm:$0xf]
      %v1052 = vsel %vm952, %v874, %v1051
      %1053 = vst [vmem:[%s950 + $0xa8] sm:$0xf] %v1052
      %1054 = vst [vmem:[%s950 + $0xac] sm:$0xf] %v883
      %v1055 = vld [vmem:[%s950 + $0xb0] sm:$0x1]
      %v1056 = vsel %vm279, %v884, %v1055
      %1057 = vst [vmem:[%s950 + $0xb0] sm:$0x1] %v1056
      %v1058 = vld [vmem:[%s950 + $0xb4] sm:$0xf]
      %v1059 = vsel %vm952, %v891, %v1058
      %1060 = vst [vmem:[%s950 + $0xb4] sm:$0xf] %v1059
      %1061 = vst [vmem:[%s950 + $0xb8] sm:$0xf] %v900
      %v1062 = vld [vmem:[%s950 + $0xbc] sm:$0x1]
      %v1063 = vsel %vm279, %v901, %v1062
      %1064 = vst [vmem:[%s950 + $0xbc] sm:$0x1] %v1063
      %v1065 = vld [vmem:[#allocation2] sm:$0xf]
      %v1066 = vld [vmem:[#allocation2 + $0x4] sm:$0xf]
      %v1067 = vld [vmem:[#allocation2 + $0xc] sm:$0xf]
      %v1068 = vld [vmem:[#allocation2 + $0x10] sm:$0xf]
      %v1069 = vld [vmem:[#allocation2 + $0x18] sm:$0xf]
      %v1070 = vld [vmem:[#allocation2 + $0x1c] sm:$0xf]
      %v1071 = vld [vmem:[#allocation2 + $0x24] sm:$0xf]
      %v1072 = vld [vmem:[#allocation2 + $0x28] sm:$0xf]
      %v1073 = vld [vmem:[#allocation2 + $0x30] sm:$0xf]
      %v1074 = vld [vmem:[#allocation2 + $0x34] sm:$0xf]
      %v1075 = vld [vmem:[#allocation2 + $0x3c] sm:$0xf]
      %v1076 = vld [vmem:[#allocation2 + $0x40] sm:$0xf]
      %v1077 = vld [vmem:[#allocation2 + $0x48] sm:$0xf]
      %v1078 = vld [vmem:[#allocation2 + $0x4c] sm:$0xf]
      %v1079 = vld [vmem:[#allocation2 + $0x54] sm:$0xf]
      %v1080 = vld [vmem:[#allocation2 + $0x58] sm:$0xf]
      %v1081 = vld [vmem:[#allocation2 + $0x60] sm:$0xf]
      %v1082 = vld [vmem:[#allocation2 + $0x64] sm:$0xf]
      %v1083 = vld [vmem:[#allocation2 + $0x6c] sm:$0xf]
      %v1084 = vld [vmem:[#allocation2 + $0x70] sm:$0xf]
      %v1085 = vld [vmem:[#allocation2 + $0x78] sm:$0xf]
      %v1086 = vld [vmem:[#allocation2 + $0x7c] sm:$0xf]
      %v1087 = vld [vmem:[#allocation2 + $0x84] sm:$0xf]
      %v1088 = vld [vmem:[#allocation2 + $0x88] sm:$0xf]
      %v1089 = vld [vmem:[#allocation2 + $0x90] sm:$0xf]
      %v1090 = vld [vmem:[#allocation2 + $0x94] sm:$0xf]
      %v1091 = vld [vmem:[#allocation2 + $0x9c] sm:$0xf]
      %v1092 = vld [vmem:[#allocation2 + $0xa0] sm:$0xf]
      %v1093 = vld [vmem:[#allocation2 + $0xa8] sm:$0xf]
      %v1094 = vld [vmem:[#allocation2 + $0xac] sm:$0xf]
      %v1095 = vld [vmem:[#allocation2 + $0xb4] sm:$0xf]
      %v1096 = vld [vmem:[#allocation2 + $0xb8] sm:$0xf]
      %v1129 = vunpack.c.l.b16 %v1065
      %v1130 = vunpack.c.l.b16 %v1066
      %v1131 = vunpack.c.l.b16 %v1067
      %v1132 = vunpack.c.l.b16 %v1068
      %v1133 = vunpack.c.l.b16 %v1069
      %v1134 = vunpack.c.l.b16 %v1070
      %v1135 = vunpack.c.l.b16 %v1071
      %v1136 = vunpack.c.l.b16 %v1072
      %v1137 = vunpack.c.l.b16 %v1073
      %v1138 = vunpack.c.l.b16 %v1074
      %v1139 = vunpack.c.l.b16 %v1075
      %v1140 = vunpack.c.l.b16 %v1076
      %v1141 = vunpack.c.l.b16 %v1077
      %v1142 = vunpack.c.l.b16 %v1078
      %v1143 = vunpack.c.l.b16 %v1079
      %v1144 = vunpack.c.l.b16 %v1080
      %v1145 = vunpack.c.l.b16 %v1081
      %v1146 = vunpack.c.l.b16 %v1082
      %v1147 = vunpack.c.l.b16 %v1083
      %v1148 = vunpack.c.l.b16 %v1084
      %v1149 = vunpack.c.l.b16 %v1085
      %v1150 = vunpack.c.l.b16 %v1086
      %v1151 = vunpack.c.l.b16 %v1087
      %v1152 = vunpack.c.l.b16 %v1088
      %v1153 = vunpack.c.l.b16 %v1089
      %v1154 = vunpack.c.l.b16 %v1090
      %v1155 = vunpack.c.l.b16 %v1091
      %v1156 = vunpack.c.l.b16 %v1092
      %v1157 = vunpack.c.l.b16 %v1093
      %v1158 = vunpack.c.l.b16 %v1094
      %v1159 = vunpack.c.l.b16 %v1095
      %v1160 = vunpack.c.l.b16 %v1096
      %v1161 = vpack.c.b16 %v1130, %v1129
      %v1162 = vpack.c.b16 %v1132, %v1131
      %v1163 = vpack.c.b16 %v1134, %v1133
      %v1164 = vpack.c.b16 %v1136, %v1135
      %v1165 = vpack.c.b16 %v1138, %v1137
      %v1166 = vpack.c.b16 %v1140, %v1139
      %v1167 = vpack.c.b16 %v1142, %v1141
      %v1168 = vpack.c.b16 %v1144, %v1143
      %v1169 = vpack.c.b16 %v1146, %v1145
      %v1170 = vpack.c.b16 %v1148, %v1147
      %v1171 = vpack.c.b16 %v1150, %v1149
      %v1172 = vpack.c.b16 %v1152, %v1151
      %v1173 = vpack.c.b16 %v1154, %v1153
      %v1174 = vpack.c.b16 %v1156, %v1155
      %v1175 = vpack.c.b16 %v1158, %v1157
      %v1176 = vpack.c.b16 %v1160, %v1159
      %1193 = vst [vmem:[#allocation3] sm:$0xff] %v1161
      %1194 = vst [vmem:[#allocation3 + $0x48] sm:$0xff] %v1162
      %1195 = vst [vmem:[#allocation3 + $0x90] sm:$0xff] %v1163
      %1196 = vst [vmem:[#allocation3 + $0xd8] sm:$0xff] %v1164
      %1197 = vst [vmem:[#allocation3 + $0x120] sm:$0xff] %v1165
      %1198 = vst [vmem:[#allocation3 + $0x168] sm:$0xff] %v1166
      %1199 = vst [vmem:[#allocation3 + $0x1b0] sm:$0xff] %v1167
      %1200 = vst [vmem:[#allocation3 + $0x1f8] sm:$0xff] %v1168
      %1201 = vst [vmem:[#allocation3 + $0x240] sm:$0xff] %v1169
      %1202 = vst [vmem:[#allocation3 + $0x288] sm:$0xff] %v1170
      %1203 = vst [vmem:[#allocation3 + $0x2d0] sm:$0xff] %v1171
      %1204 = vst [vmem:[#allocation3 + $0x318] sm:$0xff] %v1172
      %1205 = vst [vmem:[#allocation3 + $0x360] sm:$0xff] %v1173
      %1206 = vst [vmem:[#allocation3 + $0x3a8] sm:$0xff] %v1174
      %1207 = vst [vmem:[#allocation3 + $0x3f0] sm:$0xff] %v1175
      %1208 = vst [vmem:[#allocation3 + $0x438] sm:$0xff] %v1176
      %v1209 = vld [vmem:[#allocation2] sm:$0xf]
      %v1210 = vld [vmem:[#allocation2 + $0x4] sm:$0xf]
      %v1211 = vld [vmem:[#allocation2 + $0x8] sm:$0x1]
      %v1212 = vld [vmem:[#allocation2 + $0xc] sm:$0xf]
      %v1213 = vld [vmem:[#allocation2 + $0x10] sm:$0xf]
      %v1214 = vld [vmem:[#allocation2 + $0x14] sm:$0x1]
      %v1215 = vld [vmem:[#allocation2 + $0x18] sm:$0xf]
      %v1216 = vld [vmem:[#allocation2 + $0x1c] sm:$0xf]
      %v1217 = vld [vmem:[#allocation2 + $0x20] sm:$0x1]
      %v1218 = vld [vmem:[#allocation2 + $0x24] sm:$0xf]
      %v1219 = vld [vmem:[#allocation2 + $0x28] sm:$0xf]
      %v1220 = vld [vmem:[#allocation2 + $0x2c] sm:$0x1]
      %v1221 = vld [vmem:[#allocation2 + $0x30] sm:$0xf]
      %v1222 = vld [vmem:[#allocation2 + $0x34] sm:$0xf]
      %v1223 = vld [vmem:[#allocation2 + $0x38] sm:$0x1]
      %v1224 = vld [vmem:[#allocation2 + $0x3c] sm:$0xf]
      %v1225 = vld [vmem:[#allocation2 + $0x40] sm:$0xf]
      %v1226 = vld [vmem:[#allocation2 + $0x44] sm:$0x1]
      %v1227 = vld [vmem:[#allocation2 + $0x48] sm:$0xf]
      %v1228 = vld [vmem:[#allocation2 + $0x4c] sm:$0xf]
      %v1229 = vld [vmem:[#allocation2 + $0x50] sm:$0x1]
      %v1230 = vld [vmem:[#allocation2 + $0x54] sm:$0xf]
      %v1231 = vld [vmem:[#allocation2 + $0x58] sm:$0xf]
      %v1232 = vld [vmem:[#allocation2 + $0x5c] sm:$0x1]
      %v1233 = vld [vmem:[#allocation2 + $0x60] sm:$0xf]
      %v1234 = vld [vmem:[#allocation2 + $0x64] sm:$0xf]
      %v1235 = vld [vmem:[#allocation2 + $0x68] sm:$0x1]
      %v1236 = vld [vmem:[#allocation2 + $0x6c] sm:$0xf]
      %v1237 = vld [vmem:[#allocation2 + $0x70] sm:$0xf]
      %v1238 = vld [vmem:[#allocation2 + $0x74] sm:$0x1]
      %v1239 = vld [vmem:[#allocation2 + $0x78] sm:$0xf]
      %v1240 = vld [vmem:[#allocation2 + $0x7c] sm:$0xf]
      %v1241 = vld [vmem:[#allocation2 + $0x80] sm:$0x1]
      %v1242 = vld [vmem:[#allocation2 + $0x84] sm:$0xf]
      %v1243 = vld [vmem:[#allocation2 + $0x88] sm:$0xf]
      %v1244 = vld [vmem:[#allocation2 + $0x8c] sm:$0x1]
      %v1245 = vld [vmem:[#allocation2 + $0x90] sm:$0xf]
      %v1246 = vld [vmem:[#allocation2 + $0x94] sm:$0xf]
      %v1247 = vld [vmem:[#allocation2 + $0x98] sm:$0x1]
      %v1248 = vld [vmem:[#allocation2 + $0x9c] sm:$0xf]
      %v1249 = vld [vmem:[#allocation2 + $0xa0] sm:$0xf]
      %v1250 = vld [vmem:[#allocation2 + $0xa4] sm:$0x1]
      %v1251 = vld [vmem:[#allocation2 + $0xa8] sm:$0xf]
      %v1252 = vld [vmem:[#allocation2 + $0xac] sm:$0xf]
      %v1253 = vld [vmem:[#allocation2 + $0xb0] sm:$0x1]
      %v1254 = vld [vmem:[#allocation2 + $0xb4] sm:$0xf]
      %v1255 = vld [vmem:[#allocation2 + $0xb8] sm:$0xf]
      %v1256 = vld [vmem:[#allocation2 + $0xbc] sm:$0x1]
      %vm1257 = vsmask.f32 3328
      %vm1258 = vsmask.f32 7440
      %vm1259 = vmor %vm1257, %vm1258
      %v1261 = vshrl.u32 %v1209, 16
      %v1263 = vrot.slane %v1261, 4
      %v1264 = vshll.u32 %v1209, 16
      %v1266 = vrot.slane %v1264, 5
      %v1267 = vor.u32 %v1263, %v1266
      %v1268 = vrot.slane %v1267, 4
      %v1270 = vshll.u32 %v1210, 16
      %v1272 = vrot.slane %v1270, 5
      %v1273 = vsel %vm1259, %v1268, %v1272
      %v1274 = vshrl.u32 %v1210, 16
      %v1276 = vrot.slane %v1274, 4
      %v1277 = vor.u32 %v1276, %v1272
      %v1278 = vrot.slane %v1277, 4
      %v1280 = vshll.u32 %v1211, 16
      %v1282 = vrot.slane %v1280, 5
      %v1283 = vsel %vm1259, %v1278, %v1282
      %v1285 = vshrl.u32 %v1212, 16
      %v1287 = vrot.slane %v1285, 4
      %v1288 = vshll.u32 %v1212, 16
      %v1290 = vrot.slane %v1288, 5
      %v1291 = vor.u32 %v1287, %v1290
      %v1292 = vrot.slane %v1291, 4
      %v1294 = vshll.u32 %v1213, 16
      %v1296 = vrot.slane %v1294, 5
      %v1297 = vsel %vm1259, %v1292, %v1296
      %v1298 = vshrl.u32 %v1213, 16
      %v1300 = vrot.slane %v1298, 4
      %v1301 = vor.u32 %v1300, %v1296
      %v1302 = vrot.slane %v1301, 4
      %v1304 = vshll.u32 %v1214, 16
      %v1306 = vrot.slane %v1304, 5
      %v1307 = vsel %vm1259, %v1302, %v1306
      %v1309 = vshrl.u32 %v1215, 16
      %v1311 = vrot.slane %v1309, 4
      %v1312 = vshll.u32 %v1215, 16
      %v1314 = vrot.slane %v1312, 5
      %v1315 = vor.u32 %v1311, %v1314
      %v1316 = vrot.slane %v1315, 4
      %v1318 = vshll.u32 %v1216, 16
      %v1320 = vrot.slane %v1318, 5
      %v1321 = vsel %vm1259, %v1316, %v1320
      %v1322 = vshrl.u32 %v1216, 16
      %v1324 = vrot.slane %v1322, 4
      %v1325 = vor.u32 %v1324, %v1320
      %v1326 = vrot.slane %v1325, 4
      %v1328 = vshll.u32 %v1217, 16
      %v1330 = vrot.slane %v1328, 5
      %v1331 = vsel %vm1259, %v1326, %v1330
      %v1333 = vshrl.u32 %v1218, 16
      %v1335 = vrot.slane %v1333, 4
      %v1336 = vshll.u32 %v1218, 16
      %v1338 = vrot.slane %v1336, 5
      %v1339 = vor.u32 %v1335, %v1338
      %v1340 = vrot.slane %v1339, 4
      %v1342 = vshll.u32 %v1219, 16
      %v1344 = vrot.slane %v1342, 5
      %v1345 = vsel %vm1259, %v1340, %v1344
      %v1346 = vshrl.u32 %v1219, 16
      %v1348 = vrot.slane %v1346, 4
      %v1349 = vor.u32 %v1348, %v1344
      %v1350 = vrot.slane %v1349, 4
      %v1352 = vshll.u32 %v1220, 16
      %v1354 = vrot.slane %v1352, 5
      %v1355 = vsel %vm1259, %v1350, %v1354
      %v1357 = vshrl.u32 %v1221, 16
      %v1359 = vrot.slane %v1357, 4
      %v1360 = vshll.u32 %v1221, 16
      %v1362 = vrot.slane %v1360, 5
      %v1363 = vor.u32 %v1359, %v1362
      %v1364 = vrot.slane %v1363, 4
      %v1366 = vshll.u32 %v1222, 16
      %v1368 = vrot.slane %v1366, 5
      %v1369 = vsel %vm1259, %v1364, %v1368
      %v1370 = vshrl.u32 %v1222, 16
      %v1372 = vrot.slane %v1370, 4
      %v1373 = vor.u32 %v1372, %v1368
      %v1374 = vrot.slane %v1373, 4
      %v1376 = vshll.u32 %v1223, 16
      %v1378 = vrot.slane %v1376, 5
      %v1379 = vsel %vm1259, %v1374, %v1378
      %v1381 = vshrl.u32 %v1224, 16
      %v1383 = vrot.slane %v1381, 4
      %v1384 = vshll.u32 %v1224, 16
      %v1386 = vrot.slane %v1384, 5
      %v1387 = vor.u32 %v1383, %v1386
      %v1388 = vrot.slane %v1387, 4
      %v1390 = vshll.u32 %v1225, 16
      %v1392 = vrot.slane %v1390, 5
      %v1393 = vsel %vm1259, %v1388, %v1392
      %v1394 = vshrl.u32 %v1225, 16
      %v1396 = vrot.slane %v1394, 4
      %v1397 = vor.u32 %v1396, %v1392
      %v1398 = vrot.slane %v1397, 4
      %v1400 = vshll.u32 %v1226, 16
      %v1402 = vrot.slane %v1400, 5
      %v1403 = vsel %vm1259, %v1398, %v1402
      %v1405 = vshrl.u32 %v1227, 16
      %v1407 = vrot.slane %v1405, 4
      %v1408 = vshll.u32 %v1227, 16
      %v1410 = vrot.slane %v1408, 5
      %v1411 = vor.u32 %v1407, %v1410
      %v1412 = vrot.slane %v1411, 4
      %v1414 = vshll.u32 %v1228, 16
      %v1416 = vrot.slane %v1414, 5
      %v1417 = vsel %vm1259, %v1412, %v1416
      %v1418 = vshrl.u32 %v1228, 16
      %v1420 = vrot.slane %v1418, 4
      %v1421 = vor.u32 %v1420, %v1416
      %v1422 = vrot.slane %v1421, 4
      %v1424 = vshll.u32 %v1229, 16
      %v1426 = vrot.slane %v1424, 5
      %v1427 = vsel %vm1259, %v1422, %v1426
      %v1429 = vshrl.u32 %v1230, 16
      %v1431 = vrot.slane %v1429, 4
      %v1432 = vshll.u32 %v1230, 16
      %v1434 = vrot.slane %v1432, 5
      %v1435 = vor.u32 %v1431, %v1434
      %v1436 = vrot.slane %v1435, 4
      %v1438 = vshll.u32 %v1231, 16
      %v1440 = vrot.slane %v1438, 5
      %v1441 = vsel %vm1259, %v1436, %v1440
      %v1442 = vshrl.u32 %v1231, 16
      %v1444 = vrot.slane %v1442, 4
      %v1445 = vor.u32 %v1444, %v1440
      %v1446 = vrot.slane %v1445, 4
      %v1448 = vshll.u32 %v1232, 16
      %v1450 = vrot.slane %v1448, 5
      %v1451 = vsel %vm1259, %v1446, %v1450
      %v1453 = vshrl.u32 %v1233, 16
      %v1455 = vrot.slane %v1453, 4
      %v1456 = vshll.u32 %v1233, 16
      %v1458 = vrot.slane %v1456, 5
      %v1459 = vor.u32 %v1455, %v1458
      %v1460 = vrot.slane %v1459, 4
      %v1462 = vshll.u32 %v1234, 16
      %v1464 = vrot.slane %v1462, 5
      %v1465 = vsel %vm1259, %v1460, %v1464
      %v1466 = vshrl.u32 %v1234, 16
      %v1468 = vrot.slane %v1466, 4
      %v1469 = vor.u32 %v1468, %v1464
      %v1470 = vrot.slane %v1469, 4
      %v1472 = vshll.u32 %v1235, 16
      %v1474 = vrot.slane %v1472, 5
      %v1475 = vsel %vm1259, %v1470, %v1474
      %v1477 = vshrl.u32 %v1236, 16
      %v1479 = vrot.slane %v1477, 4
      %v1480 = vshll.u32 %v1236, 16
      %v1482 = vrot.slane %v1480, 5
      %v1483 = vor.u32 %v1479, %v1482
      %v1484 = vrot.slane %v1483, 4
      %v1486 = vshll.u32 %v1237, 16
      %v1488 = vrot.slane %v1486, 5
      %v1489 = vsel %vm1259, %v1484, %v1488
      %v1490 = vshrl.u32 %v1237, 16
      %v1492 = vrot.slane %v1490, 4
      %v1493 = vor.u32 %v1492, %v1488
      %v1494 = vrot.slane %v1493, 4
      %v1496 = vshll.u32 %v1238, 16
      %v1498 = vrot.slane %v1496, 5
      %v1499 = vsel %vm1259, %v1494, %v1498
      %v1501 = vshrl.u32 %v1239, 16
      %v1503 = vrot.slane %v1501, 4
      %v1504 = vshll.u32 %v1239, 16
      %v1506 = vrot.slane %v1504, 5
      %v1507 = vor.u32 %v1503, %v1506
      %v1508 = vrot.slane %v1507, 4
      %v1510 = vshll.u32 %v1240, 16
      %v1512 = vrot.slane %v1510, 5
      %v1513 = vsel %vm1259, %v1508, %v1512
      %v1514 = vshrl.u32 %v1240, 16
      %v1516 = vrot.slane %v1514, 4
      %v1517 = vor.u32 %v1516, %v1512
      %v1518 = vrot.slane %v1517, 4
      %v1520 = vshll.u32 %v1241, 16
      %v1522 = vrot.slane %v1520, 5
      %v1523 = vsel %vm1259, %v1518, %v1522
      %v1525 = vshrl.u32 %v1242, 16
      %v1527 = vrot.slane %v1525, 4
      %v1528 = vshll.u32 %v1242, 16
      %v1530 = vrot.slane %v1528, 5
      %v1531 = vor.u32 %v1527, %v1530
      %v1532 = vrot.slane %v1531, 4
      %v1534 = vshll.u32 %v1243, 16
      %v1536 = vrot.slane %v1534, 5
      %v1537 = vsel %vm1259, %v1532, %v1536
      %v1538 = vshrl.u32 %v1243, 16
      %v1540 = vrot.slane %v1538, 4
      %v1541 = vor.u32 %v1540, %v1536
      %v1542 = vrot.slane %v1541, 4
      %v1544 = vshll.u32 %v1244, 16
      %v1546 = vrot.slane %v1544, 5
      %v1547 = vsel %vm1259, %v1542, %v1546
      %v1549 = vshrl.u32 %v1245, 16
      %v1551 = vrot.slane %v1549, 4
      %v1552 = vshll.u32 %v1245, 16
      %v1554 = vrot.slane %v1552, 5
      %v1555 = vor.u32 %v1551, %v1554
      %v1556 = vrot.slane %v1555, 4
      %v1558 = vshll.u32 %v1246, 16
      %v1560 = vrot.slane %v1558, 5
      %v1561 = vsel %vm1259, %v1556, %v1560
      %v1562 = vshrl.u32 %v1246, 16
      %v1564 = vrot.slane %v1562, 4
      %v1565 = vor.u32 %v1564, %v1560
      %v1566 = vrot.slane %v1565, 4
      %v1568 = vshll.u32 %v1247, 16
      %v1570 = vrot.slane %v1568, 5
      %v1571 = vsel %vm1259, %v1566, %v1570
      %v1573 = vshrl.u32 %v1248, 16
      %v1575 = vrot.slane %v1573, 4
      %v1576 = vshll.u32 %v1248, 16
      %v1578 = vrot.slane %v1576, 5
      %v1579 = vor.u32 %v1575, %v1578
      %v1580 = vrot.slane %v1579, 4
      %v1582 = vshll.u32 %v1249, 16
      %v1584 = vrot.slane %v1582, 5
      %v1585 = vsel %vm1259, %v1580, %v1584
      %v1586 = vshrl.u32 %v1249, 16
      %v1588 = vrot.slane %v1586, 4
      %v1589 = vor.u32 %v1588, %v1584
      %v1590 = vrot.slane %v1589, 4
      %v1592 = vshll.u32 %v1250, 16
      %v1594 = vrot.slane %v1592, 5
      %v1595 = vsel %vm1259, %v1590, %v1594
      %v1597 = vshrl.u32 %v1251, 16
      %v1599 = vrot.slane %v1597, 4
      %v1600 = vshll.u32 %v1251, 16
      %v1602 = vrot.slane %v1600, 5
      %v1603 = vor.u32 %v1599, %v1602
      %v1604 = vrot.slane %v1603, 4
      %v1606 = vshll.u32 %v1252, 16
      %v1608 = vrot.slane %v1606, 5
      %v1609 = vsel %vm1259, %v1604, %v1608
      %v1610 = vshrl.u32 %v1252, 16
      %v1612 = vrot.slane %v1610, 4
      %v1613 = vor.u32 %v1612, %v1608
      %v1614 = vrot.slane %v1613, 4
      %v1616 = vshll.u32 %v1253, 16
      %v1618 = vrot.slane %v1616, 5
      %v1619 = vsel %vm1259, %v1614, %v1618
      %v1621 = vshrl.u32 %v1254, 16
      %v1623 = vrot.slane %v1621, 4
      %v1624 = vshll.u32 %v1254, 16
      %v1626 = vrot.slane %v1624, 5
      %v1627 = vor.u32 %v1623, %v1626
      %v1628 = vrot.slane %v1627, 4
      %v1630 = vshll.u32 %v1255, 16
      %v1632 = vrot.slane %v1630, 5
      %v1633 = vsel %vm1259, %v1628, %v1632
      %v1634 = vshrl.u32 %v1255, 16
      %v1636 = vrot.slane %v1634, 4
      %v1637 = vor.u32 %v1636, %v1632
      %v1638 = vrot.slane %v1637, 4
      %v1640 = vshll.u32 %v1256, 16
      %v1642 = vrot.slane %v1640, 5
      %v1643 = vsel %vm1259, %v1638, %v1642
      %v1644 = vunpack.c.l.b16 %v1273
      %v1645 = vunpack.c.l.b16 %v1283
      %v1646 = vunpack.c.l.b16 %v1297
      %v1647 = vunpack.c.l.b16 %v1307
      %v1648 = vunpack.c.l.b16 %v1321
      %v1649 = vunpack.c.l.b16 %v1331
      %v1650 = vunpack.c.l.b16 %v1345
      %v1651 = vunpack.c.l.b16 %v1355
      %v1652 = vunpack.c.l.b16 %v1369
      %v1653 = vunpack.c.l.b16 %v1379
      %v1654 = vunpack.c.l.b16 %v1393
      %v1655 = vunpack.c.l.b16 %v1403
      %v1656 = vunpack.c.l.b16 %v1417
      %v1657 = vunpack.c.l.b16 %v1427
      %v1658 = vunpack.c.l.b16 %v1441
      %v1659 = vunpack.c.l.b16 %v1451
      %v1660 = vunpack.c.l.b16 %v1465
      %v1661 = vunpack.c.l.b16 %v1475
      %v1662 = vunpack.c.l.b16 %v1489
      %v1663 = vunpack.c.l.b16 %v1499
      %v1664 = vunpack.c.l.b16 %v1513
      %v1665 = vunpack.c.l.b16 %v1523
      %v1666 = vunpack.c.l.b16 %v1537
      %v1667 = vunpack.c.l.b16 %v1547
      %v1668 = vunpack.c.l.b16 %v1561
      %v1669 = vunpack.c.l.b16 %v1571
      %v1670 = vunpack.c.l.b16 %v1585
      %v1671 = vunpack.c.l.b16 %v1595
      %v1672 = vunpack.c.l.b16 %v1609
      %v1673 = vunpack.c.l.b16 %v1619
      %v1674 = vunpack.c.l.b16 %v1633
      %v1675 = vunpack.c.l.b16 %v1643
      %v1676 = vpack.c.b16 %v1645, %v1644
      %v1677 = vpack.c.b16 %v1647, %v1646
      %v1678 = vpack.c.b16 %v1649, %v1648
      %v1679 = vpack.c.b16 %v1651, %v1650
      %v1680 = vpack.c.b16 %v1653, %v1652
      %v1681 = vpack.c.b16 %v1655, %v1654
      %v1682 = vpack.c.b16 %v1657, %v1656
      %v1683 = vpack.c.b16 %v1659, %v1658
      %v1684 = vpack.c.b16 %v1661, %v1660
      %v1685 = vpack.c.b16 %v1663, %v1662
      %v1686 = vpack.c.b16 %v1665, %v1664
      %v1687 = vpack.c.b16 %v1667, %v1666
      %v1688 = vpack.c.b16 %v1669, %v1668
      %v1689 = vpack.c.b16 %v1671, %v1670
      %v1690 = vpack.c.b16 %v1673, %v1672
      %v1691 = vpack.c.b16 %v1675, %v1674
      %1708 = vst [vmem:[#allocation3 + $0x8] sm:$0xff] %v1676
      %1709 = vst [vmem:[#allocation3 + $0x50] sm:$0xff] %v1677
      %1710 = vst [vmem:[#allocation3 + $0x98] sm:$0xff] %v1678
      %1711 = vst [vmem:[#allocation3 + $0xe0] sm:$0xff] %v1679
      %1712 = vst [vmem:[#allocation3 + $0x128] sm:$0xff] %v1680
      %1713 = vst [vmem:[#allocation3 + $0x170] sm:$0xff] %v1681
      %1714 = vst [vmem:[#allocation3 + $0x1b8] sm:$0xff] %v1682
      %1715 = vst [vmem:[#allocation3 + $0x200] sm:$0xff] %v1683
      %1716 = vst [vmem:[#allocation3 + $0x248] sm:$0xff] %v1684
      %1717 = vst [vmem:[#allocation3 + $0x290] sm:$0xff] %v1685
      %1718 = vst [vmem:[#allocation3 + $0x2d8] sm:$0xff] %v1686
      %1719 = vst [vmem:[#allocation3 + $0x320] sm:$0xff] %v1687
      %1720 = vst [vmem:[#allocation3 + $0x368] sm:$0xff] %v1688
      %1721 = vst [vmem:[#allocation3 + $0x3b0] sm:$0xff] %v1689
      %1722 = vst [vmem:[#allocation3 + $0x3f8] sm:$0xff] %v1690
      %1723 = vst [vmem:[#allocation3 + $0x440] sm:$0xff] %v1691
      %v1724 = vld [vmem:[#allocation2] sm:$0xe]
      %v1725 = vld [vmem:[#allocation2 + $0x4] sm:$0xf]
      %v1726 = vld [vmem:[#allocation2 + $0x8] sm:$0x1]
      %v1727 = vld [vmem:[#allocation2 + $0xc] sm:$0xe]
      %v1728 = vld [vmem:[#allocation2 + $0x10] sm:$0xf]
      %v1729 = vld [vmem:[#allocation2 + $0x14] sm:$0x1]
      %v1730 = vld [vmem:[#allocation2 + $0x18] sm:$0xe]
      %v1731 = vld [vmem:[#allocation2 + $0x1c] sm:$0xf]
      %v1732 = vld [vmem:[#allocation2 + $0x20] sm:$0x1]
      %v1733 = vld [vmem:[#allocation2 + $0x24] sm:$0xe]
      %v1734 = vld [vmem:[#allocation2 + $0x28] sm:$0xf]
      %v1735 = vld [vmem:[#allocation2 + $0x2c] sm:$0x1]
      %v1736 = vld [vmem:[#allocation2 + $0x30] sm:$0xe]
      %v1737 = vld [vmem:[#allocation2 + $0x34] sm:$0xf]
      %v1738 = vld [vmem:[#allocation2 + $0x38] sm:$0x1]
      %v1739 = vld [vmem:[#allocation2 + $0x3c] sm:$0xe]
      %v1740 = vld [vmem:[#allocation2 + $0x40] sm:$0xf]
      %v1741 = vld [vmem:[#allocation2 + $0x44] sm:$0x1]
      %v1742 = vld [vmem:[#allocation2 + $0x48] sm:$0xe]
      %v1743 = vld [vmem:[#allocation2 + $0x4c] sm:$0xf]
      %v1744 = vld [vmem:[#allocation2 + $0x50] sm:$0x1]
      %v1745 = vld [vmem:[#allocation2 + $0x54] sm:$0xe]
      %v1746 = vld [vmem:[#allocation2 + $0x58] sm:$0xf]
      %v1747 = vld [vmem:[#allocation2 + $0x5c] sm:$0x1]
      %v1748 = vld [vmem:[#allocation2 + $0x60] sm:$0xe]
      %v1749 = vld [vmem:[#allocation2 + $0x64] sm:$0xf]
      %v1750 = vld [vmem:[#allocation2 + $0x68] sm:$0x1]
      %v1751 = vld [vmem:[#allocation2 + $0x6c] sm:$0xe]
      %v1752 = vld [vmem:[#allocation2 + $0x70] sm:$0xf]
      %v1753 = vld [vmem:[#allocation2 + $0x74] sm:$0x1]
      %v1754 = vld [vmem:[#allocation2 + $0x78] sm:$0xe]
      %v1755 = vld [vmem:[#allocation2 + $0x7c] sm:$0xf]
      %v1756 = vld [vmem:[#allocation2 + $0x80] sm:$0x1]
      %v1757 = vld [vmem:[#allocation2 + $0x84] sm:$0xe]
      %v1758 = vld [vmem:[#allocation2 + $0x88] sm:$0xf]
      %v1759 = vld [vmem:[#allocation2 + $0x8c] sm:$0x1]
      %v1760 = vld [vmem:[#allocation2 + $0x90] sm:$0xe]
      %v1761 = vld [vmem:[#allocation2 + $0x94] sm:$0xf]
      %v1762 = vld [vmem:[#allocation2 + $0x98] sm:$0x1]
      %v1763 = vld [vmem:[#allocation2 + $0x9c] sm:$0xe]
      %v1764 = vld [vmem:[#allocation2 + $0xa0] sm:$0xf]
      %v1765 = vld [vmem:[#allocation2 + $0xa4] sm:$0x1]
      %v1766 = vld [vmem:[#allocation2 + $0xa8] sm:$0xe]
      %v1767 = vld [vmem:[#allocation2 + $0xac] sm:$0xf]
      %v1768 = vld [vmem:[#allocation2 + $0xb0] sm:$0x1]
      %v1769 = vld [vmem:[#allocation2 + $0xb4] sm:$0xe]
      %v1770 = vld [vmem:[#allocation2 + $0xb8] sm:$0xf]
      %v1771 = vld [vmem:[#allocation2 + $0xbc] sm:$0x1]
      %vm1820 = vcmask 1042432
      %vm1821 = vcmask 1046532
      %vm1822 = vmor %vm1820, %vm1821
      %v1823 = vrot.slane %v1724, 5
      %v1824 = vrot.slane %v1823, 4
      %v1825 = vrot.slane %v1725, 5
      %v1826 = vsel %vm1822, %v1824, %v1825
      %v1827 = vrot.slane %v1825, 4
      %v1828 = vrot.slane %v1726, 5
      %v1829 = vsel %vm1822, %v1827, %v1828
      %v1830 = vrot.slane %v1727, 5
      %v1831 = vrot.slane %v1830, 4
      %v1832 = vrot.slane %v1728, 5
      %v1833 = vsel %vm1822, %v1831, %v1832
      %v1834 = vrot.slane %v1832, 4
      %v1835 = vrot.slane %v1729, 5
      %v1836 = vsel %vm1822, %v1834, %v1835
      %v1837 = vrot.slane %v1730, 5
      %v1838 = vrot.slane %v1837, 4
      %v1839 = vrot.slane %v1731, 5
      %v1840 = vsel %vm1822, %v1838, %v1839
      %v1841 = vrot.slane %v1839, 4
      %v1842 = vrot.slane %v1732, 5
      %v1843 = vsel %vm1822, %v1841, %v1842
      %v1844 = vrot.slane %v1733, 5
      %v1845 = vrot.slane %v1844, 4
      %v1846 = vrot.slane %v1734, 5
      %v1847 = vsel %vm1822, %v1845, %v1846
      %v1848 = vrot.slane %v1846, 4
      %v1849 = vrot.slane %v1735, 5
      %v1850 = vsel %vm1822, %v1848, %v1849
      %v1851 = vrot.slane %v1736, 5
      %v1852 = vrot.slane %v1851, 4
      %v1853 = vrot.slane %v1737, 5
      %v1854 = vsel %vm1822, %v1852, %v1853
      %v1855 = vrot.slane %v1853, 4
      %v1856 = vrot.slane %v1738, 5
      %v1857 = vsel %vm1822, %v1855, %v1856
      %v1858 = vrot.slane %v1739, 5
      %v1859 = vrot.slane %v1858, 4
      %v1860 = vrot.slane %v1740, 5
      %v1861 = vsel %vm1822, %v1859, %v1860
      %v1862 = vrot.slane %v1860, 4
      %v1863 = vrot.slane %v1741, 5
      %v1864 = vsel %vm1822, %v1862, %v1863
      %v1865 = vrot.slane %v1742, 5
      %v1866 = vrot.slane %v1865, 4
      %v1867 = vrot.slane %v1743, 5
      %v1868 = vsel %vm1822, %v1866, %v1867
      %v1869 = vrot.slane %v1867, 4
      %v1870 = vrot.slane %v1744, 5
      %v1871 = vsel %vm1822, %v1869, %v1870
      %v1872 = vrot.slane %v1745, 5
      %v1873 = vrot.slane %v1872, 4
      %v1874 = vrot.slane %v1746, 5
      %v1875 = vsel %vm1822, %v1873, %v1874
      %v1876 = vrot.slane %v1874, 4
      %v1877 = vrot.slane %v1747, 5
      %v1878 = vsel %vm1822, %v1876, %v1877
      %v1879 = vrot.slane %v1748, 5
      %v1880 = vrot.slane %v1879, 4
      %v1881 = vrot.slane %v1749, 5
      %v1882 = vsel %vm1822, %v1880, %v1881
      %v1883 = vrot.slane %v1881, 4
      %v1884 = vrot.slane %v1750, 5
      %v1885 = vsel %vm1822, %v1883, %v1884
      %v1886 = vrot.slane %v1751, 5
      %v1887 = vrot.slane %v1886, 4
      %v1888 = vrot.slane %v1752, 5
      %v1889 = vsel %vm1822, %v1887, %v1888
      %v1890 = vrot.slane %v1888, 4
      %v1891 = vrot.slane %v1753, 5
      %v1892 = vsel %vm1822, %v1890, %v1891
      %v1893 = vrot.slane %v1754, 5
      %v1894 = vrot.slane %v1893, 4
      %v1895 = vrot.slane %v1755, 5
      %v1896 = vsel %vm1822, %v1894, %v1895
      %v1897 = vrot.slane %v1895, 4
      %v1898 = vrot.slane %v1756, 5
      %v1899 = vsel %vm1822, %v1897, %v1898
      %v1900 = vrot.slane %v1757, 5
      %v1901 = vrot.slane %v1900, 4
      %v1902 = vrot.slane %v1758, 5
      %v1903 = vsel %vm1822, %v1901, %v1902
      %v1904 = vrot.slane %v1902, 4
      %v1905 = vrot.slane %v1759, 5
      %v1906 = vsel %vm1822, %v1904, %v1905
      %v1907 = vrot.slane %v1760, 5
      %v1908 = vrot.slane %v1907, 4
      %v1909 = vrot.slane %v1761, 5
      %v1910 = vsel %vm1822, %v1908, %v1909
      %v1911 = vrot.slane %v1909, 4
      %v1912 = vrot.slane %v1762, 5
      %v1913 = vsel %vm1822, %v1911, %v1912
      %v1914 = vrot.slane %v1763, 5
      %v1915 = vrot.slane %v1914, 4
      %v1916 = vrot.slane %v1764, 5
      %v1917 = vsel %vm1822, %v1915, %v1916
      %v1918 = vrot.slane %v1916, 4
      %v1919 = vrot.slane %v1765, 5
      %v1920 = vsel %vm1822, %v1918, %v1919
      %v1921 = vrot.slane %v1766, 5
      %v1922 = vrot.slane %v1921, 4
      %v1923 = vrot.slane %v1767, 5
      %v1924 = vsel %vm1822, %v1922, %v1923
      %v1925 = vrot.slane %v1923, 4
      %v1926 = vrot.slane %v1768, 5
      %v1927 = vsel %vm1822, %v1925, %v1926
      %v1928 = vrot.slane %v1769, 5
      %v1929 = vrot.slane %v1928, 4
      %v1930 = vrot.slane %v1770, 5
      %v1931 = vsel %vm1822, %v1929, %v1930
      %v1932 = vrot.slane %v1930, 4
      %v1933 = vrot.slane %v1771, 5
      %v1934 = vsel %vm1822, %v1932, %v1933
      %v1935 = vunpack.c.l.b16 %v1826
      %v1936 = vunpack.c.l.b16 %v1829
      %v1937 = vunpack.c.l.b16 %v1833
      %v1938 = vunpack.c.l.b16 %v1836
      %v1939 = vunpack.c.l.b16 %v1840
      %v1940 = vunpack.c.l.b16 %v1843
      %v1941 = vunpack.c.l.b16 %v1847
      %v1942 = vunpack.c.l.b16 %v1850
      %v1943 = vunpack.c.l.b16 %v1854
      %v1944 = vunpack.c.l.b16 %v1857
      %v1945 = vunpack.c.l.b16 %v1861
      %v1946 = vunpack.c.l.b16 %v1864
      %v1947 = vunpack.c.l.b16 %v1868
      %v1948 = vunpack.c.l.b16 %v1871
      %v1949 = vunpack.c.l.b16 %v1875
      %v1950 = vunpack.c.l.b16 %v1878
      %v1951 = vunpack.c.l.b16 %v1882
      %v1952 = vunpack.c.l.b16 %v1885
      %v1953 = vunpack.c.l.b16 %v1889
      %v1954 = vunpack.c.l.b16 %v1892
      %v1955 = vunpack.c.l.b16 %v1896
      %v1956 = vunpack.c.l.b16 %v1899
      %v1957 = vunpack.c.l.b16 %v1903
      %v1958 = vunpack.c.l.b16 %v1906
      %v1959 = vunpack.c.l.b16 %v1910
      %v1960 = vunpack.c.l.b16 %v1913
      %v1961 = vunpack.c.l.b16 %v1917
      %v1962 = vunpack.c.l.b16 %v1920
      %v1963 = vunpack.c.l.b16 %v1924
      %v1964 = vunpack.c.l.b16 %v1927
      %v1965 = vunpack.c.l.b16 %v1931
      %v1966 = vunpack.c.l.b16 %v1934
      %v1967 = vpack.c.b16 %v1936, %v1935
      %v1968 = vpack.c.b16 %v1938, %v1937
      %v1969 = vpack.c.b16 %v1940, %v1939
      %v1970 = vpack.c.b16 %v1942, %v1941
      %v1971 = vpack.c.b16 %v1944, %v1943
      %v1972 = vpack.c.b16 %v1946, %v1945
      %v1973 = vpack.c.b16 %v1948, %v1947
      %v1974 = vpack.c.b16 %v1950, %v1949
      %v1975 = vpack.c.b16 %v1952, %v1951
      %v1976 = vpack.c.b16 %v1954, %v1953
      %v1977 = vpack.c.b16 %v1956, %v1955
      %v1978 = vpack.c.b16 %v1958, %v1957
      %v1979 = vpack.c.b16 %v1960, %v1959
      %v1980 = vpack.c.b16 %v1962, %v1961
      %v1981 = vpack.c.b16 %v1964, %v1963
      %v1982 = vpack.c.b16 %v1966, %v1965
      %1999 = vst [vmem:[#allocation3 + $0x10] sm:$0xff] %v1967
      %2000 = vst [vmem:[#allocation3 + $0x58] sm:$0xff] %v1968
      %2001 = vst [vmem:[#allocation3 + $0xa0] sm:$0xff] %v1969
      %2002 = vst [vmem:[#allocation3 + $0xe8] sm:$0xff] %v1970
      %2003 = vst [vmem:[#allocation3 + $0x130] sm:$0xff] %v1971
      %2004 = vst [vmem:[#allocation3 + $0x178] sm:$0xff] %v1972
      %2005 = vst [vmem:[#allocation3 + $0x1c0] sm:$0xff] %v1973
      %2006 = vst [vmem:[#allocation3 + $0x208] sm:$0xff] %v1974
      %2007 = vst [vmem:[#allocation3 + $0x250] sm:$0xff] %v1975
      %2008 = vst [vmem:[#allocation3 + $0x298] sm:$0xff] %v1976
      %2009 = vst [vmem:[#allocation3 + $0x2e0] sm:$0xff] %v1977
      %2010 = vst [vmem:[#allocation3 + $0x328] sm:$0xff] %v1978
      %2011 = vst [vmem:[#allocation3 + $0x370] sm:$0xff] %v1979
      %2012 = vst [vmem:[#allocation3 + $0x3b8] sm:$0xff] %v1980
      %2013 = vst [vmem:[#allocation3 + $0x400] sm:$0xff] %v1981
      %2014 = vst [vmem:[#allocation3 + $0x448] sm:$0xff] %v1982
      %v2015 = vld [vmem:[%s950] sm:$0xf]
      %v2016 = vld [vmem:[%s950 + $0x4] sm:$0xf]
      %v2017 = vld [vmem:[%s950 + $0xc] sm:$0xf]
      %v2018 = vld [vmem:[%s950 + $0x10] sm:$0xf]
      %v2019 = vld [vmem:[%s950 + $0x18] sm:$0xf]
      %v2020 = vld [vmem:[%s950 + $0x1c] sm:$0xf]
      %v2021 = vld [vmem:[%s950 + $0x24] sm:$0xf]
      %v2022 = vld [vmem:[%s950 + $0x28] sm:$0xf]
      %v2023 = vld [vmem:[%s950 + $0x30] sm:$0xf]
      %v2024 = vld [vmem:[%s950 + $0x34] sm:$0xf]
      %v2025 = vld [vmem:[%s950 + $0x3c] sm:$0xf]
      %v2026 = vld [vmem:[%s950 + $0x40] sm:$0xf]
      %v2027 = vld [vmem:[%s950 + $0x48] sm:$0xf]
      %v2028 = vld [vmem:[%s950 + $0x4c] sm:$0xf]
      %v2029 = vld [vmem:[%s950 + $0x54] sm:$0xf]
      %v2030 = vld [vmem:[%s950 + $0x58] sm:$0xf]
      %v2031 = vld [vmem:[%s950 + $0x60] sm:$0xf]
      %v2032 = vld [vmem:[%s950 + $0x64] sm:$0xf]
      %v2033 = vld [vmem:[%s950 + $0x6c] sm:$0xf]
      %v2034 = vld [vmem:[%s950 + $0x70] sm:$0xf]
      %v2035 = vld [vmem:[%s950 + $0x78] sm:$0xf]
      %v2036 = vld [vmem:[%s950 + $0x7c] sm:$0xf]
      %v2037 = vld [vmem:[%s950 + $0x84] sm:$0xf]
      %v2038 = vld [vmem:[%s950 + $0x88] sm:$0xf]
      %v2039 = vld [vmem:[%s950 + $0x90] sm:$0xf]
      %v2040 = vld [vmem:[%s950 + $0x94] sm:$0xf]
      %v2041 = vld [vmem:[%s950 + $0x9c] sm:$0xf]
      %v2042 = vld [vmem:[%s950 + $0xa0] sm:$0xf]
      %v2043 = vld [vmem:[%s950 + $0xa8] sm:$0xf]
      %v2044 = vld [vmem:[%s950 + $0xac] sm:$0xf]
      %v2045 = vld [vmem:[%s950 + $0xb4] sm:$0xf]
      %v2046 = vld [vmem:[%s950 + $0xb8] sm:$0xf]
      %v2079 = vunpack.c.l.b16 %v2015
      %v2080 = vunpack.c.l.b16 %v2016
      %v2081 = vunpack.c.l.b16 %v2017
      %v2082 = vunpack.c.l.b16 %v2018
      %v2083 = vunpack.c.l.b16 %v2019
      %v2084 = vunpack.c.l.b16 %v2020
      %v2085 = vunpack.c.l.b16 %v2021
      %v2086 = vunpack.c.l.b16 %v2022
      %v2087 = vunpack.c.l.b16 %v2023
      %v2088 = vunpack.c.l.b16 %v2024
      %v2089 = vunpack.c.l.b16 %v2025
      %v2090 = vunpack.c.l.b16 %v2026
      %v2091 = vunpack.c.l.b16 %v2027
      %v2092 = vunpack.c.l.b16 %v2028
      %v2093 = vunpack.c.l.b16 %v2029
      %v2094 = vunpack.c.l.b16 %v2030
      %v2095 = vunpack.c.l.b16 %v2031
      %v2096 = vunpack.c.l.b16 %v2032
      %v2097 = vunpack.c.l.b16 %v2033
      %v2098 = vunpack.c.l.b16 %v2034
      %v2099 = vunpack.c.l.b16 %v2035
      %v2100 = vunpack.c.l.b16 %v2036
      %v2101 = vunpack.c.l.b16 %v2037
      %v2102 = vunpack.c.l.b16 %v2038
      %v2103 = vunpack.c.l.b16 %v2039
      %v2104 = vunpack.c.l.b16 %v2040
      %v2105 = vunpack.c.l.b16 %v2041
      %v2106 = vunpack.c.l.b16 %v2042
      %v2107 = vunpack.c.l.b16 %v2043
      %v2108 = vunpack.c.l.b16 %v2044
      %v2109 = vunpack.c.l.b16 %v2045
      %v2110 = vunpack.c.l.b16 %v2046
      %v2111 = vpack.c.b16 %v2080, %v2079
      %v2112 = vpack.c.b16 %v2082, %v2081
      %v2113 = vpack.c.b16 %v2084, %v2083
      %v2114 = vpack.c.b16 %v2086, %v2085
      %v2115 = vpack.c.b16 %v2088, %v2087
      %v2116 = vpack.c.b16 %v2090, %v2089
      %v2117 = vpack.c.b16 %v2092, %v2091
      %v2118 = vpack.c.b16 %v2094, %v2093
      %v2119 = vpack.c.b16 %v2096, %v2095
      %v2120 = vpack.c.b16 %v2098, %v2097
      %v2121 = vpack.c.b16 %v2100, %v2099
      %v2122 = vpack.c.b16 %v2102, %v2101
      %v2123 = vpack.c.b16 %v2104, %v2103
      %v2124 = vpack.c.b16 %v2106, %v2105
      %v2125 = vpack.c.b16 %v2108, %v2107
      %v2126 = vpack.c.b16 %v2110, %v2109
      %2143 = vst [vmem:[#allocation3 + $0x18] sm:$0xff] %v2111
      %2144 = vst [vmem:[#allocation3 + $0x60] sm:$0xff] %v2112
      %2145 = vst [vmem:[#allocation3 + $0xa8] sm:$0xff] %v2113
      %2146 = vst [vmem:[#allocation3 + $0xf0] sm:$0xff] %v2114
      %2147 = vst [vmem:[#allocation3 + $0x138] sm:$0xff] %v2115
      %2148 = vst [vmem:[#allocation3 + $0x180] sm:$0xff] %v2116
      %2149 = vst [vmem:[#allocation3 + $0x1c8] sm:$0xff] %v2117
      %2150 = vst [vmem:[#allocation3 + $0x210] sm:$0xff] %v2118
      %2151 = vst [vmem:[#allocation3 + $0x258] sm:$0xff] %v2119
      %2152 = vst [vmem:[#allocation3 + $0x2a0] sm:$0xff] %v2120
      %2153 = vst [vmem:[#allocation3 + $0x2e8] sm:$0xff] %v2121
      %2154 = vst [vmem:[#allocation3 + $0x330] sm:$0xff] %v2122
      %2155 = vst [vmem:[#allocation3 + $0x378] sm:$0xff] %v2123
      %2156 = vst [vmem:[#allocation3 + $0x3c0] sm:$0xff] %v2124
      %2157 = vst [vmem:[#allocation3 + $0x408] sm:$0xff] %v2125
      %2158 = vst [vmem:[#allocation3 + $0x450] sm:$0xff] %v2126
      %v2159 = vld [vmem:[%s950] sm:$0xf]
      %v2160 = vld [vmem:[%s950 + $0x4] sm:$0xf]
      %v2161 = vld [vmem:[%s950 + $0x8] sm:$0x1]
      %v2162 = vld [vmem:[%s950 + $0xc] sm:$0xf]
      %v2163 = vld [vmem:[%s950 + $0x10] sm:$0xf]
      %v2164 = vld [vmem:[%s950 + $0x14] sm:$0x1]
      %v2165 = vld [vmem:[%s950 + $0x18] sm:$0xf]
      %v2166 = vld [vmem:[%s950 + $0x1c] sm:$0xf]
      %v2167 = vld [vmem:[%s950 + $0x20] sm:$0x1]
      %v2168 = vld [vmem:[%s950 + $0x24] sm:$0xf]
      %v2169 = vld [vmem:[%s950 + $0x28] sm:$0xf]
      %v2170 = vld [vmem:[%s950 + $0x2c] sm:$0x1]
      %v2171 = vld [vmem:[%s950 + $0x30] sm:$0xf]
      %v2172 = vld [vmem:[%s950 + $0x34] sm:$0xf]
      %v2173 = vld [vmem:[%s950 + $0x38] sm:$0x1]
      %v2174 = vld [vmem:[%s950 + $0x3c] sm:$0xf]
      %v2175 = vld [vmem:[%s950 + $0x40] sm:$0xf]
      %v2176 = vld [vmem:[%s950 + $0x44] sm:$0x1]
      %v2177 = vld [vmem:[%s950 + $0x48] sm:$0xf]
      %v2178 = vld [vmem:[%s950 + $0x4c] sm:$0xf]
      %v2179 = vld [vmem:[%s950 + $0x50] sm:$0x1]
      %v2180 = vld [vmem:[%s950 + $0x54] sm:$0xf]
      %v2181 = vld [vmem:[%s950 + $0x58] sm:$0xf]
      %v2182 = vld [vmem:[%s950 + $0x5c] sm:$0x1]
      %v2183 = vld [vmem:[%s950 + $0x60] sm:$0xf]
      %v2184 = vld [vmem:[%s950 + $0x64] sm:$0xf]
      %v2185 = vld [vmem:[%s950 + $0x68] sm:$0x1]
      %v2186 = vld [vmem:[%s950 + $0x6c] sm:$0xf]
      %v2187 = vld [vmem:[%s950 + $0x70] sm:$0xf]
      %v2188 = vld [vmem:[%s950 + $0x74] sm:$0x1]
      %v2189 = vld [vmem:[%s950 + $0x78] sm:$0xf]
      %v2190 = vld [vmem:[%s950 + $0x7c] sm:$0xf]
      %v2191 = vld [vmem:[%s950 + $0x80] sm:$0x1]
      %v2192 = vld [vmem:[%s950 + $0x84] sm:$0xf]
      %v2193 = vld [vmem:[%s950 + $0x88] sm:$0xf]
      %v2194 = vld [vmem:[%s950 + $0x8c] sm:$0x1]
      %v2195 = vld [vmem:[%s950 + $0x90] sm:$0xf]
      %v2196 = vld [vmem:[%s950 + $0x94] sm:$0xf]
      %v2197 = vld [vmem:[%s950 + $0x98] sm:$0x1]
      %v2198 = vld [vmem:[%s950 + $0x9c] sm:$0xf]
      %v2199 = vld [vmem:[%s950 + $0xa0] sm:$0xf]
      %v2200 = vld [vmem:[%s950 + $0xa4] sm:$0x1]
      %v2201 = vld [vmem:[%s950 + $0xa8] sm:$0xf]
      %v2202 = vld [vmem:[%s950 + $0xac] sm:$0xf]
      %v2203 = vld [vmem:[%s950 + $0xb0] sm:$0x1]
      %v2204 = vld [vmem:[%s950 + $0xb4] sm:$0xf]
      %v2205 = vld [vmem:[%s950 + $0xb8] sm:$0xf]
      %v2206 = vld [vmem:[%s950 + $0xbc] sm:$0x1]
      %v2208 = vshrl.u32 %v2159, 16
      %v2210 = vrot.slane %v2208, 4
      %v2211 = vshll.u32 %v2159, 16
      %v2213 = vrot.slane %v2211, 5
      %v2214 = vor.u32 %v2210, %v2213
      %v2215 = vrot.slane %v2214, 4
      %v2217 = vshll.u32 %v2160, 16
      %v2219 = vrot.slane %v2217, 5
      %v2220 = vsel %vm1259, %v2215, %v2219
      %v2221 = vshrl.u32 %v2160, 16
      %v2223 = vrot.slane %v2221, 4
      %v2224 = vor.u32 %v2223, %v2219
      %v2225 = vrot.slane %v2224, 4
      %v2227 = vshll.u32 %v2161, 16
      %v2229 = vrot.slane %v2227, 5
      %v2230 = vsel %vm1259, %v2225, %v2229
      %v2232 = vshrl.u32 %v2162, 16
      %v2234 = vrot.slane %v2232, 4
      %v2235 = vshll.u32 %v2162, 16
      %v2237 = vrot.slane %v2235, 5
      %v2238 = vor.u32 %v2234, %v2237
      %v2239 = vrot.slane %v2238, 4
      %v2241 = vshll.u32 %v2163, 16
      %v2243 = vrot.slane %v2241, 5
      %v2244 = vsel %vm1259, %v2239, %v2243
      %v2245 = vshrl.u32 %v2163, 16
      %v2247 = vrot.slane %v2245, 4
      %v2248 = vor.u32 %v2247, %v2243
      %v2249 = vrot.slane %v2248, 4
      %v2251 = vshll.u32 %v2164, 16
      %v2253 = vrot.slane %v2251, 5
      %v2254 = vsel %vm1259, %v2249, %v2253
      %v2256 = vshrl.u32 %v2165, 16
      %v2258 = vrot.slane %v2256, 4
      %v2259 = vshll.u32 %v2165, 16
      %v2261 = vrot.slane %v2259, 5
      %v2262 = vor.u32 %v2258, %v2261
      %v2263 = vrot.slane %v2262, 4
      %v2265 = vshll.u32 %v2166, 16
      %v2267 = vrot.slane %v2265, 5
      %v2268 = vsel %vm1259, %v2263, %v2267
      %v2269 = vshrl.u32 %v2166, 16
      %v2271 = vrot.slane %v2269, 4
      %v2272 = vor.u32 %v2271, %v2267
      %v2273 = vrot.slane %v2272, 4
      %v2275 = vshll.u32 %v2167, 16
      %v2277 = vrot.slane %v2275, 5
      %v2278 = vsel %vm1259, %v2273, %v2277
      %v2280 = vshrl.u32 %v2168, 16
      %v2282 = vrot.slane %v2280, 4
      %v2283 = vshll.u32 %v2168, 16
      %v2285 = vrot.slane %v2283, 5
      %v2286 = vor.u32 %v2282, %v2285
      %v2287 = vrot.slane %v2286, 4
      %v2289 = vshll.u32 %v2169, 16
      %v2291 = vrot.slane %v2289, 5
      %v2292 = vsel %vm1259, %v2287, %v2291
      %v2293 = vshrl.u32 %v2169, 16
      %v2295 = vrot.slane %v2293, 4
      %v2296 = vor.u32 %v2295, %v2291
      %v2297 = vrot.slane %v2296, 4
      %v2299 = vshll.u32 %v2170, 16
      %v2301 = vrot.slane %v2299, 5
      %v2302 = vsel %vm1259, %v2297, %v2301
      %v2304 = vshrl.u32 %v2171, 16
      %v2306 = vrot.slane %v2304, 4
      %v2307 = vshll.u32 %v2171, 16
      %v2309 = vrot.slane %v2307, 5
      %v2310 = vor.u32 %v2306, %v2309
      %v2311 = vrot.slane %v2310, 4
      %v2313 = vshll.u32 %v2172, 16
      %v2315 = vrot.slane %v2313, 5
      %v2316 = vsel %vm1259, %v2311, %v2315
      %v2317 = vshrl.u32 %v2172, 16
      %v2319 = vrot.slane %v2317, 4
      %v2320 = vor.u32 %v2319, %v2315
      %v2321 = vrot.slane %v2320, 4
      %v2323 = vshll.u32 %v2173, 16
      %v2325 = vrot.slane %v2323, 5
      %v2326 = vsel %vm1259, %v2321, %v2325
      %v2328 = vshrl.u32 %v2174, 16
      %v2330 = vrot.slane %v2328, 4
      %v2331 = vshll.u32 %v2174, 16
      %v2333 = vrot.slane %v2331, 5
      %v2334 = vor.u32 %v2330, %v2333
      %v2335 = vrot.slane %v2334, 4
      %v2337 = vshll.u32 %v2175, 16
      %v2339 = vrot.slane %v2337, 5
      %v2340 = vsel %vm1259, %v2335, %v2339
      %v2341 = vshrl.u32 %v2175, 16
      %v2343 = vrot.slane %v2341, 4
      %v2344 = vor.u32 %v2343, %v2339
      %v2345 = vrot.slane %v2344, 4
      %v2347 = vshll.u32 %v2176, 16
      %v2349 = vrot.slane %v2347, 5
      %v2350 = vsel %vm1259, %v2345, %v2349
      %v2352 = vshrl.u32 %v2177, 16
      %v2354 = vrot.slane %v2352, 4
      %v2355 = vshll.u32 %v2177, 16
      %v2357 = vrot.slane %v2355, 5
      %v2358 = vor.u32 %v2354, %v2357
      %v2359 = vrot.slane %v2358, 4
      %v2361 = vshll.u32 %v2178, 16
      %v2363 = vrot.slane %v2361, 5
      %v2364 = vsel %vm1259, %v2359, %v2363
      %v2365 = vshrl.u32 %v2178, 16
      %v2367 = vrot.slane %v2365, 4
      %v2368 = vor.u32 %v2367, %v2363
      %v2369 = vrot.slane %v2368, 4
      %v2371 = vshll.u32 %v2179, 16
      %v2373 = vrot.slane %v2371, 5
      %v2374 = vsel %vm1259, %v2369, %v2373
      %v2376 = vshrl.u32 %v2180, 16
      %v2378 = vrot.slane %v2376, 4
      %v2379 = vshll.u32 %v2180, 16
      %v2381 = vrot.slane %v2379, 5
      %v2382 = vor.u32 %v2378, %v2381
      %v2383 = vrot.slane %v2382, 4
      %v2385 = vshll.u32 %v2181, 16
      %v2387 = vrot.slane %v2385, 5
      %v2388 = vsel %vm1259, %v2383, %v2387
      %v2389 = vshrl.u32 %v2181, 16
      %v2391 = vrot.slane %v2389, 4
      %v2392 = vor.u32 %v2391, %v2387
      %v2393 = vrot.slane %v2392, 4
      %v2395 = vshll.u32 %v2182, 16
      %v2397 = vrot.slane %v2395, 5
      %v2398 = vsel %vm1259, %v2393, %v2397
      %v2400 = vshrl.u32 %v2183, 16
      %v2402 = vrot.slane %v2400, 4
      %v2403 = vshll.u32 %v2183, 16
      %v2405 = vrot.slane %v2403, 5
      %v2406 = vor.u32 %v2402, %v2405
      %v2407 = vrot.slane %v2406, 4
      %v2409 = vshll.u32 %v2184, 16
      %v2411 = vrot.slane %v2409, 5
      %v2412 = vsel %vm1259, %v2407, %v2411
      %v2413 = vshrl.u32 %v2184, 16
      %v2415 = vrot.slane %v2413, 4
      %v2416 = vor.u32 %v2415, %v2411
      %v2417 = vrot.slane %v2416, 4
      %v2419 = vshll.u32 %v2185, 16
      %v2421 = vrot.slane %v2419, 5
      %v2422 = vsel %vm1259, %v2417, %v2421
      %v2424 = vshrl.u32 %v2186, 16
      %v2426 = vrot.slane %v2424, 4
      %v2427 = vshll.u32 %v2186, 16
      %v2429 = vrot.slane %v2427, 5
      %v2430 = vor.u32 %v2426, %v2429
      %v2431 = vrot.slane %v2430, 4
      %v2433 = vshll.u32 %v2187, 16
      %v2435 = vrot.slane %v2433, 5
      %v2436 = vsel %vm1259, %v2431, %v2435
      %v2437 = vshrl.u32 %v2187, 16
      %v2439 = vrot.slane %v2437, 4
      %v2440 = vor.u32 %v2439, %v2435
      %v2441 = vrot.slane %v2440, 4
      %v2443 = vshll.u32 %v2188, 16
      %v2445 = vrot.slane %v2443, 5
      %v2446 = vsel %vm1259, %v2441, %v2445
      %v2448 = vshrl.u32 %v2189, 16
      %v2450 = vrot.slane %v2448, 4
      %v2451 = vshll.u32 %v2189, 16
      %v2453 = vrot.slane %v2451, 5
      %v2454 = vor.u32 %v2450, %v2453
      %v2455 = vrot.slane %v2454, 4
      %v2457 = vshll.u32 %v2190, 16
      %v2459 = vrot.slane %v2457, 5
      %v2460 = vsel %vm1259, %v2455, %v2459
      %v2461 = vshrl.u32 %v2190, 16
      %v2463 = vrot.slane %v2461, 4
      %v2464 = vor.u32 %v2463, %v2459
      %v2465 = vrot.slane %v2464, 4
      %v2467 = vshll.u32 %v2191, 16
      %v2469 = vrot.slane %v2467, 5
      %v2470 = vsel %vm1259, %v2465, %v2469
      %v2472 = vshrl.u32 %v2192, 16
      %v2474 = vrot.slane %v2472, 4
      %v2475 = vshll.u32 %v2192, 16
      %v2477 = vrot.slane %v2475, 5
      %v2478 = vor.u32 %v2474, %v2477
      %v2479 = vrot.slane %v2478, 4
      %v2481 = vshll.u32 %v2193, 16
      %v2483 = vrot.slane %v2481, 5
      %v2484 = vsel %vm1259, %v2479, %v2483
      %v2485 = vshrl.u32 %v2193, 16
      %v2487 = vrot.slane %v2485, 4
      %v2488 = vor.u32 %v2487, %v2483
      %v2489 = vrot.slane %v2488, 4
      %v2491 = vshll.u32 %v2194, 16
      %v2493 = vrot.slane %v2491, 5
      %v2494 = vsel %vm1259, %v2489, %v2493
      %v2496 = vshrl.u32 %v2195, 16
      %v2498 = vrot.slane %v2496, 4
      %v2499 = vshll.u32 %v2195, 16
      %v2501 = vrot.slane %v2499, 5
      %v2502 = vor.u32 %v2498, %v2501
      %v2503 = vrot.slane %v2502, 4
      %v2505 = vshll.u32 %v2196, 16
      %v2507 = vrot.slane %v2505, 5
      %v2508 = vsel %vm1259, %v2503, %v2507
      %v2509 = vshrl.u32 %v2196, 16
      %v2511 = vrot.slane %v2509, 4
      %v2512 = vor.u32 %v2511, %v2507
      %v2513 = vrot.slane %v2512, 4
      %v2515 = vshll.u32 %v2197, 16
      %v2517 = vrot.slane %v2515, 5
      %v2518 = vsel %vm1259, %v2513, %v2517
      %v2520 = vshrl.u32 %v2198, 16
      %v2522 = vrot.slane %v2520, 4
      %v2523 = vshll.u32 %v2198, 16
      %v2525 = vrot.slane %v2523, 5
      %v2526 = vor.u32 %v2522, %v2525
      %v2527 = vrot.slane %v2526, 4
      %v2529 = vshll.u32 %v2199, 16
      %v2531 = vrot.slane %v2529, 5
      %v2532 = vsel %vm1259, %v2527, %v2531
      %v2533 = vshrl.u32 %v2199, 16
      %v2535 = vrot.slane %v2533, 4
      %v2536 = vor.u32 %v2535, %v2531
      %v2537 = vrot.slane %v2536, 4
      %v2539 = vshll.u32 %v2200, 16
      %v2541 = vrot.slane %v2539, 5
      %v2542 = vsel %vm1259, %v2537, %v2541
      %v2544 = vshrl.u32 %v2201, 16
      %v2546 = vrot.slane %v2544, 4
      %v2547 = vshll.u32 %v2201, 16
      %v2549 = vrot.slane %v2547, 5
      %v2550 = vor.u32 %v2546, %v2549
      %v2551 = vrot.slane %v2550, 4
      %v2553 = vshll.u32 %v2202, 16
      %v2555 = vrot.slane %v2553, 5
      %v2556 = vsel %vm1259, %v2551, %v2555
      %v2557 = vshrl.u32 %v2202, 16
      %v2559 = vrot.slane %v2557, 4
      %v2560 = vor.u32 %v2559, %v2555
      %v2561 = vrot.slane %v2560, 4
      %v2563 = vshll.u32 %v2203, 16
      %v2565 = vrot.slane %v2563, 5
      %v2566 = vsel %vm1259, %v2561, %v2565
      %v2568 = vshrl.u32 %v2204, 16
      %v2570 = vrot.slane %v2568, 4
      %v2571 = vshll.u32 %v2204, 16
      %v2573 = vrot.slane %v2571, 5
      %v2574 = vor.u32 %v2570, %v2573
      %v2575 = vrot.slane %v2574, 4
      %v2577 = vshll.u32 %v2205, 16
      %v2579 = vrot.slane %v2577, 5
      %v2580 = vsel %vm1259, %v2575, %v2579
      %v2581 = vshrl.u32 %v2205, 16
      %v2583 = vrot.slane %v2581, 4
      %v2584 = vor.u32 %v2583, %v2579
      %v2585 = vrot.slane %v2584, 4
      %v2587 = vshll.u32 %v2206, 16
      %v2589 = vrot.slane %v2587, 5
      %v2590 = vsel %vm1259, %v2585, %v2589
      %v2591 = vunpack.c.l.b16 %v2220
      %v2592 = vunpack.c.l.b16 %v2230
      %v2593 = vunpack.c.l.b16 %v2244
      %v2594 = vunpack.c.l.b16 %v2254
      %v2595 = vunpack.c.l.b16 %v2268
      %v2596 = vunpack.c.l.b16 %v2278
      %v2597 = vunpack.c.l.b16 %v2292
      %v2598 = vunpack.c.l.b16 %v2302
      %v2599 = vunpack.c.l.b16 %v2316
      %v2600 = vunpack.c.l.b16 %v2326
      %v2601 = vunpack.c.l.b16 %v2340
      %v2602 = vunpack.c.l.b16 %v2350
      %v2603 = vunpack.c.l.b16 %v2364
      %v2604 = vunpack.c.l.b16 %v2374
      %v2605 = vunpack.c.l.b16 %v2388
      %v2606 = vunpack.c.l.b16 %v2398
      %v2607 = vunpack.c.l.b16 %v2412
      %v2608 = vunpack.c.l.b16 %v2422
      %v2609 = vunpack.c.l.b16 %v2436
      %v2610 = vunpack.c.l.b16 %v2446
      %v2611 = vunpack.c.l.b16 %v2460
      %v2612 = vunpack.c.l.b16 %v2470
      %v2613 = vunpack.c.l.b16 %v2484
      %v2614 = vunpack.c.l.b16 %v2494
      %v2615 = vunpack.c.l.b16 %v2508
      %v2616 = vunpack.c.l.b16 %v2518
      %v2617 = vunpack.c.l.b16 %v2532
      %v2618 = vunpack.c.l.b16 %v2542
      %v2619 = vunpack.c.l.b16 %v2556
      %v2620 = vunpack.c.l.b16 %v2566
      %v2621 = vunpack.c.l.b16 %v2580
      %v2622 = vunpack.c.l.b16 %v2590
      %v2623 = vpack.c.b16 %v2592, %v2591
      %v2624 = vpack.c.b16 %v2594, %v2593
      %v2625 = vpack.c.b16 %v2596, %v2595
      %v2626 = vpack.c.b16 %v2598, %v2597
      %v2627 = vpack.c.b16 %v2600, %v2599
      %v2628 = vpack.c.b16 %v2602, %v2601
      %v2629 = vpack.c.b16 %v2604, %v2603
      %v2630 = vpack.c.b16 %v2606, %v2605
      %v2631 = vpack.c.b16 %v2608, %v2607
      %v2632 = vpack.c.b16 %v2610, %v2609
      %v2633 = vpack.c.b16 %v2612, %v2611
      %v2634 = vpack.c.b16 %v2614, %v2613
      %v2635 = vpack.c.b16 %v2616, %v2615
      %v2636 = vpack.c.b16 %v2618, %v2617
      %v2637 = vpack.c.b16 %v2620, %v2619
      %v2638 = vpack.c.b16 %v2622, %v2621
      %2655 = vst [vmem:[#allocation3 + $0x20] sm:$0xff] %v2623
      %2656 = vst [vmem:[#allocation3 + $0x68] sm:$0xff] %v2624
      %2657 = vst [vmem:[#allocation3 + $0xb0] sm:$0xff] %v2625
      %2658 = vst [vmem:[#allocation3 + $0xf8] sm:$0xff] %v2626
      %2659 = vst [vmem:[#allocation3 + $0x140] sm:$0xff] %v2627
      %2660 = vst [vmem:[#allocation3 + $0x188] sm:$0xff] %v2628
      %2661 = vst [vmem:[#allocation3 + $0x1d0] sm:$0xff] %v2629
      %2662 = vst [vmem:[#allocation3 + $0x218] sm:$0xff] %v2630
      %2663 = vst [vmem:[#allocation3 + $0x260] sm:$0xff] %v2631
      %2664 = vst [vmem:[#allocation3 + $0x2a8] sm:$0xff] %v2632
      %2665 = vst [vmem:[#allocation3 + $0x2f0] sm:$0xff] %v2633
      %2666 = vst [vmem:[#allocation3 + $0x338] sm:$0xff] %v2634
      %2667 = vst [vmem:[#allocation3 + $0x380] sm:$0xff] %v2635
      %2668 = vst [vmem:[#allocation3 + $0x3c8] sm:$0xff] %v2636
      %2669 = vst [vmem:[#allocation3 + $0x410] sm:$0xff] %v2637
      %2670 = vst [vmem:[#allocation3 + $0x458] sm:$0xff] %v2638
      %v2671 = vld [vmem:[%s950] sm:$0xe]
      %v2672 = vld [vmem:[%s950 + $0x4] sm:$0xf]
      %v2673 = vld [vmem:[%s950 + $0x8] sm:$0x1]
      %v2674 = vld [vmem:[%s950 + $0xc] sm:$0xe]
      %v2675 = vld [vmem:[%s950 + $0x10] sm:$0xf]
      %v2676 = vld [vmem:[%s950 + $0x14] sm:$0x1]
      %v2677 = vld [vmem:[%s950 + $0x18] sm:$0xe]
      %v2678 = vld [vmem:[%s950 + $0x1c] sm:$0xf]
      %v2679 = vld [vmem:[%s950 + $0x20] sm:$0x1]
      %v2680 = vld [vmem:[%s950 + $0x24] sm:$0xe]
      %v2681 = vld [vmem:[%s950 + $0x28] sm:$0xf]
      %v2682 = vld [vmem:[%s950 + $0x2c] sm:$0x1]
      %v2683 = vld [vmem:[%s950 + $0x30] sm:$0xe]
      %v2684 = vld [vmem:[%s950 + $0x34] sm:$0xf]
      %v2685 = vld [vmem:[%s950 + $0x38] sm:$0x1]
      %v2686 = vld [vmem:[%s950 + $0x3c] sm:$0xe]
      %v2687 = vld [vmem:[%s950 + $0x40] sm:$0xf]
      %v2688 = vld [vmem:[%s950 + $0x44] sm:$0x1]
      %v2689 = vld [vmem:[%s950 + $0x48] sm:$0xe]
      %v2690 = vld [vmem:[%s950 + $0x4c] sm:$0xf]
      %v2691 = vld [vmem:[%s950 + $0x50] sm:$0x1]
      %v2692 = vld [vmem:[%s950 + $0x54] sm:$0xe]
      %v2693 = vld [vmem:[%s950 + $0x58] sm:$0xf]
      %v2694 = vld [vmem:[%s950 + $0x5c] sm:$0x1]
      %v2695 = vld [vmem:[%s950 + $0x60] sm:$0xe]
      %v2696 = vld [vmem:[%s950 + $0x64] sm:$0xf]
      %v2697 = vld [vmem:[%s950 + $0x68] sm:$0x1]
      %v2698 = vld [vmem:[%s950 + $0x6c] sm:$0xe]
      %v2699 = vld [vmem:[%s950 + $0x70] sm:$0xf]
      %v2700 = vld [vmem:[%s950 + $0x74] sm:$0x1]
      %v2701 = vld [vmem:[%s950 + $0x78] sm:$0xe]
      %v2702 = vld [vmem:[%s950 + $0x7c] sm:$0xf]
      %v2703 = vld [vmem:[%s950 + $0x80] sm:$0x1]
      %v2704 = vld [vmem:[%s950 + $0x84] sm:$0xe]
      %v2705 = vld [vmem:[%s950 + $0x88] sm:$0xf]
      %v2706 = vld [vmem:[%s950 + $0x8c] sm:$0x1]
      %v2707 = vld [vmem:[%s950 + $0x90] sm:$0xe]
      %v2708 = vld [vmem:[%s950 + $0x94] sm:$0xf]
      %v2709 = vld [vmem:[%s950 + $0x98] sm:$0x1]
      %v2710 = vld [vmem:[%s950 + $0x9c] sm:$0xe]
      %v2711 = vld [vmem:[%s950 + $0xa0] sm:$0xf]
      %v2712 = vld [vmem:[%s950 + $0xa4] sm:$0x1]
      %v2713 = vld [vmem:[%s950 + $0xa8] sm:$0xe]
      %v2714 = vld [vmem:[%s950 + $0xac] sm:$0xf]
      %v2715 = vld [vmem:[%s950 + $0xb0] sm:$0x1]
      %v2716 = vld [vmem:[%s950 + $0xb4] sm:$0xe]
      %v2717 = vld [vmem:[%s950 + $0xb8] sm:$0xf]
      %v2718 = vld [vmem:[%s950 + $0xbc] sm:$0x1]
      %v2767 = vrot.slane %v2671, 5
      %v2768 = vrot.slane %v2767, 4
      %v2769 = vrot.slane %v2672, 5
      %v2770 = vsel %vm1822, %v2768, %v2769
      %v2771 = vrot.slane %v2769, 4
      %v2772 = vrot.slane %v2673, 5
      %v2773 = vsel %vm1822, %v2771, %v2772
      %v2774 = vrot.slane %v2674, 5
      %v2775 = vrot.slane %v2774, 4
      %v2776 = vrot.slane %v2675, 5
      %v2777 = vsel %vm1822, %v2775, %v2776
      %v2778 = vrot.slane %v2776, 4
      %v2779 = vrot.slane %v2676, 5
      %v2780 = vsel %vm1822, %v2778, %v2779
      %v2781 = vrot.slane %v2677, 5
      %v2782 = vrot.slane %v2781, 4
      %v2783 = vrot.slane %v2678, 5
      %v2784 = vsel %vm1822, %v2782, %v2783
      %v2785 = vrot.slane %v2783, 4
      %v2786 = vrot.slane %v2679, 5
      %v2787 = vsel %vm1822, %v2785, %v2786
      %v2788 = vrot.slane %v2680, 5
      %v2789 = vrot.slane %v2788, 4
      %v2790 = vrot.slane %v2681, 5
      %v2791 = vsel %vm1822, %v2789, %v2790
      %v2792 = vrot.slane %v2790, 4
      %v2793 = vrot.slane %v2682, 5
      %v2794 = vsel %vm1822, %v2792, %v2793
      %v2795 = vrot.slane %v2683, 5
      %v2796 = vrot.slane %v2795, 4
      %v2797 = vrot.slane %v2684, 5
      %v2798 = vsel %vm1822, %v2796, %v2797
      %v2799 = vrot.slane %v2797, 4
      %v2800 = vrot.slane %v2685, 5
      %v2801 = vsel %vm1822, %v2799, %v2800
      %v2802 = vrot.slane %v2686, 5
      %v2803 = vrot.slane %v2802, 4
      %v2804 = vrot.slane %v2687, 5
      %v2805 = vsel %vm1822, %v2803, %v2804
      %v2806 = vrot.slane %v2804, 4
      %v2807 = vrot.slane %v2688, 5
      %v2808 = vsel %vm1822, %v2806, %v2807
      %v2809 = vrot.slane %v2689, 5
      %v2810 = vrot.slane %v2809, 4
      %v2811 = vrot.slane %v2690, 5
      %v2812 = vsel %vm1822, %v2810, %v2811
      %v2813 = vrot.slane %v2811, 4
      %v2814 = vrot.slane %v2691, 5
      %v2815 = vsel %vm1822, %v2813, %v2814
      %v2816 = vrot.slane %v2692, 5
      %v2817 = vrot.slane %v2816, 4
      %v2818 = vrot.slane %v2693, 5
      %v2819 = vsel %vm1822, %v2817, %v2818
      %v2820 = vrot.slane %v2818, 4
      %v2821 = vrot.slane %v2694, 5
      %v2822 = vsel %vm1822, %v2820, %v2821
      %v2823 = vrot.slane %v2695, 5
      %v2824 = vrot.slane %v2823, 4
      %v2825 = vrot.slane %v2696, 5
      %v2826 = vsel %vm1822, %v2824, %v2825
      %v2827 = vrot.slane %v2825, 4
      %v2828 = vrot.slane %v2697, 5
      %v2829 = vsel %vm1822, %v2827, %v2828
      %v2830 = vrot.slane %v2698, 5
      %v2831 = vrot.slane %v2830, 4
      %v2832 = vrot.slane %v2699, 5
      %v2833 = vsel %vm1822, %v2831, %v2832
      %v2834 = vrot.slane %v2832, 4
      %v2835 = vrot.slane %v2700, 5
      %v2836 = vsel %vm1822, %v2834, %v2835
      %v2837 = vrot.slane %v2701, 5
      %v2838 = vrot.slane %v2837, 4
      %v2839 = vrot.slane %v2702, 5
      %v2840 = vsel %vm1822, %v2838, %v2839
      %v2841 = vrot.slane %v2839, 4
      %v2842 = vrot.slane %v2703, 5
      %v2843 = vsel %vm1822, %v2841, %v2842
      %v2844 = vrot.slane %v2704, 5
      %v2845 = vrot.slane %v2844, 4
      %v2846 = vrot.slane %v2705, 5
      %v2847 = vsel %vm1822, %v2845, %v2846
      %v2848 = vrot.slane %v2846, 4
      %v2849 = vrot.slane %v2706, 5
      %v2850 = vsel %vm1822, %v2848, %v2849
      %v2851 = vrot.slane %v2707, 5
      %v2852 = vrot.slane %v2851, 4
      %v2853 = vrot.slane %v2708, 5
      %v2854 = vsel %vm1822, %v2852, %v2853
      %v2855 = vrot.slane %v2853, 4
      %v2856 = vrot.slane %v2709, 5
      %v2857 = vsel %vm1822, %v2855, %v2856
      %v2858 = vrot.slane %v2710, 5
      %v2859 = vrot.slane %v2858, 4
      %v2860 = vrot.slane %v2711, 5
      %v2861 = vsel %vm1822, %v2859, %v2860
      %v2862 = vrot.slane %v2860, 4
      %v2863 = vrot.slane %v2712, 5
      %v2864 = vsel %vm1822, %v2862, %v2863
      %v2865 = vrot.slane %v2713, 5
      %v2866 = vrot.slane %v2865, 4
      %v2867 = vrot.slane %v2714, 5
      %v2868 = vsel %vm1822, %v2866, %v2867
      %v2869 = vrot.slane %v2867, 4
      %v2870 = vrot.slane %v2715, 5
      %v2871 = vsel %vm1822, %v2869, %v2870
      %v2872 = vrot.slane %v2716, 5
      %v2873 = vrot.slane %v2872, 4
      %v2874 = vrot.slane %v2717, 5
      %v2875 = vsel %vm1822, %v2873, %v2874
      %v2876 = vrot.slane %v2874, 4
      %v2877 = vrot.slane %v2718, 5
      %v2878 = vsel %vm1822, %v2876, %v2877
      %v2879 = vunpack.c.l.b16 %v2770
      %v2880 = vunpack.c.l.b16 %v2773
      %v2881 = vunpack.c.l.b16 %v2777
      %v2882 = vunpack.c.l.b16 %v2780
      %v2883 = vunpack.c.l.b16 %v2784
      %v2884 = vunpack.c.l.b16 %v2787
      %v2885 = vunpack.c.l.b16 %v2791
      %v2886 = vunpack.c.l.b16 %v2794
      %v2887 = vunpack.c.l.b16 %v2798
      %v2888 = vunpack.c.l.b16 %v2801
      %v2889 = vunpack.c.l.b16 %v2805
      %v2890 = vunpack.c.l.b16 %v2808
      %v2891 = vunpack.c.l.b16 %v2812
      %v2892 = vunpack.c.l.b16 %v2815
      %v2893 = vunpack.c.l.b16 %v2819
      %v2894 = vunpack.c.l.b16 %v2822
      %v2895 = vunpack.c.l.b16 %v2826
      %v2896 = vunpack.c.l.b16 %v2829
      %v2897 = vunpack.c.l.b16 %v2833
      %v2898 = vunpack.c.l.b16 %v2836
      %v2899 = vunpack.c.l.b16 %v2840
      %v2900 = vunpack.c.l.b16 %v2843
      %v2901 = vunpack.c.l.b16 %v2847
      %v2902 = vunpack.c.l.b16 %v2850
      %v2903 = vunpack.c.l.b16 %v2854
      %v2904 = vunpack.c.l.b16 %v2857
      %v2905 = vunpack.c.l.b16 %v2861
      %v2906 = vunpack.c.l.b16 %v2864
      %v2907 = vunpack.c.l.b16 %v2868
      %v2908 = vunpack.c.l.b16 %v2871
      %v2909 = vunpack.c.l.b16 %v2875
      %v2910 = vunpack.c.l.b16 %v2878
      %v2911 = vpack.c.b16 %v2880, %v2879
      %v2912 = vpack.c.b16 %v2882, %v2881
      %v2913 = vpack.c.b16 %v2884, %v2883
      %v2914 = vpack.c.b16 %v2886, %v2885
      %v2915 = vpack.c.b16 %v2888, %v2887
      %v2916 = vpack.c.b16 %v2890, %v2889
      %v2917 = vpack.c.b16 %v2892, %v2891
      %v2918 = vpack.c.b16 %v2894, %v2893
      %v2919 = vpack.c.b16 %v2896, %v2895
      %v2920 = vpack.c.b16 %v2898, %v2897
      %v2921 = vpack.c.b16 %v2900, %v2899
      %v2922 = vpack.c.b16 %v2902, %v2901
      %v2923 = vpack.c.b16 %v2904, %v2903
      %v2924 = vpack.c.b16 %v2906, %v2905
      %v2925 = vpack.c.b16 %v2908, %v2907
      %v2926 = vpack.c.b16 %v2910, %v2909
      %2943 = vst [vmem:[#allocation3 + $0x28] sm:$0xff] %v2911
      %2944 = vst [vmem:[#allocation3 + $0x70] sm:$0xff] %v2912
      %2945 = vst [vmem:[#allocation3 + $0xb8] sm:$0xff] %v2913
      %2946 = vst [vmem:[#allocation3 + $0x100] sm:$0xff] %v2914
      %2947 = vst [vmem:[#allocation3 + $0x148] sm:$0xff] %v2915
      %2948 = vst [vmem:[#allocation3 + $0x190] sm:$0xff] %v2916
      %2949 = vst [vmem:[#allocation3 + $0x1d8] sm:$0xff] %v2917
      %2950 = vst [vmem:[#allocation3 + $0x220] sm:$0xff] %v2918
      %2951 = vst [vmem:[#allocation3 + $0x268] sm:$0xff] %v2919
      %2952 = vst [vmem:[#allocation3 + $0x2b0] sm:$0xff] %v2920
      %2953 = vst [vmem:[#allocation3 + $0x2f8] sm:$0xff] %v2921
      %2954 = vst [vmem:[#allocation3 + $0x340] sm:$0xff] %v2922
      %2955 = vst [vmem:[#allocation3 + $0x388] sm:$0xff] %v2923
      %2956 = vst [vmem:[#allocation3 + $0x3d0] sm:$0xff] %v2924
      %2957 = vst [vmem:[#allocation3 + $0x418] sm:$0xff] %v2925
      %2958 = vst [vmem:[#allocation3 + $0x460] sm:$0xff] %v2926
      %s2959 = scalar_lea.vmem [#allocation2], 24
      %v2960 = vld [vmem:[%s2959] sm:$0xf]
      %v2961 = vld [vmem:[%s2959 + $0x4] sm:$0xf]
      %v2962 = vld [vmem:[%s2959 + $0xc] sm:$0xf]
      %v2963 = vld [vmem:[%s2959 + $0x10] sm:$0xf]
      %v2964 = vld [vmem:[%s2959 + $0x18] sm:$0xf]
      %v2965 = vld [vmem:[%s2959 + $0x1c] sm:$0xf]
      %v2966 = vld [vmem:[%s2959 + $0x24] sm:$0xf]
      %v2967 = vld [vmem:[%s2959 + $0x28] sm:$0xf]
      %v2968 = vld [vmem:[%s2959 + $0x30] sm:$0xf]
      %v2969 = vld [vmem:[%s2959 + $0x34] sm:$0xf]
      %v2970 = vld [vmem:[%s2959 + $0x3c] sm:$0xf]
      %v2971 = vld [vmem:[%s2959 + $0x40] sm:$0xf]
      %v2972 = vld [vmem:[%s2959 + $0x48] sm:$0xf]
      %v2973 = vld [vmem:[%s2959 + $0x4c] sm:$0xf]
      %v2974 = vld [vmem:[%s2959 + $0x54] sm:$0xf]
      %v2975 = vld [vmem:[%s2959 + $0x58] sm:$0xf]
      %v2976 = vld [vmem:[%s2959 + $0x60] sm:$0xf]
      %v2977 = vld [vmem:[%s2959 + $0x64] sm:$0xf]
      %v2978 = vld [vmem:[%s2959 + $0x6c] sm:$0xf]
      %v2979 = vld [vmem:[%s2959 + $0x70] sm:$0xf]
      %v2980 = vld [vmem:[%s2959 + $0x78] sm:$0xf]
      %v2981 = vld [vmem:[%s2959 + $0x7c] sm:$0xf]
      %v2982 = vld [vmem:[%s2959 + $0x84] sm:$0xf]
      %v2983 = vld [vmem:[%s2959 + $0x88] sm:$0xf]
      %v2984 = vld [vmem:[%s2959 + $0x90] sm:$0xf]
      %v2985 = vld [vmem:[%s2959 + $0x94] sm:$0xf]
      %v2986 = vld [vmem:[%s2959 + $0x9c] sm:$0xf]
      %v2987 = vld [vmem:[%s2959 + $0xa0] sm:$0xf]
      %v2988 = vld [vmem:[%s2959 + $0xa8] sm:$0xf]
      %v2989 = vld [vmem:[%s2959 + $0xac] sm:$0xf]
      %v2990 = vld [vmem:[%s2959 + $0xb4] sm:$0xf]
      %v2991 = vld [vmem:[%s2959 + $0xb8] sm:$0xf]
      %v3024 = vunpack.c.l.b16 %v2960
      %v3025 = vunpack.c.l.b16 %v2961
      %v3026 = vunpack.c.l.b16 %v2962
      %v3027 = vunpack.c.l.b16 %v2963
      %v3028 = vunpack.c.l.b16 %v2964
      %v3029 = vunpack.c.l.b16 %v2965
      %v3030 = vunpack.c.l.b16 %v2966
      %v3031 = vunpack.c.l.b16 %v2967
      %v3032 = vunpack.c.l.b16 %v2968
      %v3033 = vunpack.c.l.b16 %v2969
      %v3034 = vunpack.c.l.b16 %v2970
      %v3035 = vunpack.c.l.b16 %v2971
      %v3036 = vunpack.c.l.b16 %v2972
      %v3037 = vunpack.c.l.b16 %v2973
      %v3038 = vunpack.c.l.b16 %v2974
      %v3039 = vunpack.c.l.b16 %v2975
      %v3040 = vunpack.c.l.b16 %v2976
      %v3041 = vunpack.c.l.b16 %v2977
      %v3042 = vunpack.c.l.b16 %v2978
      %v3043 = vunpack.c.l.b16 %v2979
      %v3044 = vunpack.c.l.b16 %v2980
      %v3045 = vunpack.c.l.b16 %v2981
      %v3046 = vunpack.c.l.b16 %v2982
      %v3047 = vunpack.c.l.b16 %v2983
      %v3048 = vunpack.c.l.b16 %v2984
      %v3049 = vunpack.c.l.b16 %v2985
      %v3050 = vunpack.c.l.b16 %v2986
      %v3051 = vunpack.c.l.b16 %v2987
      %v3052 = vunpack.c.l.b16 %v2988
      %v3053 = vunpack.c.l.b16 %v2989
      %v3054 = vunpack.c.l.b16 %v2990
      %v3055 = vunpack.c.l.b16 %v2991
      %v3056 = vpack.c.b16 %v3025, %v3024
      %v3057 = vpack.c.b16 %v3027, %v3026
      %v3058 = vpack.c.b16 %v3029, %v3028
      %v3059 = vpack.c.b16 %v3031, %v3030
      %v3060 = vpack.c.b16 %v3033, %v3032
      %v3061 = vpack.c.b16 %v3035, %v3034
      %v3062 = vpack.c.b16 %v3037, %v3036
      %v3063 = vpack.c.b16 %v3039, %v3038
      %v3064 = vpack.c.b16 %v3041, %v3040
      %v3065 = vpack.c.b16 %v3043, %v3042
      %v3066 = vpack.c.b16 %v3045, %v3044
      %v3067 = vpack.c.b16 %v3047, %v3046
      %v3068 = vpack.c.b16 %v3049, %v3048
      %v3069 = vpack.c.b16 %v3051, %v3050
      %v3070 = vpack.c.b16 %v3053, %v3052
      %v3071 = vpack.c.b16 %v3055, %v3054
      %3088 = vst [vmem:[#allocation3 + $0x30] sm:$0xff] %v3056
      %3089 = vst [vmem:[#allocation3 + $0x78] sm:$0xff] %v3057
      %3090 = vst [vmem:[#allocation3 + $0xc0] sm:$0xff] %v3058
      %3091 = vst [vmem:[#allocation3 + $0x108] sm:$0xff] %v3059
      %3092 = vst [vmem:[#allocation3 + $0x150] sm:$0xff] %v3060
      %3093 = vst [vmem:[#allocation3 + $0x198] sm:$0xff] %v3061
      %3094 = vst [vmem:[#allocation3 + $0x1e0] sm:$0xff] %v3062
      %3095 = vst [vmem:[#allocation3 + $0x228] sm:$0xff] %v3063
      %3096 = vst [vmem:[#allocation3 + $0x270] sm:$0xff] %v3064
      %3097 = vst [vmem:[#allocation3 + $0x2b8] sm:$0xff] %v3065
      %3098 = vst [vmem:[#allocation3 + $0x300] sm:$0xff] %v3066
      %3099 = vst [vmem:[#allocation3 + $0x348] sm:$0xff] %v3067
      %3100 = vst [vmem:[#allocation3 + $0x390] sm:$0xff] %v3068
      %3101 = vst [vmem:[#allocation3 + $0x3d8] sm:$0xff] %v3069
      %3102 = vst [vmem:[#allocation3 + $0x420] sm:$0xff] %v3070
      %3103 = vst [vmem:[#allocation3 + $0x468] sm:$0xff] %v3071
      %v3104 = vld [vmem:[%s2959] sm:$0xf]
      %v3105 = vld [vmem:[%s2959 + $0x4] sm:$0xf]
      %v3106 = vld [vmem:[%s2959 + $0x8] sm:$0x1]
      %v3107 = vld [vmem:[%s2959 + $0xc] sm:$0xf]
      %v3108 = vld [vmem:[%s2959 + $0x10] sm:$0xf]
      %v3109 = vld [vmem:[%s2959 + $0x14] sm:$0x1]
      %v3110 = vld [vmem:[%s2959 + $0x18] sm:$0xf]
      %v3111 = vld [vmem:[%s2959 + $0x1c] sm:$0xf]
      %v3112 = vld [vmem:[%s2959 + $0x20] sm:$0x1]
      %v3113 = vld [vmem:[%s2959 + $0x24] sm:$0xf]
      %v3114 = vld [vmem:[%s2959 + $0x28] sm:$0xf]
      %v3115 = vld [vmem:[%s2959 + $0x2c] sm:$0x1]
      %v3116 = vld [vmem:[%s2959 + $0x30] sm:$0xf]
      %v3117 = vld [vmem:[%s2959 + $0x34] sm:$0xf]
      %v3118 = vld [vmem:[%s2959 + $0x38] sm:$0x1]
      %v3119 = vld [vmem:[%s2959 + $0x3c] sm:$0xf]
      %v3120 = vld [vmem:[%s2959 + $0x40] sm:$0xf]
      %v3121 = vld [vmem:[%s2959 + $0x44] sm:$0x1]
      %v3122 = vld [vmem:[%s2959 + $0x48] sm:$0xf]
      %v3123 = vld [vmem:[%s2959 + $0x4c] sm:$0xf]
      %v3124 = vld [vmem:[%s2959 + $0x50] sm:$0x1]
      %v3125 = vld [vmem:[%s2959 + $0x54] sm:$0xf]
      %v3126 = vld [vmem:[%s2959 + $0x58] sm:$0xf]
      %v3127 = vld [vmem:[%s2959 + $0x5c] sm:$0x1]
      %v3128 = vld [vmem:[%s2959 + $0x60] sm:$0xf]
      %v3129 = vld [vmem:[%s2959 + $0x64] sm:$0xf]
      %v3130 = vld [vmem:[%s2959 + $0x68] sm:$0x1]
      %v3131 = vld [vmem:[%s2959 + $0x6c] sm:$0xf]
      %v3132 = vld [vmem:[%s2959 + $0x70] sm:$0xf]
      %v3133 = vld [vmem:[%s2959 + $0x74] sm:$0x1]
      %v3134 = vld [vmem:[%s2959 + $0x78] sm:$0xf]
      %v3135 = vld [vmem:[%s2959 + $0x7c] sm:$0xf]
      %v3136 = vld [vmem:[%s2959 + $0x80] sm:$0x1]
      %v3137 = vld [vmem:[%s2959 + $0x84] sm:$0xf]
      %v3138 = vld [vmem:[%s2959 + $0x88] sm:$0xf]
      %v3139 = vld [vmem:[%s2959 + $0x8c] sm:$0x1]
      %v3140 = vld [vmem:[%s2959 + $0x90] sm:$0xf]
      %v3141 = vld [vmem:[%s2959 + $0x94] sm:$0xf]
      %v3142 = vld [vmem:[%s2959 + $0x98] sm:$0x1]
      %v3143 = vld [vmem:[%s2959 + $0x9c] sm:$0xf]
      %v3144 = vld [vmem:[%s2959 + $0xa0] sm:$0xf]
      %v3145 = vld [vmem:[%s2959 + $0xa4] sm:$0x1]
      %v3146 = vld [vmem:[%s2959 + $0xa8] sm:$0xf]
      %v3147 = vld [vmem:[%s2959 + $0xac] sm:$0xf]
      %v3148 = vld [vmem:[%s2959 + $0xb0] sm:$0x1]
      %v3149 = vld [vmem:[%s2959 + $0xb4] sm:$0xf]
      %v3150 = vld [vmem:[%s2959 + $0xb8] sm:$0xf]
      %v3151 = vld [vmem:[%s2959 + $0xbc] sm:$0x1]
      %v3153 = vshrl.u32 %v3104, 16
      %v3155 = vrot.slane %v3153, 4
      %v3156 = vshll.u32 %v3104, 16
      %v3158 = vrot.slane %v3156, 5
      %v3159 = vor.u32 %v3155, %v3158
      %v3160 = vrot.slane %v3159, 4
      %v3162 = vshll.u32 %v3105, 16
      %v3164 = vrot.slane %v3162, 5
      %v3165 = vsel %vm1259, %v3160, %v3164
      %v3166 = vshrl.u32 %v3105, 16
      %v3168 = vrot.slane %v3166, 4
      %v3169 = vor.u32 %v3168, %v3164
      %v3170 = vrot.slane %v3169, 4
      %v3172 = vshll.u32 %v3106, 16
      %v3174 = vrot.slane %v3172, 5
      %v3175 = vsel %vm1259, %v3170, %v3174
      %v3177 = vshrl.u32 %v3107, 16
      %v3179 = vrot.slane %v3177, 4
      %v3180 = vshll.u32 %v3107, 16
      %v3182 = vrot.slane %v3180, 5
      %v3183 = vor.u32 %v3179, %v3182
      %v3184 = vrot.slane %v3183, 4
      %v3186 = vshll.u32 %v3108, 16
      %v3188 = vrot.slane %v3186, 5
      %v3189 = vsel %vm1259, %v3184, %v3188
      %v3190 = vshrl.u32 %v3108, 16
      %v3192 = vrot.slane %v3190, 4
      %v3193 = vor.u32 %v3192, %v3188
      %v3194 = vrot.slane %v3193, 4
      %v3196 = vshll.u32 %v3109, 16
      %v3198 = vrot.slane %v3196, 5
      %v3199 = vsel %vm1259, %v3194, %v3198
      %v3201 = vshrl.u32 %v3110, 16
      %v3203 = vrot.slane %v3201, 4
      %v3204 = vshll.u32 %v3110, 16
      %v3206 = vrot.slane %v3204, 5
      %v3207 = vor.u32 %v3203, %v3206
      %v3208 = vrot.slane %v3207, 4
      %v3210 = vshll.u32 %v3111, 16
      %v3212 = vrot.slane %v3210, 5
      %v3213 = vsel %vm1259, %v3208, %v3212
      %v3214 = vshrl.u32 %v3111, 16
      %v3216 = vrot.slane %v3214, 4
      %v3217 = vor.u32 %v3216, %v3212
      %v3218 = vrot.slane %v3217, 4
      %v3220 = vshll.u32 %v3112, 16
      %v3222 = vrot.slane %v3220, 5
      %v3223 = vsel %vm1259, %v3218, %v3222
      %v3225 = vshrl.u32 %v3113, 16
      %v3227 = vrot.slane %v3225, 4
      %v3228 = vshll.u32 %v3113, 16
      %v3230 = vrot.slane %v3228, 5
      %v3231 = vor.u32 %v3227, %v3230
      %v3232 = vrot.slane %v3231, 4
      %v3234 = vshll.u32 %v3114, 16
      %v3236 = vrot.slane %v3234, 5
      %v3237 = vsel %vm1259, %v3232, %v3236
      %v3238 = vshrl.u32 %v3114, 16
      %v3240 = vrot.slane %v3238, 4
      %v3241 = vor.u32 %v3240, %v3236
      %v3242 = vrot.slane %v3241, 4
      %v3244 = vshll.u32 %v3115, 16
      %v3246 = vrot.slane %v3244, 5
      %v3247 = vsel %vm1259, %v3242, %v3246
      %v3249 = vshrl.u32 %v3116, 16
      %v3251 = vrot.slane %v3249, 4
      %v3252 = vshll.u32 %v3116, 16
      %v3254 = vrot.slane %v3252, 5
      %v3255 = vor.u32 %v3251, %v3254
      %v3256 = vrot.slane %v3255, 4
      %v3258 = vshll.u32 %v3117, 16
      %v3260 = vrot.slane %v3258, 5
      %v3261 = vsel %vm1259, %v3256, %v3260
      %v3262 = vshrl.u32 %v3117, 16
      %v3264 = vrot.slane %v3262, 4
      %v3265 = vor.u32 %v3264, %v3260
      %v3266 = vrot.slane %v3265, 4
      %v3268 = vshll.u32 %v3118, 16
      %v3270 = vrot.slane %v3268, 5
      %v3271 = vsel %vm1259, %v3266, %v3270
      %v3273 = vshrl.u32 %v3119, 16
      %v3275 = vrot.slane %v3273, 4
      %v3276 = vshll.u32 %v3119, 16
      %v3278 = vrot.slane %v3276, 5
      %v3279 = vor.u32 %v3275, %v3278
      %v3280 = vrot.slane %v3279, 4
      %v3282 = vshll.u32 %v3120, 16
      %v3284 = vrot.slane %v3282, 5
      %v3285 = vsel %vm1259, %v3280, %v3284
      %v3286 = vshrl.u32 %v3120, 16
      %v3288 = vrot.slane %v3286, 4
      %v3289 = vor.u32 %v3288, %v3284
      %v3290 = vrot.slane %v3289, 4
      %v3292 = vshll.u32 %v3121, 16
      %v3294 = vrot.slane %v3292, 5
      %v3295 = vsel %vm1259, %v3290, %v3294
      %v3297 = vshrl.u32 %v3122, 16
      %v3299 = vrot.slane %v3297, 4
      %v3300 = vshll.u32 %v3122, 16
      %v3302 = vrot.slane %v3300, 5
      %v3303 = vor.u32 %v3299, %v3302
      %v3304 = vrot.slane %v3303, 4
      %v3306 = vshll.u32 %v3123, 16
      %v3308 = vrot.slane %v3306, 5
      %v3309 = vsel %vm1259, %v3304, %v3308
      %v3310 = vshrl.u32 %v3123, 16
      %v3312 = vrot.slane %v3310, 4
      %v3313 = vor.u32 %v3312, %v3308
      %v3314 = vrot.slane %v3313, 4
      %v3316 = vshll.u32 %v3124, 16
      %v3318 = vrot.slane %v3316, 5
      %v3319 = vsel %vm1259, %v3314, %v3318
      %v3321 = vshrl.u32 %v3125, 16
      %v3323 = vrot.slane %v3321, 4
      %v3324 = vshll.u32 %v3125, 16
      %v3326 = vrot.slane %v3324, 5
      %v3327 = vor.u32 %v3323, %v3326
      %v3328 = vrot.slane %v3327, 4
      %v3330 = vshll.u32 %v3126, 16
      %v3332 = vrot.slane %v3330, 5
      %v3333 = vsel %vm1259, %v3328, %v3332
      %v3334 = vshrl.u32 %v3126, 16
      %v3336 = vrot.slane %v3334, 4
      %v3337 = vor.u32 %v3336, %v3332
      %v3338 = vrot.slane %v3337, 4
      %v3340 = vshll.u32 %v3127, 16
      %v3342 = vrot.slane %v3340, 5
      %v3343 = vsel %vm1259, %v3338, %v3342
      %v3345 = vshrl.u32 %v3128, 16
      %v3347 = vrot.slane %v3345, 4
      %v3348 = vshll.u32 %v3128, 16
      %v3350 = vrot.slane %v3348, 5
      %v3351 = vor.u32 %v3347, %v3350
      %v3352 = vrot.slane %v3351, 4
      %v3354 = vshll.u32 %v3129, 16
      %v3356 = vrot.slane %v3354, 5
      %v3357 = vsel %vm1259, %v3352, %v3356
      %v3358 = vshrl.u32 %v3129, 16
      %v3360 = vrot.slane %v3358, 4
      %v3361 = vor.u32 %v3360, %v3356
      %v3362 = vrot.slane %v3361, 4
      %v3364 = vshll.u32 %v3130, 16
      %v3366 = vrot.slane %v3364, 5
      %v3367 = vsel %vm1259, %v3362, %v3366
      %v3369 = vshrl.u32 %v3131, 16
      %v3371 = vrot.slane %v3369, 4
      %v3372 = vshll.u32 %v3131, 16
      %v3374 = vrot.slane %v3372, 5
      %v3375 = vor.u32 %v3371, %v3374
      %v3376 = vrot.slane %v3375, 4
      %v3378 = vshll.u32 %v3132, 16
      %v3380 = vrot.slane %v3378, 5
      %v3381 = vsel %vm1259, %v3376, %v3380
      %v3382 = vshrl.u32 %v3132, 16
      %v3384 = vrot.slane %v3382, 4
      %v3385 = vor.u32 %v3384, %v3380
      %v3386 = vrot.slane %v3385, 4
      %v3388 = vshll.u32 %v3133, 16
      %v3390 = vrot.slane %v3388, 5
      %v3391 = vsel %vm1259, %v3386, %v3390
      %v3393 = vshrl.u32 %v3134, 16
      %v3395 = vrot.slane %v3393, 4
      %v3396 = vshll.u32 %v3134, 16
      %v3398 = vrot.slane %v3396, 5
      %v3399 = vor.u32 %v3395, %v3398
      %v3400 = vrot.slane %v3399, 4
      %v3402 = vshll.u32 %v3135, 16
      %v3404 = vrot.slane %v3402, 5
      %v3405 = vsel %vm1259, %v3400, %v3404
      %v3406 = vshrl.u32 %v3135, 16
      %v3408 = vrot.slane %v3406, 4
      %v3409 = vor.u32 %v3408, %v3404
      %v3410 = vrot.slane %v3409, 4
      %v3412 = vshll.u32 %v3136, 16
      %v3414 = vrot.slane %v3412, 5
      %v3415 = vsel %vm1259, %v3410, %v3414
      %v3417 = vshrl.u32 %v3137, 16
      %v3419 = vrot.slane %v3417, 4
      %v3420 = vshll.u32 %v3137, 16
      %v3422 = vrot.slane %v3420, 5
      %v3423 = vor.u32 %v3419, %v3422
      %v3424 = vrot.slane %v3423, 4
      %v3426 = vshll.u32 %v3138, 16
      %v3428 = vrot.slane %v3426, 5
      %v3429 = vsel %vm1259, %v3424, %v3428
      %v3430 = vshrl.u32 %v3138, 16
      %v3432 = vrot.slane %v3430, 4
      %v3433 = vor.u32 %v3432, %v3428
      %v3434 = vrot.slane %v3433, 4
      %v3436 = vshll.u32 %v3139, 16
      %v3438 = vrot.slane %v3436, 5
      %v3439 = vsel %vm1259, %v3434, %v3438
      %v3441 = vshrl.u32 %v3140, 16
      %v3443 = vrot.slane %v3441, 4
      %v3444 = vshll.u32 %v3140, 16
      %v3446 = vrot.slane %v3444, 5
      %v3447 = vor.u32 %v3443, %v3446
      %v3448 = vrot.slane %v3447, 4
      %v3450 = vshll.u32 %v3141, 16
      %v3452 = vrot.slane %v3450, 5
      %v3453 = vsel %vm1259, %v3448, %v3452
      %v3454 = vshrl.u32 %v3141, 16
      %v3456 = vrot.slane %v3454, 4
      %v3457 = vor.u32 %v3456, %v3452
      %v3458 = vrot.slane %v3457, 4
      %v3460 = vshll.u32 %v3142, 16
      %v3462 = vrot.slane %v3460, 5
      %v3463 = vsel %vm1259, %v3458, %v3462
      %v3465 = vshrl.u32 %v3143, 16
      %v3467 = vrot.slane %v3465, 4
      %v3468 = vshll.u32 %v3143, 16
      %v3470 = vrot.slane %v3468, 5
      %v3471 = vor.u32 %v3467, %v3470
      %v3472 = vrot.slane %v3471, 4
      %v3474 = vshll.u32 %v3144, 16
      %v3476 = vrot.slane %v3474, 5
      %v3477 = vsel %vm1259, %v3472, %v3476
      %v3478 = vshrl.u32 %v3144, 16
      %v3480 = vrot.slane %v3478, 4
      %v3481 = vor.u32 %v3480, %v3476
      %v3482 = vrot.slane %v3481, 4
      %v3484 = vshll.u32 %v3145, 16
      %v3486 = vrot.slane %v3484, 5
      %v3487 = vsel %vm1259, %v3482, %v3486
      %v3489 = vshrl.u32 %v3146, 16
      %v3491 = vrot.slane %v3489, 4
      %v3492 = vshll.u32 %v3146, 16
      %v3494 = vrot.slane %v3492, 5
      %v3495 = vor.u32 %v3491, %v3494
      %v3496 = vrot.slane %v3495, 4
      %v3498 = vshll.u32 %v3147, 16
      %v3500 = vrot.slane %v3498, 5
      %v3501 = vsel %vm1259, %v3496, %v3500
      %v3502 = vshrl.u32 %v3147, 16
      %v3504 = vrot.slane %v3502, 4
      %v3505 = vor.u32 %v3504, %v3500
      %v3506 = vrot.slane %v3505, 4
      %v3508 = vshll.u32 %v3148, 16
      %v3510 = vrot.slane %v3508, 5
      %v3511 = vsel %vm1259, %v3506, %v3510
      %v3513 = vshrl.u32 %v3149, 16
      %v3515 = vrot.slane %v3513, 4
      %v3516 = vshll.u32 %v3149, 16
      %v3518 = vrot.slane %v3516, 5
      %v3519 = vor.u32 %v3515, %v3518
      %v3520 = vrot.slane %v3519, 4
      %v3522 = vshll.u32 %v3150, 16
      %v3524 = vrot.slane %v3522, 5
      %v3525 = vsel %vm1259, %v3520, %v3524
      %v3526 = vshrl.u32 %v3150, 16
      %v3528 = vrot.slane %v3526, 4
      %v3529 = vor.u32 %v3528, %v3524
      %v3530 = vrot.slane %v3529, 4
      %v3532 = vshll.u32 %v3151, 16
      %v3534 = vrot.slane %v3532, 5
      %v3535 = vsel %vm1259, %v3530, %v3534
      %v3536 = vunpack.c.l.b16 %v3165
      %v3537 = vunpack.c.l.b16 %v3175
      %v3538 = vunpack.c.l.b16 %v3189
      %v3539 = vunpack.c.l.b16 %v3199
      %v3540 = vunpack.c.l.b16 %v3213
      %v3541 = vunpack.c.l.b16 %v3223
      %v3542 = vunpack.c.l.b16 %v3237
      %v3543 = vunpack.c.l.b16 %v3247
      %v3544 = vunpack.c.l.b16 %v3261
      %v3545 = vunpack.c.l.b16 %v3271
      %v3546 = vunpack.c.l.b16 %v3285
      %v3547 = vunpack.c.l.b16 %v3295
      %v3548 = vunpack.c.l.b16 %v3309
      %v3549 = vunpack.c.l.b16 %v3319
      %v3550 = vunpack.c.l.b16 %v3333
      %v3551 = vunpack.c.l.b16 %v3343
      %v3552 = vunpack.c.l.b16 %v3357
      %v3553 = vunpack.c.l.b16 %v3367
      %v3554 = vunpack.c.l.b16 %v3381
      %v3555 = vunpack.c.l.b16 %v3391
      %v3556 = vunpack.c.l.b16 %v3405
      %v3557 = vunpack.c.l.b16 %v3415
      %v3558 = vunpack.c.l.b16 %v3429
      %v3559 = vunpack.c.l.b16 %v3439
      %v3560 = vunpack.c.l.b16 %v3453
      %v3561 = vunpack.c.l.b16 %v3463
      %v3562 = vunpack.c.l.b16 %v3477
      %v3563 = vunpack.c.l.b16 %v3487
      %v3564 = vunpack.c.l.b16 %v3501
      %v3565 = vunpack.c.l.b16 %v3511
      %v3566 = vunpack.c.l.b16 %v3525
      %v3567 = vunpack.c.l.b16 %v3535
      %v3568 = vpack.c.b16 %v3537, %v3536
      %v3569 = vpack.c.b16 %v3539, %v3538
      %v3570 = vpack.c.b16 %v3541, %v3540
      %v3571 = vpack.c.b16 %v3543, %v3542
      %v3572 = vpack.c.b16 %v3545, %v3544
      %v3573 = vpack.c.b16 %v3547, %v3546
      %v3574 = vpack.c.b16 %v3549, %v3548
      %v3575 = vpack.c.b16 %v3551, %v3550
      %v3576 = vpack.c.b16 %v3553, %v3552
      %v3577 = vpack.c.b16 %v3555, %v3554
      %v3578 = vpack.c.b16 %v3557, %v3556
      %v3579 = vpack.c.b16 %v3559, %v3558
      %v3580 = vpack.c.b16 %v3561, %v3560
      %v3581 = vpack.c.b16 %v3563, %v3562
      %v3582 = vpack.c.b16 %v3565, %v3564
      %v3583 = vpack.c.b16 %v3567, %v3566
      %3600 = vst [vmem:[#allocation3 + $0x38] sm:$0xff] %v3568
      %3601 = vst [vmem:[#allocation3 + $0x80] sm:$0xff] %v3569
      %3602 = vst [vmem:[#allocation3 + $0xc8] sm:$0xff] %v3570
      %3603 = vst [vmem:[#allocation3 + $0x110] sm:$0xff] %v3571
      %3604 = vst [vmem:[#allocation3 + $0x158] sm:$0xff] %v3572
      %3605 = vst [vmem:[#allocation3 + $0x1a0] sm:$0xff] %v3573
      %3606 = vst [vmem:[#allocation3 + $0x1e8] sm:$0xff] %v3574
      %3607 = vst [vmem:[#allocation3 + $0x230] sm:$0xff] %v3575
      %3608 = vst [vmem:[#allocation3 + $0x278] sm:$0xff] %v3576
      %3609 = vst [vmem:[#allocation3 + $0x2c0] sm:$0xff] %v3577
      %3610 = vst [vmem:[#allocation3 + $0x308] sm:$0xff] %v3578
      %3611 = vst [vmem:[#allocation3 + $0x350] sm:$0xff] %v3579
      %3612 = vst [vmem:[#allocation3 + $0x398] sm:$0xff] %v3580
      %3613 = vst [vmem:[#allocation3 + $0x3e0] sm:$0xff] %v3581
      %3614 = vst [vmem:[#allocation3 + $0x428] sm:$0xff] %v3582
      %3615 = vst [vmem:[#allocation3 + $0x470] sm:$0xff] %v3583
      %v3616 = vld [vmem:[%s2959] sm:$0xe]
      %v3617 = vld [vmem:[%s2959 + $0x4] sm:$0xf]
      %v3618 = vld [vmem:[%s2959 + $0x8] sm:$0x1]
      %v3619 = vld [vmem:[%s2959 + $0xc] sm:$0xe]
      %v3620 = vld [vmem:[%s2959 + $0x10] sm:$0xf]
      %v3621 = vld [vmem:[%s2959 + $0x14] sm:$0x1]
      %v3622 = vld [vmem:[%s2959 + $0x18] sm:$0xe]
      %v3623 = vld [vmem:[%s2959 + $0x1c] sm:$0xf]
      %v3624 = vld [vmem:[%s2959 + $0x20] sm:$0x1]
      %v3625 = vld [vmem:[%s2959 + $0x24] sm:$0xe]
      %v3626 = vld [vmem:[%s2959 + $0x28] sm:$0xf]
      %v3627 = vld [vmem:[%s2959 + $0x2c] sm:$0x1]
      %v3628 = vld [vmem:[%s2959 + $0x30] sm:$0xe]
      %v3629 = vld [vmem:[%s2959 + $0x34] sm:$0xf]
      %v3630 = vld [vmem:[%s2959 + $0x38] sm:$0x1]
      %v3631 = vld [vmem:[%s2959 + $0x3c] sm:$0xe]
      %v3632 = vld [vmem:[%s2959 + $0x40] sm:$0xf]
      %v3633 = vld [vmem:[%s2959 + $0x44] sm:$0x1]
      %v3634 = vld [vmem:[%s2959 + $0x48] sm:$0xe]
      %v3635 = vld [vmem:[%s2959 + $0x4c] sm:$0xf]
      %v3636 = vld [vmem:[%s2959 + $0x50] sm:$0x1]
      %v3637 = vld [vmem:[%s2959 + $0x54] sm:$0xe]
      %v3638 = vld [vmem:[%s2959 + $0x58] sm:$0xf]
      %v3639 = vld [vmem:[%s2959 + $0x5c] sm:$0x1]
      %v3640 = vld [vmem:[%s2959 + $0x60] sm:$0xe]
      %v3641 = vld [vmem:[%s2959 + $0x64] sm:$0xf]
      %v3642 = vld [vmem:[%s2959 + $0x68] sm:$0x1]
      %v3643 = vld [vmem:[%s2959 + $0x6c] sm:$0xe]
      %v3644 = vld [vmem:[%s2959 + $0x70] sm:$0xf]
      %v3645 = vld [vmem:[%s2959 + $0x74] sm:$0x1]
      %v3646 = vld [vmem:[%s2959 + $0x78] sm:$0xe]
      %v3647 = vld [vmem:[%s2959 + $0x7c] sm:$0xf]
      %v3648 = vld [vmem:[%s2959 + $0x80] sm:$0x1]
      %v3649 = vld [vmem:[%s2959 + $0x84] sm:$0xe]
      %v3650 = vld [vmem:[%s2959 + $0x88] sm:$0xf]
      %v3651 = vld [vmem:[%s2959 + $0x8c] sm:$0x1]
      %v3652 = vld [vmem:[%s2959 + $0x90] sm:$0xe]
      %v3653 = vld [vmem:[%s2959 + $0x94] sm:$0xf]
      %v3654 = vld [vmem:[%s2959 + $0x98] sm:$0x1]
      %v3655 = vld [vmem:[%s2959 + $0x9c] sm:$0xe]
      %v3656 = vld [vmem:[%s2959 + $0xa0] sm:$0xf]
      %v3657 = vld [vmem:[%s2959 + $0xa4] sm:$0x1]
      %v3658 = vld [vmem:[%s2959 + $0xa8] sm:$0xe]
      %v3659 = vld [vmem:[%s2959 + $0xac] sm:$0xf]
      %v3660 = vld [vmem:[%s2959 + $0xb0] sm:$0x1]
      %v3661 = vld [vmem:[%s2959 + $0xb4] sm:$0xe]
      %v3662 = vld [vmem:[%s2959 + $0xb8] sm:$0xf]
      %v3663 = vld [vmem:[%s2959 + $0xbc] sm:$0x1]
      %v3712 = vrot.slane %v3616, 5
      %v3713 = vrot.slane %v3712, 4
      %v3714 = vrot.slane %v3617, 5
      %v3715 = vsel %vm1822, %v3713, %v3714
      %v3716 = vrot.slane %v3714, 4
      %v3717 = vrot.slane %v3618, 5
      %v3718 = vsel %vm1822, %v3716, %v3717
      %v3719 = vrot.slane %v3619, 5
      %v3720 = vrot.slane %v3719, 4
      %v3721 = vrot.slane %v3620, 5
      %v3722 = vsel %vm1822, %v3720, %v3721
      %v3723 = vrot.slane %v3721, 4
      %v3724 = vrot.slane %v3621, 5
      %v3725 = vsel %vm1822, %v3723, %v3724
      %v3726 = vrot.slane %v3622, 5
      %v3727 = vrot.slane %v3726, 4
      %v3728 = vrot.slane %v3623, 5
      %v3729 = vsel %vm1822, %v3727, %v3728
      %v3730 = vrot.slane %v3728, 4
      %v3731 = vrot.slane %v3624, 5
      %v3732 = vsel %vm1822, %v3730, %v3731
      %v3733 = vrot.slane %v3625, 5
      %v3734 = vrot.slane %v3733, 4
      %v3735 = vrot.slane %v3626, 5
      %v3736 = vsel %vm1822, %v3734, %v3735
      %v3737 = vrot.slane %v3735, 4
      %v3738 = vrot.slane %v3627, 5
      %v3739 = vsel %vm1822, %v3737, %v3738
      %v3740 = vrot.slane %v3628, 5
      %v3741 = vrot.slane %v3740, 4
      %v3742 = vrot.slane %v3629, 5
      %v3743 = vsel %vm1822, %v3741, %v3742
      %v3744 = vrot.slane %v3742, 4
      %v3745 = vrot.slane %v3630, 5
      %v3746 = vsel %vm1822, %v3744, %v3745
      %v3747 = vrot.slane %v3631, 5
      %v3748 = vrot.slane %v3747, 4
      %v3749 = vrot.slane %v3632, 5
      %v3750 = vsel %vm1822, %v3748, %v3749
      %v3751 = vrot.slane %v3749, 4
      %v3752 = vrot.slane %v3633, 5
      %v3753 = vsel %vm1822, %v3751, %v3752
      %v3754 = vrot.slane %v3634, 5
      %v3755 = vrot.slane %v3754, 4
      %v3756 = vrot.slane %v3635, 5
      %v3757 = vsel %vm1822, %v3755, %v3756
      %v3758 = vrot.slane %v3756, 4
      %v3759 = vrot.slane %v3636, 5
      %v3760 = vsel %vm1822, %v3758, %v3759
      %v3761 = vrot.slane %v3637, 5
      %v3762 = vrot.slane %v3761, 4
      %v3763 = vrot.slane %v3638, 5
      %v3764 = vsel %vm1822, %v3762, %v3763
      %v3765 = vrot.slane %v3763, 4
      %v3766 = vrot.slane %v3639, 5
      %v3767 = vsel %vm1822, %v3765, %v3766
      %v3768 = vrot.slane %v3640, 5
      %v3769 = vrot.slane %v3768, 4
      %v3770 = vrot.slane %v3641, 5
      %v3771 = vsel %vm1822, %v3769, %v3770
      %v3772 = vrot.slane %v3770, 4
      %v3773 = vrot.slane %v3642, 5
      %v3774 = vsel %vm1822, %v3772, %v3773
      %v3775 = vrot.slane %v3643, 5
      %v3776 = vrot.slane %v3775, 4
      %v3777 = vrot.slane %v3644, 5
      %v3778 = vsel %vm1822, %v3776, %v3777
      %v3779 = vrot.slane %v3777, 4
      %v3780 = vrot.slane %v3645, 5
      %v3781 = vsel %vm1822, %v3779, %v3780
      %v3782 = vrot.slane %v3646, 5
      %v3783 = vrot.slane %v3782, 4
      %v3784 = vrot.slane %v3647, 5
      %v3785 = vsel %vm1822, %v3783, %v3784
      %v3786 = vrot.slane %v3784, 4
      %v3787 = vrot.slane %v3648, 5
      %v3788 = vsel %vm1822, %v3786, %v3787
      %v3789 = vrot.slane %v3649, 5
      %v3790 = vrot.slane %v3789, 4
      %v3791 = vrot.slane %v3650, 5
      %v3792 = vsel %vm1822, %v3790, %v3791
      %v3793 = vrot.slane %v3791, 4
      %v3794 = vrot.slane %v3651, 5
      %v3795 = vsel %vm1822, %v3793, %v3794
      %v3796 = vrot.slane %v3652, 5
      %v3797 = vrot.slane %v3796, 4
      %v3798 = vrot.slane %v3653, 5
      %v3799 = vsel %vm1822, %v3797, %v3798
      %v3800 = vrot.slane %v3798, 4
      %v3801 = vrot.slane %v3654, 5
      %v3802 = vsel %vm1822, %v3800, %v3801
      %v3803 = vrot.slane %v3655, 5
      %v3804 = vrot.slane %v3803, 4
      %v3805 = vrot.slane %v3656, 5
      %v3806 = vsel %vm1822, %v3804, %v3805
      %v3807 = vrot.slane %v3805, 4
      %v3808 = vrot.slane %v3657, 5
      %v3809 = vsel %vm1822, %v3807, %v3808
      %v3810 = vrot.slane %v3658, 5
      %v3811 = vrot.slane %v3810, 4
      %v3812 = vrot.slane %v3659, 5
      %v3813 = vsel %vm1822, %v3811, %v3812
      %v3814 = vrot.slane %v3812, 4
      %v3815 = vrot.slane %v3660, 5
      %v3816 = vsel %vm1822, %v3814, %v3815
      %v3817 = vrot.slane %v3661, 5
      %v3818 = vrot.slane %v3817, 4
      %v3819 = vrot.slane %v3662, 5
      %v3820 = vsel %vm1822, %v3818, %v3819
      %v3821 = vrot.slane %v3819, 4
      %v3822 = vrot.slane %v3663, 5
      %v3823 = vsel %vm1822, %v3821, %v3822
      %v3824 = vunpack.c.l.b16 %v3715
      %v3825 = vunpack.c.l.b16 %v3718
      %v3826 = vunpack.c.l.b16 %v3722
      %v3827 = vunpack.c.l.b16 %v3725
      %v3828 = vunpack.c.l.b16 %v3729
      %v3829 = vunpack.c.l.b16 %v3732
      %v3830 = vunpack.c.l.b16 %v3736
      %v3831 = vunpack.c.l.b16 %v3739
      %v3832 = vunpack.c.l.b16 %v3743
      %v3833 = vunpack.c.l.b16 %v3746
      %v3834 = vunpack.c.l.b16 %v3750
      %v3835 = vunpack.c.l.b16 %v3753
      %v3836 = vunpack.c.l.b16 %v3757
      %v3837 = vunpack.c.l.b16 %v3760
      %v3838 = vunpack.c.l.b16 %v3764
      %v3839 = vunpack.c.l.b16 %v3767
      %v3840 = vunpack.c.l.b16 %v3771
      %v3841 = vunpack.c.l.b16 %v3774
      %v3842 = vunpack.c.l.b16 %v3778
      %v3843 = vunpack.c.l.b16 %v3781
      %v3844 = vunpack.c.l.b16 %v3785
      %v3845 = vunpack.c.l.b16 %v3788
      %v3846 = vunpack.c.l.b16 %v3792
      %v3847 = vunpack.c.l.b16 %v3795
      %v3848 = vunpack.c.l.b16 %v3799
      %v3849 = vunpack.c.l.b16 %v3802
      %v3850 = vunpack.c.l.b16 %v3806
      %v3851 = vunpack.c.l.b16 %v3809
      %v3852 = vunpack.c.l.b16 %v3813
      %v3853 = vunpack.c.l.b16 %v3816
      %v3854 = vunpack.c.l.b16 %v3820
      %v3855 = vunpack.c.l.b16 %v3823
      %v3856 = vpack.c.b16 %v3825, %v3824
      %v3857 = vpack.c.b16 %v3827, %v3826
      %v3858 = vpack.c.b16 %v3829, %v3828
      %v3859 = vpack.c.b16 %v3831, %v3830
      %v3860 = vpack.c.b16 %v3833, %v3832
      %v3861 = vpack.c.b16 %v3835, %v3834
      %v3862 = vpack.c.b16 %v3837, %v3836
      %v3863 = vpack.c.b16 %v3839, %v3838
      %v3864 = vpack.c.b16 %v3841, %v3840
      %v3865 = vpack.c.b16 %v3843, %v3842
      %v3866 = vpack.c.b16 %v3845, %v3844
      %v3867 = vpack.c.b16 %v3847, %v3846
      %v3868 = vpack.c.b16 %v3849, %v3848
      %v3869 = vpack.c.b16 %v3851, %v3850
      %v3870 = vpack.c.b16 %v3853, %v3852
      %v3871 = vpack.c.b16 %v3855, %v3854
      %3888 = vst [vmem:[#allocation3 + $0x40] sm:$0xff] %v3856
      %3889 = vst [vmem:[#allocation3 + $0x88] sm:$0xff] %v3857
      %3890 = vst [vmem:[#allocation3 + $0xd0] sm:$0xff] %v3858
      %3891 = vst [vmem:[#allocation3 + $0x118] sm:$0xff] %v3859
      %3892 = vst [vmem:[#allocation3 + $0x160] sm:$0xff] %v3860
      %3893 = vst [vmem:[#allocation3 + $0x1a8] sm:$0xff] %v3861
      %3894 = vst [vmem:[#allocation3 + $0x1f0] sm:$0xff] %v3862
      %3895 = vst [vmem:[#allocation3 + $0x238] sm:$0xff] %v3863
      %3896 = vst [vmem:[#allocation3 + $0x280] sm:$0xff] %v3864
      %3897 = vst [vmem:[#allocation3 + $0x2c8] sm:$0xff] %v3865
      %3898 = vst [vmem:[#allocation3 + $0x310] sm:$0xff] %v3866
      %3899 = vst [vmem:[#allocation3 + $0x358] sm:$0xff] %v3867
      %3900 = vst [vmem:[#allocation3 + $0x3a0] sm:$0xff] %v3868
      %3901 = vst [vmem:[#allocation3 + $0x3e8] sm:$0xff] %v3869
      %3902 = vst [vmem:[#allocation3 + $0x430] sm:$0xff] %v3870
      %3903 = vst [vmem:[#allocation3 + $0x478] sm:$0xff] %v3871
      %v3904 = vld [vmem:[#allocation3] sm:$0xff]
      %v3905 = vld [vmem:[#allocation3 + $0x8] sm:$0xff]
      %v3906 = vld [vmem:[#allocation3 + $0x10] sm:$0xff]
      %v3907 = vld [vmem:[#allocation3 + $0x18] sm:$0xff]
      %v3908 = vld [vmem:[#allocation3 + $0x20] sm:$0xff]
      %v3909 = vld [vmem:[#allocation3 + $0x28] sm:$0xff]
      %v3910 = vld [vmem:[#allocation3 + $0x30] sm:$0xff]
      %v3911 = vld [vmem:[#allocation3 + $0x38] sm:$0xff]
      %v3912 = vld [vmem:[#allocation3 + $0x40] sm:$0xff]
      %v3913 = vld [vmem:[#allocation3 + $0x48] sm:$0xff]
      %v3914 = vld [vmem:[#allocation3 + $0x50] sm:$0xff]
      %v3915 = vld [vmem:[#allocation3 + $0x58] sm:$0xff]
      %v3916 = vld [vmem:[#allocation3 + $0x60] sm:$0xff]
      %v3917 = vld [vmem:[#allocation3 + $0x68] sm:$0xff]
      %v3918 = vld [vmem:[#allocation3 + $0x70] sm:$0xff]
      %v3919 = vld [vmem:[#allocation3 + $0x78] sm:$0xff]
      %v3920 = vld [vmem:[#allocation3 + $0x80] sm:$0xff]
      %v3921 = vld [vmem:[#allocation3 + $0x88] sm:$0xff]
      %v3922 = vld [vmem:[#allocation3 + $0x90] sm:$0xff]
      %v3923 = vld [vmem:[#allocation3 + $0x98] sm:$0xff]
      %v3924 = vld [vmem:[#allocation3 + $0xa0] sm:$0xff]
      %v3925 = vld [vmem:[#allocation3 + $0xa8] sm:$0xff]
      %v3926 = vld [vmem:[#allocation3 + $0xb0] sm:$0xff]
      %v3927 = vld [vmem:[#allocation3 + $0xb8] sm:$0xff]
      %v3928 = vld [vmem:[#allocation3 + $0xc0] sm:$0xff]
      %v3929 = vld [vmem:[#allocation3 + $0xc8] sm:$0xff]
      %v3930 = vld [vmem:[#allocation3 + $0xd0] sm:$0xff]
      %v3931 = vld [vmem:[#allocation3 + $0xd8] sm:$0xff]
      %v3932 = vld [vmem:[#allocation3 + $0xe0] sm:$0xff]
      %v3933 = vld [vmem:[#allocation3 + $0xe8] sm:$0xff]
      %v3934 = vld [vmem:[#allocation3 + $0xf0] sm:$0xff]
      %v3935 = vld [vmem:[#allocation3 + $0xf8] sm:$0xff]
      %v3936 = vld [vmem:[#allocation3 + $0x100] sm:$0xff]
      %v3937 = vld [vmem:[#allocation3 + $0x108] sm:$0xff]
      %v3938 = vld [vmem:[#allocation3 + $0x110] sm:$0xff]
      %v3939 = vld [vmem:[#allocation3 + $0x118] sm:$0xff]
      %v3940 = vld [vmem:[#allocation3 + $0x120] sm:$0xff]
      %v3941 = vld [vmem:[#allocation3 + $0x128] sm:$0xff]
      %v3942 = vld [vmem:[#allocation3 + $0x130] sm:$0xff]
      %v3943 = vld [vmem:[#allocation3 + $0x138] sm:$0xff]
      %v3944 = vld [vmem:[#allocation3 + $0x140] sm:$0xff]
      %v3945 = vld [vmem:[#allocation3 + $0x148] sm:$0xff]
      %v3946 = vld [vmem:[#allocation3 + $0x150] sm:$0xff]
      %v3947 = vld [vmem:[#allocation3 + $0x158] sm:$0xff]
      %v3948 = vld [vmem:[#allocation3 + $0x160] sm:$0xff]
      %v3949 = vld [vmem:[#allocation3 + $0x168] sm:$0xff]
      %v3950 = vld [vmem:[#allocation3 + $0x170] sm:$0xff]
      %v3951 = vld [vmem:[#allocation3 + $0x178] sm:$0xff]
      %v3952 = vld [vmem:[#allocation3 + $0x180] sm:$0xff]
      %v3953 = vld [vmem:[#allocation3 + $0x188] sm:$0xff]
      %v3954 = vld [vmem:[#allocation3 + $0x190] sm:$0xff]
      %v3955 = vld [vmem:[#allocation3 + $0x198] sm:$0xff]
      %v3956 = vld [vmem:[#allocation3 + $0x1a0] sm:$0xff]
      %v3957 = vld [vmem:[#allocation3 + $0x1a8] sm:$0xff]
      %v3958 = vld [vmem:[#allocation3 + $0x1b0] sm:$0xff]
      %v3959 = vld [vmem:[#allocation3 + $0x1b8] sm:$0xff]
      %v3960 = vld [vmem:[#allocation3 + $0x1c0] sm:$0xff]
      %v3961 = vld [vmem:[#allocation3 + $0x1c8] sm:$0xff]
      %v3962 = vld [vmem:[#allocation3 + $0x1d0] sm:$0xff]
      %v3963 = vld [vmem:[#allocation3 + $0x1d8] sm:$0xff]
      %v3964 = vld [vmem:[#allocation3 + $0x1e0] sm:$0xff]
      %v3965 = vld [vmem:[#allocation3 + $0x1e8] sm:$0xff]
      %v3966 = vld [vmem:[#allocation3 + $0x1f0] sm:$0xff]
      %v3967 = vld [vmem:[#allocation3 + $0x1f8] sm:$0xff]
      %v3968 = vld [vmem:[#allocation3 + $0x200] sm:$0xff]
      %v3969 = vld [vmem:[#allocation3 + $0x208] sm:$0xff]
      %v3970 = vld [vmem:[#allocation3 + $0x210] sm:$0xff]
      %v3971 = vld [vmem:[#allocation3 + $0x218] sm:$0xff]
      %v3972 = vld [vmem:[#allocation3 + $0x220] sm:$0xff]
      %v3973 = vld [vmem:[#allocation3 + $0x228] sm:$0xff]
      %v3974 = vld [vmem:[#allocation3 + $0x230] sm:$0xff]
      %v3975 = vld [vmem:[#allocation3 + $0x238] sm:$0xff]
      %v3976 = vld [vmem:[#allocation3 + $0x240] sm:$0xff]
      %v3977 = vld [vmem:[#allocation3 + $0x248] sm:$0xff]
      %v3978 = vld [vmem:[#allocation3 + $0x250] sm:$0xff]
      %v3979 = vld [vmem:[#allocation3 + $0x258] sm:$0xff]
      %v3980 = vld [vmem:[#allocation3 + $0x260] sm:$0xff]
      %v3981 = vld [vmem:[#allocation3 + $0x268] sm:$0xff]
      %v3982 = vld [vmem:[#allocation3 + $0x270] sm:$0xff]
      %v3983 = vld [vmem:[#allocation3 + $0x278] sm:$0xff]
      %v3984 = vld [vmem:[#allocation3 + $0x280] sm:$0xff]
      %v3985 = vld [vmem:[#allocation3 + $0x288] sm:$0xff]
      %v3986 = vld [vmem:[#allocation3 + $0x290] sm:$0xff]
      %v3987 = vld [vmem:[#allocation3 + $0x298] sm:$0xff]
      %v3988 = vld [vmem:[#allocation3 + $0x2a0] sm:$0xff]
      %v3989 = vld [vmem:[#allocation3 + $0x2a8] sm:$0xff]
      %v3990 = vld [vmem:[#allocation3 + $0x2b0] sm:$0xff]
      %v3991 = vld [vmem:[#allocation3 + $0x2b8] sm:$0xff]
      %v3992 = vld [vmem:[#allocation3 + $0x2c0] sm:$0xff]
      %v3993 = vld [vmem:[#allocation3 + $0x2c8] sm:$0xff]
      %v3994 = vld [vmem:[#allocation3 + $0x2d0] sm:$0xff]
      %v3995 = vld [vmem:[#allocation3 + $0x2d8] sm:$0xff]
      %v3996 = vld [vmem:[#allocation3 + $0x2e0] sm:$0xff]
      %v3997 = vld [vmem:[#allocation3 + $0x2e8] sm:$0xff]
      %v3998 = vld [vmem:[#allocation3 + $0x2f0] sm:$0xff]
      %v3999 = vld [vmem:[#allocation3 + $0x2f8] sm:$0xff]
      %v4000 = vld [vmem:[#allocation3 + $0x300] sm:$0xff]
      %v4001 = vld [vmem:[#allocation3 + $0x308] sm:$0xff]
      %v4002 = vld [vmem:[#allocation3 + $0x310] sm:$0xff]
      %v4003 = vld [vmem:[#allocation3 + $0x318] sm:$0xff]
      %v4004 = vld [vmem:[#allocation3 + $0x320] sm:$0xff]
      %v4005 = vld [vmem:[#allocation3 + $0x328] sm:$0xff]
      %v4006 = vld [vmem:[#allocation3 + $0x330] sm:$0xff]
      %v4007 = vld [vmem:[#allocation3 + $0x338] sm:$0xff]
      %v4008 = vld [vmem:[#allocation3 + $0x340] sm:$0xff]
      %v4009 = vld [vmem:[#allocation3 + $0x348] sm:$0xff]
      %v4010 = vld [vmem:[#allocation3 + $0x350] sm:$0xff]
      %v4011 = vld [vmem:[#allocation3 + $0x358] sm:$0xff]
      %v4012 = vld [vmem:[#allocation3 + $0x360] sm:$0xff]
      %v4013 = vld [vmem:[#allocation3 + $0x368] sm:$0xff]
      %v4014 = vld [vmem:[#allocation3 + $0x370] sm:$0xff]
      %v4015 = vld [vmem:[#allocation3 + $0x378] sm:$0xff]
      %v4016 = vld [vmem:[#allocation3 + $0x380] sm:$0xff]
      %v4017 = vld [vmem:[#allocation3 + $0x388] sm:$0xff]
      %v4018 = vld [vmem:[#allocation3 + $0x390] sm:$0xff]
      %v4019 = vld [vmem:[#allocation3 + $0x398] sm:$0xff]
      %v4020 = vld [vmem:[#allocation3 + $0x3a0] sm:$0xff]
      %v4021 = vld [vmem:[#allocation3 + $0x3a8] sm:$0xff]
      %v4022 = vld [vmem:[#allocation3 + $0x3b0] sm:$0xff]
      %v4023 = vld [vmem:[#allocation3 + $0x3b8] sm:$0xff]
      %v4024 = vld [vmem:[#allocation3 + $0x3c0] sm:$0xff]
      %v4025 = vld [vmem:[#allocation3 + $0x3c8] sm:$0xff]
      %v4026 = vld [vmem:[#allocation3 + $0x3d0] sm:$0xff]
      %v4027 = vld [vmem:[#allocation3 + $0x3d8] sm:$0xff]
      %v4028 = vld [vmem:[#allocation3 + $0x3e0] sm:$0xff]
      %v4029 = vld [vmem:[#allocation3 + $0x3e8] sm:$0xff]
      %v4030 = vld [vmem:[#allocation3 + $0x3f0] sm:$0xff]
      %v4031 = vld [vmem:[#allocation3 + $0x3f8] sm:$0xff]
      %v4032 = vld [vmem:[#allocation3 + $0x400] sm:$0xff]
      %v4033 = vld [vmem:[#allocation3 + $0x408] sm:$0xff]
      %v4034 = vld [vmem:[#allocation3 + $0x410] sm:$0xff]
      %v4035 = vld [vmem:[#allocation3 + $0x418] sm:$0xff]
      %v4036 = vld [vmem:[#allocation3 + $0x420] sm:$0xff]
      %v4037 = vld [vmem:[#allocation3 + $0x428] sm:$0xff]
      %v4038 = vld [vmem:[#allocation3 + $0x430] sm:$0xff]
      %v4039 = vld [vmem:[#allocation3 + $0x438] sm:$0xff]
      %v4040 = vld [vmem:[#allocation3 + $0x440] sm:$0xff]
      %v4041 = vld [vmem:[#allocation3 + $0x448] sm:$0xff]
      %v4042 = vld [vmem:[#allocation3 + $0x450] sm:$0xff]
      %v4043 = vld [vmem:[#allocation3 + $0x458] sm:$0xff]
      %v4044 = vld [vmem:[#allocation3 + $0x460] sm:$0xff]
      %v4045 = vld [vmem:[#allocation3 + $0x468] sm:$0xff]
      %v4046 = vld [vmem:[#allocation3 + $0x470] sm:$0xff]
      %v4047 = vld [vmem:[#allocation3 + $0x478] sm:$0xff]
      %v4048 = vld [vmem:[%s3] sm:$0xf]
      %v4049 = vld [vmem:[%s3 + $0x4] sm:$0xf]
      %v4050 = vld [vmem:[%s3 + $0x8] sm:$0xf]
      %v4051 = vld [vmem:[%s3 + $0xc] sm:$0xf]
      %v4052 = vld [vmem:[%s3 + $0x10] sm:$0xf]
      %v4053 = vld [vmem:[%s3 + $0x14] sm:$0xf]
      %v4054 = vld [vmem:[%s3 + $0x18] sm:$0xf]
      %v4055 = vld [vmem:[%s3 + $0x1c] sm:$0xf]
      %v4056 = vld [vmem:[%s3 + $0x20] sm:$0xf]
      %v4057 = vld [vmem:[%s3 + $0x24] sm:$0xf]
      %v4058 = vld [vmem:[%s3 + $0x28] sm:$0xf]
      %v4059 = vld [vmem:[%s3 + $0x2c] sm:$0xf]
      %v4060 = vld [vmem:[%s3 + $0x30] sm:$0xf]
      %v4061 = vld [vmem:[%s3 + $0x34] sm:$0xf]
      %v4062 = vld [vmem:[%s3 + $0x38] sm:$0xf]
      %v4063 = vld [vmem:[%s3 + $0x3c] sm:$0xf]
      %v4064 = vld [vmem:[%s3 + $0x40] sm:$0xf]
      %v4065 = vld [vmem:[%s3 + $0x44] sm:$0xf]
      %v4066 = vld [vmem:[%s3 + $0x48] sm:$0xf]
      %v4067 = vld [vmem:[%s3 + $0x4c] sm:$0xf]
      %v4068 = vld [vmem:[%s3 + $0x50] sm:$0xf]
      %v4069 = vld [vmem:[%s3 + $0x54] sm:$0xf]
      %v4070 = vld [vmem:[%s3 + $0x58] sm:$0xf]
      %v4071 = vld [vmem:[%s3 + $0x5c] sm:$0xf]
      %v4072 = vld [vmem:[%s3 + $0x60] sm:$0xf]
      %v4073 = vld [vmem:[%s3 + $0x64] sm:$0xf]
      %v4074 = vld [vmem:[%s3 + $0x68] sm:$0xf]
      %v4075 = vld [vmem:[%s3 + $0x6c] sm:$0xf]
      %v4076 = vld [vmem:[%s3 + $0x70] sm:$0xf]
      %v4077 = vld [vmem:[%s3 + $0x74] sm:$0xf]
      %v4078 = vld [vmem:[%s3 + $0x78] sm:$0xf]
      %v4079 = vld [vmem:[%s3 + $0x7c] sm:$0xf]
      %v4080 = vld [vmem:[%s3 + $0x80] sm:$0xf]
      %v4081 = vld [vmem:[%s3 + $0x84] sm:$0xf]
      %v4082 = vld [vmem:[%s3 + $0x88] sm:$0xf]
      %v4083 = vld [vmem:[%s3 + $0x8c] sm:$0xf]
      %v4084 = vld [vmem:[%s3 + $0x90] sm:$0xf]
      %v4085 = vld [vmem:[%s3 + $0x94] sm:$0xf]
      %v4086 = vld [vmem:[%s3 + $0x98] sm:$0xf]
      %v4087 = vld [vmem:[%s3 + $0x9c] sm:$0xf]
      %v4088 = vld [vmem:[%s3 + $0xa0] sm:$0xf]
      %v4089 = vld [vmem:[%s3 + $0xa4] sm:$0xf]
      %v4090 = vld [vmem:[%s3 + $0xa8] sm:$0xf]
      %v4091 = vld [vmem:[%s3 + $0xac] sm:$0xf]
      %v4092 = vld [vmem:[%s3 + $0xb0] sm:$0xf]
      %v4093 = vld [vmem:[%s3 + $0xb4] sm:$0xf]
      %v4094 = vld [vmem:[%s3 + $0xb8] sm:$0xf]
      %v4095 = vld [vmem:[%s3 + $0xbc] sm:$0xf]
      %v4096 = vld [vmem:[%s3 + $0xc0] sm:$0xf]
      %v4097 = vld [vmem:[%s3 + $0xc4] sm:$0xf]
      %v4098 = vld [vmem:[%s3 + $0xc8] sm:$0xf]
      %v4099 = vld [vmem:[%s3 + $0xcc] sm:$0xf]
      %v4100 = vld [vmem:[%s3 + $0xd0] sm:$0xf]
      %v4101 = vld [vmem:[%s3 + $0xd4] sm:$0xf]
      %v4102 = vld [vmem:[%s3 + $0xd8] sm:$0xf]
      %v4103 = vld [vmem:[%s3 + $0xdc] sm:$0xf]
      %v4104 = vld [vmem:[%s3 + $0xe0] sm:$0xf]
      %v4105 = vld [vmem:[%s3 + $0xe4] sm:$0xf]
      %v4106 = vld [vmem:[%s3 + $0xe8] sm:$0xf]
      %v4107 = vld [vmem:[%s3 + $0xec] sm:$0xf]
      %v4108 = vld [vmem:[%s3 + $0xf0] sm:$0xf]
      %v4109 = vld [vmem:[%s3 + $0xf4] sm:$0xf]
      %v4110 = vld [vmem:[%s3 + $0xf8] sm:$0xf]
      %v4111 = vld [vmem:[%s3 + $0xfc] sm:$0xf]
      %v4112 = vld [vmem:[%s3 + $0x100] sm:$0xf]
      %v4113 = vld [vmem:[%s3 + $0x104] sm:$0xf]
      %v4114 = vld [vmem:[%s3 + $0x108] sm:$0xf]
      %v4115 = vld [vmem:[%s3 + $0x10c] sm:$0xf]
      %v4116 = vld [vmem:[%s3 + $0x110] sm:$0xf]
      %v4117 = vld [vmem:[%s3 + $0x114] sm:$0xf]
      %v4118 = vld [vmem:[%s3 + $0x118] sm:$0xf]
      %v4119 = vld [vmem:[%s3 + $0x11c] sm:$0xf]
      %v4120 = vld [vmem:[%s3 + $0x120] sm:$0xf]
      %v4121 = vld [vmem:[%s3 + $0x124] sm:$0xf]
      %v4122 = vld [vmem:[%s3 + $0x128] sm:$0xf]
      %v4123 = vld [vmem:[%s3 + $0x12c] sm:$0xf]
      %v4124 = vld [vmem:[%s3 + $0x130] sm:$0xf]
      %v4125 = vld [vmem:[%s3 + $0x134] sm:$0xf]
      %v4126 = vld [vmem:[%s3 + $0x138] sm:$0xf]
      %v4127 = vld [vmem:[%s3 + $0x13c] sm:$0xf]
      %v4128 = vld [vmem:[%s3 + $0x140] sm:$0xf]
      %v4129 = vld [vmem:[%s3 + $0x144] sm:$0xf]
      %v4130 = vld [vmem:[%s3 + $0x148] sm:$0xf]
      %v4131 = vld [vmem:[%s3 + $0x14c] sm:$0xf]
      %v4132 = vld [vmem:[%s3 + $0x150] sm:$0xf]
      %v4133 = vld [vmem:[%s3 + $0x154] sm:$0xf]
      %v4134 = vld [vmem:[%s3 + $0x158] sm:$0xf]
      %v4135 = vld [vmem:[%s3 + $0x15c] sm:$0xf]
      %v4136 = vld [vmem:[%s3 + $0x160] sm:$0xf]
      %v4137 = vld [vmem:[%s3 + $0x164] sm:$0xf]
      %v4138 = vld [vmem:[%s3 + $0x168] sm:$0xf]
      %v4139 = vld [vmem:[%s3 + $0x16c] sm:$0xf]
      %v4140 = vld [vmem:[%s3 + $0x170] sm:$0xf]
      %v4141 = vld [vmem:[%s3 + $0x174] sm:$0xf]
      %v4142 = vld [vmem:[%s3 + $0x178] sm:$0xf]
      %v4143 = vld [vmem:[%s3 + $0x17c] sm:$0xf]
      %v4144 = vld [vmem:[%s3 + $0x180] sm:$0xf]
      %v4145 = vld [vmem:[%s3 + $0x184] sm:$0xf]
      %v4146 = vld [vmem:[%s3 + $0x188] sm:$0xf]
      %v4147 = vld [vmem:[%s3 + $0x18c] sm:$0xf]
      %v4148 = vld [vmem:[%s3 + $0x190] sm:$0xf]
      %v4149 = vld [vmem:[%s3 + $0x194] sm:$0xf]
      %v4150 = vld [vmem:[%s3 + $0x198] sm:$0xf]
      %v4151 = vld [vmem:[%s3 + $0x19c] sm:$0xf]
      %v4152 = vld [vmem:[%s3 + $0x1a0] sm:$0xf]
      %v4153 = vld [vmem:[%s3 + $0x1a4] sm:$0xf]
      %v4154 = vld [vmem:[%s3 + $0x1a8] sm:$0xf]
      %v4155 = vld [vmem:[%s3 + $0x1ac] sm:$0xf]
      %v4156 = vld [vmem:[%s3 + $0x1b0] sm:$0xf]
      %v4157 = vld [vmem:[%s3 + $0x1b4] sm:$0xf]
      %v4158 = vld [vmem:[%s3 + $0x1b8] sm:$0xf]
      %v4159 = vld [vmem:[%s3 + $0x1bc] sm:$0xf]
      %v4160 = vld [vmem:[%s3 + $0x1c0] sm:$0xf]
      %v4161 = vld [vmem:[%s3 + $0x1c4] sm:$0xf]
      %v4162 = vld [vmem:[%s3 + $0x1c8] sm:$0xf]
      %v4163 = vld [vmem:[%s3 + $0x1cc] sm:$0xf]
      %v4164 = vld [vmem:[%s3 + $0x1d0] sm:$0xf]
      %v4165 = vld [vmem:[%s3 + $0x1d4] sm:$0xf]
      %v4166 = vld [vmem:[%s3 + $0x1d8] sm:$0xf]
      %v4167 = vld [vmem:[%s3 + $0x1dc] sm:$0xf]
      %v4168 = vld [vmem:[%s3 + $0x1e0] sm:$0xf]
      %v4169 = vld [vmem:[%s3 + $0x1e4] sm:$0xf]
      %v4170 = vld [vmem:[%s3 + $0x1e8] sm:$0xf]
      %v4171 = vld [vmem:[%s3 + $0x1ec] sm:$0xf]
      %v4172 = vld [vmem:[%s3 + $0x1f0] sm:$0xf]
      %v4173 = vld [vmem:[%s3 + $0x1f4] sm:$0xf]
      %v4174 = vld [vmem:[%s3 + $0x1f8] sm:$0xf]
      %v4175 = vld [vmem:[%s3 + $0x1fc] sm:$0xf]
      %v4176 = vld [vmem:[%s3 + $0x200] sm:$0xf]
      %v4177 = vld [vmem:[%s3 + $0x204] sm:$0xf]
      %v4178 = vld [vmem:[%s3 + $0x208] sm:$0xf]
      %v4179 = vld [vmem:[%s3 + $0x20c] sm:$0xf]
      %v4180 = vld [vmem:[%s3 + $0x210] sm:$0xf]
      %v4181 = vld [vmem:[%s3 + $0x214] sm:$0xf]
      %v4182 = vld [vmem:[%s3 + $0x218] sm:$0xf]
      %v4183 = vld [vmem:[%s3 + $0x21c] sm:$0xf]
      %v4184 = vld [vmem:[%s3 + $0x220] sm:$0xf]
      %v4185 = vld [vmem:[%s3 + $0x224] sm:$0xf]
      %v4186 = vld [vmem:[%s3 + $0x228] sm:$0xf]
      %v4187 = vld [vmem:[%s3 + $0x22c] sm:$0xf]
      %v4188 = vld [vmem:[%s3 + $0x230] sm:$0xf]
      %v4189 = vld [vmem:[%s3 + $0x234] sm:$0xf]
      %v4190 = vld [vmem:[%s3 + $0x238] sm:$0xf]
      %v4191 = vld [vmem:[%s3 + $0x23c] sm:$0xf]
      %v4336 = vunpack.c.l.b16 %v4048
      %v4337 = vunpack.c.l.b16 %v4049
      %v4338 = vunpack.c.l.b16 %v4050
      %v4339 = vunpack.c.l.b16 %v4051
      %v4340 = vunpack.c.l.b16 %v4052
      %v4341 = vunpack.c.l.b16 %v4053
      %v4342 = vunpack.c.l.b16 %v4054
      %v4343 = vunpack.c.l.b16 %v4055
      %v4344 = vunpack.c.l.b16 %v4056
      %v4345 = vunpack.c.l.b16 %v4057
      %v4346 = vunpack.c.l.b16 %v4058
      %v4347 = vunpack.c.l.b16 %v4059
      %v4348 = vunpack.c.l.b16 %v4060
      %v4349 = vunpack.c.l.b16 %v4061
      %v4350 = vunpack.c.l.b16 %v4062
      %v4351 = vunpack.c.l.b16 %v4063
      %v4352 = vunpack.c.l.b16 %v4064
      %v4353 = vunpack.c.l.b16 %v4065
      %v4354 = vunpack.c.l.b16 %v4066
      %v4355 = vunpack.c.l.b16 %v4067
      %v4356 = vunpack.c.l.b16 %v4068
      %v4357 = vunpack.c.l.b16 %v4069
      %v4358 = vunpack.c.l.b16 %v4070
      %v4359 = vunpack.c.l.b16 %v4071
      %v4360 = vunpack.c.l.b16 %v4072
      %v4361 = vunpack.c.l.b16 %v4073
      %v4362 = vunpack.c.l.b16 %v4074
      %v4363 = vunpack.c.l.b16 %v4075
      %v4364 = vunpack.c.l.b16 %v4076
      %v4365 = vunpack.c.l.b16 %v4077
      %v4366 = vunpack.c.l.b16 %v4078
      %v4367 = vunpack.c.l.b16 %v4079
      %v4368 = vunpack.c.l.b16 %v4080
      %v4369 = vunpack.c.l.b16 %v4081
      %v4370 = vunpack.c.l.b16 %v4082
      %v4371 = vunpack.c.l.b16 %v4083
      %v4372 = vunpack.c.l.b16 %v4084
      %v4373 = vunpack.c.l.b16 %v4085
      %v4374 = vunpack.c.l.b16 %v4086
      %v4375 = vunpack.c.l.b16 %v4087
      %v4376 = vunpack.c.l.b16 %v4088
      %v4377 = vunpack.c.l.b16 %v4089
      %v4378 = vunpack.c.l.b16 %v4090
      %v4379 = vunpack.c.l.b16 %v4091
      %v4380 = vunpack.c.l.b16 %v4092
      %v4381 = vunpack.c.l.b16 %v4093
      %v4382 = vunpack.c.l.b16 %v4094
      %v4383 = vunpack.c.l.b16 %v4095
      %v4384 = vunpack.c.l.b16 %v4096
      %v4385 = vunpack.c.l.b16 %v4097
      %v4386 = vunpack.c.l.b16 %v4098
      %v4387 = vunpack.c.l.b16 %v4099
      %v4388 = vunpack.c.l.b16 %v4100
      %v4389 = vunpack.c.l.b16 %v4101
      %v4390 = vunpack.c.l.b16 %v4102
      %v4391 = vunpack.c.l.b16 %v4103
      %v4392 = vunpack.c.l.b16 %v4104
      %v4393 = vunpack.c.l.b16 %v4105
      %v4394 = vunpack.c.l.b16 %v4106
      %v4395 = vunpack.c.l.b16 %v4107
      %v4396 = vunpack.c.l.b16 %v4108
      %v4397 = vunpack.c.l.b16 %v4109
      %v4398 = vunpack.c.l.b16 %v4110
      %v4399 = vunpack.c.l.b16 %v4111
      %v4400 = vunpack.c.l.b16 %v4112
      %v4401 = vunpack.c.l.b16 %v4113
      %v4402 = vunpack.c.l.b16 %v4114
      %v4403 = vunpack.c.l.b16 %v4115
      %v4404 = vunpack.c.l.b16 %v4116
      %v4405 = vunpack.c.l.b16 %v4117
      %v4406 = vunpack.c.l.b16 %v4118
      %v4407 = vunpack.c.l.b16 %v4119
      %v4408 = vunpack.c.l.b16 %v4120
      %v4409 = vunpack.c.l.b16 %v4121
      %v4410 = vunpack.c.l.b16 %v4122
      %v4411 = vunpack.c.l.b16 %v4123
      %v4412 = vunpack.c.l.b16 %v4124
      %v4413 = vunpack.c.l.b16 %v4125
      %v4414 = vunpack.c.l.b16 %v4126
      %v4415 = vunpack.c.l.b16 %v4127
      %v4416 = vunpack.c.l.b16 %v4128
      %v4417 = vunpack.c.l.b16 %v4129
      %v4418 = vunpack.c.l.b16 %v4130
      %v4419 = vunpack.c.l.b16 %v4131
      %v4420 = vunpack.c.l.b16 %v4132
      %v4421 = vunpack.c.l.b16 %v4133
      %v4422 = vunpack.c.l.b16 %v4134
      %v4423 = vunpack.c.l.b16 %v4135
      %v4424 = vunpack.c.l.b16 %v4136
      %v4425 = vunpack.c.l.b16 %v4137
      %v4426 = vunpack.c.l.b16 %v4138
      %v4427 = vunpack.c.l.b16 %v4139
      %v4428 = vunpack.c.l.b16 %v4140
      %v4429 = vunpack.c.l.b16 %v4141
      %v4430 = vunpack.c.l.b16 %v4142
      %v4431 = vunpack.c.l.b16 %v4143
      %v4432 = vunpack.c.l.b16 %v4144
      %v4433 = vunpack.c.l.b16 %v4145
      %v4434 = vunpack.c.l.b16 %v4146
      %v4435 = vunpack.c.l.b16 %v4147
      %v4436 = vunpack.c.l.b16 %v4148
      %v4437 = vunpack.c.l.b16 %v4149
      %v4438 = vunpack.c.l.b16 %v4150
      %v4439 = vunpack.c.l.b16 %v4151
      %v4440 = vunpack.c.l.b16 %v4152
      %v4441 = vunpack.c.l.b16 %v4153
      %v4442 = vunpack.c.l.b16 %v4154
      %v4443 = vunpack.c.l.b16 %v4155
      %v4444 = vunpack.c.l.b16 %v4156
      %v4445 = vunpack.c.l.b16 %v4157
      %v4446 = vunpack.c.l.b16 %v4158
      %v4447 = vunpack.c.l.b16 %v4159
      %v4448 = vunpack.c.l.b16 %v4160
      %v4449 = vunpack.c.l.b16 %v4161
      %v4450 = vunpack.c.l.b16 %v4162
      %v4451 = vunpack.c.l.b16 %v4163
      %v4452 = vunpack.c.l.b16 %v4164
      %v4453 = vunpack.c.l.b16 %v4165
      %v4454 = vunpack.c.l.b16 %v4166
      %v4455 = vunpack.c.l.b16 %v4167
      %v4456 = vunpack.c.l.b16 %v4168
      %v4457 = vunpack.c.l.b16 %v4169
      %v4458 = vunpack.c.l.b16 %v4170
      %v4459 = vunpack.c.l.b16 %v4171
      %v4460 = vunpack.c.l.b16 %v4172
      %v4461 = vunpack.c.l.b16 %v4173
      %v4462 = vunpack.c.l.b16 %v4174
      %v4463 = vunpack.c.l.b16 %v4175
      %v4464 = vunpack.c.l.b16 %v4176
      %v4465 = vunpack.c.l.b16 %v4177
      %v4466 = vunpack.c.l.b16 %v4178
      %v4467 = vunpack.c.l.b16 %v4179
      %v4468 = vunpack.c.l.b16 %v4180
      %v4469 = vunpack.c.l.b16 %v4181
      %v4470 = vunpack.c.l.b16 %v4182
      %v4471 = vunpack.c.l.b16 %v4183
      %v4472 = vunpack.c.l.b16 %v4184
      %v4473 = vunpack.c.l.b16 %v4185
      %v4474 = vunpack.c.l.b16 %v4186
      %v4475 = vunpack.c.l.b16 %v4187
      %v4476 = vunpack.c.l.b16 %v4188
      %v4477 = vunpack.c.l.b16 %v4189
      %v4478 = vunpack.c.l.b16 %v4190
      %v4479 = vunpack.c.l.b16 %v4191
      %v4480 = vpack.c.b16 %v4337, %v4336
      %v4481 = vpack.c.b16 %v4339, %v4338
      %v4482 = vpack.c.b16 %v4341, %v4340
      %v4483 = vpack.c.b16 %v4343, %v4342
      %v4484 = vpack.c.b16 %v4345, %v4344
      %v4485 = vpack.c.b16 %v4347, %v4346
      %v4486 = vpack.c.b16 %v4349, %v4348
      %v4487 = vpack.c.b16 %v4351, %v4350
      %v4488 = vpack.c.b16 %v4353, %v4352
      %v4489 = vpack.c.b16 %v4355, %v4354
      %v4490 = vpack.c.b16 %v4357, %v4356
      %v4491 = vpack.c.b16 %v4359, %v4358
      %v4492 = vpack.c.b16 %v4361, %v4360
      %v4493 = vpack.c.b16 %v4363, %v4362
      %v4494 = vpack.c.b16 %v4365, %v4364
      %v4495 = vpack.c.b16 %v4367, %v4366
      %v4496 = vpack.c.b16 %v4369, %v4368
      %v4497 = vpack.c.b16 %v4371, %v4370
      %v4498 = vpack.c.b16 %v4373, %v4372
      %v4499 = vpack.c.b16 %v4375, %v4374
      %v4500 = vpack.c.b16 %v4377, %v4376
      %v4501 = vpack.c.b16 %v4379, %v4378
      %v4502 = vpack.c.b16 %v4381, %v4380
      %v4503 = vpack.c.b16 %v4383, %v4382
      %v4504 = vpack.c.b16 %v4385, %v4384
      %v4505 = vpack.c.b16 %v4387, %v4386
      %v4506 = vpack.c.b16 %v4389, %v4388
      %v4507 = vpack.c.b16 %v4391, %v4390
      %v4508 = vpack.c.b16 %v4393, %v4392
      %v4509 = vpack.c.b16 %v4395, %v4394
      %v4510 = vpack.c.b16 %v4397, %v4396
      %v4511 = vpack.c.b16 %v4399, %v4398
      %v4512 = vpack.c.b16 %v4401, %v4400
      %v4513 = vpack.c.b16 %v4403, %v4402
      %v4514 = vpack.c.b16 %v4405, %v4404
      %v4515 = vpack.c.b16 %v4407, %v4406
      %v4516 = vpack.c.b16 %v4409, %v4408
      %v4517 = vpack.c.b16 %v4411, %v4410
      %v4518 = vpack.c.b16 %v4413, %v4412
      %v4519 = vpack.c.b16 %v4415, %v4414
      %v4520 = vpack.c.b16 %v4417, %v4416
      %v4521 = vpack.c.b16 %v4419, %v4418
      %v4522 = vpack.c.b16 %v4421, %v4420
      %v4523 = vpack.c.b16 %v4423, %v4422
      %v4524 = vpack.c.b16 %v4425, %v4424
      %v4525 = vpack.c.b16 %v4427, %v4426
      %v4526 = vpack.c.b16 %v4429, %v4428
      %v4527 = vpack.c.b16 %v4431, %v4430
      %v4528 = vpack.c.b16 %v4433, %v4432
      %v4529 = vpack.c.b16 %v4435, %v4434
      %v4530 = vpack.c.b16 %v4437, %v4436
      %v4531 = vpack.c.b16 %v4439, %v4438
      %v4532 = vpack.c.b16 %v4441, %v4440
      %v4533 = vpack.c.b16 %v4443, %v4442
      %v4534 = vpack.c.b16 %v4445, %v4444
      %v4535 = vpack.c.b16 %v4447, %v4446
      %v4536 = vpack.c.b16 %v4449, %v4448
      %v4537 = vpack.c.b16 %v4451, %v4450
      %v4538 = vpack.c.b16 %v4453, %v4452
      %v4539 = vpack.c.b16 %v4455, %v4454
      %v4540 = vpack.c.b16 %v4457, %v4456
      %v4541 = vpack.c.b16 %v4459, %v4458
      %v4542 = vpack.c.b16 %v4461, %v4460
      %v4543 = vpack.c.b16 %v4463, %v4462
      %v4544 = vpack.c.b16 %v4465, %v4464
      %v4545 = vpack.c.b16 %v4467, %v4466
      %v4546 = vpack.c.b16 %v4469, %v4468
      %v4547 = vpack.c.b16 %v4471, %v4470
      %v4548 = vpack.c.b16 %v4473, %v4472
      %v4549 = vpack.c.b16 %v4475, %v4474
      %v4550 = vpack.c.b16 %v4477, %v4476
      %v4551 = vpack.c.b16 %v4479, %v4478
      %4624 = vmatprep.subr.bf16.mxu0 0
      %4625 = vmatpush1.bf16.msra.mxu0 %v4480
      %4626 = vmatprep.subr.bf16.mxu0 0
      %4627 = vmatpush1.bf16.msra.mxu0 %v4481
      %4628 = vmatprep.subr.bf16.mxu0 0
      %4629 = vmatpush1.bf16.msra.mxu0 %v4482
      %4630 = vmatprep.subr.bf16.mxu0 0
      %4631 = vmatpush1.bf16.msra.mxu0 %v4483
      %4632 = vmatprep.subr.bf16.mxu0 0
      %4633 = vmatpush1.bf16.msra.mxu0 %v4484
      %4634 = vmatprep.subr.bf16.mxu0 0
      %4635 = vmatpush1.bf16.msra.mxu0 %v4485
      %4636 = vmatprep.subr.bf16.mxu0 0
      %4637 = vmatpush1.bf16.msra.mxu0 %v4486
      %4638 = vmatprep.subr.bf16.mxu0 0
      %4639 = vmatpush1.bf16.msra.mxu0 %v4487
      %4640 = vmatprep.subr.bf16.mxu0 0
      %4641 = vmatpush1.bf16.msra.mxu0 %v4488
      %4642 = vmatprep.subr.bf16.mxu0 0
      %4643 = vmatpush1.bf16.msra.mxu0 %v4489
      %4644 = vmatprep.subr.bf16.mxu0 0
      %4645 = vmatpush1.bf16.msra.mxu0 %v4490
      %4646 = vmatprep.subr.bf16.mxu0 0
      %4647 = vmatpush1.bf16.msra.mxu0 %v4491
      %4648 = vmatprep.subr.bf16.mxu0 0
      %4649 = vmatpush1.bf16.msra.mxu0 %v4492
      %4650 = vmatprep.subr.bf16.mxu0 0
      %4651 = vmatpush1.bf16.msra.mxu0 %v4493
      %4652 = vmatprep.subr.bf16.mxu0 0
      %4653 = vmatpush1.bf16.msra.mxu0 %v4494
      %4654 = vmatprep.subr.bf16.mxu0 0
      %4655 = vmatpush1.bf16.msra.mxu0 %v4495
      %4656 = vmatprep.mubr.bf16.mxu0 %v3905
      %4657 = vmatmul.mubr.bf16.gmra.mrb[0].mxu0 %v3904
      %v4658 = vpop.f32.mrb[0].mxu0
      %v4659 = vadd.f32 0.0, %v4658
      %v4660 = vpop.f32.mrb[0].mxu0
      %v4661 = vpop.f32.mrb[0].mxu0
      %v4662 = vadd.f32 0.0, %v4661
      %v4663 = vpop.f32.mrb[0].mxu0
      %4664 = vmatprep.mubr.bf16.mxu0 %v3914
      %4665 = vmatmul.mubr.bf16.gmra.mrb[0].mxu0 %v3913
      %v4666 = vpop.f32.mrb[0].mxu0
      %v4667 = vadd.f32 0.0, %v4666
      %v4668 = vpop.f32.mrb[0].mxu0
      %v4669 = vpop.f32.mrb[0].mxu0
      %v4670 = vadd.f32 0.0, %v4669
      %v4671 = vpop.f32.mrb[0].mxu0
      %4672 = vmatprep.mubr.bf16.mxu0 %v3923
      %4673 = vmatmul.mubr.bf16.gmra.mrb[0].mxu0 %v3922
      %v4674 = vpop.f32.mrb[0].mxu0
      %v4675 = vadd.f32 0.0, %v4674
      %v4676 = vpop.f32.mrb[0].mxu0
      %v4677 = vpop.f32.mrb[0].mxu0
      %v4678 = vadd.f32 0.0, %v4677
      %v4679 = vpop.f32.mrb[0].mxu0
      %4680 = vmatprep.mubr.bf16.mxu0 %v3932
      %4681 = vmatmul.mubr.bf16.gmra.mrb[0].mxu0 %v3931
      %v4682 = vpop.f32.mrb[0].mxu0
      %v4683 = vadd.f32 0.0, %v4682
      %v4684 = vpop.f32.mrb[0].mxu0
      %v4685 = vpop.f32.mrb[0].mxu0
      %v4686 = vadd.f32 0.0, %v4685
      %v4687 = vpop.f32.mrb[0].mxu0
      %4688 = vmatprep.mubr.bf16.mxu0 %v3941
      %4689 = vmatmul.mubr.bf16.gmra.mrb[0].mxu0 %v3940
      %v4690 = vpop.f32.mrb[0].mxu0
      %v4691 = vadd.f32 0.0, %v4690
      %v4692 = vpop.f32.mrb[0].mxu0
      %v4693 = vpop.f32.mrb[0].mxu0
      %v4694 = vadd.f32 0.0, %v4693
      %v4695 = vpop.f32.mrb[0].mxu0
      %4696 = vmatprep.mubr.bf16.mxu0 %v3950
      %4697 = vmatmul.mubr.bf16.gmra.mrb[0].mxu0 %v3949
      %v4698 = vpop.f32.mrb[0].mxu0
      %v4699 = vadd.f32 0.0, %v4698
      %v4700 = vpop.f32.mrb[0].mxu0
      %v4701 = vpop.f32.mrb[0].mxu0
      %v4702 = vadd.f32 0.0, %v4701
      %v4703 = vpop.f32.mrb[0].mxu0
      %4704 = vmatprep.mubr.bf16.mxu0 %v3959
      %4705 = vmatmul.mubr.bf16.gmra.mrb[0].mxu0 %v3958
      %v4706 = vpop.f32.mrb[0].mxu0
      %v4707 = vadd.f32 0.0, %v4706
      %v4708 = vpop.f32.mrb[0].mxu0
      %v4709 = vpop.f32.mrb[0].mxu0
      %v4710 = vadd.f32 0.0, %v4709
      %v4711 = vpop.f32.mrb[0].mxu0
      %4712 = vmatprep.mubr.bf16.mxu0 %v3968
      %4713 = vmatmul.mubr.bf16.gmra.mrb[0].mxu0 %v3967
      %v4714 = vpop.f32.mrb[0].mxu0
      %v4715 = vadd.f32 0.0, %v4714
      %v4716 = vpop.f32.mrb[0].mxu0
      %v4717 = vpop.f32.mrb[0].mxu0
      %v4718 = vadd.f32 0.0, %v4717
      %v4719 = vpop.f32.mrb[0].mxu0
      %4720 = vmatprep.mubr.bf16.mxu0 %v3977
      %4721 = vmatmul.mubr.bf16.gmra.mrb[0].mxu0 %v3976
      %v4722 = vpop.f32.mrb[0].mxu0
      %v4723 = vadd.f32 0.0, %v4722
      %v4724 = vpop.f32.mrb[0].mxu0
      %v4725 = vpop.f32.mrb[0].mxu0
      %v4726 = vadd.f32 0.0, %v4725
      %v4727 = vpop.f32.mrb[0].mxu0
      %4728 = vmatprep.mubr.bf16.mxu0 %v3986
      %4729 = vmatmul.mubr.bf16.gmra.mrb[0].mxu0 %v3985
      %v4730 = vpop.f32.mrb[0].mxu0
      %v4731 = vadd.f32 0.0, %v4730
      %v4732 = vpop.f32.mrb[0].mxu0
      %v4733 = vpop.f32.mrb[0].mxu0
      %v4734 = vadd.f32 0.0, %v4733
      %v4735 = vpop.f32.mrb[0].mxu0
      %4736 = vmatprep.mubr.bf16.mxu0 %v3995
      %4737 = vmatmul.mubr.bf16.gmra.mrb[0].mxu0 %v3994
      %v4738 = vpop.f32.mrb[0].mxu0
      %v4739 = vadd.f32 0.0, %v4738
      %v4740 = vpop.f32.mrb[0].mxu0
      %v4741 = vpop.f32.mrb[0].mxu0
      %v4742 = vadd.f32 0.0, %v4741
      %v4743 = vpop.f32.mrb[0].mxu0
      %4744 = vmatprep.mubr.bf16.mxu0 %v4004
      %4745 = vmatmul.mubr.bf16.gmra.mrb[0].mxu0 %v4003
      %v4746 = vpop.f32.mrb[0].mxu0
      %v4747 = vadd.f32 0.0, %v4746
      %v4748 = vpop.f32.mrb[0].mxu0
      %v4749 = vpop.f32.mrb[0].mxu0
      %v4750 = vadd.f32 0.0, %v4749
      %v4751 = vpop.f32.mrb[0].mxu0
      %4752 = vmatprep.mubr.bf16.mxu0 %v4013
      %4753 = vmatmul.mubr.bf16.gmra.mrb[0].mxu0 %v4012
      %v4754 = vpop.f32.mrb[0].mxu0
      %v4755 = vadd.f32 0.0, %v4754
      %v4756 = vpop.f32.mrb[0].mxu0
      %v4757 = vpop.f32.mrb[0].mxu0
      %v4758 = vadd.f32 0.0, %v4757
      %v4759 = vpop.f32.mrb[0].mxu0
      %4760 = vmatprep.mubr.bf16.mxu0 %v4022
      %4761 = vmatmul.mubr.bf16.gmra.mrb[0].mxu0 %v4021
      %v4762 = vpop.f32.mrb[0].mxu0
      %v4763 = vadd.f32 0.0, %v4762
      %v4764 = vpop.f32.mrb[0].mxu0
      %v4765 = vpop.f32.mrb[0].mxu0
      %v4766 = vadd.f32 0.0, %v4765
      %v4767 = vpop.f32.mrb[0].mxu0
      %4768 = vmatprep.mubr.bf16.mxu0 %v4031
      %4769 = vmatmul.mubr.bf16.gmra.mrb[0].mxu0 %v4030
      %v4770 = vpop.f32.mrb[0].mxu0
      %v4771 = vadd.f32 0.0, %v4770
      %v4772 = vpop.f32.mrb[0].mxu0
      %v4773 = vpop.f32.mrb[0].mxu0
      %v4774 = vadd.f32 0.0, %v4773
      %v4775 = vpop.f32.mrb[0].mxu0
      %4776 = vmatprep.mubr.bf16.mxu0 %v4040
      %4777 = vmatmul.mubr.bf16.gmra.mrb[0].mxu0 %v4039
      %v4778 = vpop.f32.mrb[0].mxu0
      %v4779 = vadd.f32 0.0, %v4778
      %v4780 = vpop.f32.mrb[0].mxu0
      %v4781 = vpop.f32.mrb[0].mxu0
      %v4782 = vadd.f32 0.0, %v4781
      %v4783 = vpop.f32.mrb[0].mxu0
      %4784 = vdwg.mxu0
      %4785 = vmatprep.subr.bf16.mxu0 0
      %4786 = vmatpush1.bf16.msra.mxu0 %v4496
      %4787 = vmatprep.subr.bf16.mxu0 0
      %4788 = vmatpush1.bf16.msra.mxu0 %v4497
      %4789 = vmatprep.subr.bf16.mxu0 0
      %4790 = vmatpush1.bf16.msra.mxu0 %v4498
      %4791 = vmatprep.subr.bf16.mxu0 0
      %4792 = vmatpush1.bf16.msra.mxu0 %v4499
      %4793 = vmatprep.subr.bf16.mxu0 0
      %4794 = vmatpush1.bf16.msra.mxu0 %v4500
      %4795 = vmatprep.subr.bf16.mxu0 0
      %4796 = vmatpush1.bf16.msra.mxu0 %v4501
      %4797 = vmatprep.subr.bf16.mxu0 0
      %4798 = vmatpush1.bf16.msra.mxu0 %v4502
      %4799 = vmatprep.subr.bf16.mxu0 0
      %4800 = vmatpush1.bf16.msra.mxu0 %v4503
      %4801 = vmatprep.subr.bf16.mxu0 0
      %4802 = vmatpush1.bf16.msra.mxu0 %v4504
      %4803 = vmatprep.subr.bf16.mxu0 0
      %4804 = vmatpush1.bf16.msra.mxu0 %v4505
      %4805 = vmatprep.subr.bf16.mxu0 0
      %4806 = vmatpush1.bf16.msra.mxu0 %v4506
      %4807 = vmatprep.subr.bf16.mxu0 0
      %4808 = vmatpush1.bf16.msra.mxu0 %v4507
      %4809 = vmatprep.subr.bf16.mxu0 0
      %4810 = vmatpush1.bf16.msra.mxu0 %v4508
      %4811 = vmatprep.subr.bf16.mxu0 0
      %4812 = vmatpush1.bf16.msra.mxu0 %v4509
      %4813 = vmatprep.subr.bf16.mxu0 0
      %4814 = vmatpush1.bf16.msra.mxu0 %v4510
      %4815 = vmatprep.subr.bf16.mxu0 0
      %4816 = vmatpush1.bf16.msra.mxu0 %v4511
      %4817 = vmatprep.mubr.bf16.mxu0 %v3907
      %4818 = vmatmul.mubr.bf16.gmra.mrb[0].mxu0 %v3906
      %v4819 = vpop.f32.mrb[0].mxu0
      %v4820 = vadd.f32 %v4659, %v4819
      %v4821 = vpop.f32.mrb[0].mxu0
      %v4822 = vpop.f32.mrb[0].mxu0
      %v4823 = vadd.f32 %v4662, %v4822
      %v4824 = vpop.f32.mrb[0].mxu0
      %4825 = vmatprep.mubr.bf16.mxu0 %v3916
      %4826 = vmatmul.mubr.bf16.gmra.mrb[0].mxu0 %v3915
      %v4827 = vpop.f32.mrb[0].mxu0
      %v4828 = vadd.f32 %v4667, %v4827
      %v4829 = vpop.f32.mrb[0].mxu0
      %v4830 = vpop.f32.mrb[0].mxu0
      %v4831 = vadd.f32 %v4670, %v4830
      %v4832 = vpop.f32.mrb[0].mxu0
      %4833 = vmatprep.mubr.bf16.mxu0 %v3925
      %4834 = vmatmul.mubr.bf16.gmra.mrb[0].mxu0 %v3924
      %v4835 = vpop.f32.mrb[0].mxu0
      %v4836 = vadd.f32 %v4675, %v4835
      %v4837 = vpop.f32.mrb[0].mxu0
      %v4838 = vpop.f32.mrb[0].mxu0
      %v4839 = vadd.f32 %v4678, %v4838
      %v4840 = vpop.f32.mrb[0].mxu0
      %4841 = vmatprep.mubr.bf16.mxu0 %v3934
      %4842 = vmatmul.mubr.bf16.gmra.mrb[0].mxu0 %v3933
      %v4843 = vpop.f32.mrb[0].mxu0
      %v4844 = vadd.f32 %v4683, %v4843
      %v4845 = vpop.f32.mrb[0].mxu0
      %v4846 = vpop.f32.mrb[0].mxu0
      %v4847 = vadd.f32 %v4686, %v4846
      %v4848 = vpop.f32.mrb[0].mxu0
      %4849 = vmatprep.mubr.bf16.mxu0 %v3943
      %4850 = vmatmul.mubr.bf16.gmra.mrb[0].mxu0 %v3942
      %v4851 = vpop.f32.mrb[0].mxu0
      %v4852 = vadd.f32 %v4691, %v4851
      %v4853 = vpop.f32.mrb[0].mxu0
      %v4854 = vpop.f32.mrb[0].mxu0
      %v4855 = vadd.f32 %v4694, %v4854
      %v4856 = vpop.f32.mrb[0].mxu0
      %4857 = vmatprep.mubr.bf16.mxu0 %v3952
      %4858 = vmatmul.mubr.bf16.gmra.mrb[0].mxu0 %v3951
      %v4859 = vpop.f32.mrb[0].mxu0
      %v4860 = vadd.f32 %v4699, %v4859
      %v4861 = vpop.f32.mrb[0].mxu0
      %v4862 = vpop.f32.mrb[0].mxu0
      %v4863 = vadd.f32 %v4702, %v4862
      %v4864 = vpop.f32.mrb[0].mxu0
      %4865 = vmatprep.mubr.bf16.mxu0 %v3961
      %4866 = vmatmul.mubr.bf16.gmra.mrb[0].mxu0 %v3960
      %v4867 = vpop.f32.mrb[0].mxu0
      %v4868 = vadd.f32 %v4707, %v4867
      %v4869 = vpop.f32.mrb[0].mxu0
      %v4870 = vpop.f32.mrb[0].mxu0
      %v4871 = vadd.f32 %v4710, %v4870
      %v4872 = vpop.f32.mrb[0].mxu0
      %4873 = vmatprep.mubr.bf16.mxu0 %v3970
      %4874 = vmatmul.mubr.bf16.gmra.mrb[0].mxu0 %v3969
      %v4875 = vpop.f32.mrb[0].mxu0
      %v4876 = vadd.f32 %v4715, %v4875
      %v4877 = vpop.f32.mrb[0].mxu0
      %v4878 = vpop.f32.mrb[0].mxu0
      %v4879 = vadd.f32 %v4718, %v4878
      %v4880 = vpop.f32.mrb[0].mxu0
      %4881 = vmatprep.mubr.bf16.mxu0 %v3979
      %4882 = vmatmul.mubr.bf16.gmra.mrb[0].mxu0 %v3978
      %v4883 = vpop.f32.mrb[0].mxu0
      %v4884 = vadd.f32 %v4723, %v4883
      %v4885 = vpop.f32.mrb[0].mxu0
      %v4886 = vpop.f32.mrb[0].mxu0
      %v4887 = vadd.f32 %v4726, %v4886
      %v4888 = vpop.f32.mrb[0].mxu0
      %4889 = vmatprep.mubr.bf16.mxu0 %v3988
      %4890 = vmatmul.mubr.bf16.gmra.mrb[0].mxu0 %v3987
      %v4891 = vpop.f32.mrb[0].mxu0
      %v4892 = vadd.f32 %v4731, %v4891
      %v4893 = vpop.f32.mrb[0].mxu0
      %v4894 = vpop.f32.mrb[0].mxu0
      %v4895 = vadd.f32 %v4734, %v4894
      %v4896 = vpop.f32.mrb[0].mxu0
      %4897 = vmatprep.mubr.bf16.mxu0 %v3997
      %4898 = vmatmul.mubr.bf16.gmra.mrb[0].mxu0 %v3996
      %v4899 = vpop.f32.mrb[0].mxu0
      %v4900 = vadd.f32 %v4739, %v4899
      %v4901 = vpop.f32.mrb[0].mxu0
      %v4902 = vpop.f32.mrb[0].mxu0
      %v4903 = vadd.f32 %v4742, %v4902
      %v4904 = vpop.f32.mrb[0].mxu0
      %4905 = vmatprep.mubr.bf16.mxu0 %v4006
      %4906 = vmatmul.mubr.bf16.gmra.mrb[0].mxu0 %v4005
      %v4907 = vpop.f32.mrb[0].mxu0
      %v4908 = vadd.f32 %v4747, %v4907
      %v4909 = vpop.f32.mrb[0].mxu0
      %v4910 = vpop.f32.mrb[0].mxu0
      %v4911 = vadd.f32 %v4750, %v4910
      %v4912 = vpop.f32.mrb[0].mxu0
      %4913 = vmatprep.mubr.bf16.mxu0 %v4015
      %4914 = vmatmul.mubr.bf16.gmra.mrb[0].mxu0 %v4014
      %v4915 = vpop.f32.mrb[0].mxu0
      %v4916 = vadd.f32 %v4755, %v4915
      %v4917 = vpop.f32.mrb[0].mxu0
      %v4918 = vpop.f32.mrb[0].mxu0
      %v4919 = vadd.f32 %v4758, %v4918
      %v4920 = vpop.f32.mrb[0].mxu0
      %4921 = vmatprep.mubr.bf16.mxu0 %v4024
      %4922 = vmatmul.mubr.bf16.gmra.mrb[0].mxu0 %v4023
      %v4923 = vpop.f32.mrb[0].mxu0
      %v4924 = vadd.f32 %v4763, %v4923
      %v4925 = vpop.f32.mrb[0].mxu0
      %v4926 = vpop.f32.mrb[0].mxu0
      %v4927 = vadd.f32 %v4766, %v4926
      %v4928 = vpop.f32.mrb[0].mxu0
      %4929 = vmatprep.mubr.bf16.mxu0 %v4033
      %4930 = vmatmul.mubr.bf16.gmra.mrb[0].mxu0 %v4032
      %v4931 = vpop.f32.mrb[0].mxu0
      %v4932 = vadd.f32 %v4771, %v4931
      %v4933 = vpop.f32.mrb[0].mxu0
      %v4934 = vpop.f32.mrb[0].mxu0
      %v4935 = vadd.f32 %v4774, %v4934
      %v4936 = vpop.f32.mrb[0].mxu0
      %4937 = vmatprep.mubr.bf16.mxu0 %v4042
      %4938 = vmatmul.mubr.bf16.gmra.mrb[0].mxu0 %v4041
      %v4939 = vpop.f32.mrb[0].mxu0
      %v4940 = vadd.f32 %v4779, %v4939
      %v4941 = vpop.f32.mrb[0].mxu0
      %v4942 = vpop.f32.mrb[0].mxu0
      %v4943 = vadd.f32 %v4782, %v4942
      %v4944 = vpop.f32.mrb[0].mxu0
      %4945 = vdwg.mxu0
      %4946 = vmatprep.subr.bf16.mxu0 0
      %4947 = vmatpush1.bf16.msra.mxu0 %v4512
      %4948 = vmatprep.subr.bf16.mxu0 0
      %4949 = vmatpush1.bf16.msra.mxu0 %v4513
      %4950 = vmatprep.subr.bf16.mxu0 0
      %4951 = vmatpush1.bf16.msra.mxu0 %v4514
      %4952 = vmatprep.subr.bf16.mxu0 0
      %4953 = vmatpush1.bf16.msra.mxu0 %v4515
      %4954 = vmatprep.subr.bf16.mxu0 0
      %4955 = vmatpush1.bf16.msra.mxu0 %v4516
      %4956 = vmatprep.subr.bf16.mxu0 0
      %4957 = vmatpush1.bf16.msra.mxu0 %v4517
      %4958 = vmatprep.subr.bf16.mxu0 0
      %4959 = vmatpush1.bf16.msra.mxu0 %v4518
      %4960 = vmatprep.subr.bf16.mxu0 0
      %4961 = vmatpush1.bf16.msra.mxu0 %v4519
      %4962 = vmatprep.subr.bf16.mxu0 0
      %4963 = vmatpush1.bf16.msra.mxu0 %v4520
      %4964 = vmatprep.subr.bf16.mxu0 0
      %4965 = vmatpush1.bf16.msra.mxu0 %v4521
      %4966 = vmatprep.subr.bf16.mxu0 0
      %4967 = vmatpush1.bf16.msra.mxu0 %v4522
      %4968 = vmatprep.subr.bf16.mxu0 0
      %4969 = vmatpush1.bf16.msra.mxu0 %v4523
      %4970 = vmatprep.subr.bf16.mxu0 0
      %4971 = vmatpush1.bf16.msra.mxu0 %v4524
      %4972 = vmatprep.subr.bf16.mxu0 0
      %4973 = vmatpush1.bf16.msra.mxu0 %v4525
      %4974 = vmatprep.subr.bf16.mxu0 0
      %4975 = vmatpush1.bf16.msra.mxu0 %v4526
      %4976 = vmatprep.subr.bf16.mxu0 0
      %4977 = vmatpush1.bf16.msra.mxu0 %v4527
      %4978 = vmatprep.mubr.bf16.mxu0 %v3909
      %4979 = vmatmul.mubr.bf16.gmra.mrb[0].mxu0 %v3908
      %v4980 = vpop.f32.mrb[0].mxu0
      %v4981 = vadd.f32 %v4820, %v4980
      %v4982 = vpop.f32.mrb[0].mxu0
      %v4983 = vpop.f32.mrb[0].mxu0
      %v4984 = vadd.f32 %v4823, %v4983
      %v4985 = vpop.f32.mrb[0].mxu0
      %4986 = vmatprep.mubr.bf16.mxu0 %v3918
      %4987 = vmatmul.mubr.bf16.gmra.mrb[0].mxu0 %v3917
      %v4988 = vpop.f32.mrb[0].mxu0
      %v4989 = vadd.f32 %v4828, %v4988
      %v4990 = vpop.f32.mrb[0].mxu0
      %v4991 = vpop.f32.mrb[0].mxu0
      %v4992 = vadd.f32 %v4831, %v4991
      %v4993 = vpop.f32.mrb[0].mxu0
      %4994 = vmatprep.mubr.bf16.mxu0 %v3927
      %4995 = vmatmul.mubr.bf16.gmra.mrb[0].mxu0 %v3926
      %v4996 = vpop.f32.mrb[0].mxu0
      %v4997 = vadd.f32 %v4836, %v4996
      %v4998 = vpop.f32.mrb[0].mxu0
      %v4999 = vpop.f32.mrb[0].mxu0
      %v5000 = vadd.f32 %v4839, %v4999
      %v5001 = vpop.f32.mrb[0].mxu0
      %5002 = vmatprep.mubr.bf16.mxu0 %v3936
      %5003 = vmatmul.mubr.bf16.gmra.mrb[0].mxu0 %v3935
      %v5004 = vpop.f32.mrb[0].mxu0
      %v5005 = vadd.f32 %v4844, %v5004
      %v5006 = vpop.f32.mrb[0].mxu0
      %v5007 = vpop.f32.mrb[0].mxu0
      %v5008 = vadd.f32 %v4847, %v5007
      %v5009 = vpop.f32.mrb[0].mxu0
      %5010 = vmatprep.mubr.bf16.mxu0 %v3945
      %5011 = vmatmul.mubr.bf16.gmra.mrb[0].mxu0 %v3944
      %v5012 = vpop.f32.mrb[0].mxu0
      %v5013 = vadd.f32 %v4852, %v5012
      %v5014 = vpop.f32.mrb[0].mxu0
      %v5015 = vpop.f32.mrb[0].mxu0
      %v5016 = vadd.f32 %v4855, %v5015
      %v5017 = vpop.f32.mrb[0].mxu0
      %5018 = vmatprep.mubr.bf16.mxu0 %v3954
      %5019 = vmatmul.mubr.bf16.gmra.mrb[0].mxu0 %v3953
      %v5020 = vpop.f32.mrb[0].mxu0
      %v5021 = vadd.f32 %v4860, %v5020
      %v5022 = vpop.f32.mrb[0].mxu0
      %v5023 = vpop.f32.mrb[0].mxu0
      %v5024 = vadd.f32 %v4863, %v5023
      %v5025 = vpop.f32.mrb[0].mxu0
      %5026 = vmatprep.mubr.bf16.mxu0 %v3963
      %5027 = vmatmul.mubr.bf16.gmra.mrb[0].mxu0 %v3962
      %v5028 = vpop.f32.mrb[0].mxu0
      %v5029 = vadd.f32 %v4868, %v5028
      %v5030 = vpop.f32.mrb[0].mxu0
      %v5031 = vpop.f32.mrb[0].mxu0
      %v5032 = vadd.f32 %v4871, %v5031
      %v5033 = vpop.f32.mrb[0].mxu0
      %5034 = vmatprep.mubr.bf16.mxu0 %v3972
      %5035 = vmatmul.mubr.bf16.gmra.mrb[0].mxu0 %v3971
      %v5036 = vpop.f32.mrb[0].mxu0
      %v5037 = vadd.f32 %v4876, %v5036
      %v5038 = vpop.f32.mrb[0].mxu0
      %v5039 = vpop.f32.mrb[0].mxu0
      %v5040 = vadd.f32 %v4879, %v5039
      %v5041 = vpop.f32.mrb[0].mxu0
      %5042 = vmatprep.mubr.bf16.mxu0 %v3981
      %5043 = vmatmul.mubr.bf16.gmra.mrb[0].mxu0 %v3980
      %v5044 = vpop.f32.mrb[0].mxu0
      %v5045 = vadd.f32 %v4884, %v5044
      %v5046 = vpop.f32.mrb[0].mxu0
      %v5047 = vpop.f32.mrb[0].mxu0
      %v5048 = vadd.f32 %v4887, %v5047
      %v5049 = vpop.f32.mrb[0].mxu0
      %5050 = vmatprep.mubr.bf16.mxu0 %v3990
      %5051 = vmatmul.mubr.bf16.gmra.mrb[0].mxu0 %v3989
      %v5052 = vpop.f32.mrb[0].mxu0
      %v5053 = vadd.f32 %v4892, %v5052
      %v5054 = vpop.f32.mrb[0].mxu0
      %v5055 = vpop.f32.mrb[0].mxu0
      %v5056 = vadd.f32 %v4895, %v5055
      %v5057 = vpop.f32.mrb[0].mxu0
      %5058 = vmatprep.mubr.bf16.mxu0 %v3999
      %5059 = vmatmul.mubr.bf16.gmra.mrb[0].mxu0 %v3998
      %v5060 = vpop.f32.mrb[0].mxu0
      %v5061 = vadd.f32 %v4900, %v5060
      %v5062 = vpop.f32.mrb[0].mxu0
      %v5063 = vpop.f32.mrb[0].mxu0
      %v5064 = vadd.f32 %v4903, %v5063
      %v5065 = vpop.f32.mrb[0].mxu0
      %5066 = vmatprep.mubr.bf16.mxu0 %v4008
      %5067 = vmatmul.mubr.bf16.gmra.mrb[0].mxu0 %v4007
      %v5068 = vpop.f32.mrb[0].mxu0
      %v5069 = vadd.f32 %v4908, %v5068
      %v5070 = vpop.f32.mrb[0].mxu0
      %v5071 = vpop.f32.mrb[0].mxu0
      %v5072 = vadd.f32 %v4911, %v5071
      %v5073 = vpop.f32.mrb[0].mxu0
      %5074 = vmatprep.mubr.bf16.mxu0 %v4017
      %5075 = vmatmul.mubr.bf16.gmra.mrb[0].mxu0 %v4016
      %v5076 = vpop.f32.mrb[0].mxu0
      %v5077 = vadd.f32 %v4916, %v5076
      %v5078 = vpop.f32.mrb[0].mxu0
      %v5079 = vpop.f32.mrb[0].mxu0
      %v5080 = vadd.f32 %v4919, %v5079
      %v5081 = vpop.f32.mrb[0].mxu0
      %5082 = vmatprep.mubr.bf16.mxu0 %v4026
      %5083 = vmatmul.mubr.bf16.gmra.mrb[0].mxu0 %v4025
      %v5084 = vpop.f32.mrb[0].mxu0
      %v5085 = vadd.f32 %v4924, %v5084
      %v5086 = vpop.f32.mrb[0].mxu0
      %v5087 = vpop.f32.mrb[0].mxu0
      %v5088 = vadd.f32 %v4927, %v5087
      %v5089 = vpop.f32.mrb[0].mxu0
      %5090 = vmatprep.mubr.bf16.mxu0 %v4035
      %5091 = vmatmul.mubr.bf16.gmra.mrb[0].mxu0 %v4034
      %v5092 = vpop.f32.mrb[0].mxu0
      %v5093 = vadd.f32 %v4932, %v5092
      %v5094 = vpop.f32.mrb[0].mxu0
      %v5095 = vpop.f32.mrb[0].mxu0
      %v5096 = vadd.f32 %v4935, %v5095
      %v5097 = vpop.f32.mrb[0].mxu0
      %5098 = vmatprep.mubr.bf16.mxu0 %v4044
      %5099 = vmatmul.mubr.bf16.gmra.mrb[0].mxu0 %v4043
      %v5100 = vpop.f32.mrb[0].mxu0
      %v5101 = vadd.f32 %v4940, %v5100
      %v5102 = vpop.f32.mrb[0].mxu0
      %v5103 = vpop.f32.mrb[0].mxu0
      %v5104 = vadd.f32 %v4943, %v5103
      %v5105 = vpop.f32.mrb[0].mxu0
      %5106 = vdwg.mxu0
      %5107 = vmatprep.subr.bf16.mxu0 0
      %5108 = vmatpush1.bf16.msra.mxu0 %v4528
      %5109 = vmatprep.subr.bf16.mxu0 0
      %5110 = vmatpush1.bf16.msra.mxu0 %v4529
      %5111 = vmatprep.subr.bf16.mxu0 0
      %5112 = vmatpush1.bf16.msra.mxu0 %v4530
      %5113 = vmatprep.subr.bf16.mxu0 0
      %5114 = vmatpush1.bf16.msra.mxu0 %v4531
      %5115 = vmatprep.subr.bf16.mxu0 0
      %5116 = vmatpush1.bf16.msra.mxu0 %v4532
      %5117 = vmatprep.subr.bf16.mxu0 0
      %5118 = vmatpush1.bf16.msra.mxu0 %v4533
      %5119 = vmatprep.subr.bf16.mxu0 0
      %5120 = vmatpush1.bf16.msra.mxu0 %v4534
      %5121 = vmatprep.subr.bf16.mxu0 0
      %5122 = vmatpush1.bf16.msra.mxu0 %v4535
      %5123 = vmatprep.subr.bf16.mxu0 0
      %5124 = vmatpush1.bf16.msra.mxu0 %v4536
      %5125 = vmatprep.subr.bf16.mxu0 0
      %5126 = vmatpush1.bf16.msra.mxu0 %v4537
      %5127 = vmatprep.subr.bf16.mxu0 0
      %5128 = vmatpush1.bf16.msra.mxu0 %v4538
      %5129 = vmatprep.subr.bf16.mxu0 0
      %5130 = vmatpush1.bf16.msra.mxu0 %v4539
      %5131 = vmatprep.subr.bf16.mxu0 0
      %5132 = vmatpush1.bf16.msra.mxu0 %v4540
      %5133 = vmatprep.subr.bf16.mxu0 0
      %5134 = vmatpush1.bf16.msra.mxu0 %v4541
      %5135 = vmatprep.subr.bf16.mxu0 0
      %5136 = vmatpush1.bf16.msra.mxu0 %v4542
      %5137 = vmatprep.subr.bf16.mxu0 0
      %5138 = vmatpush1.bf16.msra.mxu0 %v4543
      %5139 = vmatprep.mubr.bf16.mxu0 %v3911
      %5140 = vmatmul.mubr.bf16.gmra.mrb[0].mxu0 %v3910
      %v5141 = vpop.f32.mrb[0].mxu0
      %v5142 = vadd.f32 %v4981, %v5141
      %v5143 = vpop.f32.mrb[0].mxu0
      %v5144 = vpop.f32.mrb[0].mxu0
      %v5145 = vadd.f32 %v4984, %v5144
      %v5146 = vpop.f32.mrb[0].mxu0
      %5147 = vmatprep.mubr.bf16.mxu0 %v3920
      %5148 = vmatmul.mubr.bf16.gmra.mrb[0].mxu0 %v3919
      %v5149 = vpop.f32.mrb[0].mxu0
      %v5150 = vadd.f32 %v4989, %v5149
      %v5151 = vpop.f32.mrb[0].mxu0
      %v5152 = vpop.f32.mrb[0].mxu0
      %v5153 = vadd.f32 %v4992, %v5152
      %v5154 = vpop.f32.mrb[0].mxu0
      %5155 = vmatprep.mubr.bf16.mxu0 %v3929
      %5156 = vmatmul.mubr.bf16.gmra.mrb[0].mxu0 %v3928
      %v5157 = vpop.f32.mrb[0].mxu0
      %v5158 = vadd.f32 %v4997, %v5157
      %v5159 = vpop.f32.mrb[0].mxu0
      %v5160 = vpop.f32.mrb[0].mxu0
      %v5161 = vadd.f32 %v5000, %v5160
      %v5162 = vpop.f32.mrb[0].mxu0
      %5163 = vmatprep.mubr.bf16.mxu0 %v3938
      %5164 = vmatmul.mubr.bf16.gmra.mrb[0].mxu0 %v3937
      %v5165 = vpop.f32.mrb[0].mxu0
      %v5166 = vadd.f32 %v5005, %v5165
      %v5167 = vpop.f32.mrb[0].mxu0
      %v5168 = vpop.f32.mrb[0].mxu0
      %v5169 = vadd.f32 %v5008, %v5168
      %v5170 = vpop.f32.mrb[0].mxu0
      %5171 = vmatprep.mubr.bf16.mxu0 %v3947
      %5172 = vmatmul.mubr.bf16.gmra.mrb[0].mxu0 %v3946
      %v5173 = vpop.f32.mrb[0].mxu0
      %v5174 = vadd.f32 %v5013, %v5173
      %v5175 = vpop.f32.mrb[0].mxu0
      %v5176 = vpop.f32.mrb[0].mxu0
      %v5177 = vadd.f32 %v5016, %v5176
      %v5178 = vpop.f32.mrb[0].mxu0
      %5179 = vmatprep.mubr.bf16.mxu0 %v3956
      %5180 = vmatmul.mubr.bf16.gmra.mrb[0].mxu0 %v3955
      %v5181 = vpop.f32.mrb[0].mxu0
      %v5182 = vadd.f32 %v5021, %v5181
      %v5183 = vpop.f32.mrb[0].mxu0
      %v5184 = vpop.f32.mrb[0].mxu0
      %v5185 = vadd.f32 %v5024, %v5184
      %v5186 = vpop.f32.mrb[0].mxu0
      %5187 = vmatprep.mubr.bf16.mxu0 %v3965
      %5188 = vmatmul.mubr.bf16.gmra.mrb[0].mxu0 %v3964
      %v5189 = vpop.f32.mrb[0].mxu0
      %v5190 = vadd.f32 %v5029, %v5189
      %v5191 = vpop.f32.mrb[0].mxu0
      %v5192 = vpop.f32.mrb[0].mxu0
      %v5193 = vadd.f32 %v5032, %v5192
      %v5194 = vpop.f32.mrb[0].mxu0
      %5195 = vmatprep.mubr.bf16.mxu0 %v3974
      %5196 = vmatmul.mubr.bf16.gmra.mrb[0].mxu0 %v3973
      %v5197 = vpop.f32.mrb[0].mxu0
      %v5198 = vadd.f32 %v5037, %v5197
      %v5199 = vpop.f32.mrb[0].mxu0
      %v5200 = vpop.f32.mrb[0].mxu0
      %v5201 = vadd.f32 %v5040, %v5200
      %v5202 = vpop.f32.mrb[0].mxu0
      %5203 = vmatprep.mubr.bf16.mxu0 %v3983
      %5204 = vmatmul.mubr.bf16.gmra.mrb[0].mxu0 %v3982
      %v5205 = vpop.f32.mrb[0].mxu0
      %v5206 = vadd.f32 %v5045, %v5205
      %v5207 = vpop.f32.mrb[0].mxu0
      %v5208 = vpop.f32.mrb[0].mxu0
      %v5209 = vadd.f32 %v5048, %v5208
      %v5210 = vpop.f32.mrb[0].mxu0
      %5211 = vmatprep.mubr.bf16.mxu0 %v3992
      %5212 = vmatmul.mubr.bf16.gmra.mrb[0].mxu0 %v3991
      %v5213 = vpop.f32.mrb[0].mxu0
      %v5214 = vadd.f32 %v5053, %v5213
      %v5215 = vpop.f32.mrb[0].mxu0
      %v5216 = vpop.f32.mrb[0].mxu0
      %v5217 = vadd.f32 %v5056, %v5216
      %v5218 = vpop.f32.mrb[0].mxu0
      %5219 = vmatprep.mubr.bf16.mxu0 %v4001
      %5220 = vmatmul.mubr.bf16.gmra.mrb[0].mxu0 %v4000
      %v5221 = vpop.f32.mrb[0].mxu0
      %v5222 = vadd.f32 %v5061, %v5221
      %v5223 = vpop.f32.mrb[0].mxu0
      %v5224 = vpop.f32.mrb[0].mxu0
      %v5225 = vadd.f32 %v5064, %v5224
      %v5226 = vpop.f32.mrb[0].mxu0
      %5227 = vmatprep.mubr.bf16.mxu0 %v4010
      %5228 = vmatmul.mubr.bf16.gmra.mrb[0].mxu0 %v4009
      %v5229 = vpop.f32.mrb[0].mxu0
      %v5230 = vadd.f32 %v5069, %v5229
      %v5231 = vpop.f32.mrb[0].mxu0
      %v5232 = vpop.f32.mrb[0].mxu0
      %v5233 = vadd.f32 %v5072, %v5232
      %v5234 = vpop.f32.mrb[0].mxu0
      %5235 = vmatprep.mubr.bf16.mxu0 %v4019
      %5236 = vmatmul.mubr.bf16.gmra.mrb[0].mxu0 %v4018
      %v5237 = vpop.f32.mrb[0].mxu0
      %v5238 = vadd.f32 %v5077, %v5237
      %v5239 = vpop.f32.mrb[0].mxu0
      %v5240 = vpop.f32.mrb[0].mxu0
      %v5241 = vadd.f32 %v5080, %v5240
      %v5242 = vpop.f32.mrb[0].mxu0
      %5243 = vmatprep.mubr.bf16.mxu0 %v4028
      %5244 = vmatmul.mubr.bf16.gmra.mrb[0].mxu0 %v4027
      %v5245 = vpop.f32.mrb[0].mxu0
      %v5246 = vadd.f32 %v5085, %v5245
      %v5247 = vpop.f32.mrb[0].mxu0
      %v5248 = vpop.f32.mrb[0].mxu0
      %v5249 = vadd.f32 %v5088, %v5248
      %v5250 = vpop.f32.mrb[0].mxu0
      %5251 = vmatprep.mubr.bf16.mxu0 %v4037
      %5252 = vmatmul.mubr.bf16.gmra.mrb[0].mxu0 %v4036
      %v5253 = vpop.f32.mrb[0].mxu0
      %v5254 = vadd.f32 %v5093, %v5253
      %v5255 = vpop.f32.mrb[0].mxu0
      %v5256 = vpop.f32.mrb[0].mxu0
      %v5257 = vadd.f32 %v5096, %v5256
      %v5258 = vpop.f32.mrb[0].mxu0
      %5259 = vmatprep.mubr.bf16.mxu0 %v4046
      %5260 = vmatmul.mubr.bf16.gmra.mrb[0].mxu0 %v4045
      %v5261 = vpop.f32.mrb[0].mxu0
      %v5262 = vadd.f32 %v5101, %v5261
      %v5263 = vpop.f32.mrb[0].mxu0
      %v5264 = vpop.f32.mrb[0].mxu0
      %v5265 = vadd.f32 %v5104, %v5264
      %v5266 = vpop.f32.mrb[0].mxu0
      %5267 = vdwg.mxu0
      %5268 = vmatprep.subr.bf16.mxu0 0
      %5269 = vmatpush1.bf16.msra.mxu0 %v4544
      %5270 = vmatprep.subr.bf16.mxu0 0
      %5271 = vmatpush1.bf16.msra.mxu0 %v4545
      %5272 = vmatprep.subr.bf16.mxu0 0
      %5273 = vmatpush1.bf16.msra.mxu0 %v4546
      %5274 = vmatprep.subr.bf16.mxu0 0
      %5275 = vmatpush1.bf16.msra.mxu0 %v4547
      %5276 = vmatprep.subr.bf16.mxu0 0
      %5277 = vmatpush1.bf16.msra.mxu0 %v4548
      %5278 = vmatprep.subr.bf16.mxu0 0
      %5279 = vmatpush1.bf16.msra.mxu0 %v4549
      %5280 = vmatprep.subr.bf16.mxu0 0
      %5281 = vmatpush1.bf16.msra.mxu0 %v4550
      %5282 = vmatprep.subr.bf16.mxu0 0
      %5283 = vmatpush1.bf16.msra.mxu0 %v4551
      %5284 = vmatprep.subr.bf16.mxu0 0
      %5285 = vmatpush1.bf16.msra.mxu0 0
      %5286 = vmatprep.subr.bf16.mxu0 0
      %5287 = vmatpush1.bf16.msra.mxu0 0
      %5288 = vmatprep.subr.bf16.mxu0 0
      %5289 = vmatpush1.bf16.msra.mxu0 0
      %5290 = vmatprep.subr.bf16.mxu0 0
      %5291 = vmatpush1.bf16.msra.mxu0 0
      %5292 = vmatprep.subr.bf16.mxu0 0
      %5293 = vmatpush1.bf16.msra.mxu0 0
      %5294 = vmatprep.subr.bf16.mxu0 0
      %5295 = vmatpush1.bf16.msra.mxu0 0
      %5296 = vmatprep.subr.bf16.mxu0 0
      %5297 = vmatpush1.bf16.msra.mxu0 0
      %5298 = vmatprep.subr.bf16.mxu0 0
      %5299 = vmatpush1.bf16.msra.mxu0 0
      %5300 = vmatprep.mubr.bf16.mxu0 0
      %5301 = vmatmul.mubr.bf16.gmra.mrb[0].mxu0 %v3912
      %v5302 = vpop.f32.mrb[0].mxu0
      %v5303 = vadd.f32 %v5142, %v5302
      %v5304 = vpop.f32.mrb[0].mxu0
      %v5305 = vpop.f32.mrb[0].mxu0
      %v5306 = vadd.f32 %v5145, %v5305
      %v5307 = vpop.f32.mrb[0].mxu0
      %5308 = vmatprep.mubr.bf16.mxu0 0
      %5309 = vmatmul.mubr.bf16.gmra.mrb[0].mxu0 %v3921
      %v5310 = vpop.f32.mrb[0].mxu0
      %v5311 = vadd.f32 %v5150, %v5310
      %v5312 = vpop.f32.mrb[0].mxu0
      %v5313 = vpop.f32.mrb[0].mxu0
      %v5314 = vadd.f32 %v5153, %v5313
      %v5315 = vpop.f32.mrb[0].mxu0
      %5316 = vmatprep.mubr.bf16.mxu0 0
      %5317 = vmatmul.mubr.bf16.gmra.mrb[0].mxu0 %v3930
      %v5318 = vpop.f32.mrb[0].mxu0
      %v5319 = vadd.f32 %v5158, %v5318
      %v5320 = vpop.f32.mrb[0].mxu0
      %v5321 = vpop.f32.mrb[0].mxu0
      %v5322 = vadd.f32 %v5161, %v5321
      %v5323 = vpop.f32.mrb[0].mxu0
      %5324 = vmatprep.mubr.bf16.mxu0 0
      %5325 = vmatmul.mubr.bf16.gmra.mrb[0].mxu0 %v3939
      %v5326 = vpop.f32.mrb[0].mxu0
      %v5327 = vadd.f32 %v5166, %v5326
      %v5328 = vpop.f32.mrb[0].mxu0
      %v5329 = vpop.f32.mrb[0].mxu0
      %v5330 = vadd.f32 %v5169, %v5329
      %v5331 = vpop.f32.mrb[0].mxu0
      %5332 = vmatprep.mubr.bf16.mxu0 0
      %5333 = vmatmul.mubr.bf16.gmra.mrb[0].mxu0 %v3948
      %v5334 = vpop.f32.mrb[0].mxu0
      %v5335 = vadd.f32 %v5174, %v5334
      %v5336 = vpop.f32.mrb[0].mxu0
      %v5337 = vpop.f32.mrb[0].mxu0
      %v5338 = vadd.f32 %v5177, %v5337
      %v5339 = vpop.f32.mrb[0].mxu0
      %5340 = vmatprep.mubr.bf16.mxu0 0
      %5341 = vmatmul.mubr.bf16.gmra.mrb[0].mxu0 %v3957
      %v5342 = vpop.f32.mrb[0].mxu0
      %v5343 = vadd.f32 %v5182, %v5342
      %v5344 = vpop.f32.mrb[0].mxu0
      %v5345 = vpop.f32.mrb[0].mxu0
      %v5346 = vadd.f32 %v5185, %v5345
      %v5347 = vpop.f32.mrb[0].mxu0
      %5348 = vmatprep.mubr.bf16.mxu0 0
      %5349 = vmatmul.mubr.bf16.gmra.mrb[0].mxu0 %v3966
      %v5350 = vpop.f32.mrb[0].mxu0
      %v5351 = vadd.f32 %v5190, %v5350
      %v5352 = vpop.f32.mrb[0].mxu0
      %v5353 = vpop.f32.mrb[0].mxu0
      %v5354 = vadd.f32 %v5193, %v5353
      %v5355 = vpop.f32.mrb[0].mxu0
      %5356 = vmatprep.mubr.bf16.mxu0 0
      %5357 = vmatmul.mubr.bf16.gmra.mrb[0].mxu0 %v3975
      %v5358 = vpop.f32.mrb[0].mxu0
      %v5359 = vadd.f32 %v5198, %v5358
      %v5360 = vpop.f32.mrb[0].mxu0
      %v5361 = vpop.f32.mrb[0].mxu0
      %v5362 = vadd.f32 %v5201, %v5361
      %v5363 = vpop.f32.mrb[0].mxu0
      %5364 = vmatprep.mubr.bf16.mxu0 0
      %5365 = vmatmul.mubr.bf16.gmra.mrb[0].mxu0 %v3984
      %v5366 = vpop.f32.mrb[0].mxu0
      %v5367 = vadd.f32 %v5206, %v5366
      %v5368 = vpop.f32.mrb[0].mxu0
      %v5369 = vpop.f32.mrb[0].mxu0
      %v5370 = vadd.f32 %v5209, %v5369
      %v5371 = vpop.f32.mrb[0].mxu0
      %5372 = vmatprep.mubr.bf16.mxu0 0
      %5373 = vmatmul.mubr.bf16.gmra.mrb[0].mxu0 %v3993
      %v5374 = vpop.f32.mrb[0].mxu0
      %v5375 = vadd.f32 %v5214, %v5374
      %v5376 = vpop.f32.mrb[0].mxu0
      %v5377 = vpop.f32.mrb[0].mxu0
      %v5378 = vadd.f32 %v5217, %v5377
      %v5379 = vpop.f32.mrb[0].mxu0
      %5380 = vmatprep.mubr.bf16.mxu0 0
      %5381 = vmatmul.mubr.bf16.gmra.mrb[0].mxu0 %v4002
      %v5382 = vpop.f32.mrb[0].mxu0
      %v5383 = vadd.f32 %v5222, %v5382
      %v5384 = vpop.f32.mrb[0].mxu0
      %v5385 = vpop.f32.mrb[0].mxu0
      %v5386 = vadd.f32 %v5225, %v5385
      %v5387 = vpop.f32.mrb[0].mxu0
      %5388 = vmatprep.mubr.bf16.mxu0 0
      %5389 = vmatmul.mubr.bf16.gmra.mrb[0].mxu0 %v4011
      %v5390 = vpop.f32.mrb[0].mxu0
      %v5391 = vadd.f32 %v5230, %v5390
      %v5392 = vpop.f32.mrb[0].mxu0
      %v5393 = vpop.f32.mrb[0].mxu0
      %v5394 = vadd.f32 %v5233, %v5393
      %v5395 = vpop.f32.mrb[0].mxu0
      %5396 = vmatprep.mubr.bf16.mxu0 0
      %5397 = vmatmul.mubr.bf16.gmra.mrb[0].mxu0 %v4020
      %v5398 = vpop.f32.mrb[0].mxu0
      %v5399 = vadd.f32 %v5238, %v5398
      %v5400 = vpop.f32.mrb[0].mxu0
      %v5401 = vpop.f32.mrb[0].mxu0
      %v5402 = vadd.f32 %v5241, %v5401
      %v5403 = vpop.f32.mrb[0].mxu0
      %5404 = vmatprep.mubr.bf16.mxu0 0
      %5405 = vmatmul.mubr.bf16.gmra.mrb[0].mxu0 %v4029
      %v5406 = vpop.f32.mrb[0].mxu0
      %v5407 = vadd.f32 %v5246, %v5406
      %v5408 = vpop.f32.mrb[0].mxu0
      %v5409 = vpop.f32.mrb[0].mxu0
      %v5410 = vadd.f32 %v5249, %v5409
      %v5411 = vpop.f32.mrb[0].mxu0
      %5412 = vmatprep.mubr.bf16.mxu0 0
      %5413 = vmatmul.mubr.bf16.gmra.mrb[0].mxu0 %v4038
      %v5414 = vpop.f32.mrb[0].mxu0
      %v5415 = vadd.f32 %v5254, %v5414
      %v5416 = vpop.f32.mrb[0].mxu0
      %v5417 = vpop.f32.mrb[0].mxu0
      %v5418 = vadd.f32 %v5257, %v5417
      %v5419 = vpop.f32.mrb[0].mxu0
      %5420 = vmatprep.mubr.bf16.mxu0 0
      %5421 = vmatmul.mubr.bf16.gmra.mrb[0].mxu0 %v4047
      %v5422 = vpop.f32.mrb[0].mxu0
      %v5423 = vadd.f32 %v5262, %v5422
      %v5424 = vpop.f32.mrb[0].mxu0
      %v5425 = vpop.f32.mrb[0].mxu0
      %v5426 = vadd.f32 %v5265, %v5425
      %v5427 = vpop.f32.mrb[0].mxu0
      %5428 = vdwg.mxu0
      %5429 = vst [vmem:[%s262] sm:$0xff] %v5303
      %5430 = vst [vmem:[%s262 + $0x8] sm:$0xff] %v5306
      %5431 = vst [vmem:[%s262 + $0x10] sm:$0xff] %v5311
      %5432 = vst [vmem:[%s262 + $0x18] sm:$0xff] %v5314
      %5433 = vst [vmem:[%s262 + $0x20] sm:$0xff] %v5319
      %5434 = vst [vmem:[%s262 + $0x28] sm:$0xff] %v5322
      %5435 = vst [vmem:[%s262 + $0x30] sm:$0xff] %v5327
      %5436 = vst [vmem:[%s262 + $0x38] sm:$0xff] %v5330
      %5437 = vst [vmem:[%s262 + $0x40] sm:$0xff] %v5335
      %5438 = vst [vmem:[%s262 + $0x48] sm:$0xff] %v5338
      %5439 = vst [vmem:[%s262 + $0x50] sm:$0xff] %v5343
      %5440 = vst [vmem:[%s262 + $0x58] sm:$0xff] %v5346
      %5441 = vst [vmem:[%s262 + $0x60] sm:$0xff] %v5351
      %5442 = vst [vmem:[%s262 + $0x68] sm:$0xff] %v5354
      %5443 = vst [vmem:[%s262 + $0x70] sm:$0xff] %v5359
      %5444 = vst [vmem:[%s262 + $0x78] sm:$0xff] %v5362
      %5445 = vst [vmem:[%s262 + $0x80] sm:$0xff] %v5367
      %5446 = vst [vmem:[%s262 + $0x88] sm:$0xff] %v5370
      %5447 = vst [vmem:[%s262 + $0x90] sm:$0xff] %v5375
      %5448 = vst [vmem:[%s262 + $0x98] sm:$0xff] %v5378
      %5449 = vst [vmem:[%s262 + $0xa0] sm:$0xff] %v5383
      %5450 = vst [vmem:[%s262 + $0xa8] sm:$0xff] %v5386
      %5451 = vst [vmem:[%s262 + $0xb0] sm:$0xff] %v5391
      %5452 = vst [vmem:[%s262 + $0xb8] sm:$0xff] %v5394
      %5453 = vst [vmem:[%s262 + $0xc0] sm:$0xff] %v5399
      %5454 = vst [vmem:[%s262 + $0xc8] sm:$0xff] %v5402
      %5455 = vst [vmem:[%s262 + $0xd0] sm:$0xff] %v5407
      %5456 = vst [vmem:[%s262 + $0xd8] sm:$0xff] %v5410
      %5457 = vst [vmem:[%s262 + $0xe0] sm:$0xff] %v5415
      %5458 = vst [vmem:[%s262 + $0xe8] sm:$0xff] %v5418
      %5459 = vst [vmem:[%s262 + $0xf0] sm:$0xff] %v5423
      %5460 = vst [vmem:[%s262 + $0xf8] sm:$0xff] %v5426
      %v5461 = vadd.f32 %v5303, %v5306
      %v5462 = vadd.f32 %v5461, %v5311
      %v5463 = vadd.f32 %v5462, %v5314
      %v5464 = vadd.f32 %v5463, %v5319
      %v5465 = vadd.f32 %v5464, %v5322
      %v5466 = vadd.f32 %v5465, %v5327
      %v5467 = vadd.f32 %v5466, %v5330
      %v5468 = vadd.f32 %v5467, %v5335
      %v5469 = vadd.f32 %v5468, %v5338
      %v5470 = vadd.f32 %v5469, %v5343
      %v5471 = vadd.f32 %v5470, %v5346
      %v5472 = vadd.f32 %v5471, %v5351
      %v5473 = vadd.f32 %v5472, %v5354
      %v5474 = vadd.f32 %v5473, %v5359
      %v5475 = vadd.f32 %v5474, %v5362
      %v5476 = vadd.f32 %v5475, %v5367
      %v5477 = vadd.f32 %v5476, %v5370
      %v5478 = vadd.f32 %v5477, %v5375
      %v5479 = vadd.f32 %v5478, %v5378
      %v5480 = vadd.f32 %v5479, %v5383
      %v5481 = vadd.f32 %v5480, %v5386
      %v5482 = vadd.f32 %v5481, %v5391
      %v5483 = vadd.f32 %v5482, %v5394
      %v5484 = vadd.f32 %v5483, %v5399
      %v5485 = vadd.f32 %v5484, %v5402
      %v5486 = vadd.f32 %v5485, %v5407
      %v5487 = vadd.f32 %v5486, %v5410
      %v5488 = vadd.f32 %v5487, %v5415
      %v5489 = vadd.f32 %v5488, %v5418
      %v5490 = vadd.f32 %v5489, %v5423
      %v5491 = vadd.f32 %v5490, %v5426
      %v5492 = vrot.slane %v5491, 4
      %v5493 = vadd.f32 %v5491, %v5492
      %v5494 = vrot.slane %v5493, 2
      %v5495 = vadd.f32 %v5493, %v5494
      %v5496 = vrot.slane %v5495, 1
      %v5497 = vadd.f32 %v5495, %v5496
      %5498 = vst [vmem:[%s265] sm:$0x1] %v5497
      %v5499 = vmul.f32 %v5303, %v5303
      %v5500 = vmul.f32 %v5306, %v5306
      %v5501 = vmul.f32 %v5311, %v5311
      %v5502 = vmul.f32 %v5314, %v5314
      %v5503 = vmul.f32 %v5319, %v5319
      %v5504 = vmul.f32 %v5322, %v5322
      %v5505 = vmul.f32 %v5327, %v5327
      %v5506 = vmul.f32 %v5330, %v5330
      %v5507 = vmul.f32 %v5335, %v5335
      %v5508 = vmul.f32 %v5338, %v5338
      %v5509 = vmul.f32 %v5343, %v5343
      %v5510 = vmul.f32 %v5346, %v5346
      %v5511 = vmul.f32 %v5351, %v5351
      %v5512 = vmul.f32 %v5354, %v5354
      %v5513 = vmul.f32 %v5359, %v5359
      %v5514 = vmul.f32 %v5362, %v5362
      %v5515 = vmul.f32 %v5367, %v5367
      %v5516 = vmul.f32 %v5370, %v5370
      %v5517 = vmul.f32 %v5375, %v5375
      %v5518 = vmul.f32 %v5378, %v5378
      %v5519 = vmul.f32 %v5383, %v5383
      %v5520 = vmul.f32 %v5386, %v5386
      %v5521 = vmul.f32 %v5391, %v5391
      %v5522 = vmul.f32 %v5394, %v5394
      %v5523 = vmul.f32 %v5399, %v5399
      %v5524 = vmul.f32 %v5402, %v5402
      %v5525 = vmul.f32 %v5407, %v5407
      %v5526 = vmul.f32 %v5410, %v5410
      %v5527 = vmul.f32 %v5415, %v5415
      %v5528 = vmul.f32 %v5418, %v5418
      %v5529 = vmul.f32 %v5423, %v5423
      %v5530 = vmul.f32 %v5426, %v5426
      %v5531 = vadd.f32 %v5499, %v5500
      %v5532 = vadd.f32 %v5531, %v5501
      %v5533 = vadd.f32 %v5532, %v5502
      %v5534 = vadd.f32 %v5533, %v5503
      %v5535 = vadd.f32 %v5534, %v5504
      %v5536 = vadd.f32 %v5535, %v5505
      %v5537 = vadd.f32 %v5536, %v5506
      %v5538 = vadd.f32 %v5537, %v5507
      %v5539 = vadd.f32 %v5538, %v5508
      %v5540 = vadd.f32 %v5539, %v5509
      %v5541 = vadd.f32 %v5540, %v5510
      %v5542 = vadd.f32 %v5541, %v5511
      %v5543 = vadd.f32 %v5542, %v5512
      %v5544 = vadd.f32 %v5543, %v5513
      %v5545 = vadd.f32 %v5544, %v5514
      %v5546 = vadd.f32 %v5545, %v5515
      %v5547 = vadd.f32 %v5546, %v5516
      %v5548 = vadd.f32 %v5547, %v5517
      %v5549 = vadd.f32 %v5548, %v5518
      %v5550 = vadd.f32 %v5549, %v5519
      %v5551 = vadd.f32 %v5550, %v5520
      %v5552 = vadd.f32 %v5551, %v5521
      %v5553 = vadd.f32 %v5552, %v5522
      %v5554 = vadd.f32 %v5553, %v5523
      %v5555 = vadd.f32 %v5554, %v5524
      %v5556 = vadd.f32 %v5555, %v5525
      %v5557 = vadd.f32 %v5556, %v5526
      %v5558 = vadd.f32 %v5557, %v5527
      %v5559 = vadd.f32 %v5558, %v5528
      %v5560 = vadd.f32 %v5559, %v5529
      %v5561 = vadd.f32 %v5560, %v5530
      %v5562 = vrot.slane %v5561, 4
      %v5563 = vadd.f32 %v5561, %v5562
      %v5564 = vrot.slane %v5563, 2
      %v5565 = vadd.f32 %v5563, %v5564
      %v5566 = vrot.slane %v5565, 1
      %v5567 = vadd.f32 %v5565, %v5566
      %5568 = vst [vmem:[%s268] sm:$0x1] %v5567
      %p5569 = scmp.lt.s32.totalorder %s18, 1
      %s5570 = scalar_select %p5569, %s18, 1
      %s5571 = smul.addr %s5570, 32
      %s5572 = smul.addr %s5571, 8
      %s5573 = scalar_lea.vmem %s4, %s5572
      %p5574 = scmp.lt.s32.totalorder %s18, 1
      %s5575 = scalar_select %p5574, %s18, 1
      %s5576 = scalar_lea.vmem %s5, %s5575
      %p5577 = scmp.lt.s32.totalorder %s18, 1
      %s5578 = scalar_select %p5577, %s18, 1
      %s5579 = scalar_lea.vmem %s6, %s5578
      // Predicated region
      $region37: #{bottleneck_forward.5} parent=35 // pred_check
        %p5580 = pneg %p125
      $region38: #{bottleneck_forward.5} parent=35 // pred_check_branch
        %5582 = sbr.rel (%p5580) target = $region40
      $region39: #{bottleneck_forward.5} parent=35 // pred_region
        _
      $region40: #{bottleneck_forward.5} parent=35 // pred_fallthru
        _
      // Predicated region
      $region41: #{bottleneck_forward.5} parent=35 // pred_check
        %p5583 = pneg %p151
      $region42: #{bottleneck_forward.5} parent=35 // pred_check_branch
        %5585 = sbr.rel (%p5583) target = $region44
      $region43: #{bottleneck_forward.5} parent=35 // pred_region
        _
      $region44: #{bottleneck_forward.5} parent=35 // pred_fallthru
        _
      // Predicated region
      $region45: #{bottleneck_forward.5} parent=35 // pred_check
        %p5586 = pneg %p177
      $region46: #{bottleneck_forward.5} parent=35 // pred_check_branch
        %5588 = sbr.rel (%p5586) target = $region48
      $region47: #{bottleneck_forward.5} parent=35 // pred_region
        _
      $region48: #{bottleneck_forward.5} parent=35 // pred_fallthru
        _
    $region36: #{bottleneck_forward.5} parent=5 // pred_fallthru
      _
    %p5589 = scmp.le.s32.totalorder 2, %s13
    // Predicated region
    $region49: #{bottleneck_forward.5} parent=5 // pred_check
      %p5590 = pneg %p5589
    $region50: #{bottleneck_forward.5} parent=5 // pred_check_branch
      %5592 = sbr.rel (%p5590) target = $region52
    $region51: #{bottleneck_forward.5} parent=5 // pred_region
      %s5593 = ssub.s32 %s13, 2
      // Predicated region
      $region53: #{bottleneck_forward.5} parent=51 // pred_check
        %p5594 = pneg %p131
      $region54: #{bottleneck_forward.5} parent=51 // pred_check_branch
        %5596 = sbr.rel (%p5594) target = $region56
      $region55: #{bottleneck_forward.5} parent=51 // pred_region
        %p5597 = scmp.lt.s32.totalorder %s19, 1
        %s5598 = scalar_select %p5597, %s19, 1
        %s5599 = smul.addr %s5598, 32
        %s5600 = smul.addr %s5599, 8
        %s5601 = scalar_lea.vmem %s4, %s5600
      $region56: #{bottleneck_forward.5} parent=51 // pred_fallthru
        _
      // Predicated region
      $region57: #{bottleneck_forward.5} parent=51 // pred_check
        %p5602 = pneg %p157
      $region58: #{bottleneck_forward.5} parent=51 // pred_check_branch
        %5604 = sbr.rel (%p5602) target = $region60
      $region59: #{bottleneck_forward.5} parent=51 // pred_region
        %p5605 = scmp.lt.s32.totalorder %s19, 1
        %s5606 = scalar_select %p5605, %s19, 1
        %s5607 = scalar_lea.vmem %s5, %s5606
      $region60: #{bottleneck_forward.5} parent=51 // pred_fallthru
        _
      // Predicated region
      $region61: #{bottleneck_forward.5} parent=51 // pred_check
        %p5608 = pneg %p183
      $region62: #{bottleneck_forward.5} parent=51 // pred_check_branch
        %5610 = sbr.rel (%p5608) target = $region64
      $region63: #{bottleneck_forward.5} parent=51 // pred_region
        %p5611 = scmp.lt.s32.totalorder %s19, 1
        %s5612 = scalar_select %p5611, %s19, 1
        %s5613 = scalar_lea.vmem %s6, %s5612
      $region64: #{bottleneck_forward.5} parent=51 // pred_fallthru
        _
    $region52: #{bottleneck_forward.5} parent=5 // pred_fallthru
      _
  $region6: #{bottleneck_forward.5} parent=0 // loop_footer
    %s17 = sadd.s32 1, %s13
  $region7: #{bottleneck_forward.5} parent=0 // loop_footer_branch
    %12 = sbr.rel target = $region3
  $region8: #{bottleneck_forward.5} parent=0 // loop_exit
    _

</llo_original>
